<compile_context>
chip_gen: v6e
topology: v6e:2x2x1
jax: 0.10.0
libtpu: 0.0.40
codegen_flags: <defaults>
</compile_context>

<pallas_src>
import functools

import jax
import jax.numpy as jnp
from jax.experimental import pallas as pl
from jax.experimental.pallas import tpu as pltpu

LANE = 128
VMEM_LIMIT = 32 * 1024 * 1024  # explicit scoped-VMEM budget (safe on v5e/v6e/v7x)


def _round_up(x, m):
    return (x + m - 1) // m * m


# ---------------------------------------------------------------------------
# Conv2d with the KH*KW taps folded into the contraction; bias + optional
# LeakyReLU fused in the epilogue; optionally emits per-row-block partial
# per-channel sum / sum-of-squares for a following BatchNorm.
# ---------------------------------------------------------------------------
def _conv_kernel(p_ref, w_ref, *rest, leaky, has_bias, with_stats):
    idx = 0
    b_ref = None
    if has_bias:
        b_ref = rest[idx]
        idx += 1
    o_ref = rest[idx]
    idx += 1

    # (TM, KC) bf16 x (KC, Cout) bf16 -> f32 accumulate on the MXU.
    y = jnp.dot(p_ref[...], w_ref[...], preferred_element_type=jnp.float32)
    if has_bias:
        y = y + b_ref[...]
    if leaky:
        y = jnp.where(y > 0, y, 0.2 * y)
    o_ref[...] = y.astype(o_ref.dtype)

    if with_stats:
        # Per-block partial BN statistics (one (1,1,Cout) row per grid step).
        # Padded (zero) rows of the last block contribute exactly zero because
        # the stats layers have no bias, so no correction is needed.
        sum_ref, ssq_ref = rest[idx], rest[idx + 1]
        sum_ref[...] = jnp.sum(y, axis=0, keepdims=True)[None]
        ssq_ref[...] = jnp.sum(y * y, axis=0, keepdims=True)[None]


def conv_layer(x, w, b, *, stride, pad, leaky, with_stats, out_dtype):
    """x: (N,H,W,Cin) NHWC; w: (KH,KW,Cin,Cout); b: (Cout,) or None."""
    x = x.astype(jnp.bfloat16)
    N, H, W, Cin = x.shape
    KH, KW, Cin_w, Cout = w.shape
    assert Cin == Cin_w, (Cin, Cin_w)
    OH = (H + 2 * pad - KH) // stride + 1
    OW = (W + 2 * pad - KW) // stride + 1
    M = N * OH * OW
    KC = KH * KW * Cin  # real channels only: no 128-lane padding carried around

    # Weight flattened with (kh, kw, cin) ordering matching the slab below.
    w_mat = w.astype(jnp.bfloat16).reshape(KC, Cout)

    # im2col: a single (M, KH*KW*Cin) bf16 slab built by XLA (fuses with the
    # producer's BN/LeakyReLU elementwise ops).
    xp = jnp.pad(x, ((0, 0), (pad, pad), (pad, pad), (0, 0)))
    taps = [xp[:, kh:kh + stride * (OH - 1) + 1:stride,
                  kw:kw + stride * (OW - 1) + 1:stride, :]
            for kh in range(KH) for kw in range(KW)]
    slab = jnp.concatenate(taps, axis=-1).reshape(M, KC)

    # Row tile: power-of-two multiple of 128, capped so the double-buffered
    # bf16 input tile stays ~<=6 MiB (comfortable under v7x's 64 MiB VMEM).
    TM = LANE
    while TM < 2048 and TM < M:
        TM *= 2
    while TM > LANE and TM * KC * 2 > (6 << 20):
        TM //= 2
    Mpad = _round_up(M, TM)
    if Mpad != M:
        slab = jnp.pad(slab, ((0, Mpad - M), (0, 0)))
    nblk = Mpad // TM

    operands = [slab, w_mat]
    in_specs = [
        pl.BlockSpec((TM, KC), lambda i: (i, 0)),
        pl.BlockSpec((KC, Cout), lambda i: (0, 0)),
    ]
    has_bias = b is not None
    if has_bias:
        operands.append(b.astype(jnp.float32).reshape(1, Cout))
        in_specs.append(pl.BlockSpec((1, Cout), lambda i: (0, 0)))

    out_shape = [jax.ShapeDtypeStruct((Mpad, Cout), out_dtype)]
    out_specs = [pl.BlockSpec((TM, Cout), lambda i: (i, 0))]
    if with_stats:
        out_shape += [jax.ShapeDtypeStruct((nblk, 1, Cout), jnp.float32)] * 2
        out_specs += [pl.BlockSpec((1, 1, Cout), lambda i: (i, 0, 0))] * 2

    outs = pl.pallas_call(
        functools.partial(_conv_kernel, leaky=leaky, has_bias=has_bias,
                          with_stats=with_stats),
        out_shape=tuple(out_shape) if with_stats else out_shape[0],
        grid=(nblk,),
        in_specs=in_specs,
        out_specs=tuple(out_specs) if with_stats else out_specs[0],
        compiler_params=pltpu.CompilerParams(
            dimension_semantics=("parallel",),   # per-block stats -> no reduction axis
            vmem_limit_bytes=VMEM_LIMIT),
    )(*operands)

    shp = (N, OH, OW, Cout)
    if with_stats:
        y, psum, pssq = outs
        return y, psum, pssq, shp, M
    return outs, shp, M


# ---------------------------------------------------------------------------
# Global average pool + both Linear heads fused (single lane-padded matmul).
# ---------------------------------------------------------------------------
def _heads_kernel(f_ref, w_ref, b_ref, o_ref, *, inv_p):
    g = jnp.sum(f_ref[...].astype(jnp.float32), axis=1) * inv_p     # (N, C) pool
    o_ref[...] = jnp.dot(g.astype(jnp.bfloat16), w_ref[...],
                         preferred_element_type=jnp.float32) + b_ref[...]


def heads(feat, wt, bt, ws, bs):
    N, OH, OW, C = feat.shape
    T = wt.shape[1]
    S = ws.shape[1]
    HP = _round_up(T + S, LANE)
    w_all = jnp.pad(jnp.concatenate([wt, ws], axis=1).astype(jnp.bfloat16),
                    ((0, 0), (0, HP - (T + S))))
    b_all = jnp.pad(jnp.concatenate([bt, bs]).astype(jnp.float32),
                    (0, HP - (T + S))).reshape(1, HP)
    f = feat.astype(jnp.bfloat16).reshape(N, OH * OW, C)

    out = pl.pallas_call(
        functools.partial(_heads_kernel, inv_p=1.0 / (OH * OW)),
        out_shape=jax.ShapeDtypeStruct((N, HP), jnp.float32),
        grid=(1,),
        in_specs=[pl.BlockSpec((N, OH * OW, C), lambda i: (0, 0, 0)),
                  pl.BlockSpec((C, HP), lambda i: (0, 0)),
                  pl.BlockSpec((1, HP), lambda i: (0, 0))],
        out_specs=pl.BlockSpec((N, HP), lambda i: (0, 0)),
        compiler_params=pltpu.CompilerParams(
            dimension_semantics=("arbitrary",),
            vmem_limit_bytes=VMEM_LIMIT),
    )(f, w_all, b_all)
    return out[:, :T], out[:, T:T + S]


# ---------------------------------------------------------------------------
# Full forward pass (matches PatchGANDiscriminator.forward).
# ---------------------------------------------------------------------------
def patchgan_forward(images, params):
    """images: (N, C, H, W) float32 NCHW (PyTorch convention)."""
    x = jnp.transpose(images, (0, 2, 3, 1)).astype(jnp.bfloat16)     # -> NHWC

    # Conv(3 -> B) + LeakyReLU
    y, shp, M = conv_layer(x, params["w0"], params["b0"], stride=2, pad=1,
                           leaky=True, with_stats=False, out_dtype=jnp.bfloat16)
    x = y[:M].reshape(shp)

    # Conv(-> 2B / 4B / 8B) + BatchNorm(training-mode batch stats) + LeakyReLU.
    # Conv bias omitted: the batch-mean subtraction in BN cancels it exactly.
    # BN is folded into a per-channel scale/shift computed from the per-block
    # partial stats and applied as plain jnp ops (fused by XLA with the next
    # layer's im2col slab construction — no separate normalization kernel).
    for i in ("1", "2", "3"):
        y, psum, pssq, shp, M = conv_layer(
            x, params["w" + i], None, stride=2, pad=1,
            leaky=False, with_stats=True, out_dtype=jnp.bfloat16)
        csum = jnp.sum(psum, axis=0)                       # (1, Cout) f32
        cssq = jnp.sum(pssq, axis=0)                       # (1, Cout) f32
        mean = csum / M
        var = jnp.maximum(cssq / M - mean * mean, 0.0)     # biased var (PyTorch BN)
        scale = params["g" + i].astype(jnp.float32) * jax.lax.rsqrt(var + 1e-5)
        shift = params["be" + i].astype(jnp.float32) - scale * mean
        yf = y[:M].astype(jnp.float32) * scale + shift
        x = jnp.where(yf > 0, yf, 0.2 * yf).astype(jnp.bfloat16).reshape(shp)

    # Global average pool + fused type/stats heads.
    predicted_types, predicted_stats = heads(
        x, params["wt"], params["bt"], params["ws"], params["bs"])

    # Final patch-logit conv (8B -> 1, stride 1, pad 1), stored at real width.
    y, shp, M = conv_layer(x, params["w4"], params["b4"], stride=1, pad=1,
                           leaky=False, with_stats=False, out_dtype=jnp.float32)
    N, OH, OW, _ = shp
    patch = y[:M].reshape(N, OH, OW, 1)
    patch_logits = jnp.transpose(patch, (0, 3, 1, 2))                # back to NCHW
    return patch_logits, predicted_types, predicted_stats


# ---------------------------------------------------------------------------
# Deterministic synthetic parameter init (shapes follow the module __init__).
# ---------------------------------------------------------------------------
def init_params(key, img_channels=3, num_types=11, stats_dim=4, base=16):
    ks = list(jax.random.split(key, 20))
    nk = iter(ks)

    def conv_w(cin, cout):
        return 0.05 * jax.random.normal(next(nk), (4, 4, cin, cout), jnp.float32)

    def vec(n, scale=0.01):
        return scale * jax.random.normal(next(nk), (n,), jnp.float32)

    p = {}
    p["w0"], p["b0"] = conv_w(img_channels, base), vec(base)
    p["w1"], p["b1"] = conv_w(base, base * 2), vec(base * 2)
    p["g1"], p["be1"] = 1.0 + vec(base * 2, 0.1), vec(base * 2, 0.1)
    p["w2"], p["b2"] = conv_w(base * 2, base * 4), vec(base * 4)
    p["g2"], p["be2"] = 1.0 + vec(base * 4, 0.1), vec(base * 4, 0.1)
    p["w3"], p["b3"] = conv_w(base * 4, base * 8), vec(base * 8)
    p["g3"], p["be3"] = 1.0 + vec(base * 8, 0.1), vec(base * 8, 0.1)
    p["w4"], p["b4"] = conv_w(base * 8, 1), vec(1)
    p["wt"] = 0.05 * jax.random.normal(next(nk), (base * 8, num_types), jnp.float32)
    p["bt"] = vec(num_types)
    p["ws"] = 0.05 * jax.random.normal(next(nk), (base * 8, stats_dim), jnp.float32)
    p["bs"] = vec(stats_dim)
    return p


if __name__ == "__main__":
    key = jax.random.PRNGKey(0)
    pkey, xkey = jax.random.split(key)

    base = 16          # base_channels (small synthetic config)
    N, C, H, W = 2, 3, 64, 64
    params = init_params(pkey, img_channels=C, num_types=11, stats_dim=4, base=base)
    images = jax.random.normal(xkey, (N, C, H, W), jnp.float32)

    patch_logits, pred_types, pred_stats = jax.jit(patchgan_forward)(images, params)
    jax.block_until_ready(patch_logits)
    jax.block_until_ready(pred_types)
    jax.block_until_ready(pred_stats)

    # Shape checks: 64 -> 32 -> 16 -> 8 -> 4 (features); final conv: 4 -> 3
    assert patch_logits.shape == (N, 1, 3, 3), patch_logits.shape
    assert pred_types.shape == (N, 11), pred_types.shape
    assert pred_stats.shape == (N, 4), pred_stats.shape
    assert jnp.all(jnp.isfinite(patch_logits))
    assert jnp.all(jnp.isfinite(pred_types))
    assert jnp.all(jnp.isfinite(pred_stats))

    print("KERNEL_OK")
</pallas_src>

<mosaic_0001>
module attributes {stable_mosaic.version = 11 : i64} {
  func.func @_conv_kernel(%arg0: i32, %arg1: memref<2048x48xbf16, #tpu.memory_space<vmem>>, %arg2: memref<48x16xbf16, #tpu.memory_space<vmem>>, %arg3: memref<1x16xf32, #tpu.memory_space<vmem>>, %arg4: memref<2048x16xbf16, #tpu.memory_space<vmem>>) attributes {dimension_semantics = [#tpu.dimension_semantics<parallel>], iteration_bounds = array<i64: 1>, scalar_prefetch = 0 : i64, scratch_operands = 0 : i64, tpu.core_type = #tpu.core_type<tc>, window_params = [{transform_indices = @transform_0, window_bounds = array<i64: 2048, 48>}, {pipeline_mode = #tpu.pipeline_mode<synchronous>, transform_indices = @transform_1, window_bounds = array<i64: 48, 16>}, {pipeline_mode = #tpu.pipeline_mode<synchronous>, transform_indices = @transform_2, window_bounds = array<i64: 1, 16>}, {transform_indices = @transform_3, window_bounds = array<i64: 2048, 16>}]} {
    %c0 = arith.constant 0 : index
    %c0_0 = arith.constant 0 : index
    %0 = vector.load %arg1[%c0, %c0_0] : memref<2048x48xbf16, #tpu.memory_space<vmem>>, vector<2048x48xbf16>
    %c0_1 = arith.constant 0 : index
    %c0_2 = arith.constant 0 : index
    %1 = vector.load %arg2[%c0_1, %c0_2] : memref<48x16xbf16, #tpu.memory_space<vmem>>, vector<48x16xbf16>
    %cst = arith.constant dense<0.000000e+00> : vector<2048x16xf32>
    %2 = tpu.matmul %0, %1, %cst {dimension_numbers = #tpu.dot_dimension_numbers<[1], [0], [0], [1], [0, 0, 1, 1], [], []>} : vector<2048x48xbf16>, vector<48x16xbf16>, vector<2048x16xf32> -> vector<2048x16xf32>
    %c0_3 = arith.constant 0 : index
    %c0_4 = arith.constant 0 : index
    %3 = vector.load %arg3[%c0_3, %c0_4] : memref<1x16xf32, #tpu.memory_space<vmem>>, vector<1x16xf32>
    %4 = vector.broadcast %3 : vector<1x16xf32> to vector<2048x16xf32>
    %5 = arith.addf %2, %4 : vector<2048x16xf32>
    %cst_5 = arith.constant 0.000000e+00 : f32
    %6 = vector.broadcast %cst_5 : f32 to vector<2048x16xf32>
    %7 = arith.cmpf ogt, %5, %6 : vector<2048x16xf32>
    %cst_6 = arith.constant 2.000000e-01 : f32
    %8 = vector.broadcast %cst_6 : f32 to vector<2048x16xf32>
    %9 = arith.mulf %8, %5 : vector<2048x16xf32>
    %10 = arith.select %7, %5, %9 : vector<2048x16xi1>, vector<2048x16xf32>
    %11 = arith.truncf %10 : vector<2048x16xf32> to vector<2048x16xbf16>
    %c0_7 = arith.constant 0 : index
    %c0_8 = arith.constant 0 : index
    %12 = vector.load %arg4[%c0_7, %c0_8] : memref<2048x16xbf16, #tpu.memory_space<vmem>>, vector<2048x16xbf16>
    tpu.vector_store %arg4[%c0_7, %c0_8], %11 {strides = array<i32>} : memref<2048x16xbf16, #tpu.memory_space<vmem>>, vector<2048x16xbf16>,
    return
  }
  func.func @transform_0(%arg0: i32) -> (i32, i32) {
    %c0_i32 = arith.constant 0 : i32
    %c0_i32_0 = arith.constant 0 : i32
    return %arg0, %c0_i32 : i32, i32
  }
  func.func @transform_1(%arg0: i32) -> (i32, i32) {
    %c0_i32 = arith.constant 0 : i32
    %c0_i32_0 = arith.constant 0 : i32
    %c0_i32_1 = arith.constant 0 : i32
    return %c0_i32, %c0_i32_0 : i32, i32
  }
  func.func @transform_2(%arg0: i32) -> (i32, i32) {
    %c0_i32 = arith.constant 0 : i32
    %c0_i32_0 = arith.constant 0 : i32
    %c0_i32_1 = arith.constant 0 : i32
    return %c0_i32, %c0_i32_0 : i32, i32
  }
  func.func @transform_3(%arg0: i32) -> (i32, i32) {
    %c0_i32 = arith.constant 0 : i32
    %c0_i32_0 = arith.constant 0 : i32
    return %arg0, %c0_i32 : i32, i32
  }
}

module attributes {stable_mosaic.version = 11 : i64} {
  func.func @_conv_kernel(%arg0: i32, %arg1: memref<512x256xbf16, #tpu.memory_space<vmem>>, %arg2: memref<256x32xbf16, #tpu.memory_space<vmem>>, %arg3: memref<512x32xbf16, #tpu.memory_space<vmem>>, %arg4: memref<1x1x32xf32, #tpu.memory_space<vmem>>, %arg5: memref<1x1x32xf32, #tpu.memory_space<vmem>>) attributes {dimension_semantics = [#tpu.dimension_semantics<parallel>], iteration_bounds = array<i64: 1>, scalar_prefetch = 0 : i64, scratch_operands = 0 : i64, tpu.core_type = #tpu.core_type<tc>, window_params = [{transform_indices = @transform_0, window_bounds = array<i64: 512, 256>}, {pipeline_mode = #tpu.pipeline_mode<synchronous>, transform_indices = @transform_1, window_bounds = array<i64: 256, 32>}, {transform_indices = @transform_2, window_bounds = array<i64: 512, 32>}, {transform_indices = @transform_3, window_bounds = array<i64: 1, 1, 32>}, {transform_indices = @transform_4, window_bounds = array<i64: 1, 1, 32>}]} {
    %c0 = arith.constant 0 : index
    %c0_0 = arith.constant 0 : index
    %0 = vector.load %arg1[%c0, %c0_0] : memref<512x256xbf16, #tpu.memory_space<vmem>>, vector<512x256xbf16>
    %c0_1 = arith.constant 0 : index
    %c0_2 = arith.constant 0 : index
    %1 = vector.load %arg2[%c0_1, %c0_2] : memref<256x32xbf16, #tpu.memory_space<vmem>>, vector<256x32xbf16>
    %cst = arith.constant dense<0.000000e+00> : vector<512x32xf32>
    %2 = tpu.matmul %0, %1, %cst {dimension_numbers = #tpu.dot_dimension_numbers<[1], [0], [0], [1], [0, 0, 1, 1], [], []>} : vector<512x256xbf16>, vector<256x32xbf16>, vector<512x32xf32> -> vector<512x32xf32>
    %3 = arith.truncf %2 : vector<512x32xf32> to vector<512x32xbf16>
    %c0_3 = arith.constant 0 : index
    %c0_4 = arith.constant 0 : index
    %4 = vector.load %arg3[%c0_3, %c0_4] : memref<512x32xbf16, #tpu.memory_space<vmem>>, vector<512x32xbf16>
    tpu.vector_store %arg3[%c0_3, %c0_4], %3 {strides = array<i32>} : memref<512x32xbf16, #tpu.memory_space<vmem>>, vector<512x32xbf16>,
    %cst_5 = arith.constant dense<0.000000e+00> : vector<32xf32>
    %5 = vector.multi_reduction <add>, %2, %cst_5 [0] : vector<512x32xf32> to vector<32xf32>
    %6 = vector.shape_cast %5 : vector<32xf32> to vector<1x32xf32>
    %7 = vector.shape_cast %6 : vector<1x32xf32> to vector<1x1x32xf32>
    %c0_6 = arith.constant 0 : index
    %c0_7 = arith.constant 0 : index
    %c0_8 = arith.constant 0 : index
    %8 = vector.load %arg4[%c0_6, %c0_7, %c0_8] : memref<1x1x32xf32, #tpu.memory_space<vmem>>, vector<1x1x32xf32>
    tpu.vector_store %arg4[%c0_6, %c0_7, %c0_8], %7 {strides = array<i32>} : memref<1x1x32xf32, #tpu.memory_space<vmem>>, vector<1x1x32xf32>,
    %9 = arith.mulf %2, %2 : vector<512x32xf32>
    %cst_9 = arith.constant dense<0.000000e+00> : vector<32xf32>
    %10 = vector.multi_reduction <add>, %9, %cst_9 [0] : vector<512x32xf32> to vector<32xf32>
    %11 = vector.shape_cast %10 : vector<32xf32> to vector<1x32xf32>
    %12 = vector.shape_cast %11 : vector<1x32xf32> to vector<1x1x32xf32>
    %c0_10 = arith.constant 0 : index
    %c0_11 = arith.constant 0 : index
    %c0_12 = arith.constant 0 : index
    %13 = vector.load %arg5[%c0_10, %c0_11, %c0_12] : memref<1x1x32xf32, #tpu.memory_space<vmem>>, vector<1x1x32xf32>
    tpu.vector_store %arg5[%c0_10, %c0_11, %c0_12], %12 {strides = array<i32>} : memref<1x1x32xf32, #tpu.memory_space<vmem>>, vector<1x1x32xf32>,
    return
  }
  func.func @transform_0(%arg0: i32) -> (i32, i32) {
    %c0_i32 = arith.constant 0 : i32
    %c0_i32_0 = arith.constant 0 : i32
    return %arg0, %c0_i32 : i32, i32
  }
  func.func @transform_1(%arg0: i32) -> (i32, i32) {
    %c0_i32 = arith.constant 0 : i32
    %c0_i32_0 = arith.constant 0 : i32
    %c0_i32_1 = arith.constant 0 : i32
    return %c0_i32, %c0_i32_0 : i32, i32
  }
  func.func @transform_2(%arg0: i32) -> (i32, i32) {
    %c0_i32 = arith.constant 0 : i32
    %c0_i32_0 = arith.constant 0 : i32
    return %arg0, %c0_i32 : i32, i32
  }
  func.func @transform_3(%arg0: i32) -> (i32, i32, i32) {
    %c0_i32 = arith.constant 0 : i32
    %c0_i32_0 = arith.constant 0 : i32
    %c0_i32_1 = arith.constant 0 : i32
    return %arg0, %c0_i32, %c0_i32_0 : i32, i32, i32
  }
  func.func @transform_4(%arg0: i32) -> (i32, i32, i32) {
    %c0_i32 = arith.constant 0 : i32
    %c0_i32_0 = arith.constant 0 : i32
    %c0_i32_1 = arith.constant 0 : i32
    return %arg0, %c0_i32, %c0_i32_0 : i32, i32, i32
  }
}

module attributes {stable_mosaic.version = 11 : i64} {
  func.func @_conv_kernel(%arg0: i32, %arg1: memref<128x512xbf16, #tpu.memory_space<vmem>>, %arg2: memref<512x64xbf16, #tpu.memory_space<vmem>>, %arg3: memref<128x64xbf16, #tpu.memory_space<vmem>>, %arg4: memref<1x1x64xf32, #tpu.memory_space<vmem>>, %arg5: memref<1x1x64xf32, #tpu.memory_space<vmem>>) attributes {dimension_semantics = [#tpu.dimension_semantics<parallel>], iteration_bounds = array<i64: 1>, scalar_prefetch = 0 : i64, scratch_operands = 0 : i64, tpu.core_type = #tpu.core_type<tc>, window_params = [{transform_indices = @transform_0, window_bounds = array<i64: 128, 512>}, {pipeline_mode = #tpu.pipeline_mode<synchronous>, transform_indices = @transform_1, window_bounds = array<i64: 512, 64>}, {transform_indices = @transform_2, window_bounds = array<i64: 128, 64>}, {transform_indices = @transform_3, window_bounds = array<i64: 1, 1, 64>}, {transform_indices = @transform_4, window_bounds = array<i64: 1, 1, 64>}]} {
    %c0 = arith.constant 0 : index
    %c0_0 = arith.constant 0 : index
    %0 = vector.load %arg1[%c0, %c0_0] : memref<128x512xbf16, #tpu.memory_space<vmem>>, vector<128x512xbf16>
    %c0_1 = arith.constant 0 : index
    %c0_2 = arith.constant 0 : index
    %1 = vector.load %arg2[%c0_1, %c0_2] : memref<512x64xbf16, #tpu.memory_space<vmem>>, vector<512x64xbf16>
    %cst = arith.constant dense<0.000000e+00> : vector<128x64xf32>
    %2 = tpu.matmul %0, %1, %cst {dimension_numbers = #tpu.dot_dimension_numbers<[1], [0], [0], [1], [0, 0, 1, 1], [], []>} : vector<128x512xbf16>, vector<512x64xbf16>, vector<128x64xf32> -> vector<128x64xf32>
    %3 = arith.truncf %2 : vector<128x64xf32> to vector<128x64xbf16>
    %c0_3 = arith.constant 0 : index
    %c0_4 = arith.constant 0 : index
    %4 = vector.load %arg3[%c0_3, %c0_4] : memref<128x64xbf16, #tpu.memory_space<vmem>>, vector<128x64xbf16>
    tpu.vector_store %arg3[%c0_3, %c0_4], %3 {strides = array<i32>} : memref<128x64xbf16, #tpu.memory_space<vmem>>, vector<128x64xbf16>,
    %cst_5 = arith.constant dense<0.000000e+00> : vector<64xf32>
    %5 = vector.multi_reduction <add>, %2, %cst_5 [0] : vector<128x64xf32> to vector<64xf32>
    %6 = vector.shape_cast %5 : vector<64xf32> to vector<1x64xf32>
    %7 = vector.shape_cast %6 : vector<1x64xf32> to vector<1x1x64xf32>
    %c0_6 = arith.constant 0 : index
    %c0_7 = arith.constant 0 : index
    %c0_8 = arith.constant 0 : index
    %8 = vector.load %arg4[%c0_6, %c0_7, %c0_8] : memref<1x1x64xf32, #tpu.memory_space<vmem>>, vector<1x1x64xf32>
    tpu.vector_store %arg4[%c0_6, %c0_7, %c0_8], %7 {strides = array<i32>} : memref<1x1x64xf32, #tpu.memory_space<vmem>>, vector<1x1x64xf32>,
    %9 = arith.mulf %2, %2 : vector<128x64xf32>
    %cst_9 = arith.constant dense<0.000000e+00> : vector<64xf32>
    %10 = vector.multi_reduction <add>, %9, %cst_9 [0] : vector<128x64xf32> to vector<64xf32>
    %11 = vector.shape_cast %10 : vector<64xf32> to vector<1x64xf32>
    %12 = vector.shape_cast %11 : vector<1x64xf32> to vector<1x1x64xf32>
    %c0_10 = arith.constant 0 : index
    %c0_11 = arith.constant 0 : index
    %c0_12 = arith.constant 0 : index
    %13 = vector.load %arg5[%c0_10, %c0_11, %c0_12] : memref<1x1x64xf32, #tpu.memory_space<vmem>>, vector<1x1x64xf32>
    tpu.vector_store %arg5[%c0_10, %c0_11, %c0_12], %12 {strides = array<i32>} : memref<1x1x64xf32, #tpu.memory_space<vmem>>, vector<1x1x64xf32>,
    return
  }
  func.func @transform_0(%arg0: i32) -> (i32, i32) {
    %c0_i32 = arith.constant 0 : i32
    %c0_i32_0 = arith.constant 0 : i32
    return %arg0, %c0_i32 : i32, i32
  }
  func.func @transform_1(%arg0: i32) -> (i32, i32) {
    %c0_i32 = arith.constant 0 : i32
    %c0_i32_0 = arith.constant 0 : i32
    %c0_i32_1 = arith.constant 0 : i32
    return %c0_i32, %c0_i32_0 : i32, i32
  }
  func.func @transform_2(%arg0: i32) -> (i32, i32) {
    %c0_i32 = arith.constant 0 : i32
    %c0_i32_0 = arith.constant 0 : i32
    return %arg0, %c0_i32 : i32, i32
  }
  func.func @transform_3(%arg0: i32) -> (i32, i32, i32) {
    %c0_i32 = arith.constant 0 : i32
    %c0_i32_0 = arith.constant 0 : i32
    %c0_i32_1 = arith.constant 0 : i32
    return %arg0, %c0_i32, %c0_i32_0 : i32, i32, i32
  }
  func.func @transform_4(%arg0: i32) -> (i32, i32, i32) {
    %c0_i32 = arith.constant 0 : i32
    %c0_i32_0 = arith.constant 0 : i32
    %c0_i32_1 = arith.constant 0 : i32
    return %arg0, %c0_i32, %c0_i32_0 : i32, i32, i32
  }
}

module attributes {stable_mosaic.version = 11 : i64} {
  func.func @_conv_kernel(%arg0: i32, %arg1: memref<128x1024xbf16, #tpu.memory_space<vmem>>, %arg2: memref<1024x128xbf16, #tpu.memory_space<vmem>>, %arg3: memref<128x128xbf16, #tpu.memory_space<vmem>>, %arg4: memref<1x1x128xf32, #tpu.memory_space<vmem>>, %arg5: memref<1x1x128xf32, #tpu.memory_space<vmem>>) attributes {dimension_semantics = [#tpu.dimension_semantics<parallel>], iteration_bounds = array<i64: 1>, scalar_prefetch = 0 : i64, scratch_operands = 0 : i64, tpu.core_type = #tpu.core_type<tc>, window_params = [{transform_indices = @transform_0, window_bounds = array<i64: 128, 1024>}, {pipeline_mode = #tpu.pipeline_mode<synchronous>, transform_indices = @transform_1, window_bounds = array<i64: 1024, 128>}, {transform_indices = @transform_2, window_bounds = array<i64: 128, 128>}, {transform_indices = @transform_3, window_bounds = array<i64: 1, 1, 128>}, {transform_indices = @transform_4, window_bounds = array<i64: 1, 1, 128>}]} {
    %c0 = arith.constant 0 : index
    %c0_0 = arith.constant 0 : index
    %0 = vector.load %arg1[%c0, %c0_0] : memref<128x1024xbf16, #tpu.memory_space<vmem>>, vector<128x1024xbf16>
    %c0_1 = arith.constant 0 : index
    %c0_2 = arith.constant 0 : index
    %1 = vector.load %arg2[%c0_1, %c0_2] : memref<1024x128xbf16, #tpu.memory_space<vmem>>, vector<1024x128xbf16>
    %cst = arith.constant dense<0.000000e+00> : vector<128x128xf32>
    %2 = tpu.matmul %0, %1, %cst {dimension_numbers = #tpu.dot_dimension_numbers<[1], [0], [0], [1], [0, 0, 1, 1], [], []>} : vector<128x1024xbf16>, vector<1024x128xbf16>, vector<128x128xf32> -> vector<128x128xf32>
    %3 = arith.truncf %2 : vector<128x128xf32> to vector<128x128xbf16>
    %c0_3 = arith.constant 0 : index
    %c0_4 = arith.constant 0 : index
    %4 = vector.load %arg3[%c0_3, %c0_4] : memref<128x128xbf16, #tpu.memory_space<vmem>>, vector<128x128xbf16>
    tpu.vector_store %arg3[%c0_3, %c0_4], %3 {strides = array<i32>} : memref<128x128xbf16, #tpu.memory_space<vmem>>, vector<128x128xbf16>,
    %cst_5 = arith.constant dense<0.000000e+00> : vector<128xf32>
    %5 = vector.multi_reduction <add>, %2, %cst_5 [0] : vector<128x128xf32> to vector<128xf32>
    %6 = vector.shape_cast %5 : vector<128xf32> to vector<1x128xf32>
    %7 = vector.shape_cast %6 : vector<1x128xf32> to vector<1x1x128xf32>
    %c0_6 = arith.constant 0 : index
    %c0_7 = arith.constant 0 : index
    %c0_8 = arith.constant 0 : index
    %8 = vector.load %arg4[%c0_6, %c0_7, %c0_8] : memref<1x1x128xf32, #tpu.memory_space<vmem>>, vector<1x1x128xf32>
    tpu.vector_store %arg4[%c0_6, %c0_7, %c0_8], %7 {strides = array<i32>} : memref<1x1x128xf32, #tpu.memory_space<vmem>>, vector<1x1x128xf32>,
    %9 = arith.mulf %2, %2 : vector<128x128xf32>
    %cst_9 = arith.constant dense<0.000000e+00> : vector<128xf32>
    %10 = vector.multi_reduction <add>, %9, %cst_9 [0] : vector<128x128xf32> to vector<128xf32>
    %11 = vector.shape_cast %10 : vector<128xf32> to vector<1x128xf32>
    %12 = vector.shape_cast %11 : vector<1x128xf32> to vector<1x1x128xf32>
    %c0_10 = arith.constant 0 : index
    %c0_11 = arith.constant 0 : index
    %c0_12 = arith.constant 0 : index
    %13 = vector.load %arg5[%c0_10, %c0_11, %c0_12] : memref<1x1x128xf32, #tpu.memory_space<vmem>>, vector<1x1x128xf32>
    tpu.vector_store %arg5[%c0_10, %c0_11, %c0_12], %12 {strides = array<i32>} : memref<1x1x128xf32, #tpu.memory_space<vmem>>, vector<1x1x128xf32>,
    return
  }
  func.func @transform_0(%arg0: i32) -> (i32, i32) {
    %c0_i32 = arith.constant 0 : i32
    %c0_i32_0 = arith.constant 0 : i32
    return %arg0, %c0_i32 : i32, i32
  }
  func.func @transform_1(%arg0: i32) -> (i32, i32) {
    %c0_i32 = arith.constant 0 : i32
    %c0_i32_0 = arith.constant 0 : i32
    %c0_i32_1 = arith.constant 0 : i32
    return %c0_i32, %c0_i32_0 : i32, i32
  }
  func.func @transform_2(%arg0: i32) -> (i32, i32) {
    %c0_i32 = arith.constant 0 : i32
    %c0_i32_0 = arith.constant 0 : i32
    return %arg0, %c0_i32 : i32, i32
  }
  func.func @transform_3(%arg0: i32) -> (i32, i32, i32) {
    %c0_i32 = arith.constant 0 : i32
    %c0_i32_0 = arith.constant 0 : i32
    %c0_i32_1 = arith.constant 0 : i32
    return %arg0, %c0_i32, %c0_i32_0 : i32, i32, i32
  }
  func.func @transform_4(%arg0: i32) -> (i32, i32, i32) {
    %c0_i32 = arith.constant 0 : i32
    %c0_i32_0 = arith.constant 0 : i32
    %c0_i32_1 = arith.constant 0 : i32
    return %arg0, %c0_i32, %c0_i32_0 : i32, i32, i32
  }
}

module attributes {stable_mosaic.version = 11 : i64} {
  func.func @_conv_kernel(%arg0: i32, %arg1: memref<128x2048xbf16, #tpu.memory_space<vmem>>, %arg2: memref<2048x1xbf16, #tpu.memory_space<vmem>>, %arg3: memref<1x1xf32, #tpu.memory_space<vmem>>, %arg4: memref<128x1xf32, #tpu.memory_space<vmem>>) attributes {dimension_semantics = [#tpu.dimension_semantics<parallel>], iteration_bounds = array<i64: 1>, scalar_prefetch = 0 : i64, scratch_operands = 0 : i64, tpu.core_type = #tpu.core_type<tc>, window_params = [{transform_indices = @transform_0, window_bounds = array<i64: 128, 2048>}, {pipeline_mode = #tpu.pipeline_mode<synchronous>, transform_indices = @transform_1, window_bounds = array<i64: 2048, 1>}, {pipeline_mode = #tpu.pipeline_mode<synchronous>, transform_indices = @transform_2, window_bounds = array<i64: 1, 1>}, {transform_indices = @transform_3, window_bounds = array<i64: 128, 1>}]} {
    %c0 = arith.constant 0 : index
    %c0_0 = arith.constant 0 : index
    %0 = vector.load %arg1[%c0, %c0_0] : memref<128x2048xbf16, #tpu.memory_space<vmem>>, vector<128x2048xbf16>
    %c0_1 = arith.constant 0 : index
    %c0_2 = arith.constant 0 : index
    %1 = vector.load %arg2[%c0_1, %c0_2] : memref<2048x1xbf16, #tpu.memory_space<vmem>>, vector<2048x1xbf16>
    %cst = arith.constant dense<0.000000e+00> : vector<128x1xf32>
    %2 = tpu.matmul %0, %1, %cst {dimension_numbers = #tpu.dot_dimension_numbers<[1], [0], [0], [1], [0, 0, 1, 1], [], []>} : vector<128x2048xbf16>, vector<2048x1xbf16>, vector<128x1xf32> -> vector<128x1xf32>
    %c0_3 = arith.constant 0 : index
    %c0_4 = arith.constant 0 : index
    %3 = vector.load %arg3[%c0_3, %c0_4] : memref<1x1xf32, #tpu.memory_space<vmem>>, vector<1x1xf32>
    %4 = vector.broadcast %3 : vector<1x1xf32> to vector<128x1xf32>
    %5 = arith.addf %2, %4 : vector<128x1xf32>
    %c0_5 = arith.constant 0 : index
    %c0_6 = arith.constant 0 : index
    %6 = vector.load %arg4[%c0_5, %c0_6] : memref<128x1xf32, #tpu.memory_space<vmem>>, vector<128x1xf32>
    tpu.vector_store %arg4[%c0_5, %c0_6], %5 {strides = array<i32>} : memref<128x1xf32, #tpu.memory_space<vmem>>, vector<128x1xf32>,
    return
  }
  func.func @transform_0(%arg0: i32) -> (i32, i32) {
    %c0_i32 = arith.constant 0 : i32
    %c0_i32_0 = arith.constant 0 : i32
    return %arg0, %c0_i32 : i32, i32
  }
  func.func @transform_1(%arg0: i32) -> (i32, i32) {
    %c0_i32 = arith.constant 0 : i32
    %c0_i32_0 = arith.constant 0 : i32
    %c0_i32_1 = arith.constant 0 : i32
    return %c0_i32, %c0_i32_0 : i32, i32
  }
  func.func @transform_2(%arg0: i32) -> (i32, i32) {
    %c0_i32 = arith.constant 0 : i32
    %c0_i32_0 = arith.constant 0 : i32
    %c0_i32_1 = arith.constant 0 : i32
    return %c0_i32, %c0_i32_0 : i32, i32
  }
  func.func @transform_3(%arg0: i32) -> (i32, i32) {
    %c0_i32 = arith.constant 0 : i32
    %c0_i32_0 = arith.constant 0 : i32
    return %arg0, %c0_i32 : i32, i32
  }
}

module attributes {stable_mosaic.version = 11 : i64} {
  func.func @_heads_kernel(%arg0: i32, %arg1: memref<2x16x128xbf16, #tpu.memory_space<vmem>>, %arg2: memref<128x128xbf16, #tpu.memory_space<vmem>>, %arg3: memref<1x128xf32, #tpu.memory_space<vmem>>, %arg4: memref<2x128xf32, #tpu.memory_space<vmem>>) attributes {dimension_semantics = [#tpu.dimension_semantics<arbitrary>], iteration_bounds = array<i64: 1>, scalar_prefetch = 0 : i64, scratch_operands = 0 : i64, tpu.core_type = #tpu.core_type<tc>, window_params = [{pipeline_mode = #tpu.pipeline_mode<synchronous>, transform_indices = @transform_0, window_bounds = array<i64: 2, 16, 128>}, {pipeline_mode = #tpu.pipeline_mode<synchronous>, transform_indices = @transform_1, window_bounds = array<i64: 128, 128>}, {pipeline_mode = #tpu.pipeline_mode<synchronous>, transform_indices = @transform_2, window_bounds = array<i64: 1, 128>}, {pipeline_mode = #tpu.pipeline_mode<synchronous>, transform_indices = @transform_3, window_bounds = array<i64: 2, 128>}]} {
    %c0 = arith.constant 0 : index
    %c0_0 = arith.constant 0 : index
    %c0_1 = arith.constant 0 : index
    %0 = vector.load %arg1[%c0, %c0_0, %c0_1] : memref<2x16x128xbf16, #tpu.memory_space<vmem>>, vector<2x16x128xbf16>
    %1 = arith.extf %0 : vector<2x16x128xbf16> to vector<2x16x128xf32>
    %cst = arith.constant dense<0.000000e+00> : vector<2x128xf32>
    %2 = vector.multi_reduction <add>, %1, %cst [1] : vector<2x16x128xf32> to vector<2x128xf32>
    %cst_2 = arith.constant 6.250000e-02 : f32
    %3 = vector.broadcast %cst_2 : f32 to vector<2x128xf32>
    %4 = arith.mulf %2, %3 : vector<2x128xf32>
    %5 = arith.truncf %4 : vector<2x128xf32> to vector<2x128xbf16>
    %c0_3 = arith.constant 0 : index
    %c0_4 = arith.constant 0 : index
    %6 = vector.load %arg2[%c0_3, %c0_4] : memref<128x128xbf16, #tpu.memory_space<vmem>>, vector<128x128xbf16>
    %cst_5 = arith.constant dense<0.000000e+00> : vector<2x128xf32>
    %7 = tpu.matmul %5, %6, %cst_5 {dimension_numbers = #tpu.dot_dimension_numbers<[1], [0], [0], [1], [0, 0, 1, 1], [], []>} : vector<2x128xbf16>, vector<128x128xbf16>, vector<2x128xf32> -> vector<2x128xf32>
    %c0_6 = arith.constant 0 : index
    %c0_7 = arith.constant 0 : index
    %8 = vector.load %arg3[%c0_6, %c0_7] : memref<1x128xf32, #tpu.memory_space<vmem>>, vector<1x128xf32>
    %9 = vector.broadcast %8 : vector<1x128xf32> to vector<2x128xf32>
    %10 = arith.addf %7, %9 : vector<2x128xf32>
    %c0_8 = arith.constant 0 : index
    %c0_9 = arith.constant 0 : index
    %11 = vector.load %arg4[%c0_8, %c0_9] : memref<2x128xf32, #tpu.memory_space<vmem>>, vector<2x128xf32>
    tpu.vector_store %arg4[%c0_8, %c0_9], %10 {strides = array<i32>} : memref<2x128xf32, #tpu.memory_space<vmem>>, vector<2x128xf32>,
    return
  }
  func.func @transform_0(%arg0: i32) -> (i32, i32, i32) {
    %c0_i32 = arith.constant 0 : i32
    %c0_i32_0 = arith.constant 0 : i32
    %c0_i32_1 = arith.constant 0 : i32
    %c0_i32_2 = arith.constant 0 : i32
    return %c0_i32, %c0_i32_0, %c0_i32_1 : i32, i32, i32
  }
  func.func @transform_1(%arg0: i32) -> (i32, i32) {
    %c0_i32 = arith.constant 0 : i32
    %c0_i32_0 = arith.constant 0 : i32
    %c0_i32_1 = arith.constant 0 : i32
    return %c0_i32, %c0_i32_0 : i32, i32
  }
  func.func @transform_2(%arg0: i32) -> (i32, i32) {
    %c0_i32 = arith.constant 0 : i32
    %c0_i32_0 = arith.constant 0 : i32
    %c0_i32_1 = arith.constant 0 : i32
    return %c0_i32, %c0_i32_0 : i32, i32
  }
  func.func @transform_3(%arg0: i32) -> (i32, i32) {
    %c0_i32 = arith.constant 0 : i32
    %c0_i32_0 = arith.constant 0 : i32
    %c0_i32_1 = arith.constant 0 : i32
    return %c0_i32, %c0_i32_0 : i32, i32
  }
}

</mosaic_0001>

<llo_original>
// kernel: patchgan_forward.6
$region0: #{patchgan_forward.6}
  #allocation0 [shape = 'u32[]', space=smem, size = 0x4, offset = 0x4, fixed_abs, tag = 'smem constant byte address 0x4 - core index']
  #allocation1 [shape = 'u32[144,128]{1,0:T(1,128)}', space=vmem, size = 0x12000, scoped, tag = 'internal scratch']
  %s0 = inlined_call_operand.vmem [shape: bf16[2048,48], index: 0, kind: input, shape index: {}]
  %s1 = inlined_call_operand.vmem [shape: bf16[48,16], index: 1, kind: input, shape index: {}]
  %s2 = inlined_call_operand.vmem [shape: f32[1,16], index: 2, kind: input, shape index: {}]
  %s3 = inlined_call_operand.vmem [shape: bf16[2048,16], index: 3, kind: output, shape index: {}]
  %s4 = sld [smem:[#allocation0]]
  $region22: #{patchgan_forward.6} parent=0
    _
  %s6 = ssub.s32 1, %s4
  %s7 = scalar_select 0, %s6, %s4
  // Predicated region
  $region2: #{patchgan_forward.6} parent=0 // pred_check
    _
  $region3: #{patchgan_forward.6} parent=0 // pred_check_branch
    %9 = sbr.rel (0) target = $region5
  $region4: #{patchgan_forward.6} parent=0 // pred_region
    _
  $region5: #{patchgan_forward.6} parent=0 // pred_fallthru
    _
  // Predicated region
  $region6: #{patchgan_forward.6} parent=0 // pred_check
    _
  $region7: #{patchgan_forward.6} parent=0 // pred_check_branch
    %11 = sbr.rel (0) target = $region9
  $region8: #{patchgan_forward.6} parent=0 // pred_region
    _
  $region9: #{patchgan_forward.6} parent=0 // pred_fallthru
    _
  // Predicated region
  $region10: #{patchgan_forward.6} parent=0 // pred_check
    _
  $region11: #{patchgan_forward.6} parent=0 // pred_check_branch
    %13 = sbr.rel (0) target = $region13
  $region12: #{patchgan_forward.6} parent=0 // pred_region
    _
  $region13: #{patchgan_forward.6} parent=0 // pred_fallthru
    _
  %v15 = vld [vmem:[%s0] sm:$0xf]
  %v16 = vld [vmem:[%s0 + $0x4] sm:$0xf]
  %v17 = vld [vmem:[%s0 + $0x8] sm:$0xf]
  %v18 = vld [vmem:[%s0 + $0xc] sm:$0xf]
  %v19 = vld [vmem:[%s0 + $0x10] sm:$0xf]
  %v20 = vld [vmem:[%s0 + $0x14] sm:$0xf]
  %v21 = vld [vmem:[%s0 + $0x18] sm:$0xf]
  %v22 = vld [vmem:[%s0 + $0x1c] sm:$0xf]
  %v23 = vld [vmem:[%s0 + $0x20] sm:$0xf]
  %v24 = vld [vmem:[%s0 + $0x24] sm:$0xf]
  %v25 = vld [vmem:[%s0 + $0x28] sm:$0xf]
  %v26 = vld [vmem:[%s0 + $0x2c] sm:$0xf]
  %v27 = vld [vmem:[%s0 + $0x30] sm:$0xf]
  %v28 = vld [vmem:[%s0 + $0x34] sm:$0xf]
  %v29 = vld [vmem:[%s0 + $0x38] sm:$0xf]
  %v30 = vld [vmem:[%s0 + $0x3c] sm:$0xf]
  %v31 = vld [vmem:[%s0 + $0x40] sm:$0xf]
  %v32 = vld [vmem:[%s0 + $0x44] sm:$0xf]
  %v33 = vld [vmem:[%s0 + $0x48] sm:$0xf]
  %v34 = vld [vmem:[%s0 + $0x4c] sm:$0xf]
  %v35 = vld [vmem:[%s0 + $0x50] sm:$0xf]
  %v36 = vld [vmem:[%s0 + $0x54] sm:$0xf]
  %v37 = vld [vmem:[%s0 + $0x58] sm:$0xf]
  %v38 = vld [vmem:[%s0 + $0x5c] sm:$0xf]
  %v39 = vld [vmem:[%s0 + $0x60] sm:$0xf]
  %v40 = vld [vmem:[%s0 + $0x64] sm:$0xf]
  %v41 = vld [vmem:[%s0 + $0x68] sm:$0xf]
  %v42 = vld [vmem:[%s0 + $0x6c] sm:$0xf]
  %v43 = vld [vmem:[%s0 + $0x70] sm:$0xf]
  %v44 = vld [vmem:[%s0 + $0x74] sm:$0xf]
  %v45 = vld [vmem:[%s0 + $0x78] sm:$0xf]
  %v46 = vld [vmem:[%s0 + $0x7c] sm:$0xf]
  %v47 = vld [vmem:[%s0 + $0x80] sm:$0xf]
  %v48 = vld [vmem:[%s0 + $0x84] sm:$0xf]
  %v49 = vld [vmem:[%s0 + $0x88] sm:$0xf]
  %v50 = vld [vmem:[%s0 + $0x8c] sm:$0xf]
  %v51 = vld [vmem:[%s0 + $0x90] sm:$0xf]
  %v52 = vld [vmem:[%s0 + $0x94] sm:$0xf]
  %v53 = vld [vmem:[%s0 + $0x98] sm:$0xf]
  %v54 = vld [vmem:[%s0 + $0x9c] sm:$0xf]
  %v55 = vld [vmem:[%s0 + $0xa0] sm:$0xf]
  %v56 = vld [vmem:[%s0 + $0xa4] sm:$0xf]
  %v57 = vld [vmem:[%s0 + $0xa8] sm:$0xf]
  %v58 = vld [vmem:[%s0 + $0xac] sm:$0xf]
  %v59 = vld [vmem:[%s0 + $0xb0] sm:$0xf]
  %v60 = vld [vmem:[%s0 + $0xb4] sm:$0xf]
  %v61 = vld [vmem:[%s0 + $0xb8] sm:$0xf]
  %v62 = vld [vmem:[%s0 + $0xbc] sm:$0xf]
  %v63 = vld [vmem:[%s0 + $0xc0] sm:$0xf]
  %v64 = vld [vmem:[%s0 + $0xc4] sm:$0xf]
  %v65 = vld [vmem:[%s0 + $0xc8] sm:$0xf]
  %v66 = vld [vmem:[%s0 + $0xcc] sm:$0xf]
  %v67 = vld [vmem:[%s0 + $0xd0] sm:$0xf]
  %v68 = vld [vmem:[%s0 + $0xd4] sm:$0xf]
  %v69 = vld [vmem:[%s0 + $0xd8] sm:$0xf]
  %v70 = vld [vmem:[%s0 + $0xdc] sm:$0xf]
  %v71 = vld [vmem:[%s0 + $0xe0] sm:$0xf]
  %v72 = vld [vmem:[%s0 + $0xe4] sm:$0xf]
  %v73 = vld [vmem:[%s0 + $0xe8] sm:$0xf]
  %v74 = vld [vmem:[%s0 + $0xec] sm:$0xf]
  %v75 = vld [vmem:[%s0 + $0xf0] sm:$0xf]
  %v76 = vld [vmem:[%s0 + $0xf4] sm:$0xf]
  %v77 = vld [vmem:[%s0 + $0xf8] sm:$0xf]
  %v78 = vld [vmem:[%s0 + $0xfc] sm:$0xf]
  %v79 = vld [vmem:[%s0 + $0x100] sm:$0xf]
  %v80 = vld [vmem:[%s0 + $0x104] sm:$0xf]
  %v81 = vld [vmem:[%s0 + $0x108] sm:$0xf]
  %v82 = vld [vmem:[%s0 + $0x10c] sm:$0xf]
  %v83 = vld [vmem:[%s0 + $0x110] sm:$0xf]
  %v84 = vld [vmem:[%s0 + $0x114] sm:$0xf]
  %v85 = vld [vmem:[%s0 + $0x118] sm:$0xf]
  %v86 = vld [vmem:[%s0 + $0x11c] sm:$0xf]
  %v87 = vld [vmem:[%s0 + $0x120] sm:$0xf]
  %v88 = vld [vmem:[%s0 + $0x124] sm:$0xf]
  %v89 = vld [vmem:[%s0 + $0x128] sm:$0xf]
  %v90 = vld [vmem:[%s0 + $0x12c] sm:$0xf]
  %v91 = vld [vmem:[%s0 + $0x130] sm:$0xf]
  %v92 = vld [vmem:[%s0 + $0x134] sm:$0xf]
  %v93 = vld [vmem:[%s0 + $0x138] sm:$0xf]
  %v94 = vld [vmem:[%s0 + $0x13c] sm:$0xf]
  %v95 = vld [vmem:[%s0 + $0x140] sm:$0xf]
  %v96 = vld [vmem:[%s0 + $0x144] sm:$0xf]
  %v97 = vld [vmem:[%s0 + $0x148] sm:$0xf]
  %v98 = vld [vmem:[%s0 + $0x14c] sm:$0xf]
  %v99 = vld [vmem:[%s0 + $0x150] sm:$0xf]
  %v100 = vld [vmem:[%s0 + $0x154] sm:$0xf]
  %v101 = vld [vmem:[%s0 + $0x158] sm:$0xf]
  %v102 = vld [vmem:[%s0 + $0x15c] sm:$0xf]
  %v103 = vld [vmem:[%s0 + $0x160] sm:$0xf]
  %v104 = vld [vmem:[%s0 + $0x164] sm:$0xf]
  %v105 = vld [vmem:[%s0 + $0x168] sm:$0xf]
  %v106 = vld [vmem:[%s0 + $0x16c] sm:$0xf]
  %v107 = vld [vmem:[%s0 + $0x170] sm:$0xf]
  %v108 = vld [vmem:[%s0 + $0x174] sm:$0xf]
  %v109 = vld [vmem:[%s0 + $0x178] sm:$0xf]
  %v110 = vld [vmem:[%s0 + $0x17c] sm:$0xf]
  %v111 = vld [vmem:[%s0 + $0x180] sm:$0xf]
  %v112 = vld [vmem:[%s0 + $0x184] sm:$0xf]
  %v113 = vld [vmem:[%s0 + $0x188] sm:$0xf]
  %v114 = vld [vmem:[%s0 + $0x18c] sm:$0xf]
  %v115 = vld [vmem:[%s0 + $0x190] sm:$0xf]
  %v116 = vld [vmem:[%s0 + $0x194] sm:$0xf]
  %v117 = vld [vmem:[%s0 + $0x198] sm:$0xf]
  %v118 = vld [vmem:[%s0 + $0x19c] sm:$0xf]
  %v119 = vld [vmem:[%s0 + $0x1a0] sm:$0xf]
  %v120 = vld [vmem:[%s0 + $0x1a4] sm:$0xf]
  %v121 = vld [vmem:[%s0 + $0x1a8] sm:$0xf]
  %v122 = vld [vmem:[%s0 + $0x1ac] sm:$0xf]
  %v123 = vld [vmem:[%s0 + $0x1b0] sm:$0xf]
  %v124 = vld [vmem:[%s0 + $0x1b4] sm:$0xf]
  %v125 = vld [vmem:[%s0 + $0x1b8] sm:$0xf]
  %v126 = vld [vmem:[%s0 + $0x1bc] sm:$0xf]
  %v127 = vld [vmem:[%s0 + $0x1c0] sm:$0xf]
  %v128 = vld [vmem:[%s0 + $0x1c4] sm:$0xf]
  %v129 = vld [vmem:[%s0 + $0x1c8] sm:$0xf]
  %v130 = vld [vmem:[%s0 + $0x1cc] sm:$0xf]
  %v131 = vld [vmem:[%s0 + $0x1d0] sm:$0xf]
  %v132 = vld [vmem:[%s0 + $0x1d4] sm:$0xf]
  %v133 = vld [vmem:[%s0 + $0x1d8] sm:$0xf]
  %v134 = vld [vmem:[%s0 + $0x1dc] sm:$0xf]
  %v135 = vld [vmem:[%s0 + $0x1e0] sm:$0xf]
  %v136 = vld [vmem:[%s0 + $0x1e4] sm:$0xf]
  %v137 = vld [vmem:[%s0 + $0x1e8] sm:$0xf]
  %v138 = vld [vmem:[%s0 + $0x1ec] sm:$0xf]
  %v139 = vld [vmem:[%s0 + $0x1f0] sm:$0xf]
  %v140 = vld [vmem:[%s0 + $0x1f4] sm:$0xf]
  %v141 = vld [vmem:[%s0 + $0x1f8] sm:$0xf]
  %v142 = vld [vmem:[%s0 + $0x1fc] sm:$0xf]
  %v143 = vld [vmem:[%s0 + $0x200] sm:$0xf]
  %v144 = vld [vmem:[%s0 + $0x204] sm:$0xf]
  %v145 = vld [vmem:[%s0 + $0x208] sm:$0xf]
  %v146 = vld [vmem:[%s0 + $0x20c] sm:$0xf]
  %v147 = vld [vmem:[%s0 + $0x210] sm:$0xf]
  %v148 = vld [vmem:[%s0 + $0x214] sm:$0xf]
  %v149 = vld [vmem:[%s0 + $0x218] sm:$0xf]
  %v150 = vld [vmem:[%s0 + $0x21c] sm:$0xf]
  %v151 = vld [vmem:[%s0 + $0x220] sm:$0xf]
  %v152 = vld [vmem:[%s0 + $0x224] sm:$0xf]
  %v153 = vld [vmem:[%s0 + $0x228] sm:$0xf]
  %v154 = vld [vmem:[%s0 + $0x22c] sm:$0xf]
  %v155 = vld [vmem:[%s0 + $0x230] sm:$0xf]
  %v156 = vld [vmem:[%s0 + $0x234] sm:$0xf]
  %v157 = vld [vmem:[%s0 + $0x238] sm:$0xf]
  %v158 = vld [vmem:[%s0 + $0x23c] sm:$0xf]
  %v159 = vld [vmem:[%s0 + $0x240] sm:$0xf]
  %v160 = vld [vmem:[%s0 + $0x244] sm:$0xf]
  %v161 = vld [vmem:[%s0 + $0x248] sm:$0xf]
  %v162 = vld [vmem:[%s0 + $0x24c] sm:$0xf]
  %v163 = vld [vmem:[%s0 + $0x250] sm:$0xf]
  %v164 = vld [vmem:[%s0 + $0x254] sm:$0xf]
  %v165 = vld [vmem:[%s0 + $0x258] sm:$0xf]
  %v166 = vld [vmem:[%s0 + $0x25c] sm:$0xf]
  %v167 = vld [vmem:[%s0 + $0x260] sm:$0xf]
  %v168 = vld [vmem:[%s0 + $0x264] sm:$0xf]
  %v169 = vld [vmem:[%s0 + $0x268] sm:$0xf]
  %v170 = vld [vmem:[%s0 + $0x26c] sm:$0xf]
  %v171 = vld [vmem:[%s0 + $0x270] sm:$0xf]
  %v172 = vld [vmem:[%s0 + $0x274] sm:$0xf]
  %v173 = vld [vmem:[%s0 + $0x278] sm:$0xf]
  %v174 = vld [vmem:[%s0 + $0x27c] sm:$0xf]
  %v175 = vld [vmem:[%s0 + $0x280] sm:$0xf]
  %v176 = vld [vmem:[%s0 + $0x284] sm:$0xf]
  %v177 = vld [vmem:[%s0 + $0x288] sm:$0xf]
  %v178 = vld [vmem:[%s0 + $0x28c] sm:$0xf]
  %v179 = vld [vmem:[%s0 + $0x290] sm:$0xf]
  %v180 = vld [vmem:[%s0 + $0x294] sm:$0xf]
  %v181 = vld [vmem:[%s0 + $0x298] sm:$0xf]
  %v182 = vld [vmem:[%s0 + $0x29c] sm:$0xf]
  %v183 = vld [vmem:[%s0 + $0x2a0] sm:$0xf]
  %v184 = vld [vmem:[%s0 + $0x2a4] sm:$0xf]
  %v185 = vld [vmem:[%s0 + $0x2a8] sm:$0xf]
  %v186 = vld [vmem:[%s0 + $0x2ac] sm:$0xf]
  %v187 = vld [vmem:[%s0 + $0x2b0] sm:$0xf]
  %v188 = vld [vmem:[%s0 + $0x2b4] sm:$0xf]
  %v189 = vld [vmem:[%s0 + $0x2b8] sm:$0xf]
  %v190 = vld [vmem:[%s0 + $0x2bc] sm:$0xf]
  %v191 = vld [vmem:[%s0 + $0x2c0] sm:$0xf]
  %v192 = vld [vmem:[%s0 + $0x2c4] sm:$0xf]
  %v193 = vld [vmem:[%s0 + $0x2c8] sm:$0xf]
  %v194 = vld [vmem:[%s0 + $0x2cc] sm:$0xf]
  %v195 = vld [vmem:[%s0 + $0x2d0] sm:$0xf]
  %v196 = vld [vmem:[%s0 + $0x2d4] sm:$0xf]
  %v197 = vld [vmem:[%s0 + $0x2d8] sm:$0xf]
  %v198 = vld [vmem:[%s0 + $0x2dc] sm:$0xf]
  %v199 = vld [vmem:[%s0 + $0x2e0] sm:$0xf]
  %v200 = vld [vmem:[%s0 + $0x2e4] sm:$0xf]
  %v201 = vld [vmem:[%s0 + $0x2e8] sm:$0xf]
  %v202 = vld [vmem:[%s0 + $0x2ec] sm:$0xf]
  %v203 = vld [vmem:[%s0 + $0x2f0] sm:$0xf]
  %v204 = vld [vmem:[%s0 + $0x2f4] sm:$0xf]
  %v205 = vld [vmem:[%s0 + $0x2f8] sm:$0xf]
  %v206 = vld [vmem:[%s0 + $0x2fc] sm:$0xf]
  %v207 = vld [vmem:[%s0 + $0x300] sm:$0xf]
  %v208 = vld [vmem:[%s0 + $0x304] sm:$0xf]
  %v209 = vld [vmem:[%s0 + $0x308] sm:$0xf]
  %v210 = vld [vmem:[%s0 + $0x30c] sm:$0xf]
  %v211 = vld [vmem:[%s0 + $0x310] sm:$0xf]
  %v212 = vld [vmem:[%s0 + $0x314] sm:$0xf]
  %v213 = vld [vmem:[%s0 + $0x318] sm:$0xf]
  %v214 = vld [vmem:[%s0 + $0x31c] sm:$0xf]
  %v215 = vld [vmem:[%s0 + $0x320] sm:$0xf]
  %v216 = vld [vmem:[%s0 + $0x324] sm:$0xf]
  %v217 = vld [vmem:[%s0 + $0x328] sm:$0xf]
  %v218 = vld [vmem:[%s0 + $0x32c] sm:$0xf]
  %v219 = vld [vmem:[%s0 + $0x330] sm:$0xf]
  %v220 = vld [vmem:[%s0 + $0x334] sm:$0xf]
  %v221 = vld [vmem:[%s0 + $0x338] sm:$0xf]
  %v222 = vld [vmem:[%s0 + $0x33c] sm:$0xf]
  %v223 = vld [vmem:[%s0 + $0x340] sm:$0xf]
  %v224 = vld [vmem:[%s0 + $0x344] sm:$0xf]
  %v225 = vld [vmem:[%s0 + $0x348] sm:$0xf]
  %v226 = vld [vmem:[%s0 + $0x34c] sm:$0xf]
  %v227 = vld [vmem:[%s0 + $0x350] sm:$0xf]
  %v228 = vld [vmem:[%s0 + $0x354] sm:$0xf]
  %v229 = vld [vmem:[%s0 + $0x358] sm:$0xf]
  %v230 = vld [vmem:[%s0 + $0x35c] sm:$0xf]
  %v231 = vld [vmem:[%s0 + $0x360] sm:$0xf]
  %v232 = vld [vmem:[%s0 + $0x364] sm:$0xf]
  %v233 = vld [vmem:[%s0 + $0x368] sm:$0xf]
  %v234 = vld [vmem:[%s0 + $0x36c] sm:$0xf]
  %v235 = vld [vmem:[%s0 + $0x370] sm:$0xf]
  %v236 = vld [vmem:[%s0 + $0x374] sm:$0xf]
  %v237 = vld [vmem:[%s0 + $0x378] sm:$0xf]
  %v238 = vld [vmem:[%s0 + $0x37c] sm:$0xf]
  %v239 = vld [vmem:[%s0 + $0x380] sm:$0xf]
  %v240 = vld [vmem:[%s0 + $0x384] sm:$0xf]
  %v241 = vld [vmem:[%s0 + $0x388] sm:$0xf]
  %v242 = vld [vmem:[%s0 + $0x38c] sm:$0xf]
  %v243 = vld [vmem:[%s0 + $0x390] sm:$0xf]
  %v244 = vld [vmem:[%s0 + $0x394] sm:$0xf]
  %v245 = vld [vmem:[%s0 + $0x398] sm:$0xf]
  %v246 = vld [vmem:[%s0 + $0x39c] sm:$0xf]
  %v247 = vld [vmem:[%s0 + $0x3a0] sm:$0xf]
  %v248 = vld [vmem:[%s0 + $0x3a4] sm:$0xf]
  %v249 = vld [vmem:[%s0 + $0x3a8] sm:$0xf]
  %v250 = vld [vmem:[%s0 + $0x3ac] sm:$0xf]
  %v251 = vld [vmem:[%s0 + $0x3b0] sm:$0xf]
  %v252 = vld [vmem:[%s0 + $0x3b4] sm:$0xf]
  %v253 = vld [vmem:[%s0 + $0x3b8] sm:$0xf]
  %v254 = vld [vmem:[%s0 + $0x3bc] sm:$0xf]
  %v255 = vld [vmem:[%s0 + $0x3c0] sm:$0xf]
  %v256 = vld [vmem:[%s0 + $0x3c4] sm:$0xf]
  %v257 = vld [vmem:[%s0 + $0x3c8] sm:$0xf]
  %v258 = vld [vmem:[%s0 + $0x3cc] sm:$0xf]
  %v259 = vld [vmem:[%s0 + $0x3d0] sm:$0xf]
  %v260 = vld [vmem:[%s0 + $0x3d4] sm:$0xf]
  %v261 = vld [vmem:[%s0 + $0x3d8] sm:$0xf]
  %v262 = vld [vmem:[%s0 + $0x3dc] sm:$0xf]
  %v263 = vld [vmem:[%s0 + $0x3e0] sm:$0xf]
  %v264 = vld [vmem:[%s0 + $0x3e4] sm:$0xf]
  %v265 = vld [vmem:[%s0 + $0x3e8] sm:$0xf]
  %v266 = vld [vmem:[%s0 + $0x3ec] sm:$0xf]
  %v267 = vld [vmem:[%s0 + $0x3f0] sm:$0xf]
  %v268 = vld [vmem:[%s0 + $0x3f4] sm:$0xf]
  %v269 = vld [vmem:[%s0 + $0x3f8] sm:$0xf]
  %v270 = vld [vmem:[%s0 + $0x3fc] sm:$0xf]
  %v271 = vld [vmem:[%s1] sm:$0xf]
  %v272 = vld [vmem:[%s1 + $0x4] sm:$0xf]
  %v273 = vld [vmem:[%s1 + $0x8] sm:$0xf]
  %v274 = vld [vmem:[%s1 + $0xc] sm:$0xf]
  %v275 = vld [vmem:[%s1 + $0x10] sm:$0xf]
  %v276 = vld [vmem:[%s1 + $0x14] sm:$0xf]
  %v277 = vld [vmem:[%s2] sm:$0x1]
  %v279 = vlaneseq
  %v280 = vshrl.u32 %v279, 7
  %v281 = vsub.s32 0, %v280
  %v282 = vrot.slane %v277, %v281
  %v540 = vunpack.c.l.b16 %v15
  %v541 = vunpack.c.l.b16 %v16
  %v542 = vunpack.c.l.b16 %v17
  %v543 = vunpack.c.l.b16 %v18
  %v544 = vunpack.c.l.b16 %v19
  %v545 = vunpack.c.l.b16 %v20
  %v546 = vunpack.c.l.b16 %v21
  %v547 = vunpack.c.l.b16 %v22
  %v548 = vunpack.c.l.b16 %v23
  %v549 = vunpack.c.l.b16 %v24
  %v550 = vunpack.c.l.b16 %v25
  %v551 = vunpack.c.l.b16 %v26
  %v552 = vunpack.c.l.b16 %v27
  %v553 = vunpack.c.l.b16 %v28
  %v554 = vunpack.c.l.b16 %v29
  %v555 = vunpack.c.l.b16 %v30
  %v556 = vunpack.c.l.b16 %v31
  %v557 = vunpack.c.l.b16 %v32
  %v558 = vunpack.c.l.b16 %v33
  %v559 = vunpack.c.l.b16 %v34
  %v560 = vunpack.c.l.b16 %v35
  %v561 = vunpack.c.l.b16 %v36
  %v562 = vunpack.c.l.b16 %v37
  %v563 = vunpack.c.l.b16 %v38
  %v564 = vunpack.c.l.b16 %v39
  %v565 = vunpack.c.l.b16 %v40
  %v566 = vunpack.c.l.b16 %v41
  %v567 = vunpack.c.l.b16 %v42
  %v568 = vunpack.c.l.b16 %v43
  %v569 = vunpack.c.l.b16 %v44
  %v570 = vunpack.c.l.b16 %v45
  %v571 = vunpack.c.l.b16 %v46
  %v572 = vunpack.c.l.b16 %v47
  %v573 = vunpack.c.l.b16 %v48
  %v574 = vunpack.c.l.b16 %v49
  %v575 = vunpack.c.l.b16 %v50
  %v576 = vunpack.c.l.b16 %v51
  %v577 = vunpack.c.l.b16 %v52
  %v578 = vunpack.c.l.b16 %v53
  %v579 = vunpack.c.l.b16 %v54
  %v580 = vunpack.c.l.b16 %v55
  %v581 = vunpack.c.l.b16 %v56
  %v582 = vunpack.c.l.b16 %v57
  %v583 = vunpack.c.l.b16 %v58
  %v584 = vunpack.c.l.b16 %v59
  %v585 = vunpack.c.l.b16 %v60
  %v586 = vunpack.c.l.b16 %v61
  %v587 = vunpack.c.l.b16 %v62
  %v588 = vunpack.c.l.b16 %v63
  %v589 = vunpack.c.l.b16 %v64
  %v590 = vunpack.c.l.b16 %v65
  %v591 = vunpack.c.l.b16 %v66
  %v592 = vunpack.c.l.b16 %v67
  %v593 = vunpack.c.l.b16 %v68
  %v594 = vunpack.c.l.b16 %v69
  %v595 = vunpack.c.l.b16 %v70
  %v596 = vunpack.c.l.b16 %v71
  %v597 = vunpack.c.l.b16 %v72
  %v598 = vunpack.c.l.b16 %v73
  %v599 = vunpack.c.l.b16 %v74
  %v600 = vunpack.c.l.b16 %v75
  %v601 = vunpack.c.l.b16 %v76
  %v602 = vunpack.c.l.b16 %v77
  %v603 = vunpack.c.l.b16 %v78
  %v604 = vunpack.c.l.b16 %v79
  %v605 = vunpack.c.l.b16 %v80
  %v606 = vunpack.c.l.b16 %v81
  %v607 = vunpack.c.l.b16 %v82
  %v608 = vunpack.c.l.b16 %v83
  %v609 = vunpack.c.l.b16 %v84
  %v610 = vunpack.c.l.b16 %v85
  %v611 = vunpack.c.l.b16 %v86
  %v612 = vunpack.c.l.b16 %v87
  %v613 = vunpack.c.l.b16 %v88
  %v614 = vunpack.c.l.b16 %v89
  %v615 = vunpack.c.l.b16 %v90
  %v616 = vunpack.c.l.b16 %v91
  %v617 = vunpack.c.l.b16 %v92
  %v618 = vunpack.c.l.b16 %v93
  %v619 = vunpack.c.l.b16 %v94
  %v620 = vunpack.c.l.b16 %v95
  %v621 = vunpack.c.l.b16 %v96
  %v622 = vunpack.c.l.b16 %v97
  %v623 = vunpack.c.l.b16 %v98
  %v624 = vunpack.c.l.b16 %v99
  %v625 = vunpack.c.l.b16 %v100
  %v626 = vunpack.c.l.b16 %v101
  %v627 = vunpack.c.l.b16 %v102
  %v628 = vunpack.c.l.b16 %v103
  %v629 = vunpack.c.l.b16 %v104
  %v630 = vunpack.c.l.b16 %v105
  %v631 = vunpack.c.l.b16 %v106
  %v632 = vunpack.c.l.b16 %v107
  %v633 = vunpack.c.l.b16 %v108
  %v634 = vunpack.c.l.b16 %v109
  %v635 = vunpack.c.l.b16 %v110
  %v636 = vunpack.c.l.b16 %v111
  %v637 = vunpack.c.l.b16 %v112
  %v638 = vunpack.c.l.b16 %v113
  %v639 = vunpack.c.l.b16 %v114
  %v640 = vunpack.c.l.b16 %v115
  %v641 = vunpack.c.l.b16 %v116
  %v642 = vunpack.c.l.b16 %v117
  %v643 = vunpack.c.l.b16 %v118
  %v644 = vunpack.c.l.b16 %v119
  %v645 = vunpack.c.l.b16 %v120
  %v646 = vunpack.c.l.b16 %v121
  %v647 = vunpack.c.l.b16 %v122
  %v648 = vunpack.c.l.b16 %v123
  %v649 = vunpack.c.l.b16 %v124
  %v650 = vunpack.c.l.b16 %v125
  %v651 = vunpack.c.l.b16 %v126
  %v652 = vunpack.c.l.b16 %v127
  %v653 = vunpack.c.l.b16 %v128
  %v654 = vunpack.c.l.b16 %v129
  %v655 = vunpack.c.l.b16 %v130
  %v656 = vunpack.c.l.b16 %v131
  %v657 = vunpack.c.l.b16 %v132
  %v658 = vunpack.c.l.b16 %v133
  %v659 = vunpack.c.l.b16 %v134
  %v660 = vunpack.c.l.b16 %v135
  %v661 = vunpack.c.l.b16 %v136
  %v662 = vunpack.c.l.b16 %v137
  %v663 = vunpack.c.l.b16 %v138
  %v664 = vunpack.c.l.b16 %v139
  %v665 = vunpack.c.l.b16 %v140
  %v666 = vunpack.c.l.b16 %v141
  %v667 = vunpack.c.l.b16 %v142
  %v668 = vunpack.c.l.b16 %v143
  %v669 = vunpack.c.l.b16 %v144
  %v670 = vunpack.c.l.b16 %v145
  %v671 = vunpack.c.l.b16 %v146
  %v672 = vunpack.c.l.b16 %v147
  %v673 = vunpack.c.l.b16 %v148
  %v674 = vunpack.c.l.b16 %v149
  %v675 = vunpack.c.l.b16 %v150
  %v676 = vunpack.c.l.b16 %v151
  %v677 = vunpack.c.l.b16 %v152
  %v678 = vunpack.c.l.b16 %v153
  %v679 = vunpack.c.l.b16 %v154
  %v680 = vunpack.c.l.b16 %v155
  %v681 = vunpack.c.l.b16 %v156
  %v682 = vunpack.c.l.b16 %v157
  %v683 = vunpack.c.l.b16 %v158
  %v684 = vunpack.c.l.b16 %v159
  %v685 = vunpack.c.l.b16 %v160
  %v686 = vunpack.c.l.b16 %v161
  %v687 = vunpack.c.l.b16 %v162
  %v688 = vunpack.c.l.b16 %v163
  %v689 = vunpack.c.l.b16 %v164
  %v690 = vunpack.c.l.b16 %v165
  %v691 = vunpack.c.l.b16 %v166
  %v692 = vunpack.c.l.b16 %v167
  %v693 = vunpack.c.l.b16 %v168
  %v694 = vunpack.c.l.b16 %v169
  %v695 = vunpack.c.l.b16 %v170
  %v696 = vunpack.c.l.b16 %v171
  %v697 = vunpack.c.l.b16 %v172
  %v698 = vunpack.c.l.b16 %v173
  %v699 = vunpack.c.l.b16 %v174
  %v700 = vunpack.c.l.b16 %v175
  %v701 = vunpack.c.l.b16 %v176
  %v702 = vunpack.c.l.b16 %v177
  %v703 = vunpack.c.l.b16 %v178
  %v704 = vunpack.c.l.b16 %v179
  %v705 = vunpack.c.l.b16 %v180
  %v706 = vunpack.c.l.b16 %v181
  %v707 = vunpack.c.l.b16 %v182
  %v708 = vunpack.c.l.b16 %v183
  %v709 = vunpack.c.l.b16 %v184
  %v710 = vunpack.c.l.b16 %v185
  %v711 = vunpack.c.l.b16 %v186
  %v712 = vunpack.c.l.b16 %v187
  %v713 = vunpack.c.l.b16 %v188
  %v714 = vunpack.c.l.b16 %v189
  %v715 = vunpack.c.l.b16 %v190
  %v716 = vunpack.c.l.b16 %v191
  %v717 = vunpack.c.l.b16 %v192
  %v718 = vunpack.c.l.b16 %v193
  %v719 = vunpack.c.l.b16 %v194
  %v720 = vunpack.c.l.b16 %v195
  %v721 = vunpack.c.l.b16 %v196
  %v722 = vunpack.c.l.b16 %v197
  %v723 = vunpack.c.l.b16 %v198
  %v724 = vunpack.c.l.b16 %v199
  %v725 = vunpack.c.l.b16 %v200
  %v726 = vunpack.c.l.b16 %v201
  %v727 = vunpack.c.l.b16 %v202
  %v728 = vunpack.c.l.b16 %v203
  %v729 = vunpack.c.l.b16 %v204
  %v730 = vunpack.c.l.b16 %v205
  %v731 = vunpack.c.l.b16 %v206
  %v732 = vunpack.c.l.b16 %v207
  %v733 = vunpack.c.l.b16 %v208
  %v734 = vunpack.c.l.b16 %v209
  %v735 = vunpack.c.l.b16 %v210
  %v736 = vunpack.c.l.b16 %v211
  %v737 = vunpack.c.l.b16 %v212
  %v738 = vunpack.c.l.b16 %v213
  %v739 = vunpack.c.l.b16 %v214
  %v740 = vunpack.c.l.b16 %v215
  %v741 = vunpack.c.l.b16 %v216
  %v742 = vunpack.c.l.b16 %v217
  %v743 = vunpack.c.l.b16 %v218
  %v744 = vunpack.c.l.b16 %v219
  %v745 = vunpack.c.l.b16 %v220
  %v746 = vunpack.c.l.b16 %v221
  %v747 = vunpack.c.l.b16 %v222
  %v748 = vunpack.c.l.b16 %v223
  %v749 = vunpack.c.l.b16 %v224
  %v750 = vunpack.c.l.b16 %v225
  %v751 = vunpack.c.l.b16 %v226
  %v752 = vunpack.c.l.b16 %v227
  %v753 = vunpack.c.l.b16 %v228
  %v754 = vunpack.c.l.b16 %v229
  %v755 = vunpack.c.l.b16 %v230
  %v756 = vunpack.c.l.b16 %v231
  %v757 = vunpack.c.l.b16 %v232
  %v758 = vunpack.c.l.b16 %v233
  %v759 = vunpack.c.l.b16 %v234
  %v760 = vunpack.c.l.b16 %v235
  %v761 = vunpack.c.l.b16 %v236
  %v762 = vunpack.c.l.b16 %v237
  %v763 = vunpack.c.l.b16 %v238
  %v764 = vunpack.c.l.b16 %v239
  %v765 = vunpack.c.l.b16 %v240
  %v766 = vunpack.c.l.b16 %v241
  %v767 = vunpack.c.l.b16 %v242
  %v768 = vunpack.c.l.b16 %v243
  %v769 = vunpack.c.l.b16 %v244
  %v770 = vunpack.c.l.b16 %v245
  %v771 = vunpack.c.l.b16 %v246
  %v772 = vunpack.c.l.b16 %v247
  %v773 = vunpack.c.l.b16 %v248
  %v774 = vunpack.c.l.b16 %v249
  %v775 = vunpack.c.l.b16 %v250
  %v776 = vunpack.c.l.b16 %v251
  %v777 = vunpack.c.l.b16 %v252
  %v778 = vunpack.c.l.b16 %v253
  %v779 = vunpack.c.l.b16 %v254
  %v780 = vunpack.c.l.b16 %v255
  %v781 = vunpack.c.l.b16 %v256
  %v782 = vunpack.c.l.b16 %v257
  %v783 = vunpack.c.l.b16 %v258
  %v784 = vunpack.c.l.b16 %v259
  %v785 = vunpack.c.l.b16 %v260
  %v786 = vunpack.c.l.b16 %v261
  %v787 = vunpack.c.l.b16 %v262
  %v788 = vunpack.c.l.b16 %v263
  %v789 = vunpack.c.l.b16 %v264
  %v790 = vunpack.c.l.b16 %v265
  %v791 = vunpack.c.l.b16 %v266
  %v792 = vunpack.c.l.b16 %v267
  %v793 = vunpack.c.l.b16 %v268
  %v794 = vunpack.c.l.b16 %v269
  %v795 = vunpack.c.l.b16 %v270
  %v796 = vpack.c.b16 %v541, %v540
  %v797 = vpack.c.b16 %v543, %v542
  %v798 = vpack.c.b16 %v545, %v544
  %v799 = vpack.c.b16 %v547, %v546
  %v800 = vpack.c.b16 %v549, %v548
  %v801 = vpack.c.b16 %v551, %v550
  %v802 = vpack.c.b16 %v553, %v552
  %v803 = vpack.c.b16 %v555, %v554
  %v804 = vpack.c.b16 %v557, %v556
  %v805 = vpack.c.b16 %v559, %v558
  %v806 = vpack.c.b16 %v561, %v560
  %v807 = vpack.c.b16 %v563, %v562
  %v808 = vpack.c.b16 %v565, %v564
  %v809 = vpack.c.b16 %v567, %v566
  %v810 = vpack.c.b16 %v569, %v568
  %v811 = vpack.c.b16 %v571, %v570
  %v812 = vpack.c.b16 %v573, %v572
  %v813 = vpack.c.b16 %v575, %v574
  %v814 = vpack.c.b16 %v577, %v576
  %v815 = vpack.c.b16 %v579, %v578
  %v816 = vpack.c.b16 %v581, %v580
  %v817 = vpack.c.b16 %v583, %v582
  %v818 = vpack.c.b16 %v585, %v584
  %v819 = vpack.c.b16 %v587, %v586
  %v820 = vpack.c.b16 %v589, %v588
  %v821 = vpack.c.b16 %v591, %v590
  %v822 = vpack.c.b16 %v593, %v592
  %v823 = vpack.c.b16 %v595, %v594
  %v824 = vpack.c.b16 %v597, %v596
  %v825 = vpack.c.b16 %v599, %v598
  %v826 = vpack.c.b16 %v601, %v600
  %v827 = vpack.c.b16 %v603, %v602
  %v828 = vpack.c.b16 %v605, %v604
  %v829 = vpack.c.b16 %v607, %v606
  %v830 = vpack.c.b16 %v609, %v608
  %v831 = vpack.c.b16 %v611, %v610
  %v832 = vpack.c.b16 %v613, %v612
  %v833 = vpack.c.b16 %v615, %v614
  %v834 = vpack.c.b16 %v617, %v616
  %v835 = vpack.c.b16 %v619, %v618
  %v836 = vpack.c.b16 %v621, %v620
  %v837 = vpack.c.b16 %v623, %v622
  %v838 = vpack.c.b16 %v625, %v624
  %v839 = vpack.c.b16 %v627, %v626
  %v840 = vpack.c.b16 %v629, %v628
  %v841 = vpack.c.b16 %v631, %v630
  %v842 = vpack.c.b16 %v633, %v632
  %v843 = vpack.c.b16 %v635, %v634
  %v844 = vpack.c.b16 %v637, %v636
  %v845 = vpack.c.b16 %v639, %v638
  %v846 = vpack.c.b16 %v641, %v640
  %v847 = vpack.c.b16 %v643, %v642
  %v848 = vpack.c.b16 %v645, %v644
  %v849 = vpack.c.b16 %v647, %v646
  %v850 = vpack.c.b16 %v649, %v648
  %v851 = vpack.c.b16 %v651, %v650
  %v852 = vpack.c.b16 %v653, %v652
  %v853 = vpack.c.b16 %v655, %v654
  %v854 = vpack.c.b16 %v657, %v656
  %v855 = vpack.c.b16 %v659, %v658
  %v856 = vpack.c.b16 %v661, %v660
  %v857 = vpack.c.b16 %v663, %v662
  %v858 = vpack.c.b16 %v665, %v664
  %v859 = vpack.c.b16 %v667, %v666
  %v860 = vpack.c.b16 %v669, %v668
  %v861 = vpack.c.b16 %v671, %v670
  %v862 = vpack.c.b16 %v673, %v672
  %v863 = vpack.c.b16 %v675, %v674
  %v864 = vpack.c.b16 %v677, %v676
  %v865 = vpack.c.b16 %v679, %v678
  %v866 = vpack.c.b16 %v681, %v680
  %v867 = vpack.c.b16 %v683, %v682
  %v868 = vpack.c.b16 %v685, %v684
  %v869 = vpack.c.b16 %v687, %v686
  %v870 = vpack.c.b16 %v689, %v688
  %v871 = vpack.c.b16 %v691, %v690
  %v872 = vpack.c.b16 %v693, %v692
  %v873 = vpack.c.b16 %v695, %v694
  %v874 = vpack.c.b16 %v697, %v696
  %v875 = vpack.c.b16 %v699, %v698
  %v876 = vpack.c.b16 %v701, %v700
  %v877 = vpack.c.b16 %v703, %v702
  %v878 = vpack.c.b16 %v705, %v704
  %v879 = vpack.c.b16 %v707, %v706
  %v880 = vpack.c.b16 %v709, %v708
  %v881 = vpack.c.b16 %v711, %v710
  %v882 = vpack.c.b16 %v713, %v712
  %v883 = vpack.c.b16 %v715, %v714
  %v884 = vpack.c.b16 %v717, %v716
  %v885 = vpack.c.b16 %v719, %v718
  %v886 = vpack.c.b16 %v721, %v720
  %v887 = vpack.c.b16 %v723, %v722
  %v888 = vpack.c.b16 %v725, %v724
  %v889 = vpack.c.b16 %v727, %v726
  %v890 = vpack.c.b16 %v729, %v728
  %v891 = vpack.c.b16 %v731, %v730
  %v892 = vpack.c.b16 %v733, %v732
  %v893 = vpack.c.b16 %v735, %v734
  %v894 = vpack.c.b16 %v737, %v736
  %v895 = vpack.c.b16 %v739, %v738
  %v896 = vpack.c.b16 %v741, %v740
  %v897 = vpack.c.b16 %v743, %v742
  %v898 = vpack.c.b16 %v745, %v744
  %v899 = vpack.c.b16 %v747, %v746
  %v900 = vpack.c.b16 %v749, %v748
  %v901 = vpack.c.b16 %v751, %v750
  %v902 = vpack.c.b16 %v753, %v752
  %v903 = vpack.c.b16 %v755, %v754
  %v904 = vpack.c.b16 %v757, %v756
  %v905 = vpack.c.b16 %v759, %v758
  %v906 = vpack.c.b16 %v761, %v760
  %v907 = vpack.c.b16 %v763, %v762
  %v908 = vpack.c.b16 %v765, %v764
  %v909 = vpack.c.b16 %v767, %v766
  %v910 = vpack.c.b16 %v769, %v768
  %v911 = vpack.c.b16 %v771, %v770
  %v912 = vpack.c.b16 %v773, %v772
  %v913 = vpack.c.b16 %v775, %v774
  %v914 = vpack.c.b16 %v777, %v776
  %v915 = vpack.c.b16 %v779, %v778
  %v916 = vpack.c.b16 %v781, %v780
  %v917 = vpack.c.b16 %v783, %v782
  %v918 = vpack.c.b16 %v785, %v784
  %v919 = vpack.c.b16 %v787, %v786
  %v920 = vpack.c.b16 %v789, %v788
  %v921 = vpack.c.b16 %v791, %v790
  %v922 = vpack.c.b16 %v793, %v792
  %v923 = vpack.c.b16 %v795, %v794
  %v930 = vunpack.c.l.b16 %v271
  %v931 = vunpack.c.l.b16 %v272
  %v932 = vunpack.c.l.b16 %v273
  %v933 = vunpack.c.l.b16 %v274
  %v934 = vunpack.c.l.b16 %v275
  %v935 = vunpack.c.l.b16 %v276
  %v936 = vpack.c.b16 %v931, %v930
  %v937 = vpack.c.b16 %v933, %v932
  %v938 = vpack.c.b16 %v935, %v934
  %vm942 = vcmask 392192
  %v944 = vsel %vm942, %v796, 0
  %v947 = vsel %vm942, %v797, 0
  %v950 = vsel %vm942, %v798, 0
  %v953 = vsel %vm942, %v799, 0
  %v956 = vsel %vm942, %v800, 0
  %v959 = vsel %vm942, %v801, 0
  %v962 = vsel %vm942, %v802, 0
  %v965 = vsel %vm942, %v803, 0
  %v968 = vsel %vm942, %v804, 0
  %v971 = vsel %vm942, %v805, 0
  %v974 = vsel %vm942, %v806, 0
  %v977 = vsel %vm942, %v807, 0
  %v980 = vsel %vm942, %v808, 0
  %v983 = vsel %vm942, %v809, 0
  %v986 = vsel %vm942, %v810, 0
  %v989 = vsel %vm942, %v811, 0
  %v992 = vsel %vm942, %v812, 0
  %v995 = vsel %vm942, %v813, 0
  %v998 = vsel %vm942, %v814, 0
  %v1001 = vsel %vm942, %v815, 0
  %v1004 = vsel %vm942, %v816, 0
  %v1007 = vsel %vm942, %v817, 0
  %v1010 = vsel %vm942, %v818, 0
  %v1013 = vsel %vm942, %v819, 0
  %v1016 = vsel %vm942, %v820, 0
  %v1019 = vsel %vm942, %v821, 0
  %v1022 = vsel %vm942, %v822, 0
  %v1025 = vsel %vm942, %v823, 0
  %v1028 = vsel %vm942, %v824, 0
  %v1031 = vsel %vm942, %v825, 0
  %v1034 = vsel %vm942, %v826, 0
  %v1037 = vsel %vm942, %v827, 0
  %v1040 = vsel %vm942, %v828, 0
  %v1043 = vsel %vm942, %v829, 0
  %v1046 = vsel %vm942, %v830, 0
  %v1049 = vsel %vm942, %v831, 0
  %v1052 = vsel %vm942, %v832, 0
  %v1055 = vsel %vm942, %v833, 0
  %v1058 = vsel %vm942, %v834, 0
  %v1061 = vsel %vm942, %v835, 0
  %v1064 = vsel %vm942, %v836, 0
  %v1067 = vsel %vm942, %v837, 0
  %v1070 = vsel %vm942, %v838, 0
  %v1073 = vsel %vm942, %v839, 0
  %v1076 = vsel %vm942, %v840, 0
  %v1079 = vsel %vm942, %v841, 0
  %v1082 = vsel %vm942, %v842, 0
  %v1085 = vsel %vm942, %v843, 0
  %v1088 = vsel %vm942, %v844, 0
  %v1091 = vsel %vm942, %v845, 0
  %v1094 = vsel %vm942, %v846, 0
  %v1097 = vsel %vm942, %v847, 0
  %v1100 = vsel %vm942, %v848, 0
  %v1103 = vsel %vm942, %v849, 0
  %v1106 = vsel %vm942, %v850, 0
  %v1109 = vsel %vm942, %v851, 0
  %v1112 = vsel %vm942, %v852, 0
  %v1115 = vsel %vm942, %v853, 0
  %v1118 = vsel %vm942, %v854, 0
  %v1121 = vsel %vm942, %v855, 0
  %v1124 = vsel %vm942, %v856, 0
  %v1127 = vsel %vm942, %v857, 0
  %v1130 = vsel %vm942, %v858, 0
  %v1133 = vsel %vm942, %v859, 0
  %v1136 = vsel %vm942, %v860, 0
  %v1139 = vsel %vm942, %v861, 0
  %v1142 = vsel %vm942, %v862, 0
  %v1145 = vsel %vm942, %v863, 0
  %v1148 = vsel %vm942, %v864, 0
  %v1151 = vsel %vm942, %v865, 0
  %v1154 = vsel %vm942, %v866, 0
  %v1157 = vsel %vm942, %v867, 0
  %v1160 = vsel %vm942, %v868, 0
  %v1163 = vsel %vm942, %v869, 0
  %v1166 = vsel %vm942, %v870, 0
  %v1169 = vsel %vm942, %v871, 0
  %v1172 = vsel %vm942, %v872, 0
  %v1175 = vsel %vm942, %v873, 0
  %v1178 = vsel %vm942, %v874, 0
  %v1181 = vsel %vm942, %v875, 0
  %v1184 = vsel %vm942, %v876, 0
  %v1187 = vsel %vm942, %v877, 0
  %v1190 = vsel %vm942, %v878, 0
  %v1193 = vsel %vm942, %v879, 0
  %v1196 = vsel %vm942, %v880, 0
  %v1199 = vsel %vm942, %v881, 0
  %v1202 = vsel %vm942, %v882, 0
  %v1205 = vsel %vm942, %v883, 0
  %v1208 = vsel %vm942, %v884, 0
  %v1211 = vsel %vm942, %v885, 0
  %v1214 = vsel %vm942, %v886, 0
  %v1217 = vsel %vm942, %v887, 0
  %v1220 = vsel %vm942, %v888, 0
  %v1223 = vsel %vm942, %v889, 0
  %v1226 = vsel %vm942, %v890, 0
  %v1229 = vsel %vm942, %v891, 0
  %v1232 = vsel %vm942, %v892, 0
  %v1235 = vsel %vm942, %v893, 0
  %v1238 = vsel %vm942, %v894, 0
  %v1241 = vsel %vm942, %v895, 0
  %v1244 = vsel %vm942, %v896, 0
  %v1247 = vsel %vm942, %v897, 0
  %v1250 = vsel %vm942, %v898, 0
  %v1253 = vsel %vm942, %v899, 0
  %v1256 = vsel %vm942, %v900, 0
  %v1259 = vsel %vm942, %v901, 0
  %v1262 = vsel %vm942, %v902, 0
  %v1265 = vsel %vm942, %v903, 0
  %v1268 = vsel %vm942, %v904, 0
  %v1271 = vsel %vm942, %v905, 0
  %v1274 = vsel %vm942, %v906, 0
  %v1277 = vsel %vm942, %v907, 0
  %v1280 = vsel %vm942, %v908, 0
  %v1283 = vsel %vm942, %v909, 0
  %v1286 = vsel %vm942, %v910, 0
  %v1289 = vsel %vm942, %v911, 0
  %v1292 = vsel %vm942, %v912, 0
  %v1295 = vsel %vm942, %v913, 0
  %v1298 = vsel %vm942, %v914, 0
  %v1301 = vsel %vm942, %v915, 0
  %v1304 = vsel %vm942, %v916, 0
  %v1307 = vsel %vm942, %v917, 0
  %v1310 = vsel %vm942, %v918, 0
  %v1313 = vsel %vm942, %v919, 0
  %v1316 = vsel %vm942, %v920, 0
  %v1319 = vsel %vm942, %v921, 0
  %v1322 = vsel %vm942, %v922, 0
  %v1325 = vsel %vm942, %v923, 0
  %1327 = vmatprep.subr.bf16.mxu0 0
  %1328 = vmatpush1.bf16.msra.mxu0 0
  %1329 = vmatprep.subr.bf16.mxu0 0
  %1330 = vmatpush1.bf16.msra.mxu0 0
  %1331 = vmatprep.subr.bf16.mxu0 0
  %1332 = vmatpush1.bf16.msra.mxu0 0
  %1333 = vmatprep.subr.bf16.mxu0 0
  %1334 = vmatpush1.bf16.msra.mxu0 0
  %1335 = vmatprep.subr.bf16.mxu0 0
  %1336 = vmatpush1.bf16.msra.mxu0 0
  %1337 = vmatprep.subr.bf16.mxu0 0
  %1338 = vmatpush1.bf16.msra.mxu0 %v938
  %1339 = vmatprep.subr.bf16.mxu0 0
  %1340 = vmatpush1.bf16.msra.mxu0 %v937
  %1341 = vmatprep.subr.bf16.mxu0 0
  %1342 = vmatpush1.bf16.msra.mxu0 %v936
  %1343 = vmatprep.subr.bf16.mxu0 0
  %1344 = vmatpush2.bf16.msra.mxu0 0
  %1345 = vmatprep.subr.bf16.mxu0 0
  %1346 = vmatpush2.bf16.msra.mxu0 0
  %1347 = vmatprep.subr.bf16.mxu0 0
  %1348 = vmatpush2.bf16.msra.mxu0 0
  %1349 = vmatprep.subr.bf16.mxu0 0
  %1350 = vmatpush2.bf16.msra.mxu0 0
  %1351 = vmatprep.subr.bf16.mxu0 0
  %1352 = vmatpush2.bf16.msra.mxu0 0
  %1353 = vmatprep.subr.bf16.mxu0 0
  %1354 = vmatpush2.bf16.msra.mxu0 0
  %1355 = vmatprep.subr.bf16.mxu0 0
  %1356 = vmatpush2.bf16.msra.mxu0 0
  %1357 = vmatprep.subr.bf16.mxu0 0
  %1358 = vmatpush2.bf16.msra.mxu0 0
  %1359 = vmatprep.mubr.bf16.mxu0 0
  %1360 = vmatmul.mubr.bf16.gmra.mxu0 %v944
  %v1361 = vpop.f32.mrf.mxu0
  %v1362 = vadd.f32 %v282, %v1361
  %v1363 = vpop.f32.mrf.mxu0
  %v1364 = vpop.f32.mrf.mxu0
  %v1365 = vadd.f32 %v282, %v1364
  %v1366 = vpop.f32.mrf.mxu0
  %1367 = vmatprep.mubr.bf16.mxu0 0
  %1368 = vmatmul.mubr.bf16.gmra.mxu0 %v947
  %v1369 = vpop.f32.mrf.mxu0
  %v1370 = vadd.f32 %v282, %v1369
  %v1371 = vpop.f32.mrf.mxu0
  %v1372 = vpop.f32.mrf.mxu0
  %v1373 = vadd.f32 %v282, %v1372
  %v1374 = vpop.f32.mrf.mxu0
  %1375 = vmatprep.mubr.bf16.mxu0 0
  %1376 = vmatmul.mubr.bf16.gmra.mxu0 %v950
  %v1377 = vpop.f32.mrf.mxu0
  %v1378 = vadd.f32 %v282, %v1377
  %v1379 = vpop.f32.mrf.mxu0
  %v1380 = vpop.f32.mrf.mxu0
  %v1381 = vadd.f32 %v282, %v1380
  %v1382 = vpop.f32.mrf.mxu0
  %1383 = vmatprep.mubr.bf16.mxu0 0
  %1384 = vmatmul.mubr.bf16.gmra.mxu0 %v953
  %v1385 = vpop.f32.mrf.mxu0
  %v1386 = vadd.f32 %v282, %v1385
  %v1387 = vpop.f32.mrf.mxu0
  %v1388 = vpop.f32.mrf.mxu0
  %v1389 = vadd.f32 %v282, %v1388
  %v1390 = vpop.f32.mrf.mxu0
  %1391 = vmatprep.mubr.bf16.mxu0 0
  %1392 = vmatmul.mubr.bf16.gmra.mxu0 %v956
  %v1393 = vpop.f32.mrf.mxu0
  %v1394 = vadd.f32 %v282, %v1393
  %v1395 = vpop.f32.mrf.mxu0
  %v1396 = vpop.f32.mrf.mxu0
  %v1397 = vadd.f32 %v282, %v1396
  %v1398 = vpop.f32.mrf.mxu0
  %1399 = vmatprep.mubr.bf16.mxu0 0
  %1400 = vmatmul.mubr.bf16.gmra.mxu0 %v959
  %v1401 = vpop.f32.mrf.mxu0
  %v1402 = vadd.f32 %v282, %v1401
  %v1403 = vpop.f32.mrf.mxu0
  %v1404 = vpop.f32.mrf.mxu0
  %v1405 = vadd.f32 %v282, %v1404
  %v1406 = vpop.f32.mrf.mxu0
  %1407 = vmatprep.mubr.bf16.mxu0 0
  %1408 = vmatmul.mubr.bf16.gmra.mxu0 %v962
  %v1409 = vpop.f32.mrf.mxu0
  %v1410 = vadd.f32 %v282, %v1409
  %v1411 = vpop.f32.mrf.mxu0
  %v1412 = vpop.f32.mrf.mxu0
  %v1413 = vadd.f32 %v282, %v1412
  %v1414 = vpop.f32.mrf.mxu0
  %1415 = vmatprep.mubr.bf16.mxu0 0
  %1416 = vmatmul.mubr.bf16.gmra.mxu0 %v965
  %v1417 = vpop.f32.mrf.mxu0
  %v1418 = vadd.f32 %v282, %v1417
  %v1419 = vpop.f32.mrf.mxu0
  %v1420 = vpop.f32.mrf.mxu0
  %v1421 = vadd.f32 %v282, %v1420
  %v1422 = vpop.f32.mrf.mxu0
  %1423 = vmatprep.mubr.bf16.mxu0 0
  %1424 = vmatmul.mubr.bf16.gmra.mxu0 %v968
  %v1425 = vpop.f32.mrf.mxu0
  %v1426 = vadd.f32 %v282, %v1425
  %v1427 = vpop.f32.mrf.mxu0
  %v1428 = vpop.f32.mrf.mxu0
  %v1429 = vadd.f32 %v282, %v1428
  %v1430 = vpop.f32.mrf.mxu0
  %1431 = vmatprep.mubr.bf16.mxu0 0
  %1432 = vmatmul.mubr.bf16.gmra.mxu0 %v971
  %v1433 = vpop.f32.mrf.mxu0
  %v1434 = vadd.f32 %v282, %v1433
  %v1435 = vpop.f32.mrf.mxu0
  %v1436 = vpop.f32.mrf.mxu0
  %v1437 = vadd.f32 %v282, %v1436
  %v1438 = vpop.f32.mrf.mxu0
  %1439 = vmatprep.mubr.bf16.mxu0 0
  %1440 = vmatmul.mubr.bf16.gmra.mxu0 %v974
  %v1441 = vpop.f32.mrf.mxu0
  %v1442 = vadd.f32 %v282, %v1441
  %v1443 = vpop.f32.mrf.mxu0
  %v1444 = vpop.f32.mrf.mxu0
  %v1445 = vadd.f32 %v282, %v1444
  %v1446 = vpop.f32.mrf.mxu0
  %1447 = vmatprep.mubr.bf16.mxu0 0
  %1448 = vmatmul.mubr.bf16.gmra.mxu0 %v977
  %v1449 = vpop.f32.mrf.mxu0
  %v1450 = vadd.f32 %v282, %v1449
  %v1451 = vpop.f32.mrf.mxu0
  %v1452 = vpop.f32.mrf.mxu0
  %v1453 = vadd.f32 %v282, %v1452
  %v1454 = vpop.f32.mrf.mxu0
  %1455 = vmatprep.mubr.bf16.mxu0 0
  %1456 = vmatmul.mubr.bf16.gmra.mxu0 %v980
  %v1457 = vpop.f32.mrf.mxu0
  %v1458 = vadd.f32 %v282, %v1457
  %v1459 = vpop.f32.mrf.mxu0
  %v1460 = vpop.f32.mrf.mxu0
  %v1461 = vadd.f32 %v282, %v1460
  %v1462 = vpop.f32.mrf.mxu0
  %1463 = vmatprep.mubr.bf16.mxu0 0
  %1464 = vmatmul.mubr.bf16.gmra.mxu0 %v983
  %v1465 = vpop.f32.mrf.mxu0
  %v1466 = vadd.f32 %v282, %v1465
  %v1467 = vpop.f32.mrf.mxu0
  %v1468 = vpop.f32.mrf.mxu0
  %v1469 = vadd.f32 %v282, %v1468
  %v1470 = vpop.f32.mrf.mxu0
  %1471 = vmatprep.mubr.bf16.mxu0 0
  %1472 = vmatmul.mubr.bf16.gmra.mxu0 %v986
  %v1473 = vpop.f32.mrf.mxu0
  %v1474 = vadd.f32 %v282, %v1473
  %v1475 = vpop.f32.mrf.mxu0
  %v1476 = vpop.f32.mrf.mxu0
  %v1477 = vadd.f32 %v282, %v1476
  %v1478 = vpop.f32.mrf.mxu0
  %1479 = vmatprep.mubr.bf16.mxu0 0
  %1480 = vmatmul.mubr.bf16.gmra.mxu0 %v989
  %v1481 = vpop.f32.mrf.mxu0
  %v1482 = vadd.f32 %v282, %v1481
  %v1483 = vpop.f32.mrf.mxu0
  %v1484 = vpop.f32.mrf.mxu0
  %v1485 = vadd.f32 %v282, %v1484
  %v1486 = vpop.f32.mrf.mxu0
  %1487 = vmatprep.mubr.bf16.mxu0 0
  %1488 = vmatmul.mubr.bf16.gmra.mxu0 %v992
  %v1489 = vpop.f32.mrf.mxu0
  %v1490 = vadd.f32 %v282, %v1489
  %v1491 = vpop.f32.mrf.mxu0
  %v1492 = vpop.f32.mrf.mxu0
  %v1493 = vadd.f32 %v282, %v1492
  %v1494 = vpop.f32.mrf.mxu0
  %1495 = vmatprep.mubr.bf16.mxu0 0
  %1496 = vmatmul.mubr.bf16.gmra.mxu0 %v995
  %v1497 = vpop.f32.mrf.mxu0
  %v1498 = vadd.f32 %v282, %v1497
  %v1499 = vpop.f32.mrf.mxu0
  %v1500 = vpop.f32.mrf.mxu0
  %v1501 = vadd.f32 %v282, %v1500
  %v1502 = vpop.f32.mrf.mxu0
  %1503 = vmatprep.mubr.bf16.mxu0 0
  %1504 = vmatmul.mubr.bf16.gmra.mxu0 %v998
  %v1505 = vpop.f32.mrf.mxu0
  %v1506 = vadd.f32 %v282, %v1505
  %v1507 = vpop.f32.mrf.mxu0
  %v1508 = vpop.f32.mrf.mxu0
  %v1509 = vadd.f32 %v282, %v1508
  %v1510 = vpop.f32.mrf.mxu0
  %1511 = vmatprep.mubr.bf16.mxu0 0
  %1512 = vmatmul.mubr.bf16.gmra.mxu0 %v1001
  %v1513 = vpop.f32.mrf.mxu0
  %v1514 = vadd.f32 %v282, %v1513
  %v1515 = vpop.f32.mrf.mxu0
  %v1516 = vpop.f32.mrf.mxu0
  %v1517 = vadd.f32 %v282, %v1516
  %v1518 = vpop.f32.mrf.mxu0
  %1519 = vmatprep.mubr.bf16.mxu0 0
  %1520 = vmatmul.mubr.bf16.gmra.mxu0 %v1004
  %v1521 = vpop.f32.mrf.mxu0
  %v1522 = vadd.f32 %v282, %v1521
  %v1523 = vpop.f32.mrf.mxu0
  %v1524 = vpop.f32.mrf.mxu0
  %v1525 = vadd.f32 %v282, %v1524
  %v1526 = vpop.f32.mrf.mxu0
  %1527 = vmatprep.mubr.bf16.mxu0 0
  %1528 = vmatmul.mubr.bf16.gmra.mxu0 %v1007
  %v1529 = vpop.f32.mrf.mxu0
  %v1530 = vadd.f32 %v282, %v1529
  %v1531 = vpop.f32.mrf.mxu0
  %v1532 = vpop.f32.mrf.mxu0
  %v1533 = vadd.f32 %v282, %v1532
  %v1534 = vpop.f32.mrf.mxu0
  %1535 = vmatprep.mubr.bf16.mxu0 0
  %1536 = vmatmul.mubr.bf16.gmra.mxu0 %v1010
  %v1537 = vpop.f32.mrf.mxu0
  %v1538 = vadd.f32 %v282, %v1537
  %v1539 = vpop.f32.mrf.mxu0
  %v1540 = vpop.f32.mrf.mxu0
  %v1541 = vadd.f32 %v282, %v1540
  %v1542 = vpop.f32.mrf.mxu0
  %1543 = vmatprep.mubr.bf16.mxu0 0
  %1544 = vmatmul.mubr.bf16.gmra.mxu0 %v1013
  %v1545 = vpop.f32.mrf.mxu0
  %v1546 = vadd.f32 %v282, %v1545
  %v1547 = vpop.f32.mrf.mxu0
  %v1548 = vpop.f32.mrf.mxu0
  %v1549 = vadd.f32 %v282, %v1548
  %v1550 = vpop.f32.mrf.mxu0
  %1551 = vmatprep.mubr.bf16.mxu0 0
  %1552 = vmatmul.mubr.bf16.gmra.mxu0 %v1016
  %v1553 = vpop.f32.mrf.mxu0
  %v1554 = vadd.f32 %v282, %v1553
  %v1555 = vpop.f32.mrf.mxu0
  %v1556 = vpop.f32.mrf.mxu0
  %v1557 = vadd.f32 %v282, %v1556
  %v1558 = vpop.f32.mrf.mxu0
  %1559 = vmatprep.mubr.bf16.mxu0 0
  %1560 = vmatmul.mubr.bf16.gmra.mxu0 %v1019
  %v1561 = vpop.f32.mrf.mxu0
  %v1562 = vadd.f32 %v282, %v1561
  %v1563 = vpop.f32.mrf.mxu0
  %v1564 = vpop.f32.mrf.mxu0
  %v1565 = vadd.f32 %v282, %v1564
  %v1566 = vpop.f32.mrf.mxu0
  %1567 = vmatprep.mubr.bf16.mxu0 0
  %1568 = vmatmul.mubr.bf16.gmra.mxu0 %v1022
  %v1569 = vpop.f32.mrf.mxu0
  %v1570 = vadd.f32 %v282, %v1569
  %v1571 = vpop.f32.mrf.mxu0
  %v1572 = vpop.f32.mrf.mxu0
  %v1573 = vadd.f32 %v282, %v1572
  %v1574 = vpop.f32.mrf.mxu0
  %1575 = vmatprep.mubr.bf16.mxu0 0
  %1576 = vmatmul.mubr.bf16.gmra.mxu0 %v1025
  %v1577 = vpop.f32.mrf.mxu0
  %v1578 = vadd.f32 %v282, %v1577
  %v1579 = vpop.f32.mrf.mxu0
  %v1580 = vpop.f32.mrf.mxu0
  %v1581 = vadd.f32 %v282, %v1580
  %v1582 = vpop.f32.mrf.mxu0
  %1583 = vmatprep.mubr.bf16.mxu0 0
  %1584 = vmatmul.mubr.bf16.gmra.mxu0 %v1028
  %v1585 = vpop.f32.mrf.mxu0
  %v1586 = vadd.f32 %v282, %v1585
  %v1587 = vpop.f32.mrf.mxu0
  %v1588 = vpop.f32.mrf.mxu0
  %v1589 = vadd.f32 %v282, %v1588
  %v1590 = vpop.f32.mrf.mxu0
  %1591 = vmatprep.mubr.bf16.mxu0 0
  %1592 = vmatmul.mubr.bf16.gmra.mxu0 %v1031
  %v1593 = vpop.f32.mrf.mxu0
  %v1594 = vadd.f32 %v282, %v1593
  %v1595 = vpop.f32.mrf.mxu0
  %v1596 = vpop.f32.mrf.mxu0
  %v1597 = vadd.f32 %v282, %v1596
  %v1598 = vpop.f32.mrf.mxu0
  %1599 = vmatprep.mubr.bf16.mxu0 0
  %1600 = vmatmul.mubr.bf16.gmra.mxu0 %v1034
  %v1601 = vpop.f32.mrf.mxu0
  %v1602 = vadd.f32 %v282, %v1601
  %v1603 = vpop.f32.mrf.mxu0
  %v1604 = vpop.f32.mrf.mxu0
  %v1605 = vadd.f32 %v282, %v1604
  %v1606 = vpop.f32.mrf.mxu0
  %1607 = vmatprep.mubr.bf16.mxu0 0
  %1608 = vmatmul.mubr.bf16.gmra.mxu0 %v1037
  %v1609 = vpop.f32.mrf.mxu0
  %v1610 = vadd.f32 %v282, %v1609
  %v1611 = vpop.f32.mrf.mxu0
  %v1612 = vpop.f32.mrf.mxu0
  %v1613 = vadd.f32 %v282, %v1612
  %v1614 = vpop.f32.mrf.mxu0
  %1615 = vmatprep.mubr.bf16.mxu0 0
  %1616 = vmatmul.mubr.bf16.gmra.mxu0 %v1040
  %v1617 = vpop.f32.mrf.mxu0
  %v1618 = vadd.f32 %v282, %v1617
  %v1619 = vpop.f32.mrf.mxu0
  %v1620 = vpop.f32.mrf.mxu0
  %v1621 = vadd.f32 %v282, %v1620
  %v1622 = vpop.f32.mrf.mxu0
  %1623 = vmatprep.mubr.bf16.mxu0 0
  %1624 = vmatmul.mubr.bf16.gmra.mxu0 %v1043
  %v1625 = vpop.f32.mrf.mxu0
  %v1626 = vadd.f32 %v282, %v1625
  %v1627 = vpop.f32.mrf.mxu0
  %v1628 = vpop.f32.mrf.mxu0
  %v1629 = vadd.f32 %v282, %v1628
  %v1630 = vpop.f32.mrf.mxu0
  %1631 = vmatprep.mubr.bf16.mxu0 0
  %1632 = vmatmul.mubr.bf16.gmra.mxu0 %v1046
  %v1633 = vpop.f32.mrf.mxu0
  %v1634 = vadd.f32 %v282, %v1633
  %v1635 = vpop.f32.mrf.mxu0
  %v1636 = vpop.f32.mrf.mxu0
  %v1637 = vadd.f32 %v282, %v1636
  %v1638 = vpop.f32.mrf.mxu0
  %1639 = vmatprep.mubr.bf16.mxu0 0
  %1640 = vmatmul.mubr.bf16.gmra.mxu0 %v1049
  %v1641 = vpop.f32.mrf.mxu0
  %v1642 = vadd.f32 %v282, %v1641
  %v1643 = vpop.f32.mrf.mxu0
  %v1644 = vpop.f32.mrf.mxu0
  %v1645 = vadd.f32 %v282, %v1644
  %v1646 = vpop.f32.mrf.mxu0
  %1647 = vmatprep.mubr.bf16.mxu0 0
  %1648 = vmatmul.mubr.bf16.gmra.mxu0 %v1052
  %v1649 = vpop.f32.mrf.mxu0
  %v1650 = vadd.f32 %v282, %v1649
  %v1651 = vpop.f32.mrf.mxu0
  %v1652 = vpop.f32.mrf.mxu0
  %v1653 = vadd.f32 %v282, %v1652
  %v1654 = vpop.f32.mrf.mxu0
  %1655 = vmatprep.mubr.bf16.mxu0 0
  %1656 = vmatmul.mubr.bf16.gmra.mxu0 %v1055
  %v1657 = vpop.f32.mrf.mxu0
  %v1658 = vadd.f32 %v282, %v1657
  %v1659 = vpop.f32.mrf.mxu0
  %v1660 = vpop.f32.mrf.mxu0
  %v1661 = vadd.f32 %v282, %v1660
  %v1662 = vpop.f32.mrf.mxu0
  %1663 = vmatprep.mubr.bf16.mxu0 0
  %1664 = vmatmul.mubr.bf16.gmra.mxu0 %v1058
  %v1665 = vpop.f32.mrf.mxu0
  %v1666 = vadd.f32 %v282, %v1665
  %v1667 = vpop.f32.mrf.mxu0
  %v1668 = vpop.f32.mrf.mxu0
  %v1669 = vadd.f32 %v282, %v1668
  %v1670 = vpop.f32.mrf.mxu0
  %1671 = vmatprep.mubr.bf16.mxu0 0
  %1672 = vmatmul.mubr.bf16.gmra.mxu0 %v1061
  %v1673 = vpop.f32.mrf.mxu0
  %v1674 = vadd.f32 %v282, %v1673
  %v1675 = vpop.f32.mrf.mxu0
  %v1676 = vpop.f32.mrf.mxu0
  %v1677 = vadd.f32 %v282, %v1676
  %v1678 = vpop.f32.mrf.mxu0
  %1679 = vmatprep.mubr.bf16.mxu0 0
  %1680 = vmatmul.mubr.bf16.gmra.mxu0 %v1064
  %v1681 = vpop.f32.mrf.mxu0
  %v1682 = vadd.f32 %v282, %v1681
  %v1683 = vpop.f32.mrf.mxu0
  %v1684 = vpop.f32.mrf.mxu0
  %v1685 = vadd.f32 %v282, %v1684
  %v1686 = vpop.f32.mrf.mxu0
  %1687 = vmatprep.mubr.bf16.mxu0 0
  %1688 = vmatmul.mubr.bf16.gmra.mxu0 %v1067
  %v1689 = vpop.f32.mrf.mxu0
  %v1690 = vadd.f32 %v282, %v1689
  %v1691 = vpop.f32.mrf.mxu0
  %v1692 = vpop.f32.mrf.mxu0
  %v1693 = vadd.f32 %v282, %v1692
  %v1694 = vpop.f32.mrf.mxu0
  %1695 = vmatprep.mubr.bf16.mxu0 0
  %1696 = vmatmul.mubr.bf16.gmra.mxu0 %v1070
  %v1697 = vpop.f32.mrf.mxu0
  %v1698 = vadd.f32 %v282, %v1697
  %v1699 = vpop.f32.mrf.mxu0
  %v1700 = vpop.f32.mrf.mxu0
  %v1701 = vadd.f32 %v282, %v1700
  %v1702 = vpop.f32.mrf.mxu0
  %1703 = vmatprep.mubr.bf16.mxu0 0
  %1704 = vmatmul.mubr.bf16.gmra.mxu0 %v1073
  %v1705 = vpop.f32.mrf.mxu0
  %v1706 = vadd.f32 %v282, %v1705
  %v1707 = vpop.f32.mrf.mxu0
  %v1708 = vpop.f32.mrf.mxu0
  %v1709 = vadd.f32 %v282, %v1708
  %v1710 = vpop.f32.mrf.mxu0
  %1711 = vmatprep.mubr.bf16.mxu0 0
  %1712 = vmatmul.mubr.bf16.gmra.mxu0 %v1076
  %v1713 = vpop.f32.mrf.mxu0
  %v1714 = vadd.f32 %v282, %v1713
  %v1715 = vpop.f32.mrf.mxu0
  %v1716 = vpop.f32.mrf.mxu0
  %v1717 = vadd.f32 %v282, %v1716
  %v1718 = vpop.f32.mrf.mxu0
  %1719 = vmatprep.mubr.bf16.mxu0 0
  %1720 = vmatmul.mubr.bf16.gmra.mxu0 %v1079
  %v1721 = vpop.f32.mrf.mxu0
  %v1722 = vadd.f32 %v282, %v1721
  %v1723 = vpop.f32.mrf.mxu0
  %v1724 = vpop.f32.mrf.mxu0
  %v1725 = vadd.f32 %v282, %v1724
  %v1726 = vpop.f32.mrf.mxu0
  %1727 = vmatprep.mubr.bf16.mxu0 0
  %1728 = vmatmul.mubr.bf16.gmra.mxu0 %v1082
  %v1729 = vpop.f32.mrf.mxu0
  %v1730 = vadd.f32 %v282, %v1729
  %v1731 = vpop.f32.mrf.mxu0
  %v1732 = vpop.f32.mrf.mxu0
  %v1733 = vadd.f32 %v282, %v1732
  %v1734 = vpop.f32.mrf.mxu0
  %1735 = vmatprep.mubr.bf16.mxu0 0
  %1736 = vmatmul.mubr.bf16.gmra.mxu0 %v1085
  %v1737 = vpop.f32.mrf.mxu0
  %v1738 = vadd.f32 %v282, %v1737
  %v1739 = vpop.f32.mrf.mxu0
  %v1740 = vpop.f32.mrf.mxu0
  %v1741 = vadd.f32 %v282, %v1740
  %v1742 = vpop.f32.mrf.mxu0
  %1743 = vmatprep.mubr.bf16.mxu0 0
  %1744 = vmatmul.mubr.bf16.gmra.mxu0 %v1088
  %v1745 = vpop.f32.mrf.mxu0
  %v1746 = vadd.f32 %v282, %v1745
  %v1747 = vpop.f32.mrf.mxu0
  %v1748 = vpop.f32.mrf.mxu0
  %v1749 = vadd.f32 %v282, %v1748
  %v1750 = vpop.f32.mrf.mxu0
  %1751 = vmatprep.mubr.bf16.mxu0 0
  %1752 = vmatmul.mubr.bf16.gmra.mxu0 %v1091
  %v1753 = vpop.f32.mrf.mxu0
  %v1754 = vadd.f32 %v282, %v1753
  %v1755 = vpop.f32.mrf.mxu0
  %v1756 = vpop.f32.mrf.mxu0
  %v1757 = vadd.f32 %v282, %v1756
  %v1758 = vpop.f32.mrf.mxu0
  %1759 = vmatprep.mubr.bf16.mxu0 0
  %1760 = vmatmul.mubr.bf16.gmra.mxu0 %v1094
  %v1761 = vpop.f32.mrf.mxu0
  %v1762 = vadd.f32 %v282, %v1761
  %v1763 = vpop.f32.mrf.mxu0
  %v1764 = vpop.f32.mrf.mxu0
  %v1765 = vadd.f32 %v282, %v1764
  %v1766 = vpop.f32.mrf.mxu0
  %1767 = vmatprep.mubr.bf16.mxu0 0
  %1768 = vmatmul.mubr.bf16.gmra.mxu0 %v1097
  %v1769 = vpop.f32.mrf.mxu0
  %v1770 = vadd.f32 %v282, %v1769
  %v1771 = vpop.f32.mrf.mxu0
  %v1772 = vpop.f32.mrf.mxu0
  %v1773 = vadd.f32 %v282, %v1772
  %v1774 = vpop.f32.mrf.mxu0
  %1775 = vmatprep.mubr.bf16.mxu0 0
  %1776 = vmatmul.mubr.bf16.gmra.mxu0 %v1100
  %v1777 = vpop.f32.mrf.mxu0
  %v1778 = vadd.f32 %v282, %v1777
  %v1779 = vpop.f32.mrf.mxu0
  %v1780 = vpop.f32.mrf.mxu0
  %v1781 = vadd.f32 %v282, %v1780
  %v1782 = vpop.f32.mrf.mxu0
  %1783 = vmatprep.mubr.bf16.mxu0 0
  %1784 = vmatmul.mubr.bf16.gmra.mxu0 %v1103
  %v1785 = vpop.f32.mrf.mxu0
  %v1786 = vadd.f32 %v282, %v1785
  %v1787 = vpop.f32.mrf.mxu0
  %v1788 = vpop.f32.mrf.mxu0
  %v1789 = vadd.f32 %v282, %v1788
  %v1790 = vpop.f32.mrf.mxu0
  %1791 = vmatprep.mubr.bf16.mxu0 0
  %1792 = vmatmul.mubr.bf16.gmra.mxu0 %v1106
  %v1793 = vpop.f32.mrf.mxu0
  %v1794 = vadd.f32 %v282, %v1793
  %v1795 = vpop.f32.mrf.mxu0
  %v1796 = vpop.f32.mrf.mxu0
  %v1797 = vadd.f32 %v282, %v1796
  %v1798 = vpop.f32.mrf.mxu0
  %1799 = vmatprep.mubr.bf16.mxu0 0
  %1800 = vmatmul.mubr.bf16.gmra.mxu0 %v1109
  %v1801 = vpop.f32.mrf.mxu0
  %v1802 = vadd.f32 %v282, %v1801
  %v1803 = vpop.f32.mrf.mxu0
  %v1804 = vpop.f32.mrf.mxu0
  %v1805 = vadd.f32 %v282, %v1804
  %v1806 = vpop.f32.mrf.mxu0
  %1807 = vmatprep.mubr.bf16.mxu0 0
  %1808 = vmatmul.mubr.bf16.gmra.mxu0 %v1112
  %v1809 = vpop.f32.mrf.mxu0
  %v1810 = vadd.f32 %v282, %v1809
  %v1811 = vpop.f32.mrf.mxu0
  %v1812 = vpop.f32.mrf.mxu0
  %v1813 = vadd.f32 %v282, %v1812
  %v1814 = vpop.f32.mrf.mxu0
  %1815 = vmatprep.mubr.bf16.mxu0 0
  %1816 = vmatmul.mubr.bf16.gmra.mxu0 %v1115
  %v1817 = vpop.f32.mrf.mxu0
  %v1818 = vadd.f32 %v282, %v1817
  %v1819 = vpop.f32.mrf.mxu0
  %v1820 = vpop.f32.mrf.mxu0
  %v1821 = vadd.f32 %v282, %v1820
  %v1822 = vpop.f32.mrf.mxu0
  %1823 = vmatprep.mubr.bf16.mxu0 0
  %1824 = vmatmul.mubr.bf16.gmra.mxu0 %v1118
  %v1825 = vpop.f32.mrf.mxu0
  %v1826 = vadd.f32 %v282, %v1825
  %v1827 = vpop.f32.mrf.mxu0
  %v1828 = vpop.f32.mrf.mxu0
  %v1829 = vadd.f32 %v282, %v1828
  %v1830 = vpop.f32.mrf.mxu0
  %1831 = vmatprep.mubr.bf16.mxu0 0
  %1832 = vmatmul.mubr.bf16.gmra.mxu0 %v1121
  %v1833 = vpop.f32.mrf.mxu0
  %v1834 = vadd.f32 %v282, %v1833
  %v1835 = vpop.f32.mrf.mxu0
  %v1836 = vpop.f32.mrf.mxu0
  %v1837 = vadd.f32 %v282, %v1836
  %v1838 = vpop.f32.mrf.mxu0
  %1839 = vmatprep.mubr.bf16.mxu0 0
  %1840 = vmatmul.mubr.bf16.gmra.mxu0 %v1124
  %v1841 = vpop.f32.mrf.mxu0
  %v1842 = vadd.f32 %v282, %v1841
  %v1843 = vpop.f32.mrf.mxu0
  %v1844 = vpop.f32.mrf.mxu0
  %v1845 = vadd.f32 %v282, %v1844
  %v1846 = vpop.f32.mrf.mxu0
  %1847 = vmatprep.mubr.bf16.mxu0 0
  %1848 = vmatmul.mubr.bf16.gmra.mxu0 %v1127
  %v1849 = vpop.f32.mrf.mxu0
  %v1850 = vadd.f32 %v282, %v1849
  %v1851 = vpop.f32.mrf.mxu0
  %v1852 = vpop.f32.mrf.mxu0
  %v1853 = vadd.f32 %v282, %v1852
  %v1854 = vpop.f32.mrf.mxu0
  %1855 = vmatprep.mubr.bf16.mxu0 0
  %1856 = vmatmul.mubr.bf16.gmra.mxu0 %v1130
  %v1857 = vpop.f32.mrf.mxu0
  %v1858 = vadd.f32 %v282, %v1857
  %v1859 = vpop.f32.mrf.mxu0
  %v1860 = vpop.f32.mrf.mxu0
  %v1861 = vadd.f32 %v282, %v1860
  %v1862 = vpop.f32.mrf.mxu0
  %1863 = vmatprep.mubr.bf16.mxu0 0
  %1864 = vmatmul.mubr.bf16.gmra.mxu0 %v1133
  %v1865 = vpop.f32.mrf.mxu0
  %v1866 = vadd.f32 %v282, %v1865
  %v1867 = vpop.f32.mrf.mxu0
  %v1868 = vpop.f32.mrf.mxu0
  %v1869 = vadd.f32 %v282, %v1868
  %v1870 = vpop.f32.mrf.mxu0
  %1871 = vmatprep.mubr.bf16.mxu0 0
  %1872 = vmatmul.mubr.bf16.gmra.mxu0 %v1136
  %v1873 = vpop.f32.mrf.mxu0
  %v1874 = vadd.f32 %v282, %v1873
  %v1875 = vpop.f32.mrf.mxu0
  %v1876 = vpop.f32.mrf.mxu0
  %v1877 = vadd.f32 %v282, %v1876
  %v1878 = vpop.f32.mrf.mxu0
  %1879 = vmatprep.mubr.bf16.mxu0 0
  %1880 = vmatmul.mubr.bf16.gmra.mxu0 %v1139
  %v1881 = vpop.f32.mrf.mxu0
  %v1882 = vadd.f32 %v282, %v1881
  %v1883 = vpop.f32.mrf.mxu0
  %v1884 = vpop.f32.mrf.mxu0
  %v1885 = vadd.f32 %v282, %v1884
  %v1886 = vpop.f32.mrf.mxu0
  %1887 = vmatprep.mubr.bf16.mxu0 0
  %1888 = vmatmul.mubr.bf16.gmra.mxu0 %v1142
  %v1889 = vpop.f32.mrf.mxu0
  %v1890 = vadd.f32 %v282, %v1889
  %v1891 = vpop.f32.mrf.mxu0
  %v1892 = vpop.f32.mrf.mxu0
  %v1893 = vadd.f32 %v282, %v1892
  %v1894 = vpop.f32.mrf.mxu0
  %1895 = vmatprep.mubr.bf16.mxu0 0
  %1896 = vmatmul.mubr.bf16.gmra.mxu0 %v1145
  %v1897 = vpop.f32.mrf.mxu0
  %v1898 = vadd.f32 %v282, %v1897
  %v1899 = vpop.f32.mrf.mxu0
  %v1900 = vpop.f32.mrf.mxu0
  %v1901 = vadd.f32 %v282, %v1900
  %v1902 = vpop.f32.mrf.mxu0
  %1903 = vmatprep.mubr.bf16.mxu0 0
  %1904 = vmatmul.mubr.bf16.gmra.mxu0 %v1148
  %v1905 = vpop.f32.mrf.mxu0
  %v1906 = vadd.f32 %v282, %v1905
  %v1907 = vpop.f32.mrf.mxu0
  %v1908 = vpop.f32.mrf.mxu0
  %v1909 = vadd.f32 %v282, %v1908
  %v1910 = vpop.f32.mrf.mxu0
  %1911 = vmatprep.mubr.bf16.mxu0 0
  %1912 = vmatmul.mubr.bf16.gmra.mxu0 %v1151
  %v1913 = vpop.f32.mrf.mxu0
  %v1914 = vadd.f32 %v282, %v1913
  %v1915 = vpop.f32.mrf.mxu0
  %v1916 = vpop.f32.mrf.mxu0
  %v1917 = vadd.f32 %v282, %v1916
  %v1918 = vpop.f32.mrf.mxu0
  %1919 = vmatprep.mubr.bf16.mxu0 0
  %1920 = vmatmul.mubr.bf16.gmra.mxu0 %v1154
  %v1921 = vpop.f32.mrf.mxu0
  %v1922 = vadd.f32 %v282, %v1921
  %v1923 = vpop.f32.mrf.mxu0
  %v1924 = vpop.f32.mrf.mxu0
  %v1925 = vadd.f32 %v282, %v1924
  %v1926 = vpop.f32.mrf.mxu0
  %1927 = vmatprep.mubr.bf16.mxu0 0
  %1928 = vmatmul.mubr.bf16.gmra.mxu0 %v1157
  %v1929 = vpop.f32.mrf.mxu0
  %v1930 = vadd.f32 %v282, %v1929
  %v1931 = vpop.f32.mrf.mxu0
  %v1932 = vpop.f32.mrf.mxu0
  %v1933 = vadd.f32 %v282, %v1932
  %v1934 = vpop.f32.mrf.mxu0
  %1935 = vmatprep.mubr.bf16.mxu0 0
  %1936 = vmatmul.mubr.bf16.gmra.mxu0 %v1160
  %v1937 = vpop.f32.mrf.mxu0
  %v1938 = vadd.f32 %v282, %v1937
  %v1939 = vpop.f32.mrf.mxu0
  %v1940 = vpop.f32.mrf.mxu0
  %v1941 = vadd.f32 %v282, %v1940
  %v1942 = vpop.f32.mrf.mxu0
  %1943 = vmatprep.mubr.bf16.mxu0 0
  %1944 = vmatmul.mubr.bf16.gmra.mxu0 %v1163
  %v1945 = vpop.f32.mrf.mxu0
  %v1946 = vadd.f32 %v282, %v1945
  %v1947 = vpop.f32.mrf.mxu0
  %v1948 = vpop.f32.mrf.mxu0
  %v1949 = vadd.f32 %v282, %v1948
  %v1950 = vpop.f32.mrf.mxu0
  %1951 = vmatprep.mubr.bf16.mxu0 0
  %1952 = vmatmul.mubr.bf16.gmra.mxu0 %v1166
  %v1953 = vpop.f32.mrf.mxu0
  %v1954 = vadd.f32 %v282, %v1953
  %v1955 = vpop.f32.mrf.mxu0
  %v1956 = vpop.f32.mrf.mxu0
  %v1957 = vadd.f32 %v282, %v1956
  %v1958 = vpop.f32.mrf.mxu0
  %1959 = vmatprep.mubr.bf16.mxu0 0
  %1960 = vmatmul.mubr.bf16.gmra.mxu0 %v1169
  %v1961 = vpop.f32.mrf.mxu0
  %v1962 = vadd.f32 %v282, %v1961
  %v1963 = vpop.f32.mrf.mxu0
  %v1964 = vpop.f32.mrf.mxu0
  %v1965 = vadd.f32 %v282, %v1964
  %v1966 = vpop.f32.mrf.mxu0
  %1967 = vmatprep.mubr.bf16.mxu0 0
  %1968 = vmatmul.mubr.bf16.gmra.mxu0 %v1172
  %v1969 = vpop.f32.mrf.mxu0
  %v1970 = vadd.f32 %v282, %v1969
  %v1971 = vpop.f32.mrf.mxu0
  %v1972 = vpop.f32.mrf.mxu0
  %v1973 = vadd.f32 %v282, %v1972
  %v1974 = vpop.f32.mrf.mxu0
  %1975 = vmatprep.mubr.bf16.mxu0 0
  %1976 = vmatmul.mubr.bf16.gmra.mxu0 %v1175
  %v1977 = vpop.f32.mrf.mxu0
  %v1978 = vadd.f32 %v282, %v1977
  %v1979 = vpop.f32.mrf.mxu0
  %v1980 = vpop.f32.mrf.mxu0
  %v1981 = vadd.f32 %v282, %v1980
  %v1982 = vpop.f32.mrf.mxu0
  %1983 = vmatprep.mubr.bf16.mxu0 0
  %1984 = vmatmul.mubr.bf16.gmra.mxu0 %v1178
  %v1985 = vpop.f32.mrf.mxu0
  %v1986 = vadd.f32 %v282, %v1985
  %v1987 = vpop.f32.mrf.mxu0
  %v1988 = vpop.f32.mrf.mxu0
  %v1989 = vadd.f32 %v282, %v1988
  %v1990 = vpop.f32.mrf.mxu0
  %1991 = vmatprep.mubr.bf16.mxu0 0
  %1992 = vmatmul.mubr.bf16.gmra.mxu0 %v1181
  %v1993 = vpop.f32.mrf.mxu0
  %v1994 = vadd.f32 %v282, %v1993
  %v1995 = vpop.f32.mrf.mxu0
  %v1996 = vpop.f32.mrf.mxu0
  %v1997 = vadd.f32 %v282, %v1996
  %v1998 = vpop.f32.mrf.mxu0
  %1999 = vmatprep.mubr.bf16.mxu0 0
  %2000 = vmatmul.mubr.bf16.gmra.mxu0 %v1184
  %v2001 = vpop.f32.mrf.mxu0
  %v2002 = vadd.f32 %v282, %v2001
  %v2003 = vpop.f32.mrf.mxu0
  %v2004 = vpop.f32.mrf.mxu0
  %v2005 = vadd.f32 %v282, %v2004
  %v2006 = vpop.f32.mrf.mxu0
  %2007 = vmatprep.mubr.bf16.mxu0 0
  %2008 = vmatmul.mubr.bf16.gmra.mxu0 %v1187
  %v2009 = vpop.f32.mrf.mxu0
  %v2010 = vadd.f32 %v282, %v2009
  %v2011 = vpop.f32.mrf.mxu0
  %v2012 = vpop.f32.mrf.mxu0
  %v2013 = vadd.f32 %v282, %v2012
  %v2014 = vpop.f32.mrf.mxu0
  %2015 = vmatprep.mubr.bf16.mxu0 0
  %2016 = vmatmul.mubr.bf16.gmra.mxu0 %v1190
  %v2017 = vpop.f32.mrf.mxu0
  %v2018 = vadd.f32 %v282, %v2017
  %v2019 = vpop.f32.mrf.mxu0
  %v2020 = vpop.f32.mrf.mxu0
  %v2021 = vadd.f32 %v282, %v2020
  %v2022 = vpop.f32.mrf.mxu0
  %2023 = vmatprep.mubr.bf16.mxu0 0
  %2024 = vmatmul.mubr.bf16.gmra.mxu0 %v1193
  %v2025 = vpop.f32.mrf.mxu0
  %v2026 = vadd.f32 %v282, %v2025
  %v2027 = vpop.f32.mrf.mxu0
  %v2028 = vpop.f32.mrf.mxu0
  %v2029 = vadd.f32 %v282, %v2028
  %v2030 = vpop.f32.mrf.mxu0
  %2031 = vmatprep.mubr.bf16.mxu0 0
  %2032 = vmatmul.mubr.bf16.gmra.mxu0 %v1196
  %v2033 = vpop.f32.mrf.mxu0
  %v2034 = vadd.f32 %v282, %v2033
  %v2035 = vpop.f32.mrf.mxu0
  %v2036 = vpop.f32.mrf.mxu0
  %v2037 = vadd.f32 %v282, %v2036
  %v2038 = vpop.f32.mrf.mxu0
  %2039 = vmatprep.mubr.bf16.mxu0 0
  %2040 = vmatmul.mubr.bf16.gmra.mxu0 %v1199
  %v2041 = vpop.f32.mrf.mxu0
  %v2042 = vadd.f32 %v282, %v2041
  %v2043 = vpop.f32.mrf.mxu0
  %v2044 = vpop.f32.mrf.mxu0
  %v2045 = vadd.f32 %v282, %v2044
  %v2046 = vpop.f32.mrf.mxu0
  %2047 = vmatprep.mubr.bf16.mxu0 0
  %2048 = vmatmul.mubr.bf16.gmra.mxu0 %v1202
  %v2049 = vpop.f32.mrf.mxu0
  %v2050 = vadd.f32 %v282, %v2049
  %v2051 = vpop.f32.mrf.mxu0
  %v2052 = vpop.f32.mrf.mxu0
  %v2053 = vadd.f32 %v282, %v2052
  %v2054 = vpop.f32.mrf.mxu0
  %2055 = vmatprep.mubr.bf16.mxu0 0
  %2056 = vmatmul.mubr.bf16.gmra.mxu0 %v1205
  %v2057 = vpop.f32.mrf.mxu0
  %v2058 = vadd.f32 %v282, %v2057
  %v2059 = vpop.f32.mrf.mxu0
  %v2060 = vpop.f32.mrf.mxu0
  %v2061 = vadd.f32 %v282, %v2060
  %v2062 = vpop.f32.mrf.mxu0
  %2063 = vmatprep.mubr.bf16.mxu0 0
  %2064 = vmatmul.mubr.bf16.gmra.mxu0 %v1208
  %v2065 = vpop.f32.mrf.mxu0
  %v2066 = vadd.f32 %v282, %v2065
  %v2067 = vpop.f32.mrf.mxu0
  %v2068 = vpop.f32.mrf.mxu0
  %v2069 = vadd.f32 %v282, %v2068
  %v2070 = vpop.f32.mrf.mxu0
  %2071 = vmatprep.mubr.bf16.mxu0 0
  %2072 = vmatmul.mubr.bf16.gmra.mxu0 %v1211
  %v2073 = vpop.f32.mrf.mxu0
  %v2074 = vadd.f32 %v282, %v2073
  %v2075 = vpop.f32.mrf.mxu0
  %v2076 = vpop.f32.mrf.mxu0
  %v2077 = vadd.f32 %v282, %v2076
  %v2078 = vpop.f32.mrf.mxu0
  %2079 = vmatprep.mubr.bf16.mxu0 0
  %2080 = vmatmul.mubr.bf16.gmra.mxu0 %v1214
  %v2081 = vpop.f32.mrf.mxu0
  %v2082 = vadd.f32 %v282, %v2081
  %v2083 = vpop.f32.mrf.mxu0
  %v2084 = vpop.f32.mrf.mxu0
  %v2085 = vadd.f32 %v282, %v2084
  %v2086 = vpop.f32.mrf.mxu0
  %2087 = vmatprep.mubr.bf16.mxu0 0
  %2088 = vmatmul.mubr.bf16.gmra.mxu0 %v1217
  %v2089 = vpop.f32.mrf.mxu0
  %v2090 = vadd.f32 %v282, %v2089
  %v2091 = vpop.f32.mrf.mxu0
  %v2092 = vpop.f32.mrf.mxu0
  %v2093 = vadd.f32 %v282, %v2092
  %v2094 = vpop.f32.mrf.mxu0
  %2095 = vmatprep.mubr.bf16.mxu0 0
  %2096 = vmatmul.mubr.bf16.gmra.mxu0 %v1220
  %v2097 = vpop.f32.mrf.mxu0
  %v2098 = vadd.f32 %v282, %v2097
  %v2099 = vpop.f32.mrf.mxu0
  %v2100 = vpop.f32.mrf.mxu0
  %v2101 = vadd.f32 %v282, %v2100
  %v2102 = vpop.f32.mrf.mxu0
  %2103 = vmatprep.mubr.bf16.mxu0 0
  %2104 = vmatmul.mubr.bf16.gmra.mxu0 %v1223
  %v2105 = vpop.f32.mrf.mxu0
  %v2106 = vadd.f32 %v282, %v2105
  %v2107 = vpop.f32.mrf.mxu0
  %v2108 = vpop.f32.mrf.mxu0
  %v2109 = vadd.f32 %v282, %v2108
  %v2110 = vpop.f32.mrf.mxu0
  %2111 = vmatprep.mubr.bf16.mxu0 0
  %2112 = vmatmul.mubr.bf16.gmra.mxu0 %v1226
  %v2113 = vpop.f32.mrf.mxu0
  %v2114 = vadd.f32 %v282, %v2113
  %v2115 = vpop.f32.mrf.mxu0
  %v2116 = vpop.f32.mrf.mxu0
  %v2117 = vadd.f32 %v282, %v2116
  %v2118 = vpop.f32.mrf.mxu0
  %2119 = vmatprep.mubr.bf16.mxu0 0
  %2120 = vmatmul.mubr.bf16.gmra.mxu0 %v1229
  %v2121 = vpop.f32.mrf.mxu0
  %v2122 = vadd.f32 %v282, %v2121
  %v2123 = vpop.f32.mrf.mxu0
  %v2124 = vpop.f32.mrf.mxu0
  %v2125 = vadd.f32 %v282, %v2124
  %v2126 = vpop.f32.mrf.mxu0
  %2127 = vmatprep.mubr.bf16.mxu0 0
  %2128 = vmatmul.mubr.bf16.gmra.mxu0 %v1232
  %v2129 = vpop.f32.mrf.mxu0
  %v2130 = vadd.f32 %v282, %v2129
  %v2131 = vpop.f32.mrf.mxu0
  %v2132 = vpop.f32.mrf.mxu0
  %v2133 = vadd.f32 %v282, %v2132
  %v2134 = vpop.f32.mrf.mxu0
  %2135 = vmatprep.mubr.bf16.mxu0 0
  %2136 = vmatmul.mubr.bf16.gmra.mxu0 %v1235
  %v2137 = vpop.f32.mrf.mxu0
  %v2138 = vadd.f32 %v282, %v2137
  %v2139 = vpop.f32.mrf.mxu0
  %v2140 = vpop.f32.mrf.mxu0
  %v2141 = vadd.f32 %v282, %v2140
  %v2142 = vpop.f32.mrf.mxu0
  %2143 = vmatprep.mubr.bf16.mxu0 0
  %2144 = vmatmul.mubr.bf16.gmra.mxu0 %v1238
  %v2145 = vpop.f32.mrf.mxu0
  %v2146 = vadd.f32 %v282, %v2145
  %v2147 = vpop.f32.mrf.mxu0
  %v2148 = vpop.f32.mrf.mxu0
  %v2149 = vadd.f32 %v282, %v2148
  %v2150 = vpop.f32.mrf.mxu0
  %2151 = vmatprep.mubr.bf16.mxu0 0
  %2152 = vmatmul.mubr.bf16.gmra.mxu0 %v1241
  %v2153 = vpop.f32.mrf.mxu0
  %v2154 = vadd.f32 %v282, %v2153
  %v2155 = vpop.f32.mrf.mxu0
  %v2156 = vpop.f32.mrf.mxu0
  %v2157 = vadd.f32 %v282, %v2156
  %v2158 = vpop.f32.mrf.mxu0
  %2159 = vmatprep.mubr.bf16.mxu0 0
  %2160 = vmatmul.mubr.bf16.gmra.mxu0 %v1244
  %v2161 = vpop.f32.mrf.mxu0
  %v2162 = vadd.f32 %v282, %v2161
  %v2163 = vpop.f32.mrf.mxu0
  %v2164 = vpop.f32.mrf.mxu0
  %v2165 = vadd.f32 %v282, %v2164
  %v2166 = vpop.f32.mrf.mxu0
  %2167 = vmatprep.mubr.bf16.mxu0 0
  %2168 = vmatmul.mubr.bf16.gmra.mxu0 %v1247
  %v2169 = vpop.f32.mrf.mxu0
  %v2170 = vadd.f32 %v282, %v2169
  %v2171 = vpop.f32.mrf.mxu0
  %v2172 = vpop.f32.mrf.mxu0
  %v2173 = vadd.f32 %v282, %v2172
  %v2174 = vpop.f32.mrf.mxu0
  %2175 = vmatprep.mubr.bf16.mxu0 0
  %2176 = vmatmul.mubr.bf16.gmra.mxu0 %v1250
  %v2177 = vpop.f32.mrf.mxu0
  %v2178 = vadd.f32 %v282, %v2177
  %v2179 = vpop.f32.mrf.mxu0
  %v2180 = vpop.f32.mrf.mxu0
  %v2181 = vadd.f32 %v282, %v2180
  %v2182 = vpop.f32.mrf.mxu0
  %2183 = vmatprep.mubr.bf16.mxu0 0
  %2184 = vmatmul.mubr.bf16.gmra.mxu0 %v1253
  %v2185 = vpop.f32.mrf.mxu0
  %v2186 = vadd.f32 %v282, %v2185
  %v2187 = vpop.f32.mrf.mxu0
  %v2188 = vpop.f32.mrf.mxu0
  %v2189 = vadd.f32 %v282, %v2188
  %v2190 = vpop.f32.mrf.mxu0
  %2191 = vmatprep.mubr.bf16.mxu0 0
  %2192 = vmatmul.mubr.bf16.gmra.mxu0 %v1256
  %v2193 = vpop.f32.mrf.mxu0
  %v2194 = vadd.f32 %v282, %v2193
  %v2195 = vpop.f32.mrf.mxu0
  %v2196 = vpop.f32.mrf.mxu0
  %v2197 = vadd.f32 %v282, %v2196
  %v2198 = vpop.f32.mrf.mxu0
  %2199 = vmatprep.mubr.bf16.mxu0 0
  %2200 = vmatmul.mubr.bf16.gmra.mxu0 %v1259
  %v2201 = vpop.f32.mrf.mxu0
  %v2202 = vadd.f32 %v282, %v2201
  %v2203 = vpop.f32.mrf.mxu0
  %v2204 = vpop.f32.mrf.mxu0
  %v2205 = vadd.f32 %v282, %v2204
  %v2206 = vpop.f32.mrf.mxu0
  %2207 = vmatprep.mubr.bf16.mxu0 0
  %2208 = vmatmul.mubr.bf16.gmra.mxu0 %v1262
  %v2209 = vpop.f32.mrf.mxu0
  %v2210 = vadd.f32 %v282, %v2209
  %v2211 = vpop.f32.mrf.mxu0
  %v2212 = vpop.f32.mrf.mxu0
  %v2213 = vadd.f32 %v282, %v2212
  %v2214 = vpop.f32.mrf.mxu0
  %2215 = vmatprep.mubr.bf16.mxu0 0
  %2216 = vmatmul.mubr.bf16.gmra.mxu0 %v1265
  %v2217 = vpop.f32.mrf.mxu0
  %v2218 = vadd.f32 %v282, %v2217
  %v2219 = vpop.f32.mrf.mxu0
  %v2220 = vpop.f32.mrf.mxu0
  %v2221 = vadd.f32 %v282, %v2220
  %v2222 = vpop.f32.mrf.mxu0
  %2223 = vmatprep.mubr.bf16.mxu0 0
  %2224 = vmatmul.mubr.bf16.gmra.mxu0 %v1268
  %v2225 = vpop.f32.mrf.mxu0
  %v2226 = vadd.f32 %v282, %v2225
  %v2227 = vpop.f32.mrf.mxu0
  %v2228 = vpop.f32.mrf.mxu0
  %v2229 = vadd.f32 %v282, %v2228
  %v2230 = vpop.f32.mrf.mxu0
  %2231 = vmatprep.mubr.bf16.mxu0 0
  %2232 = vmatmul.mubr.bf16.gmra.mxu0 %v1271
  %v2233 = vpop.f32.mrf.mxu0
  %v2234 = vadd.f32 %v282, %v2233
  %v2235 = vpop.f32.mrf.mxu0
  %v2236 = vpop.f32.mrf.mxu0
  %v2237 = vadd.f32 %v282, %v2236
  %v2238 = vpop.f32.mrf.mxu0
  %2239 = vmatprep.mubr.bf16.mxu0 0
  %2240 = vmatmul.mubr.bf16.gmra.mxu0 %v1274
  %v2241 = vpop.f32.mrf.mxu0
  %v2242 = vadd.f32 %v282, %v2241
  %v2243 = vpop.f32.mrf.mxu0
  %v2244 = vpop.f32.mrf.mxu0
  %v2245 = vadd.f32 %v282, %v2244
  %v2246 = vpop.f32.mrf.mxu0
  %2247 = vmatprep.mubr.bf16.mxu0 0
  %2248 = vmatmul.mubr.bf16.gmra.mxu0 %v1277
  %v2249 = vpop.f32.mrf.mxu0
  %v2250 = vadd.f32 %v282, %v2249
  %v2251 = vpop.f32.mrf.mxu0
  %v2252 = vpop.f32.mrf.mxu0
  %v2253 = vadd.f32 %v282, %v2252
  %v2254 = vpop.f32.mrf.mxu0
  %2255 = vmatprep.mubr.bf16.mxu0 0
  %2256 = vmatmul.mubr.bf16.gmra.mxu0 %v1280
  %v2257 = vpop.f32.mrf.mxu0
  %v2258 = vadd.f32 %v282, %v2257
  %v2259 = vpop.f32.mrf.mxu0
  %v2260 = vpop.f32.mrf.mxu0
  %v2261 = vadd.f32 %v282, %v2260
  %v2262 = vpop.f32.mrf.mxu0
  %2263 = vmatprep.mubr.bf16.mxu0 0
  %2264 = vmatmul.mubr.bf16.gmra.mxu0 %v1283
  %v2265 = vpop.f32.mrf.mxu0
  %v2266 = vadd.f32 %v282, %v2265
  %v2267 = vpop.f32.mrf.mxu0
  %v2268 = vpop.f32.mrf.mxu0
  %v2269 = vadd.f32 %v282, %v2268
  %v2270 = vpop.f32.mrf.mxu0
  %2271 = vmatprep.mubr.bf16.mxu0 0
  %2272 = vmatmul.mubr.bf16.gmra.mxu0 %v1286
  %v2273 = vpop.f32.mrf.mxu0
  %v2274 = vadd.f32 %v282, %v2273
  %v2275 = vpop.f32.mrf.mxu0
  %v2276 = vpop.f32.mrf.mxu0
  %v2277 = vadd.f32 %v282, %v2276
  %v2278 = vpop.f32.mrf.mxu0
  %2279 = vmatprep.mubr.bf16.mxu0 0
  %2280 = vmatmul.mubr.bf16.gmra.mxu0 %v1289
  %v2281 = vpop.f32.mrf.mxu0
  %v2282 = vadd.f32 %v282, %v2281
  %v2283 = vpop.f32.mrf.mxu0
  %v2284 = vpop.f32.mrf.mxu0
  %v2285 = vadd.f32 %v282, %v2284
  %v2286 = vpop.f32.mrf.mxu0
  %2287 = vmatprep.mubr.bf16.mxu0 0
  %2288 = vmatmul.mubr.bf16.gmra.mxu0 %v1292
  %v2289 = vpop.f32.mrf.mxu0
  %v2290 = vadd.f32 %v282, %v2289
  %v2291 = vpop.f32.mrf.mxu0
  %v2292 = vpop.f32.mrf.mxu0
  %v2293 = vadd.f32 %v282, %v2292
  %v2294 = vpop.f32.mrf.mxu0
  %2295 = vmatprep.mubr.bf16.mxu0 0
  %2296 = vmatmul.mubr.bf16.gmra.mxu0 %v1295
  %v2297 = vpop.f32.mrf.mxu0
  %v2298 = vadd.f32 %v282, %v2297
  %v2299 = vpop.f32.mrf.mxu0
  %v2300 = vpop.f32.mrf.mxu0
  %v2301 = vadd.f32 %v282, %v2300
  %v2302 = vpop.f32.mrf.mxu0
  %2303 = vmatprep.mubr.bf16.mxu0 0
  %2304 = vmatmul.mubr.bf16.gmra.mxu0 %v1298
  %v2305 = vpop.f32.mrf.mxu0
  %v2306 = vadd.f32 %v282, %v2305
  %v2307 = vpop.f32.mrf.mxu0
  %v2308 = vpop.f32.mrf.mxu0
  %v2309 = vadd.f32 %v282, %v2308
  %v2310 = vpop.f32.mrf.mxu0
  %2311 = vmatprep.mubr.bf16.mxu0 0
  %2312 = vmatmul.mubr.bf16.gmra.mxu0 %v1301
  %v2313 = vpop.f32.mrf.mxu0
  %v2314 = vadd.f32 %v282, %v2313
  %v2315 = vpop.f32.mrf.mxu0
  %v2316 = vpop.f32.mrf.mxu0
  %v2317 = vadd.f32 %v282, %v2316
  %v2318 = vpop.f32.mrf.mxu0
  %2319 = vmatprep.mubr.bf16.mxu0 0
  %2320 = vmatmul.mubr.bf16.gmra.mxu0 %v1304
  %v2321 = vpop.f32.mrf.mxu0
  %v2322 = vadd.f32 %v282, %v2321
  %v2323 = vpop.f32.mrf.mxu0
  %v2324 = vpop.f32.mrf.mxu0
  %v2325 = vadd.f32 %v282, %v2324
  %v2326 = vpop.f32.mrf.mxu0
  %2327 = vmatprep.mubr.bf16.mxu0 0
  %2328 = vmatmul.mubr.bf16.gmra.mxu0 %v1307
  %v2329 = vpop.f32.mrf.mxu0
  %v2330 = vadd.f32 %v282, %v2329
  %v2331 = vpop.f32.mrf.mxu0
  %v2332 = vpop.f32.mrf.mxu0
  %v2333 = vadd.f32 %v282, %v2332
  %v2334 = vpop.f32.mrf.mxu0
  %2335 = vmatprep.mubr.bf16.mxu0 0
  %2336 = vmatmul.mubr.bf16.gmra.mxu0 %v1310
  %v2337 = vpop.f32.mrf.mxu0
  %v2338 = vadd.f32 %v282, %v2337
  %v2339 = vpop.f32.mrf.mxu0
  %v2340 = vpop.f32.mrf.mxu0
  %v2341 = vadd.f32 %v282, %v2340
  %v2342 = vpop.f32.mrf.mxu0
  %2343 = vmatprep.mubr.bf16.mxu0 0
  %2344 = vmatmul.mubr.bf16.gmra.mxu0 %v1313
  %v2345 = vpop.f32.mrf.mxu0
  %v2346 = vadd.f32 %v282, %v2345
  %v2347 = vpop.f32.mrf.mxu0
  %v2348 = vpop.f32.mrf.mxu0
  %v2349 = vadd.f32 %v282, %v2348
  %v2350 = vpop.f32.mrf.mxu0
  %2351 = vmatprep.mubr.bf16.mxu0 0
  %2352 = vmatmul.mubr.bf16.gmra.mxu0 %v1316
  %v2353 = vpop.f32.mrf.mxu0
  %v2354 = vadd.f32 %v282, %v2353
  %v2355 = vpop.f32.mrf.mxu0
  %v2356 = vpop.f32.mrf.mxu0
  %v2357 = vadd.f32 %v282, %v2356
  %v2358 = vpop.f32.mrf.mxu0
  %2359 = vmatprep.mubr.bf16.mxu0 0
  %2360 = vmatmul.mubr.bf16.gmra.mxu0 %v1319
  %v2361 = vpop.f32.mrf.mxu0
  %v2362 = vadd.f32 %v282, %v2361
  %v2363 = vpop.f32.mrf.mxu0
  %v2364 = vpop.f32.mrf.mxu0
  %v2365 = vadd.f32 %v282, %v2364
  %v2366 = vpop.f32.mrf.mxu0
  %2367 = vmatprep.mubr.bf16.mxu0 0
  %2368 = vmatmul.mubr.bf16.gmra.mxu0 %v1322
  %v2369 = vpop.f32.mrf.mxu0
  %v2370 = vadd.f32 %v282, %v2369
  %v2371 = vpop.f32.mrf.mxu0
  %v2372 = vpop.f32.mrf.mxu0
  %v2373 = vadd.f32 %v282, %v2372
  %v2374 = vpop.f32.mrf.mxu0
  %2375 = vmatprep.mubr.bf16.mxu0 0
  %2376 = vmatmul.mubr.bf16.gmra.mxu0 %v1325
  %v2377 = vpop.f32.mrf.mxu0
  %v2378 = vadd.f32 %v282, %v2377
  %v2379 = vpop.f32.mrf.mxu0
  %v2380 = vpop.f32.mrf.mxu0
  %v2381 = vadd.f32 %v282, %v2380
  %v2382 = vpop.f32.mrf.mxu0
  %2383 = vdwg.mxu0
  %vm2384 = vcmp.gt.f32.partialorder %v1362, 0.0
  %vm2385 = vcmp.gt.f32.partialorder %v1365, 0.0
  %vm2386 = vcmp.gt.f32.partialorder %v1370, 0.0
  %vm2387 = vcmp.gt.f32.partialorder %v1373, 0.0
  %vm2388 = vcmp.gt.f32.partialorder %v1378, 0.0
  %vm2389 = vcmp.gt.f32.partialorder %v1381, 0.0
  %vm2390 = vcmp.gt.f32.partialorder %v1386, 0.0
  %vm2391 = vcmp.gt.f32.partialorder %v1389, 0.0
  %vm2392 = vcmp.gt.f32.partialorder %v1394, 0.0
  %vm2393 = vcmp.gt.f32.partialorder %v1397, 0.0
  %vm2394 = vcmp.gt.f32.partialorder %v1402, 0.0
  %vm2395 = vcmp.gt.f32.partialorder %v1405, 0.0
  %vm2396 = vcmp.gt.f32.partialorder %v1410, 0.0
  %vm2397 = vcmp.gt.f32.partialorder %v1413, 0.0
  %vm2398 = vcmp.gt.f32.partialorder %v1418, 0.0
  %vm2399 = vcmp.gt.f32.partialorder %v1421, 0.0
  %vm2400 = vcmp.gt.f32.partialorder %v1426, 0.0
  %vm2401 = vcmp.gt.f32.partialorder %v1429, 0.0
  %vm2402 = vcmp.gt.f32.partialorder %v1434, 0.0
  %vm2403 = vcmp.gt.f32.partialorder %v1437, 0.0
  %vm2404 = vcmp.gt.f32.partialorder %v1442, 0.0
  %vm2405 = vcmp.gt.f32.partialorder %v1445, 0.0
  %vm2406 = vcmp.gt.f32.partialorder %v1450, 0.0
  %vm2407 = vcmp.gt.f32.partialorder %v1453, 0.0
  %vm2408 = vcmp.gt.f32.partialorder %v1458, 0.0
  %vm2409 = vcmp.gt.f32.partialorder %v1461, 0.0
  %vm2410 = vcmp.gt.f32.partialorder %v1466, 0.0
  %vm2411 = vcmp.gt.f32.partialorder %v1469, 0.0
  %vm2412 = vcmp.gt.f32.partialorder %v1474, 0.0
  %vm2413 = vcmp.gt.f32.partialorder %v1477, 0.0
  %vm2414 = vcmp.gt.f32.partialorder %v1482, 0.0
  %vm2415 = vcmp.gt.f32.partialorder %v1485, 0.0
  %vm2416 = vcmp.gt.f32.partialorder %v1490, 0.0
  %vm2417 = vcmp.gt.f32.partialorder %v1493, 0.0
  %vm2418 = vcmp.gt.f32.partialorder %v1498, 0.0
  %vm2419 = vcmp.gt.f32.partialorder %v1501, 0.0
  %vm2420 = vcmp.gt.f32.partialorder %v1506, 0.0
  %vm2421 = vcmp.gt.f32.partialorder %v1509, 0.0
  %vm2422 = vcmp.gt.f32.partialorder %v1514, 0.0
  %vm2423 = vcmp.gt.f32.partialorder %v1517, 0.0
  %vm2424 = vcmp.gt.f32.partialorder %v1522, 0.0
  %vm2425 = vcmp.gt.f32.partialorder %v1525, 0.0
  %vm2426 = vcmp.gt.f32.partialorder %v1530, 0.0
  %vm2427 = vcmp.gt.f32.partialorder %v1533, 0.0
  %vm2428 = vcmp.gt.f32.partialorder %v1538, 0.0
  %vm2429 = vcmp.gt.f32.partialorder %v1541, 0.0
  %vm2430 = vcmp.gt.f32.partialorder %v1546, 0.0
  %vm2431 = vcmp.gt.f32.partialorder %v1549, 0.0
  %vm2432 = vcmp.gt.f32.partialorder %v1554, 0.0
  %vm2433 = vcmp.gt.f32.partialorder %v1557, 0.0
  %vm2434 = vcmp.gt.f32.partialorder %v1562, 0.0
  %vm2435 = vcmp.gt.f32.partialorder %v1565, 0.0
  %vm2436 = vcmp.gt.f32.partialorder %v1570, 0.0
  %vm2437 = vcmp.gt.f32.partialorder %v1573, 0.0
  %vm2438 = vcmp.gt.f32.partialorder %v1578, 0.0
  %vm2439 = vcmp.gt.f32.partialorder %v1581, 0.0
  %vm2440 = vcmp.gt.f32.partialorder %v1586, 0.0
  %vm2441 = vcmp.gt.f32.partialorder %v1589, 0.0
  %vm2442 = vcmp.gt.f32.partialorder %v1594, 0.0
  %vm2443 = vcmp.gt.f32.partialorder %v1597, 0.0
  %vm2444 = vcmp.gt.f32.partialorder %v1602, 0.0
  %vm2445 = vcmp.gt.f32.partialorder %v1605, 0.0
  %vm2446 = vcmp.gt.f32.partialorder %v1610, 0.0
  %vm2447 = vcmp.gt.f32.partialorder %v1613, 0.0
  %vm2448 = vcmp.gt.f32.partialorder %v1618, 0.0
  %vm2449 = vcmp.gt.f32.partialorder %v1621, 0.0
  %vm2450 = vcmp.gt.f32.partialorder %v1626, 0.0
  %vm2451 = vcmp.gt.f32.partialorder %v1629, 0.0
  %vm2452 = vcmp.gt.f32.partialorder %v1634, 0.0
  %vm2453 = vcmp.gt.f32.partialorder %v1637, 0.0
  %vm2454 = vcmp.gt.f32.partialorder %v1642, 0.0
  %vm2455 = vcmp.gt.f32.partialorder %v1645, 0.0
  %vm2456 = vcmp.gt.f32.partialorder %v1650, 0.0
  %vm2457 = vcmp.gt.f32.partialorder %v1653, 0.0
  %vm2458 = vcmp.gt.f32.partialorder %v1658, 0.0
  %vm2459 = vcmp.gt.f32.partialorder %v1661, 0.0
  %vm2460 = vcmp.gt.f32.partialorder %v1666, 0.0
  %vm2461 = vcmp.gt.f32.partialorder %v1669, 0.0
  %vm2462 = vcmp.gt.f32.partialorder %v1674, 0.0
  %vm2463 = vcmp.gt.f32.partialorder %v1677, 0.0
  %vm2464 = vcmp.gt.f32.partialorder %v1682, 0.0
  %vm2465 = vcmp.gt.f32.partialorder %v1685, 0.0
  %vm2466 = vcmp.gt.f32.partialorder %v1690, 0.0
  %vm2467 = vcmp.gt.f32.partialorder %v1693, 0.0
  %vm2468 = vcmp.gt.f32.partialorder %v1698, 0.0
  %vm2469 = vcmp.gt.f32.partialorder %v1701, 0.0
  %vm2470 = vcmp.gt.f32.partialorder %v1706, 0.0
  %vm2471 = vcmp.gt.f32.partialorder %v1709, 0.0
  %vm2472 = vcmp.gt.f32.partialorder %v1714, 0.0
  %vm2473 = vcmp.gt.f32.partialorder %v1717, 0.0
  %vm2474 = vcmp.gt.f32.partialorder %v1722, 0.0
  %vm2475 = vcmp.gt.f32.partialorder %v1725, 0.0
  %vm2476 = vcmp.gt.f32.partialorder %v1730, 0.0
  %vm2477 = vcmp.gt.f32.partialorder %v1733, 0.0
  %vm2478 = vcmp.gt.f32.partialorder %v1738, 0.0
  %vm2479 = vcmp.gt.f32.partialorder %v1741, 0.0
  %vm2480 = vcmp.gt.f32.partialorder %v1746, 0.0
  %vm2481 = vcmp.gt.f32.partialorder %v1749, 0.0
  %vm2482 = vcmp.gt.f32.partialorder %v1754, 0.0
  %vm2483 = vcmp.gt.f32.partialorder %v1757, 0.0
  %vm2484 = vcmp.gt.f32.partialorder %v1762, 0.0
  %vm2485 = vcmp.gt.f32.partialorder %v1765, 0.0
  %vm2486 = vcmp.gt.f32.partialorder %v1770, 0.0
  %vm2487 = vcmp.gt.f32.partialorder %v1773, 0.0
  %vm2488 = vcmp.gt.f32.partialorder %v1778, 0.0
  %vm2489 = vcmp.gt.f32.partialorder %v1781, 0.0
  %vm2490 = vcmp.gt.f32.partialorder %v1786, 0.0
  %vm2491 = vcmp.gt.f32.partialorder %v1789, 0.0
  %vm2492 = vcmp.gt.f32.partialorder %v1794, 0.0
  %vm2493 = vcmp.gt.f32.partialorder %v1797, 0.0
  %vm2494 = vcmp.gt.f32.partialorder %v1802, 0.0
  %vm2495 = vcmp.gt.f32.partialorder %v1805, 0.0
  %vm2496 = vcmp.gt.f32.partialorder %v1810, 0.0
  %vm2497 = vcmp.gt.f32.partialorder %v1813, 0.0
  %vm2498 = vcmp.gt.f32.partialorder %v1818, 0.0
  %vm2499 = vcmp.gt.f32.partialorder %v1821, 0.0
  %vm2500 = vcmp.gt.f32.partialorder %v1826, 0.0
  %vm2501 = vcmp.gt.f32.partialorder %v1829, 0.0
  %vm2502 = vcmp.gt.f32.partialorder %v1834, 0.0
  %vm2503 = vcmp.gt.f32.partialorder %v1837, 0.0
  %vm2504 = vcmp.gt.f32.partialorder %v1842, 0.0
  %vm2505 = vcmp.gt.f32.partialorder %v1845, 0.0
  %vm2506 = vcmp.gt.f32.partialorder %v1850, 0.0
  %vm2507 = vcmp.gt.f32.partialorder %v1853, 0.0
  %vm2508 = vcmp.gt.f32.partialorder %v1858, 0.0
  %vm2509 = vcmp.gt.f32.partialorder %v1861, 0.0
  %vm2510 = vcmp.gt.f32.partialorder %v1866, 0.0
  %vm2511 = vcmp.gt.f32.partialorder %v1869, 0.0
  %vm2512 = vcmp.gt.f32.partialorder %v1874, 0.0
  %vm2513 = vcmp.gt.f32.partialorder %v1877, 0.0
  %vm2514 = vcmp.gt.f32.partialorder %v1882, 0.0
  %vm2515 = vcmp.gt.f32.partialorder %v1885, 0.0
  %vm2516 = vcmp.gt.f32.partialorder %v1890, 0.0
  %vm2517 = vcmp.gt.f32.partialorder %v1893, 0.0
  %vm2518 = vcmp.gt.f32.partialorder %v1898, 0.0
  %vm2519 = vcmp.gt.f32.partialorder %v1901, 0.0
  %vm2520 = vcmp.gt.f32.partialorder %v1906, 0.0
  %vm2521 = vcmp.gt.f32.partialorder %v1909, 0.0
  %vm2522 = vcmp.gt.f32.partialorder %v1914, 0.0
  %vm2523 = vcmp.gt.f32.partialorder %v1917, 0.0
  %vm2524 = vcmp.gt.f32.partialorder %v1922, 0.0
  %vm2525 = vcmp.gt.f32.partialorder %v1925, 0.0
  %vm2526 = vcmp.gt.f32.partialorder %v1930, 0.0
  %vm2527 = vcmp.gt.f32.partialorder %v1933, 0.0
  %vm2528 = vcmp.gt.f32.partialorder %v1938, 0.0
  %vm2529 = vcmp.gt.f32.partialorder %v1941, 0.0
  %vm2530 = vcmp.gt.f32.partialorder %v1946, 0.0
  %vm2531 = vcmp.gt.f32.partialorder %v1949, 0.0
  %vm2532 = vcmp.gt.f32.partialorder %v1954, 0.0
  %vm2533 = vcmp.gt.f32.partialorder %v1957, 0.0
  %vm2534 = vcmp.gt.f32.partialorder %v1962, 0.0
  %vm2535 = vcmp.gt.f32.partialorder %v1965, 0.0
  %vm2536 = vcmp.gt.f32.partialorder %v1970, 0.0
  %vm2537 = vcmp.gt.f32.partialorder %v1973, 0.0
  %vm2538 = vcmp.gt.f32.partialorder %v1978, 0.0
  %vm2539 = vcmp.gt.f32.partialorder %v1981, 0.0
  %vm2540 = vcmp.gt.f32.partialorder %v1986, 0.0
  %vm2541 = vcmp.gt.f32.partialorder %v1989, 0.0
  %vm2542 = vcmp.gt.f32.partialorder %v1994, 0.0
  %vm2543 = vcmp.gt.f32.partialorder %v1997, 0.0
  %vm2544 = vcmp.gt.f32.partialorder %v2002, 0.0
  %vm2545 = vcmp.gt.f32.partialorder %v2005, 0.0
  %vm2546 = vcmp.gt.f32.partialorder %v2010, 0.0
  %vm2547 = vcmp.gt.f32.partialorder %v2013, 0.0
  %vm2548 = vcmp.gt.f32.partialorder %v2018, 0.0
  %vm2549 = vcmp.gt.f32.partialorder %v2021, 0.0
  %vm2550 = vcmp.gt.f32.partialorder %v2026, 0.0
  %vm2551 = vcmp.gt.f32.partialorder %v2029, 0.0
  %vm2552 = vcmp.gt.f32.partialorder %v2034, 0.0
  %vm2553 = vcmp.gt.f32.partialorder %v2037, 0.0
  %vm2554 = vcmp.gt.f32.partialorder %v2042, 0.0
  %vm2555 = vcmp.gt.f32.partialorder %v2045, 0.0
  %vm2556 = vcmp.gt.f32.partialorder %v2050, 0.0
  %vm2557 = vcmp.gt.f32.partialorder %v2053, 0.0
  %vm2558 = vcmp.gt.f32.partialorder %v2058, 0.0
  %vm2559 = vcmp.gt.f32.partialorder %v2061, 0.0
  %vm2560 = vcmp.gt.f32.partialorder %v2066, 0.0
  %vm2561 = vcmp.gt.f32.partialorder %v2069, 0.0
  %vm2562 = vcmp.gt.f32.partialorder %v2074, 0.0
  %vm2563 = vcmp.gt.f32.partialorder %v2077, 0.0
  %vm2564 = vcmp.gt.f32.partialorder %v2082, 0.0
  %vm2565 = vcmp.gt.f32.partialorder %v2085, 0.0
  %vm2566 = vcmp.gt.f32.partialorder %v2090, 0.0
  %vm2567 = vcmp.gt.f32.partialorder %v2093, 0.0
  %vm2568 = vcmp.gt.f32.partialorder %v2098, 0.0
  %vm2569 = vcmp.gt.f32.partialorder %v2101, 0.0
  %vm2570 = vcmp.gt.f32.partialorder %v2106, 0.0
  %vm2571 = vcmp.gt.f32.partialorder %v2109, 0.0
  %vm2572 = vcmp.gt.f32.partialorder %v2114, 0.0
  %vm2573 = vcmp.gt.f32.partialorder %v2117, 0.0
  %vm2574 = vcmp.gt.f32.partialorder %v2122, 0.0
  %vm2575 = vcmp.gt.f32.partialorder %v2125, 0.0
  %vm2576 = vcmp.gt.f32.partialorder %v2130, 0.0
  %vm2577 = vcmp.gt.f32.partialorder %v2133, 0.0
  %vm2578 = vcmp.gt.f32.partialorder %v2138, 0.0
  %vm2579 = vcmp.gt.f32.partialorder %v2141, 0.0
  %vm2580 = vcmp.gt.f32.partialorder %v2146, 0.0
  %vm2581 = vcmp.gt.f32.partialorder %v2149, 0.0
  %vm2582 = vcmp.gt.f32.partialorder %v2154, 0.0
  %vm2583 = vcmp.gt.f32.partialorder %v2157, 0.0
  %vm2584 = vcmp.gt.f32.partialorder %v2162, 0.0
  %vm2585 = vcmp.gt.f32.partialorder %v2165, 0.0
  %vm2586 = vcmp.gt.f32.partialorder %v2170, 0.0
  %vm2587 = vcmp.gt.f32.partialorder %v2173, 0.0
  %vm2588 = vcmp.gt.f32.partialorder %v2178, 0.0
  %vm2589 = vcmp.gt.f32.partialorder %v2181, 0.0
  %vm2590 = vcmp.gt.f32.partialorder %v2186, 0.0
  %vm2591 = vcmp.gt.f32.partialorder %v2189, 0.0
  %vm2592 = vcmp.gt.f32.partialorder %v2194, 0.0
  %vm2593 = vcmp.gt.f32.partialorder %v2197, 0.0
  %vm2594 = vcmp.gt.f32.partialorder %v2202, 0.0
  %vm2595 = vcmp.gt.f32.partialorder %v2205, 0.0
  %vm2596 = vcmp.gt.f32.partialorder %v2210, 0.0
  %vm2597 = vcmp.gt.f32.partialorder %v2213, 0.0
  %vm2598 = vcmp.gt.f32.partialorder %v2218, 0.0
  %vm2599 = vcmp.gt.f32.partialorder %v2221, 0.0
  %vm2600 = vcmp.gt.f32.partialorder %v2226, 0.0
  %vm2601 = vcmp.gt.f32.partialorder %v2229, 0.0
  %vm2602 = vcmp.gt.f32.partialorder %v2234, 0.0
  %vm2603 = vcmp.gt.f32.partialorder %v2237, 0.0
  %vm2604 = vcmp.gt.f32.partialorder %v2242, 0.0
  %vm2605 = vcmp.gt.f32.partialorder %v2245, 0.0
  %vm2606 = vcmp.gt.f32.partialorder %v2250, 0.0
  %vm2607 = vcmp.gt.f32.partialorder %v2253, 0.0
  %vm2608 = vcmp.gt.f32.partialorder %v2258, 0.0
  %vm2609 = vcmp.gt.f32.partialorder %v2261, 0.0
  %vm2610 = vcmp.gt.f32.partialorder %v2266, 0.0
  %vm2611 = vcmp.gt.f32.partialorder %v2269, 0.0
  %vm2612 = vcmp.gt.f32.partialorder %v2274, 0.0
  %vm2613 = vcmp.gt.f32.partialorder %v2277, 0.0
  %vm2614 = vcmp.gt.f32.partialorder %v2282, 0.0
  %vm2615 = vcmp.gt.f32.partialorder %v2285, 0.0
  %vm2616 = vcmp.gt.f32.partialorder %v2290, 0.0
  %vm2617 = vcmp.gt.f32.partialorder %v2293, 0.0
  %vm2618 = vcmp.gt.f32.partialorder %v2298, 0.0
  %vm2619 = vcmp.gt.f32.partialorder %v2301, 0.0
  %vm2620 = vcmp.gt.f32.partialorder %v2306, 0.0
  %vm2621 = vcmp.gt.f32.partialorder %v2309, 0.0
  %vm2622 = vcmp.gt.f32.partialorder %v2314, 0.0
  %vm2623 = vcmp.gt.f32.partialorder %v2317, 0.0
  %vm2624 = vcmp.gt.f32.partialorder %v2322, 0.0
  %vm2625 = vcmp.gt.f32.partialorder %v2325, 0.0
  %vm2626 = vcmp.gt.f32.partialorder %v2330, 0.0
  %vm2627 = vcmp.gt.f32.partialorder %v2333, 0.0
  %vm2628 = vcmp.gt.f32.partialorder %v2338, 0.0
  %vm2629 = vcmp.gt.f32.partialorder %v2341, 0.0
  %vm2630 = vcmp.gt.f32.partialorder %v2346, 0.0
  %vm2631 = vcmp.gt.f32.partialorder %v2349, 0.0
  %vm2632 = vcmp.gt.f32.partialorder %v2354, 0.0
  %vm2633 = vcmp.gt.f32.partialorder %v2357, 0.0
  %vm2634 = vcmp.gt.f32.partialorder %v2362, 0.0
  %vm2635 = vcmp.gt.f32.partialorder %v2365, 0.0
  %vm2636 = vcmp.gt.f32.partialorder %v2370, 0.0
  %vm2637 = vcmp.gt.f32.partialorder %v2373, 0.0
  %vm2638 = vcmp.gt.f32.partialorder %v2378, 0.0
  %vm2639 = vcmp.gt.f32.partialorder %v2381, 0.0
  %v2640 = vmul.f32 %v1362, 0.2
  %v2641 = vmul.f32 %v1365, 0.2
  %v2642 = vmul.f32 %v1370, 0.2
  %v2643 = vmul.f32 %v1373, 0.2
  %v2644 = vmul.f32 %v1378, 0.2
  %v2645 = vmul.f32 %v1381, 0.2
  %v2646 = vmul.f32 %v1386, 0.2
  %v2647 = vmul.f32 %v1389, 0.2
  %v2648 = vmul.f32 %v1394, 0.2
  %v2649 = vmul.f32 %v1397, 0.2
  %v2650 = vmul.f32 %v1402, 0.2
  %v2651 = vmul.f32 %v1405, 0.2
  %v2652 = vmul.f32 %v1410, 0.2
  %v2653 = vmul.f32 %v1413, 0.2
  %v2654 = vmul.f32 %v1418, 0.2
  %v2655 = vmul.f32 %v1421, 0.2
  %v2656 = vmul.f32 %v1426, 0.2
  %v2657 = vmul.f32 %v1429, 0.2
  %v2658 = vmul.f32 %v1434, 0.2
  %v2659 = vmul.f32 %v1437, 0.2
  %v2660 = vmul.f32 %v1442, 0.2
  %v2661 = vmul.f32 %v1445, 0.2
  %v2662 = vmul.f32 %v1450, 0.2
  %v2663 = vmul.f32 %v1453, 0.2
  %v2664 = vmul.f32 %v1458, 0.2
  %v2665 = vmul.f32 %v1461, 0.2
  %v2666 = vmul.f32 %v1466, 0.2
  %v2667 = vmul.f32 %v1469, 0.2
  %v2668 = vmul.f32 %v1474, 0.2
  %v2669 = vmul.f32 %v1477, 0.2
  %v2670 = vmul.f32 %v1482, 0.2
  %v2671 = vmul.f32 %v1485, 0.2
  %v2672 = vmul.f32 %v1490, 0.2
  %v2673 = vmul.f32 %v1493, 0.2
  %v2674 = vmul.f32 %v1498, 0.2
  %v2675 = vmul.f32 %v1501, 0.2
  %v2676 = vmul.f32 %v1506, 0.2
  %v2677 = vmul.f32 %v1509, 0.2
  %v2678 = vmul.f32 %v1514, 0.2
  %v2679 = vmul.f32 %v1517, 0.2
  %v2680 = vmul.f32 %v1522, 0.2
  %v2681 = vmul.f32 %v1525, 0.2
  %v2682 = vmul.f32 %v1530, 0.2
  %v2683 = vmul.f32 %v1533, 0.2
  %v2684 = vmul.f32 %v1538, 0.2
  %v2685 = vmul.f32 %v1541, 0.2
  %v2686 = vmul.f32 %v1546, 0.2
  %v2687 = vmul.f32 %v1549, 0.2
  %v2688 = vmul.f32 %v1554, 0.2
  %v2689 = vmul.f32 %v1557, 0.2
  %v2690 = vmul.f32 %v1562, 0.2
  %v2691 = vmul.f32 %v1565, 0.2
  %v2692 = vmul.f32 %v1570, 0.2
  %v2693 = vmul.f32 %v1573, 0.2
  %v2694 = vmul.f32 %v1578, 0.2
  %v2695 = vmul.f32 %v1581, 0.2
  %v2696 = vmul.f32 %v1586, 0.2
  %v2697 = vmul.f32 %v1589, 0.2
  %v2698 = vmul.f32 %v1594, 0.2
  %v2699 = vmul.f32 %v1597, 0.2
  %v2700 = vmul.f32 %v1602, 0.2
  %v2701 = vmul.f32 %v1605, 0.2
  %v2702 = vmul.f32 %v1610, 0.2
  %v2703 = vmul.f32 %v1613, 0.2
  %v2704 = vmul.f32 %v1618, 0.2
  %v2705 = vmul.f32 %v1621, 0.2
  %v2706 = vmul.f32 %v1626, 0.2
  %v2707 = vmul.f32 %v1629, 0.2
  %v2708 = vmul.f32 %v1634, 0.2
  %v2709 = vmul.f32 %v1637, 0.2
  %v2710 = vmul.f32 %v1642, 0.2
  %v2711 = vmul.f32 %v1645, 0.2
  %v2712 = vmul.f32 %v1650, 0.2
  %v2713 = vmul.f32 %v1653, 0.2
  %v2714 = vmul.f32 %v1658, 0.2
  %v2715 = vmul.f32 %v1661, 0.2
  %v2716 = vmul.f32 %v1666, 0.2
  %v2717 = vmul.f32 %v1669, 0.2
  %v2718 = vmul.f32 %v1674, 0.2
  %v2719 = vmul.f32 %v1677, 0.2
  %v2720 = vmul.f32 %v1682, 0.2
  %v2721 = vmul.f32 %v1685, 0.2
  %v2722 = vmul.f32 %v1690, 0.2
  %v2723 = vmul.f32 %v1693, 0.2
  %v2724 = vmul.f32 %v1698, 0.2
  %v2725 = vmul.f32 %v1701, 0.2
  %v2726 = vmul.f32 %v1706, 0.2
  %v2727 = vmul.f32 %v1709, 0.2
  %v2728 = vmul.f32 %v1714, 0.2
  %v2729 = vmul.f32 %v1717, 0.2
  %v2730 = vmul.f32 %v1722, 0.2
  %v2731 = vmul.f32 %v1725, 0.2
  %v2732 = vmul.f32 %v1730, 0.2
  %v2733 = vmul.f32 %v1733, 0.2
  %v2734 = vmul.f32 %v1738, 0.2
  %v2735 = vmul.f32 %v1741, 0.2
  %v2736 = vmul.f32 %v1746, 0.2
  %v2737 = vmul.f32 %v1749, 0.2
  %v2738 = vmul.f32 %v1754, 0.2
  %v2739 = vmul.f32 %v1757, 0.2
  %v2740 = vmul.f32 %v1762, 0.2
  %v2741 = vmul.f32 %v1765, 0.2
  %v2742 = vmul.f32 %v1770, 0.2
  %v2743 = vmul.f32 %v1773, 0.2
  %v2744 = vmul.f32 %v1778, 0.2
  %v2745 = vmul.f32 %v1781, 0.2
  %v2746 = vmul.f32 %v1786, 0.2
  %v2747 = vmul.f32 %v1789, 0.2
  %v2748 = vmul.f32 %v1794, 0.2
  %v2749 = vmul.f32 %v1797, 0.2
  %v2750 = vmul.f32 %v1802, 0.2
  %v2751 = vmul.f32 %v1805, 0.2
  %v2752 = vmul.f32 %v1810, 0.2
  %v2753 = vmul.f32 %v1813, 0.2
  %v2754 = vmul.f32 %v1818, 0.2
  %v2755 = vmul.f32 %v1821, 0.2
  %v2756 = vmul.f32 %v1826, 0.2
  %v2757 = vmul.f32 %v1829, 0.2
  %v2758 = vmul.f32 %v1834, 0.2
  %v2759 = vmul.f32 %v1837, 0.2
  %v2760 = vmul.f32 %v1842, 0.2
  %v2761 = vmul.f32 %v1845, 0.2
  %v2762 = vmul.f32 %v1850, 0.2
  %v2763 = vmul.f32 %v1853, 0.2
  %v2764 = vmul.f32 %v1858, 0.2
  %v2765 = vmul.f32 %v1861, 0.2
  %v2766 = vmul.f32 %v1866, 0.2
  %v2767 = vmul.f32 %v1869, 0.2
  %v2768 = vmul.f32 %v1874, 0.2
  %v2769 = vmul.f32 %v1877, 0.2
  %v2770 = vmul.f32 %v1882, 0.2
  %v2771 = vmul.f32 %v1885, 0.2
  %v2772 = vmul.f32 %v1890, 0.2
  %v2773 = vmul.f32 %v1893, 0.2
  %v2774 = vmul.f32 %v1898, 0.2
  %v2775 = vmul.f32 %v1901, 0.2
  %v2776 = vmul.f32 %v1906, 0.2
  %v2777 = vmul.f32 %v1909, 0.2
  %v2778 = vmul.f32 %v1914, 0.2
  %v2779 = vmul.f32 %v1917, 0.2
  %v2780 = vmul.f32 %v1922, 0.2
  %v2781 = vmul.f32 %v1925, 0.2
  %v2782 = vmul.f32 %v1930, 0.2
  %v2783 = vmul.f32 %v1933, 0.2
  %v2784 = vmul.f32 %v1938, 0.2
  %v2785 = vmul.f32 %v1941, 0.2
  %v2786 = vmul.f32 %v1946, 0.2
  %v2787 = vmul.f32 %v1949, 0.2
  %v2788 = vmul.f32 %v1954, 0.2
  %v2789 = vmul.f32 %v1957, 0.2
  %v2790 = vmul.f32 %v1962, 0.2
  %v2791 = vmul.f32 %v1965, 0.2
  %v2792 = vmul.f32 %v1970, 0.2
  %v2793 = vmul.f32 %v1973, 0.2
  %v2794 = vmul.f32 %v1978, 0.2
  %v2795 = vmul.f32 %v1981, 0.2
  %v2796 = vmul.f32 %v1986, 0.2
  %v2797 = vmul.f32 %v1989, 0.2
  %v2798 = vmul.f32 %v1994, 0.2
  %v2799 = vmul.f32 %v1997, 0.2
  %v2800 = vmul.f32 %v2002, 0.2
  %v2801 = vmul.f32 %v2005, 0.2
  %v2802 = vmul.f32 %v2010, 0.2
  %v2803 = vmul.f32 %v2013, 0.2
  %v2804 = vmul.f32 %v2018, 0.2
  %v2805 = vmul.f32 %v2021, 0.2
  %v2806 = vmul.f32 %v2026, 0.2
  %v2807 = vmul.f32 %v2029, 0.2
  %v2808 = vmul.f32 %v2034, 0.2
  %v2809 = vmul.f32 %v2037, 0.2
  %v2810 = vmul.f32 %v2042, 0.2
  %v2811 = vmul.f32 %v2045, 0.2
  %v2812 = vmul.f32 %v2050, 0.2
  %v2813 = vmul.f32 %v2053, 0.2
  %v2814 = vmul.f32 %v2058, 0.2
  %v2815 = vmul.f32 %v2061, 0.2
  %v2816 = vmul.f32 %v2066, 0.2
  %v2817 = vmul.f32 %v2069, 0.2
  %v2818 = vmul.f32 %v2074, 0.2
  %v2819 = vmul.f32 %v2077, 0.2
  %v2820 = vmul.f32 %v2082, 0.2
  %v2821 = vmul.f32 %v2085, 0.2
  %v2822 = vmul.f32 %v2090, 0.2
  %v2823 = vmul.f32 %v2093, 0.2
  %v2824 = vmul.f32 %v2098, 0.2
  %v2825 = vmul.f32 %v2101, 0.2
  %v2826 = vmul.f32 %v2106, 0.2
  %v2827 = vmul.f32 %v2109, 0.2
  %v2828 = vmul.f32 %v2114, 0.2
  %v2829 = vmul.f32 %v2117, 0.2
  %v2830 = vmul.f32 %v2122, 0.2
  %v2831 = vmul.f32 %v2125, 0.2
  %v2832 = vmul.f32 %v2130, 0.2
  %v2833 = vmul.f32 %v2133, 0.2
  %v2834 = vmul.f32 %v2138, 0.2
  %v2835 = vmul.f32 %v2141, 0.2
  %v2836 = vmul.f32 %v2146, 0.2
  %v2837 = vmul.f32 %v2149, 0.2
  %v2838 = vmul.f32 %v2154, 0.2
  %v2839 = vmul.f32 %v2157, 0.2
  %v2840 = vmul.f32 %v2162, 0.2
  %v2841 = vmul.f32 %v2165, 0.2
  %v2842 = vmul.f32 %v2170, 0.2
  %v2843 = vmul.f32 %v2173, 0.2
  %v2844 = vmul.f32 %v2178, 0.2
  %v2845 = vmul.f32 %v2181, 0.2
  %v2846 = vmul.f32 %v2186, 0.2
  %v2847 = vmul.f32 %v2189, 0.2
  %v2848 = vmul.f32 %v2194, 0.2
  %v2849 = vmul.f32 %v2197, 0.2
  %v2850 = vmul.f32 %v2202, 0.2
  %v2851 = vmul.f32 %v2205, 0.2
  %v2852 = vmul.f32 %v2210, 0.2
  %v2853 = vmul.f32 %v2213, 0.2
  %v2854 = vmul.f32 %v2218, 0.2
  %v2855 = vmul.f32 %v2221, 0.2
  %v2856 = vmul.f32 %v2226, 0.2
  %v2857 = vmul.f32 %v2229, 0.2
  %v2858 = vmul.f32 %v2234, 0.2
  %v2859 = vmul.f32 %v2237, 0.2
  %v2860 = vmul.f32 %v2242, 0.2
  %v2861 = vmul.f32 %v2245, 0.2
  %v2862 = vmul.f32 %v2250, 0.2
  %v2863 = vmul.f32 %v2253, 0.2
  %v2864 = vmul.f32 %v2258, 0.2
  %v2865 = vmul.f32 %v2261, 0.2
  %v2866 = vmul.f32 %v2266, 0.2
  %v2867 = vmul.f32 %v2269, 0.2
  %v2868 = vmul.f32 %v2274, 0.2
  %v2869 = vmul.f32 %v2277, 0.2
  %v2870 = vmul.f32 %v2282, 0.2
  %v2871 = vmul.f32 %v2285, 0.2
  %v2872 = vmul.f32 %v2290, 0.2
  %v2873 = vmul.f32 %v2293, 0.2
  %v2874 = vmul.f32 %v2298, 0.2
  %v2875 = vmul.f32 %v2301, 0.2
  %v2876 = vmul.f32 %v2306, 0.2
  %v2877 = vmul.f32 %v2309, 0.2
  %v2878 = vmul.f32 %v2314, 0.2
  %v2879 = vmul.f32 %v2317, 0.2
  %v2880 = vmul.f32 %v2322, 0.2
  %v2881 = vmul.f32 %v2325, 0.2
  %v2882 = vmul.f32 %v2330, 0.2
  %v2883 = vmul.f32 %v2333, 0.2
  %v2884 = vmul.f32 %v2338, 0.2
  %v2885 = vmul.f32 %v2341, 0.2
  %v2886 = vmul.f32 %v2346, 0.2
  %v2887 = vmul.f32 %v2349, 0.2
  %v2888 = vmul.f32 %v2354, 0.2
  %v2889 = vmul.f32 %v2357, 0.2
  %v2890 = vmul.f32 %v2362, 0.2
  %v2891 = vmul.f32 %v2365, 0.2
  %v2892 = vmul.f32 %v2370, 0.2
  %v2893 = vmul.f32 %v2373, 0.2
  %v2894 = vmul.f32 %v2378, 0.2
  %v2895 = vmul.f32 %v2381, 0.2
  %v2896 = vsel %vm2384, %v1362, %v2640
  %v2897 = vsel %vm2385, %v1365, %v2641
  %v2898 = vsel %vm2386, %v1370, %v2642
  %v2899 = vsel %vm2387, %v1373, %v2643
  %v2900 = vsel %vm2388, %v1378, %v2644
  %v2901 = vsel %vm2389, %v1381, %v2645
  %v2902 = vsel %vm2390, %v1386, %v2646
  %v2903 = vsel %vm2391, %v1389, %v2647
  %v2904 = vsel %vm2392, %v1394, %v2648
  %v2905 = vsel %vm2393, %v1397, %v2649
  %v2906 = vsel %vm2394, %v1402, %v2650
  %v2907 = vsel %vm2395, %v1405, %v2651
  %v2908 = vsel %vm2396, %v1410, %v2652
  %v2909 = vsel %vm2397, %v1413, %v2653
  %v2910 = vsel %vm2398, %v1418, %v2654
  %v2911 = vsel %vm2399, %v1421, %v2655
  %v2912 = vsel %vm2400, %v1426, %v2656
  %v2913 = vsel %vm2401, %v1429, %v2657
  %v2914 = vsel %vm2402, %v1434, %v2658
  %v2915 = vsel %vm2403, %v1437, %v2659
  %v2916 = vsel %vm2404, %v1442, %v2660
  %v2917 = vsel %vm2405, %v1445, %v2661
  %v2918 = vsel %vm2406, %v1450, %v2662
  %v2919 = vsel %vm2407, %v1453, %v2663
  %v2920 = vsel %vm2408, %v1458, %v2664
  %v2921 = vsel %vm2409, %v1461, %v2665
  %v2922 = vsel %vm2410, %v1466, %v2666
  %v2923 = vsel %vm2411, %v1469, %v2667
  %v2924 = vsel %vm2412, %v1474, %v2668
  %v2925 = vsel %vm2413, %v1477, %v2669
  %v2926 = vsel %vm2414, %v1482, %v2670
  %v2927 = vsel %vm2415, %v1485, %v2671
  %v2928 = vsel %vm2416, %v1490, %v2672
  %v2929 = vsel %vm2417, %v1493, %v2673
  %v2930 = vsel %vm2418, %v1498, %v2674
  %v2931 = vsel %vm2419, %v1501, %v2675
  %v2932 = vsel %vm2420, %v1506, %v2676
  %v2933 = vsel %vm2421, %v1509, %v2677
  %v2934 = vsel %vm2422, %v1514, %v2678
  %v2935 = vsel %vm2423, %v1517, %v2679
  %v2936 = vsel %vm2424, %v1522, %v2680
  %v2937 = vsel %vm2425, %v1525, %v2681
  %v2938 = vsel %vm2426, %v1530, %v2682
  %v2939 = vsel %vm2427, %v1533, %v2683
  %v2940 = vsel %vm2428, %v1538, %v2684
  %v2941 = vsel %vm2429, %v1541, %v2685
  %v2942 = vsel %vm2430, %v1546, %v2686
  %v2943 = vsel %vm2431, %v1549, %v2687
  %v2944 = vsel %vm2432, %v1554, %v2688
  %v2945 = vsel %vm2433, %v1557, %v2689
  %v2946 = vsel %vm2434, %v1562, %v2690
  %v2947 = vsel %vm2435, %v1565, %v2691
  %v2948 = vsel %vm2436, %v1570, %v2692
  %v2949 = vsel %vm2437, %v1573, %v2693
  %v2950 = vsel %vm2438, %v1578, %v2694
  %v2951 = vsel %vm2439, %v1581, %v2695
  %v2952 = vsel %vm2440, %v1586, %v2696
  %v2953 = vsel %vm2441, %v1589, %v2697
  %v2954 = vsel %vm2442, %v1594, %v2698
  %v2955 = vsel %vm2443, %v1597, %v2699
  %v2956 = vsel %vm2444, %v1602, %v2700
  %v2957 = vsel %vm2445, %v1605, %v2701
  %v2958 = vsel %vm2446, %v1610, %v2702
  %v2959 = vsel %vm2447, %v1613, %v2703
  %v2960 = vsel %vm2448, %v1618, %v2704
  %v2961 = vsel %vm2449, %v1621, %v2705
  %v2962 = vsel %vm2450, %v1626, %v2706
  %v2963 = vsel %vm2451, %v1629, %v2707
  %v2964 = vsel %vm2452, %v1634, %v2708
  %v2965 = vsel %vm2453, %v1637, %v2709
  %v2966 = vsel %vm2454, %v1642, %v2710
  %v2967 = vsel %vm2455, %v1645, %v2711
  %v2968 = vsel %vm2456, %v1650, %v2712
  %v2969 = vsel %vm2457, %v1653, %v2713
  %v2970 = vsel %vm2458, %v1658, %v2714
  %v2971 = vsel %vm2459, %v1661, %v2715
  %v2972 = vsel %vm2460, %v1666, %v2716
  %v2973 = vsel %vm2461, %v1669, %v2717
  %v2974 = vsel %vm2462, %v1674, %v2718
  %v2975 = vsel %vm2463, %v1677, %v2719
  %v2976 = vsel %vm2464, %v1682, %v2720
  %v2977 = vsel %vm2465, %v1685, %v2721
  %v2978 = vsel %vm2466, %v1690, %v2722
  %v2979 = vsel %vm2467, %v1693, %v2723
  %v2980 = vsel %vm2468, %v1698, %v2724
  %v2981 = vsel %vm2469, %v1701, %v2725
  %v2982 = vsel %vm2470, %v1706, %v2726
  %v2983 = vsel %vm2471, %v1709, %v2727
  %v2984 = vsel %vm2472, %v1714, %v2728
  %v2985 = vsel %vm2473, %v1717, %v2729
  %v2986 = vsel %vm2474, %v1722, %v2730
  %v2987 = vsel %vm2475, %v1725, %v2731
  %v2988 = vsel %vm2476, %v1730, %v2732
  %v2989 = vsel %vm2477, %v1733, %v2733
  %v2990 = vsel %vm2478, %v1738, %v2734
  %v2991 = vsel %vm2479, %v1741, %v2735
  %v2992 = vsel %vm2480, %v1746, %v2736
  %v2993 = vsel %vm2481, %v1749, %v2737
  %v2994 = vsel %vm2482, %v1754, %v2738
  %v2995 = vsel %vm2483, %v1757, %v2739
  %v2996 = vsel %vm2484, %v1762, %v2740
  %v2997 = vsel %vm2485, %v1765, %v2741
  %v2998 = vsel %vm2486, %v1770, %v2742
  %v2999 = vsel %vm2487, %v1773, %v2743
  %v3000 = vsel %vm2488, %v1778, %v2744
  %v3001 = vsel %vm2489, %v1781, %v2745
  %v3002 = vsel %vm2490, %v1786, %v2746
  %v3003 = vsel %vm2491, %v1789, %v2747
  %v3004 = vsel %vm2492, %v1794, %v2748
  %v3005 = vsel %vm2493, %v1797, %v2749
  %v3006 = vsel %vm2494, %v1802, %v2750
  %v3007 = vsel %vm2495, %v1805, %v2751
  %v3008 = vsel %vm2496, %v1810, %v2752
  %v3009 = vsel %vm2497, %v1813, %v2753
  %v3010 = vsel %vm2498, %v1818, %v2754
  %v3011 = vsel %vm2499, %v1821, %v2755
  %v3012 = vsel %vm2500, %v1826, %v2756
  %v3013 = vsel %vm2501, %v1829, %v2757
  %v3014 = vsel %vm2502, %v1834, %v2758
  %v3015 = vsel %vm2503, %v1837, %v2759
  %v3016 = vsel %vm2504, %v1842, %v2760
  %v3017 = vsel %vm2505, %v1845, %v2761
  %v3018 = vsel %vm2506, %v1850, %v2762
  %v3019 = vsel %vm2507, %v1853, %v2763
  %v3020 = vsel %vm2508, %v1858, %v2764
  %v3021 = vsel %vm2509, %v1861, %v2765
  %v3022 = vsel %vm2510, %v1866, %v2766
  %v3023 = vsel %vm2511, %v1869, %v2767
  %v3024 = vsel %vm2512, %v1874, %v2768
  %v3025 = vsel %vm2513, %v1877, %v2769
  %v3026 = vsel %vm2514, %v1882, %v2770
  %v3027 = vsel %vm2515, %v1885, %v2771
  %v3028 = vsel %vm2516, %v1890, %v2772
  %v3029 = vsel %vm2517, %v1893, %v2773
  %v3030 = vsel %vm2518, %v1898, %v2774
  %v3031 = vsel %vm2519, %v1901, %v2775
  %v3032 = vsel %vm2520, %v1906, %v2776
  %v3033 = vsel %vm2521, %v1909, %v2777
  %v3034 = vsel %vm2522, %v1914, %v2778
  %v3035 = vsel %vm2523, %v1917, %v2779
  %v3036 = vsel %vm2524, %v1922, %v2780
  %v3037 = vsel %vm2525, %v1925, %v2781
  %v3038 = vsel %vm2526, %v1930, %v2782
  %v3039 = vsel %vm2527, %v1933, %v2783
  %v3040 = vsel %vm2528, %v1938, %v2784
  %v3041 = vsel %vm2529, %v1941, %v2785
  %v3042 = vsel %vm2530, %v1946, %v2786
  %v3043 = vsel %vm2531, %v1949, %v2787
  %v3044 = vsel %vm2532, %v1954, %v2788
  %v3045 = vsel %vm2533, %v1957, %v2789
  %v3046 = vsel %vm2534, %v1962, %v2790
  %v3047 = vsel %vm2535, %v1965, %v2791
  %v3048 = vsel %vm2536, %v1970, %v2792
  %v3049 = vsel %vm2537, %v1973, %v2793
  %v3050 = vsel %vm2538, %v1978, %v2794
  %v3051 = vsel %vm2539, %v1981, %v2795
  %v3052 = vsel %vm2540, %v1986, %v2796
  %v3053 = vsel %vm2541, %v1989, %v2797
  %v3054 = vsel %vm2542, %v1994, %v2798
  %v3055 = vsel %vm2543, %v1997, %v2799
  %v3056 = vsel %vm2544, %v2002, %v2800
  %v3057 = vsel %vm2545, %v2005, %v2801
  %v3058 = vsel %vm2546, %v2010, %v2802
  %v3059 = vsel %vm2547, %v2013, %v2803
  %v3060 = vsel %vm2548, %v2018, %v2804
  %v3061 = vsel %vm2549, %v2021, %v2805
  %v3062 = vsel %vm2550, %v2026, %v2806
  %v3063 = vsel %vm2551, %v2029, %v2807
  %v3064 = vsel %vm2552, %v2034, %v2808
  %v3065 = vsel %vm2553, %v2037, %v2809
  %v3066 = vsel %vm2554, %v2042, %v2810
  %v3067 = vsel %vm2555, %v2045, %v2811
  %v3068 = vsel %vm2556, %v2050, %v2812
  %v3069 = vsel %vm2557, %v2053, %v2813
  %v3070 = vsel %vm2558, %v2058, %v2814
  %v3071 = vsel %vm2559, %v2061, %v2815
  %v3072 = vsel %vm2560, %v2066, %v2816
  %v3073 = vsel %vm2561, %v2069, %v2817
  %v3074 = vsel %vm2562, %v2074, %v2818
  %v3075 = vsel %vm2563, %v2077, %v2819
  %v3076 = vsel %vm2564, %v2082, %v2820
  %v3077 = vsel %vm2565, %v2085, %v2821
  %v3078 = vsel %vm2566, %v2090, %v2822
  %v3079 = vsel %vm2567, %v2093, %v2823
  %v3080 = vsel %vm2568, %v2098, %v2824
  %v3081 = vsel %vm2569, %v2101, %v2825
  %v3082 = vsel %vm2570, %v2106, %v2826
  %v3083 = vsel %vm2571, %v2109, %v2827
  %v3084 = vsel %vm2572, %v2114, %v2828
  %v3085 = vsel %vm2573, %v2117, %v2829
  %v3086 = vsel %vm2574, %v2122, %v2830
  %v3087 = vsel %vm2575, %v2125, %v2831
  %v3088 = vsel %vm2576, %v2130, %v2832
  %v3089 = vsel %vm2577, %v2133, %v2833
  %v3090 = vsel %vm2578, %v2138, %v2834
  %v3091 = vsel %vm2579, %v2141, %v2835
  %v3092 = vsel %vm2580, %v2146, %v2836
  %v3093 = vsel %vm2581, %v2149, %v2837
  %v3094 = vsel %vm2582, %v2154, %v2838
  %v3095 = vsel %vm2583, %v2157, %v2839
  %v3096 = vsel %vm2584, %v2162, %v2840
  %v3097 = vsel %vm2585, %v2165, %v2841
  %v3098 = vsel %vm2586, %v2170, %v2842
  %v3099 = vsel %vm2587, %v2173, %v2843
  %v3100 = vsel %vm2588, %v2178, %v2844
  %v3101 = vsel %vm2589, %v2181, %v2845
  %v3102 = vsel %vm2590, %v2186, %v2846
  %v3103 = vsel %vm2591, %v2189, %v2847
  %v3104 = vsel %vm2592, %v2194, %v2848
  %v3105 = vsel %vm2593, %v2197, %v2849
  %v3106 = vsel %vm2594, %v2202, %v2850
  %v3107 = vsel %vm2595, %v2205, %v2851
  %v3108 = vsel %vm2596, %v2210, %v2852
  %v3109 = vsel %vm2597, %v2213, %v2853
  %v3110 = vsel %vm2598, %v2218, %v2854
  %v3111 = vsel %vm2599, %v2221, %v2855
  %v3112 = vsel %vm2600, %v2226, %v2856
  %v3113 = vsel %vm2601, %v2229, %v2857
  %v3114 = vsel %vm2602, %v2234, %v2858
  %v3115 = vsel %vm2603, %v2237, %v2859
  %v3116 = vsel %vm2604, %v2242, %v2860
  %v3117 = vsel %vm2605, %v2245, %v2861
  %v3118 = vsel %vm2606, %v2250, %v2862
  %v3119 = vsel %vm2607, %v2253, %v2863
  %v3120 = vsel %vm2608, %v2258, %v2864
  %v3121 = vsel %vm2609, %v2261, %v2865
  %v3122 = vsel %vm2610, %v2266, %v2866
  %v3123 = vsel %vm2611, %v2269, %v2867
  %v3124 = vsel %vm2612, %v2274, %v2868
  %v3125 = vsel %vm2613, %v2277, %v2869
  %v3126 = vsel %vm2614, %v2282, %v2870
  %v3127 = vsel %vm2615, %v2285, %v2871
  %v3128 = vsel %vm2616, %v2290, %v2872
  %v3129 = vsel %vm2617, %v2293, %v2873
  %v3130 = vsel %vm2618, %v2298, %v2874
  %v3131 = vsel %vm2619, %v2301, %v2875
  %v3132 = vsel %vm2620, %v2306, %v2876
  %v3133 = vsel %vm2621, %v2309, %v2877
  %v3134 = vsel %vm2622, %v2314, %v2878
  %v3135 = vsel %vm2623, %v2317, %v2879
  %v3136 = vsel %vm2624, %v2322, %v2880
  %v3137 = vsel %vm2625, %v2325, %v2881
  %v3138 = vsel %vm2626, %v2330, %v2882
  %v3139 = vsel %vm2627, %v2333, %v2883
  %v3140 = vsel %vm2628, %v2338, %v2884
  %v3141 = vsel %vm2629, %v2341, %v2885
  %v3142 = vsel %vm2630, %v2346, %v2886
  %v3143 = vsel %vm2631, %v2349, %v2887
  %v3144 = vsel %vm2632, %v2354, %v2888
  %v3145 = vsel %vm2633, %v2357, %v2889
  %v3146 = vsel %vm2634, %v2362, %v2890
  %v3147 = vsel %vm2635, %v2365, %v2891
  %v3148 = vsel %vm2636, %v2370, %v2892
  %v3149 = vsel %vm2637, %v2373, %v2893
  %v3150 = vsel %vm2638, %v2378, %v2894
  %v3151 = vsel %vm2639, %v2381, %v2895
  %v3152 = vpack.c.bf16 %v2897, %v2896
  %v3153 = vpack.c.bf16 %v2899, %v2898
  %v3154 = vpack.c.bf16 %v2901, %v2900
  %v3155 = vpack.c.bf16 %v2903, %v2902
  %v3156 = vpack.c.bf16 %v2905, %v2904
  %v3157 = vpack.c.bf16 %v2907, %v2906
  %v3158 = vpack.c.bf16 %v2909, %v2908
  %v3159 = vpack.c.bf16 %v2911, %v2910
  %v3160 = vpack.c.bf16 %v2913, %v2912
  %v3161 = vpack.c.bf16 %v2915, %v2914
  %v3162 = vpack.c.bf16 %v2917, %v2916
  %v3163 = vpack.c.bf16 %v2919, %v2918
  %v3164 = vpack.c.bf16 %v2921, %v2920
  %v3165 = vpack.c.bf16 %v2923, %v2922
  %v3166 = vpack.c.bf16 %v2925, %v2924
  %v3167 = vpack.c.bf16 %v2927, %v2926
  %v3168 = vpack.c.bf16 %v2929, %v2928
  %v3169 = vpack.c.bf16 %v2931, %v2930
  %v3170 = vpack.c.bf16 %v2933, %v2932
  %v3171 = vpack.c.bf16 %v2935, %v2934
  %v3172 = vpack.c.bf16 %v2937, %v2936
  %v3173 = vpack.c.bf16 %v2939, %v2938
  %v3174 = vpack.c.bf16 %v2941, %v2940
  %v3175 = vpack.c.bf16 %v2943, %v2942
  %v3176 = vpack.c.bf16 %v2945, %v2944
  %v3177 = vpack.c.bf16 %v2947, %v2946
  %v3178 = vpack.c.bf16 %v2949, %v2948
  %v3179 = vpack.c.bf16 %v2951, %v2950
  %v3180 = vpack.c.bf16 %v2953, %v2952
  %v3181 = vpack.c.bf16 %v2955, %v2954
  %v3182 = vpack.c.bf16 %v2957, %v2956
  %v3183 = vpack.c.bf16 %v2959, %v2958
  %v3184 = vpack.c.bf16 %v2961, %v2960
  %v3185 = vpack.c.bf16 %v2963, %v2962
  %v3186 = vpack.c.bf16 %v2965, %v2964
  %v3187 = vpack.c.bf16 %v2967, %v2966
  %v3188 = vpack.c.bf16 %v2969, %v2968
  %v3189 = vpack.c.bf16 %v2971, %v2970
  %v3190 = vpack.c.bf16 %v2973, %v2972
  %v3191 = vpack.c.bf16 %v2975, %v2974
  %v3192 = vpack.c.bf16 %v2977, %v2976
  %v3193 = vpack.c.bf16 %v2979, %v2978
  %v3194 = vpack.c.bf16 %v2981, %v2980
  %v3195 = vpack.c.bf16 %v2983, %v2982
  %v3196 = vpack.c.bf16 %v2985, %v2984
  %v3197 = vpack.c.bf16 %v2987, %v2986
  %v3198 = vpack.c.bf16 %v2989, %v2988
  %v3199 = vpack.c.bf16 %v2991, %v2990
  %v3200 = vpack.c.bf16 %v2993, %v2992
  %v3201 = vpack.c.bf16 %v2995, %v2994
  %v3202 = vpack.c.bf16 %v2997, %v2996
  %v3203 = vpack.c.bf16 %v2999, %v2998
  %v3204 = vpack.c.bf16 %v3001, %v3000
  %v3205 = vpack.c.bf16 %v3003, %v3002
  %v3206 = vpack.c.bf16 %v3005, %v3004
  %v3207 = vpack.c.bf16 %v3007, %v3006
  %v3208 = vpack.c.bf16 %v3009, %v3008
  %v3209 = vpack.c.bf16 %v3011, %v3010
  %v3210 = vpack.c.bf16 %v3013, %v3012
  %v3211 = vpack.c.bf16 %v3015, %v3014
  %v3212 = vpack.c.bf16 %v3017, %v3016
  %v3213 = vpack.c.bf16 %v3019, %v3018
  %v3214 = vpack.c.bf16 %v3021, %v3020
  %v3215 = vpack.c.bf16 %v3023, %v3022
  %v3216 = vpack.c.bf16 %v3025, %v3024
  %v3217 = vpack.c.bf16 %v3027, %v3026
  %v3218 = vpack.c.bf16 %v3029, %v3028
  %v3219 = vpack.c.bf16 %v3031, %v3030
  %v3220 = vpack.c.bf16 %v3033, %v3032
  %v3221 = vpack.c.bf16 %v3035, %v3034
  %v3222 = vpack.c.bf16 %v3037, %v3036
  %v3223 = vpack.c.bf16 %v3039, %v3038
  %v3224 = vpack.c.bf16 %v3041, %v3040
  %v3225 = vpack.c.bf16 %v3043, %v3042
  %v3226 = vpack.c.bf16 %v3045, %v3044
  %v3227 = vpack.c.bf16 %v3047, %v3046
  %v3228 = vpack.c.bf16 %v3049, %v3048
  %v3229 = vpack.c.bf16 %v3051, %v3050
  %v3230 = vpack.c.bf16 %v3053, %v3052
  %v3231 = vpack.c.bf16 %v3055, %v3054
  %v3232 = vpack.c.bf16 %v3057, %v3056
  %v3233 = vpack.c.bf16 %v3059, %v3058
  %v3234 = vpack.c.bf16 %v3061, %v3060
  %v3235 = vpack.c.bf16 %v3063, %v3062
  %v3236 = vpack.c.bf16 %v3065, %v3064
  %v3237 = vpack.c.bf16 %v3067, %v3066
  %v3238 = vpack.c.bf16 %v3069, %v3068
  %v3239 = vpack.c.bf16 %v3071, %v3070
  %v3240 = vpack.c.bf16 %v3073, %v3072
  %v3241 = vpack.c.bf16 %v3075, %v3074
  %v3242 = vpack.c.bf16 %v3077, %v3076
  %v3243 = vpack.c.bf16 %v3079, %v3078
  %v3244 = vpack.c.bf16 %v3081, %v3080
  %v3245 = vpack.c.bf16 %v3083, %v3082
  %v3246 = vpack.c.bf16 %v3085, %v3084
  %v3247 = vpack.c.bf16 %v3087, %v3086
  %v3248 = vpack.c.bf16 %v3089, %v3088
  %v3249 = vpack.c.bf16 %v3091, %v3090
  %v3250 = vpack.c.bf16 %v3093, %v3092
  %v3251 = vpack.c.bf16 %v3095, %v3094
  %v3252 = vpack.c.bf16 %v3097, %v3096
  %v3253 = vpack.c.bf16 %v3099, %v3098
  %v3254 = vpack.c.bf16 %v3101, %v3100
  %v3255 = vpack.c.bf16 %v3103, %v3102
  %v3256 = vpack.c.bf16 %v3105, %v3104
  %v3257 = vpack.c.bf16 %v3107, %v3106
  %v3258 = vpack.c.bf16 %v3109, %v3108
  %v3259 = vpack.c.bf16 %v3111, %v3110
  %v3260 = vpack.c.bf16 %v3113, %v3112
  %v3261 = vpack.c.bf16 %v3115, %v3114
  %v3262 = vpack.c.bf16 %v3117, %v3116
  %v3263 = vpack.c.bf16 %v3119, %v3118
  %v3264 = vpack.c.bf16 %v3121, %v3120
  %v3265 = vpack.c.bf16 %v3123, %v3122
  %v3266 = vpack.c.bf16 %v3125, %v3124
  %v3267 = vpack.c.bf16 %v3127, %v3126
  %v3268 = vpack.c.bf16 %v3129, %v3128
  %v3269 = vpack.c.bf16 %v3131, %v3130
  %v3270 = vpack.c.bf16 %v3133, %v3132
  %v3271 = vpack.c.bf16 %v3135, %v3134
  %v3272 = vpack.c.bf16 %v3137, %v3136
  %v3273 = vpack.c.bf16 %v3139, %v3138
  %v3274 = vpack.c.bf16 %v3141, %v3140
  %v3275 = vpack.c.bf16 %v3143, %v3142
  %v3276 = vpack.c.bf16 %v3145, %v3144
  %v3277 = vpack.c.bf16 %v3147, %v3146
  %v3278 = vpack.c.bf16 %v3149, %v3148
  %v3279 = vpack.c.bf16 %v3151, %v3150
  %v3408 = vunpack.c.l.b16 %v3152
  %v3409 = vunpack.c.h.b16 %v3152
  %v3410 = vunpack.c.l.b16 %v3153
  %v3411 = vunpack.c.h.b16 %v3153
  %v3412 = vunpack.c.l.b16 %v3154
  %v3413 = vunpack.c.h.b16 %v3154
  %v3414 = vunpack.c.l.b16 %v3155
  %v3415 = vunpack.c.h.b16 %v3155
  %v3416 = vunpack.c.l.b16 %v3156
  %v3417 = vunpack.c.h.b16 %v3156
  %v3418 = vunpack.c.l.b16 %v3157
  %v3419 = vunpack.c.h.b16 %v3157
  %v3420 = vunpack.c.l.b16 %v3158
  %v3421 = vunpack.c.h.b16 %v3158
  %v3422 = vunpack.c.l.b16 %v3159
  %v3423 = vunpack.c.h.b16 %v3159
  %v3424 = vunpack.c.l.b16 %v3160
  %v3425 = vunpack.c.h.b16 %v3160
  %v3426 = vunpack.c.l.b16 %v3161
  %v3427 = vunpack.c.h.b16 %v3161
  %v3428 = vunpack.c.l.b16 %v3162
  %v3429 = vunpack.c.h.b16 %v3162
  %v3430 = vunpack.c.l.b16 %v3163
  %v3431 = vunpack.c.h.b16 %v3163
  %v3432 = vunpack.c.l.b16 %v3164
  %v3433 = vunpack.c.h.b16 %v3164
  %v3434 = vunpack.c.l.b16 %v3165
  %v3435 = vunpack.c.h.b16 %v3165
  %v3436 = vunpack.c.l.b16 %v3166
  %v3437 = vunpack.c.h.b16 %v3166
  %v3438 = vunpack.c.l.b16 %v3167
  %v3439 = vunpack.c.h.b16 %v3167
  %v3440 = vunpack.c.l.b16 %v3168
  %v3441 = vunpack.c.h.b16 %v3168
  %v3442 = vunpack.c.l.b16 %v3169
  %v3443 = vunpack.c.h.b16 %v3169
  %v3444 = vunpack.c.l.b16 %v3170
  %v3445 = vunpack.c.h.b16 %v3170
  %v3446 = vunpack.c.l.b16 %v3171
  %v3447 = vunpack.c.h.b16 %v3171
  %v3448 = vunpack.c.l.b16 %v3172
  %v3449 = vunpack.c.h.b16 %v3172
  %v3450 = vunpack.c.l.b16 %v3173
  %v3451 = vunpack.c.h.b16 %v3173
  %v3452 = vunpack.c.l.b16 %v3174
  %v3453 = vunpack.c.h.b16 %v3174
  %v3454 = vunpack.c.l.b16 %v3175
  %v3455 = vunpack.c.h.b16 %v3175
  %v3456 = vunpack.c.l.b16 %v3176
  %v3457 = vunpack.c.h.b16 %v3176
  %v3458 = vunpack.c.l.b16 %v3177
  %v3459 = vunpack.c.h.b16 %v3177
  %v3460 = vunpack.c.l.b16 %v3178
  %v3461 = vunpack.c.h.b16 %v3178
  %v3462 = vunpack.c.l.b16 %v3179
  %v3463 = vunpack.c.h.b16 %v3179
  %v3464 = vunpack.c.l.b16 %v3180
  %v3465 = vunpack.c.h.b16 %v3180
  %v3466 = vunpack.c.l.b16 %v3181
  %v3467 = vunpack.c.h.b16 %v3181
  %v3468 = vunpack.c.l.b16 %v3182
  %v3469 = vunpack.c.h.b16 %v3182
  %v3470 = vunpack.c.l.b16 %v3183
  %v3471 = vunpack.c.h.b16 %v3183
  %v3472 = vunpack.c.l.b16 %v3184
  %v3473 = vunpack.c.h.b16 %v3184
  %v3474 = vunpack.c.l.b16 %v3185
  %v3475 = vunpack.c.h.b16 %v3185
  %v3476 = vunpack.c.l.b16 %v3186
  %v3477 = vunpack.c.h.b16 %v3186
  %v3478 = vunpack.c.l.b16 %v3187
  %v3479 = vunpack.c.h.b16 %v3187
  %v3480 = vunpack.c.l.b16 %v3188
  %v3481 = vunpack.c.h.b16 %v3188
  %v3482 = vunpack.c.l.b16 %v3189
  %v3483 = vunpack.c.h.b16 %v3189
  %v3484 = vunpack.c.l.b16 %v3190
  %v3485 = vunpack.c.h.b16 %v3190
  %v3486 = vunpack.c.l.b16 %v3191
  %v3487 = vunpack.c.h.b16 %v3191
  %v3488 = vunpack.c.l.b16 %v3192
  %v3489 = vunpack.c.h.b16 %v3192
  %v3490 = vunpack.c.l.b16 %v3193
  %v3491 = vunpack.c.h.b16 %v3193
  %v3492 = vunpack.c.l.b16 %v3194
  %v3493 = vunpack.c.h.b16 %v3194
  %v3494 = vunpack.c.l.b16 %v3195
  %v3495 = vunpack.c.h.b16 %v3195
  %v3496 = vunpack.c.l.b16 %v3196
  %v3497 = vunpack.c.h.b16 %v3196
  %v3498 = vunpack.c.l.b16 %v3197
  %v3499 = vunpack.c.h.b16 %v3197
  %v3500 = vunpack.c.l.b16 %v3198
  %v3501 = vunpack.c.h.b16 %v3198
  %v3502 = vunpack.c.l.b16 %v3199
  %v3503 = vunpack.c.h.b16 %v3199
  %v3504 = vunpack.c.l.b16 %v3200
  %v3505 = vunpack.c.h.b16 %v3200
  %v3506 = vunpack.c.l.b16 %v3201
  %v3507 = vunpack.c.h.b16 %v3201
  %v3508 = vunpack.c.l.b16 %v3202
  %v3509 = vunpack.c.h.b16 %v3202
  %v3510 = vunpack.c.l.b16 %v3203
  %v3511 = vunpack.c.h.b16 %v3203
  %v3512 = vunpack.c.l.b16 %v3204
  %v3513 = vunpack.c.h.b16 %v3204
  %v3514 = vunpack.c.l.b16 %v3205
  %v3515 = vunpack.c.h.b16 %v3205
  %v3516 = vunpack.c.l.b16 %v3206
  %v3517 = vunpack.c.h.b16 %v3206
  %v3518 = vunpack.c.l.b16 %v3207
  %v3519 = vunpack.c.h.b16 %v3207
  %v3520 = vunpack.c.l.b16 %v3208
  %v3521 = vunpack.c.h.b16 %v3208
  %v3522 = vunpack.c.l.b16 %v3209
  %v3523 = vunpack.c.h.b16 %v3209
  %v3524 = vunpack.c.l.b16 %v3210
  %v3525 = vunpack.c.h.b16 %v3210
  %v3526 = vunpack.c.l.b16 %v3211
  %v3527 = vunpack.c.h.b16 %v3211
  %v3528 = vunpack.c.l.b16 %v3212
  %v3529 = vunpack.c.h.b16 %v3212
  %v3530 = vunpack.c.l.b16 %v3213
  %v3531 = vunpack.c.h.b16 %v3213
  %v3532 = vunpack.c.l.b16 %v3214
  %v3533 = vunpack.c.h.b16 %v3214
  %v3534 = vunpack.c.l.b16 %v3215
  %v3535 = vunpack.c.h.b16 %v3215
  %v3536 = vunpack.c.l.b16 %v3216
  %v3537 = vunpack.c.h.b16 %v3216
  %v3538 = vunpack.c.l.b16 %v3217
  %v3539 = vunpack.c.h.b16 %v3217
  %v3540 = vunpack.c.l.b16 %v3218
  %v3541 = vunpack.c.h.b16 %v3218
  %v3542 = vunpack.c.l.b16 %v3219
  %v3543 = vunpack.c.h.b16 %v3219
  %v3544 = vunpack.c.l.b16 %v3220
  %v3545 = vunpack.c.h.b16 %v3220
  %v3546 = vunpack.c.l.b16 %v3221
  %v3547 = vunpack.c.h.b16 %v3221
  %v3548 = vunpack.c.l.b16 %v3222
  %v3549 = vunpack.c.h.b16 %v3222
  %v3550 = vunpack.c.l.b16 %v3223
  %v3551 = vunpack.c.h.b16 %v3223
  %v3552 = vunpack.c.l.b16 %v3224
  %v3553 = vunpack.c.h.b16 %v3224
  %v3554 = vunpack.c.l.b16 %v3225
  %v3555 = vunpack.c.h.b16 %v3225
  %v3556 = vunpack.c.l.b16 %v3226
  %v3557 = vunpack.c.h.b16 %v3226
  %v3558 = vunpack.c.l.b16 %v3227
  %v3559 = vunpack.c.h.b16 %v3227
  %v3560 = vunpack.c.l.b16 %v3228
  %v3561 = vunpack.c.h.b16 %v3228
  %v3562 = vunpack.c.l.b16 %v3229
  %v3563 = vunpack.c.h.b16 %v3229
  %v3564 = vunpack.c.l.b16 %v3230
  %v3565 = vunpack.c.h.b16 %v3230
  %v3566 = vunpack.c.l.b16 %v3231
  %v3567 = vunpack.c.h.b16 %v3231
  %v3568 = vunpack.c.l.b16 %v3232
  %v3569 = vunpack.c.h.b16 %v3232
  %v3570 = vunpack.c.l.b16 %v3233
  %v3571 = vunpack.c.h.b16 %v3233
  %v3572 = vunpack.c.l.b16 %v3234
  %v3573 = vunpack.c.h.b16 %v3234
  %v3574 = vunpack.c.l.b16 %v3235
  %v3575 = vunpack.c.h.b16 %v3235
  %v3576 = vunpack.c.l.b16 %v3236
  %v3577 = vunpack.c.h.b16 %v3236
  %v3578 = vunpack.c.l.b16 %v3237
  %v3579 = vunpack.c.h.b16 %v3237
  %v3580 = vunpack.c.l.b16 %v3238
  %v3581 = vunpack.c.h.b16 %v3238
  %v3582 = vunpack.c.l.b16 %v3239
  %v3583 = vunpack.c.h.b16 %v3239
  %v3584 = vunpack.c.l.b16 %v3240
  %v3585 = vunpack.c.h.b16 %v3240
  %v3586 = vunpack.c.l.b16 %v3241
  %v3587 = vunpack.c.h.b16 %v3241
  %v3588 = vunpack.c.l.b16 %v3242
  %v3589 = vunpack.c.h.b16 %v3242
  %v3590 = vunpack.c.l.b16 %v3243
  %v3591 = vunpack.c.h.b16 %v3243
  %v3592 = vunpack.c.l.b16 %v3244
  %v3593 = vunpack.c.h.b16 %v3244
  %v3594 = vunpack.c.l.b16 %v3245
  %v3595 = vunpack.c.h.b16 %v3245
  %v3596 = vunpack.c.l.b16 %v3246
  %v3597 = vunpack.c.h.b16 %v3246
  %v3598 = vunpack.c.l.b16 %v3247
  %v3599 = vunpack.c.h.b16 %v3247
  %v3600 = vunpack.c.l.b16 %v3248
  %v3601 = vunpack.c.h.b16 %v3248
  %v3602 = vunpack.c.l.b16 %v3249
  %v3603 = vunpack.c.h.b16 %v3249
  %v3604 = vunpack.c.l.b16 %v3250
  %v3605 = vunpack.c.h.b16 %v3250
  %v3606 = vunpack.c.l.b16 %v3251
  %v3607 = vunpack.c.h.b16 %v3251
  %v3608 = vunpack.c.l.b16 %v3252
  %v3609 = vunpack.c.h.b16 %v3252
  %v3610 = vunpack.c.l.b16 %v3253
  %v3611 = vunpack.c.h.b16 %v3253
  %v3612 = vunpack.c.l.b16 %v3254
  %v3613 = vunpack.c.h.b16 %v3254
  %v3614 = vunpack.c.l.b16 %v3255
  %v3615 = vunpack.c.h.b16 %v3255
  %v3616 = vunpack.c.l.b16 %v3256
  %v3617 = vunpack.c.h.b16 %v3256
  %v3618 = vunpack.c.l.b16 %v3257
  %v3619 = vunpack.c.h.b16 %v3257
  %v3620 = vunpack.c.l.b16 %v3258
  %v3621 = vunpack.c.h.b16 %v3258
  %v3622 = vunpack.c.l.b16 %v3259
  %v3623 = vunpack.c.h.b16 %v3259
  %v3624 = vunpack.c.l.b16 %v3260
  %v3625 = vunpack.c.h.b16 %v3260
  %v3626 = vunpack.c.l.b16 %v3261
  %v3627 = vunpack.c.h.b16 %v3261
  %v3628 = vunpack.c.l.b16 %v3262
  %v3629 = vunpack.c.h.b16 %v3262
  %v3630 = vunpack.c.l.b16 %v3263
  %v3631 = vunpack.c.h.b16 %v3263
  %v3632 = vunpack.c.l.b16 %v3264
  %v3633 = vunpack.c.h.b16 %v3264
  %v3634 = vunpack.c.l.b16 %v3265
  %v3635 = vunpack.c.h.b16 %v3265
  %v3636 = vunpack.c.l.b16 %v3266
  %v3637 = vunpack.c.h.b16 %v3266
  %v3638 = vunpack.c.l.b16 %v3267
  %v3639 = vunpack.c.h.b16 %v3267
  %v3640 = vunpack.c.l.b16 %v3268
  %v3641 = vunpack.c.h.b16 %v3268
  %v3642 = vunpack.c.l.b16 %v3269
  %v3643 = vunpack.c.h.b16 %v3269
  %v3644 = vunpack.c.l.b16 %v3270
  %v3645 = vunpack.c.h.b16 %v3270
  %v3646 = vunpack.c.l.b16 %v3271
  %v3647 = vunpack.c.h.b16 %v3271
  %v3648 = vunpack.c.l.b16 %v3272
  %v3649 = vunpack.c.h.b16 %v3272
  %v3650 = vunpack.c.l.b16 %v3273
  %v3651 = vunpack.c.h.b16 %v3273
  %v3652 = vunpack.c.l.b16 %v3274
  %v3653 = vunpack.c.h.b16 %v3274
  %v3654 = vunpack.c.l.b16 %v3275
  %v3655 = vunpack.c.h.b16 %v3275
  %v3656 = vunpack.c.l.b16 %v3276
  %v3657 = vunpack.c.h.b16 %v3276
  %v3658 = vunpack.c.l.b16 %v3277
  %v3659 = vunpack.c.h.b16 %v3277
  %v3660 = vunpack.c.l.b16 %v3278
  %v3661 = vunpack.c.h.b16 %v3278
  %v3662 = vunpack.c.l.b16 %v3279
  %v3663 = vunpack.c.h.b16 %v3279
  %v3664 = vpack.c.b16 %v3408, %v3408
  %v3665 = vpack.c.b16 %v3409, %v3409
  %v3666 = vpack.c.b16 %v3410, %v3410
  %v3667 = vpack.c.b16 %v3411, %v3411
  %v3668 = vpack.c.b16 %v3412, %v3412
  %v3669 = vpack.c.b16 %v3413, %v3413
  %v3670 = vpack.c.b16 %v3414, %v3414
  %v3671 = vpack.c.b16 %v3415, %v3415
  %v3672 = vpack.c.b16 %v3416, %v3416
  %v3673 = vpack.c.b16 %v3417, %v3417
  %v3674 = vpack.c.b16 %v3418, %v3418
  %v3675 = vpack.c.b16 %v3419, %v3419
  %v3676 = vpack.c.b16 %v3420, %v3420
  %v3677 = vpack.c.b16 %v3421, %v3421
  %v3678 = vpack.c.b16 %v3422, %v3422
  %v3679 = vpack.c.b16 %v3423, %v3423
  %v3680 = vpack.c.b16 %v3424, %v3424
  %v3681 = vpack.c.b16 %v3425, %v3425
  %v3682 = vpack.c.b16 %v3426, %v3426
  %v3683 = vpack.c.b16 %v3427, %v3427
  %v3684 = vpack.c.b16 %v3428, %v3428
  %v3685 = vpack.c.b16 %v3429, %v3429
  %v3686 = vpack.c.b16 %v3430, %v3430
  %v3687 = vpack.c.b16 %v3431, %v3431
  %v3688 = vpack.c.b16 %v3432, %v3432
  %v3689 = vpack.c.b16 %v3433, %v3433
  %v3690 = vpack.c.b16 %v3434, %v3434
  %v3691 = vpack.c.b16 %v3435, %v3435
  %v3692 = vpack.c.b16 %v3436, %v3436
  %v3693 = vpack.c.b16 %v3437, %v3437
  %v3694 = vpack.c.b16 %v3438, %v3438
  %v3695 = vpack.c.b16 %v3439, %v3439
  %v3696 = vpack.c.b16 %v3440, %v3440
  %v3697 = vpack.c.b16 %v3441, %v3441
  %v3698 = vpack.c.b16 %v3442, %v3442
  %v3699 = vpack.c.b16 %v3443, %v3443
  %v3700 = vpack.c.b16 %v3444, %v3444
  %v3701 = vpack.c.b16 %v3445, %v3445
  %v3702 = vpack.c.b16 %v3446, %v3446
  %v3703 = vpack.c.b16 %v3447, %v3447
  %v3704 = vpack.c.b16 %v3448, %v3448
  %v3705 = vpack.c.b16 %v3449, %v3449
  %v3706 = vpack.c.b16 %v3450, %v3450
  %v3707 = vpack.c.b16 %v3451, %v3451
  %v3708 = vpack.c.b16 %v3452, %v3452
  %v3709 = vpack.c.b16 %v3453, %v3453
  %v3710 = vpack.c.b16 %v3454, %v3454
  %v3711 = vpack.c.b16 %v3455, %v3455
  %v3712 = vpack.c.b16 %v3456, %v3456
  %v3713 = vpack.c.b16 %v3457, %v3457
  %v3714 = vpack.c.b16 %v3458, %v3458
  %v3715 = vpack.c.b16 %v3459, %v3459
  %v3716 = vpack.c.b16 %v3460, %v3460
  %v3717 = vpack.c.b16 %v3461, %v3461
  %v3718 = vpack.c.b16 %v3462, %v3462
  %v3719 = vpack.c.b16 %v3463, %v3463
  %v3720 = vpack.c.b16 %v3464, %v3464
  %v3721 = vpack.c.b16 %v3465, %v3465
  %v3722 = vpack.c.b16 %v3466, %v3466
  %v3723 = vpack.c.b16 %v3467, %v3467
  %v3724 = vpack.c.b16 %v3468, %v3468
  %v3725 = vpack.c.b16 %v3469, %v3469
  %v3726 = vpack.c.b16 %v3470, %v3470
  %v3727 = vpack.c.b16 %v3471, %v3471
  %v3728 = vpack.c.b16 %v3472, %v3472
  %v3729 = vpack.c.b16 %v3473, %v3473
  %v3730 = vpack.c.b16 %v3474, %v3474
  %v3731 = vpack.c.b16 %v3475, %v3475
  %v3732 = vpack.c.b16 %v3476, %v3476
  %v3733 = vpack.c.b16 %v3477, %v3477
  %v3734 = vpack.c.b16 %v3478, %v3478
  %v3735 = vpack.c.b16 %v3479, %v3479
  %v3736 = vpack.c.b16 %v3480, %v3480
  %v3737 = vpack.c.b16 %v3481, %v3481
  %v3738 = vpack.c.b16 %v3482, %v3482
  %v3739 = vpack.c.b16 %v3483, %v3483
  %v3740 = vpack.c.b16 %v3484, %v3484
  %v3741 = vpack.c.b16 %v3485, %v3485
  %v3742 = vpack.c.b16 %v3486, %v3486
  %v3743 = vpack.c.b16 %v3487, %v3487
  %v3744 = vpack.c.b16 %v3488, %v3488
  %v3745 = vpack.c.b16 %v3489, %v3489
  %v3746 = vpack.c.b16 %v3490, %v3490
  %v3747 = vpack.c.b16 %v3491, %v3491
  %v3748 = vpack.c.b16 %v3492, %v3492
  %v3749 = vpack.c.b16 %v3493, %v3493
  %v3750 = vpack.c.b16 %v3494, %v3494
  %v3751 = vpack.c.b16 %v3495, %v3495
  %v3752 = vpack.c.b16 %v3496, %v3496
  %v3753 = vpack.c.b16 %v3497, %v3497
  %v3754 = vpack.c.b16 %v3498, %v3498
  %v3755 = vpack.c.b16 %v3499, %v3499
  %v3756 = vpack.c.b16 %v3500, %v3500
  %v3757 = vpack.c.b16 %v3501, %v3501
  %v3758 = vpack.c.b16 %v3502, %v3502
  %v3759 = vpack.c.b16 %v3503, %v3503
  %v3760 = vpack.c.b16 %v3504, %v3504
  %v3761 = vpack.c.b16 %v3505, %v3505
  %v3762 = vpack.c.b16 %v3506, %v3506
  %v3763 = vpack.c.b16 %v3507, %v3507
  %v3764 = vpack.c.b16 %v3508, %v3508
  %v3765 = vpack.c.b16 %v3509, %v3509
  %v3766 = vpack.c.b16 %v3510, %v3510
  %v3767 = vpack.c.b16 %v3511, %v3511
  %v3768 = vpack.c.b16 %v3512, %v3512
  %v3769 = vpack.c.b16 %v3513, %v3513
  %v3770 = vpack.c.b16 %v3514, %v3514
  %v3771 = vpack.c.b16 %v3515, %v3515
  %v3772 = vpack.c.b16 %v3516, %v3516
  %v3773 = vpack.c.b16 %v3517, %v3517
  %v3774 = vpack.c.b16 %v3518, %v3518
  %v3775 = vpack.c.b16 %v3519, %v3519
  %v3776 = vpack.c.b16 %v3520, %v3520
  %v3777 = vpack.c.b16 %v3521, %v3521
  %v3778 = vpack.c.b16 %v3522, %v3522
  %v3779 = vpack.c.b16 %v3523, %v3523
  %v3780 = vpack.c.b16 %v3524, %v3524
  %v3781 = vpack.c.b16 %v3525, %v3525
  %v3782 = vpack.c.b16 %v3526, %v3526
  %v3783 = vpack.c.b16 %v3527, %v3527
  %v3784 = vpack.c.b16 %v3528, %v3528
  %v3785 = vpack.c.b16 %v3529, %v3529
  %v3786 = vpack.c.b16 %v3530, %v3530
  %v3787 = vpack.c.b16 %v3531, %v3531
  %v3788 = vpack.c.b16 %v3532, %v3532
  %v3789 = vpack.c.b16 %v3533, %v3533
  %v3790 = vpack.c.b16 %v3534, %v3534
  %v3791 = vpack.c.b16 %v3535, %v3535
  %v3792 = vpack.c.b16 %v3536, %v3536
  %v3793 = vpack.c.b16 %v3537, %v3537
  %v3794 = vpack.c.b16 %v3538, %v3538
  %v3795 = vpack.c.b16 %v3539, %v3539
  %v3796 = vpack.c.b16 %v3540, %v3540
  %v3797 = vpack.c.b16 %v3541, %v3541
  %v3798 = vpack.c.b16 %v3542, %v3542
  %v3799 = vpack.c.b16 %v3543, %v3543
  %v3800 = vpack.c.b16 %v3544, %v3544
  %v3801 = vpack.c.b16 %v3545, %v3545
  %v3802 = vpack.c.b16 %v3546, %v3546
  %v3803 = vpack.c.b16 %v3547, %v3547
  %v3804 = vpack.c.b16 %v3548, %v3548
  %v3805 = vpack.c.b16 %v3549, %v3549
  %v3806 = vpack.c.b16 %v3550, %v3550
  %v3807 = vpack.c.b16 %v3551, %v3551
  %v3808 = vpack.c.b16 %v3552, %v3552
  %v3809 = vpack.c.b16 %v3553, %v3553
  %v3810 = vpack.c.b16 %v3554, %v3554
  %v3811 = vpack.c.b16 %v3555, %v3555
  %v3812 = vpack.c.b16 %v3556, %v3556
  %v3813 = vpack.c.b16 %v3557, %v3557
  %v3814 = vpack.c.b16 %v3558, %v3558
  %v3815 = vpack.c.b16 %v3559, %v3559
  %v3816 = vpack.c.b16 %v3560, %v3560
  %v3817 = vpack.c.b16 %v3561, %v3561
  %v3818 = vpack.c.b16 %v3562, %v3562
  %v3819 = vpack.c.b16 %v3563, %v3563
  %v3820 = vpack.c.b16 %v3564, %v3564
  %v3821 = vpack.c.b16 %v3565, %v3565
  %v3822 = vpack.c.b16 %v3566, %v3566
  %v3823 = vpack.c.b16 %v3567, %v3567
  %v3824 = vpack.c.b16 %v3568, %v3568
  %v3825 = vpack.c.b16 %v3569, %v3569
  %v3826 = vpack.c.b16 %v3570, %v3570
  %v3827 = vpack.c.b16 %v3571, %v3571
  %v3828 = vpack.c.b16 %v3572, %v3572
  %v3829 = vpack.c.b16 %v3573, %v3573
  %v3830 = vpack.c.b16 %v3574, %v3574
  %v3831 = vpack.c.b16 %v3575, %v3575
  %v3832 = vpack.c.b16 %v3576, %v3576
  %v3833 = vpack.c.b16 %v3577, %v3577
  %v3834 = vpack.c.b16 %v3578, %v3578
  %v3835 = vpack.c.b16 %v3579, %v3579
  %v3836 = vpack.c.b16 %v3580, %v3580
  %v3837 = vpack.c.b16 %v3581, %v3581
  %v3838 = vpack.c.b16 %v3582, %v3582
  %v3839 = vpack.c.b16 %v3583, %v3583
  %v3840 = vpack.c.b16 %v3584, %v3584
  %v3841 = vpack.c.b16 %v3585, %v3585
  %v3842 = vpack.c.b16 %v3586, %v3586
  %v3843 = vpack.c.b16 %v3587, %v3587
  %v3844 = vpack.c.b16 %v3588, %v3588
  %v3845 = vpack.c.b16 %v3589, %v3589
  %v3846 = vpack.c.b16 %v3590, %v3590
  %v3847 = vpack.c.b16 %v3591, %v3591
  %v3848 = vpack.c.b16 %v3592, %v3592
  %v3849 = vpack.c.b16 %v3593, %v3593
  %v3850 = vpack.c.b16 %v3594, %v3594
  %v3851 = vpack.c.b16 %v3595, %v3595
  %v3852 = vpack.c.b16 %v3596, %v3596
  %v3853 = vpack.c.b16 %v3597, %v3597
  %v3854 = vpack.c.b16 %v3598, %v3598
  %v3855 = vpack.c.b16 %v3599, %v3599
  %v3856 = vpack.c.b16 %v3600, %v3600
  %v3857 = vpack.c.b16 %v3601, %v3601
  %v3858 = vpack.c.b16 %v3602, %v3602
  %v3859 = vpack.c.b16 %v3603, %v3603
  %v3860 = vpack.c.b16 %v3604, %v3604
  %v3861 = vpack.c.b16 %v3605, %v3605
  %v3862 = vpack.c.b16 %v3606, %v3606
  %v3863 = vpack.c.b16 %v3607, %v3607
  %v3864 = vpack.c.b16 %v3608, %v3608
  %v3865 = vpack.c.b16 %v3609, %v3609
  %v3866 = vpack.c.b16 %v3610, %v3610
  %v3867 = vpack.c.b16 %v3611, %v3611
  %v3868 = vpack.c.b16 %v3612, %v3612
  %v3869 = vpack.c.b16 %v3613, %v3613
  %v3870 = vpack.c.b16 %v3614, %v3614
  %v3871 = vpack.c.b16 %v3615, %v3615
  %v3872 = vpack.c.b16 %v3616, %v3616
  %v3873 = vpack.c.b16 %v3617, %v3617
  %v3874 = vpack.c.b16 %v3618, %v3618
  %v3875 = vpack.c.b16 %v3619, %v3619
  %v3876 = vpack.c.b16 %v3620, %v3620
  %v3877 = vpack.c.b16 %v3621, %v3621
  %v3878 = vpack.c.b16 %v3622, %v3622
  %v3879 = vpack.c.b16 %v3623, %v3623
  %v3880 = vpack.c.b16 %v3624, %v3624
  %v3881 = vpack.c.b16 %v3625, %v3625
  %v3882 = vpack.c.b16 %v3626, %v3626
  %v3883 = vpack.c.b16 %v3627, %v3627
  %v3884 = vpack.c.b16 %v3628, %v3628
  %v3885 = vpack.c.b16 %v3629, %v3629
  %v3886 = vpack.c.b16 %v3630, %v3630
  %v3887 = vpack.c.b16 %v3631, %v3631
  %v3888 = vpack.c.b16 %v3632, %v3632
  %v3889 = vpack.c.b16 %v3633, %v3633
  %v3890 = vpack.c.b16 %v3634, %v3634
  %v3891 = vpack.c.b16 %v3635, %v3635
  %v3892 = vpack.c.b16 %v3636, %v3636
  %v3893 = vpack.c.b16 %v3637, %v3637
  %v3894 = vpack.c.b16 %v3638, %v3638
  %v3895 = vpack.c.b16 %v3639, %v3639
  %v3896 = vpack.c.b16 %v3640, %v3640
  %v3897 = vpack.c.b16 %v3641, %v3641
  %v3898 = vpack.c.b16 %v3642, %v3642
  %v3899 = vpack.c.b16 %v3643, %v3643
  %v3900 = vpack.c.b16 %v3644, %v3644
  %v3901 = vpack.c.b16 %v3645, %v3645
  %v3902 = vpack.c.b16 %v3646, %v3646
  %v3903 = vpack.c.b16 %v3647, %v3647
  %v3904 = vpack.c.b16 %v3648, %v3648
  %v3905 = vpack.c.b16 %v3649, %v3649
  %v3906 = vpack.c.b16 %v3650, %v3650
  %v3907 = vpack.c.b16 %v3651, %v3651
  %v3908 = vpack.c.b16 %v3652, %v3652
  %v3909 = vpack.c.b16 %v3653, %v3653
  %v3910 = vpack.c.b16 %v3654, %v3654
  %v3911 = vpack.c.b16 %v3655, %v3655
  %v3912 = vpack.c.b16 %v3656, %v3656
  %v3913 = vpack.c.b16 %v3657, %v3657
  %v3914 = vpack.c.b16 %v3658, %v3658
  %v3915 = vpack.c.b16 %v3659, %v3659
  %v3916 = vpack.c.b16 %v3660, %v3660
  %v3917 = vpack.c.b16 %v3661, %v3661
  %v3918 = vpack.c.b16 %v3662, %v3662
  %v3919 = vpack.c.b16 %v3663, %v3663
  %vm4176 = vcmask 125952
  %4177 = vst.msk [vmem:[%s3] sm:$0xf] %vm4176, %v3664
  %4178 = vst.msk [vmem:[%s3 + $0x4] sm:$0xf] %vm4176, %v3665
  %4179 = vst.msk [vmem:[%s3 + $0x8] sm:$0xf] %vm4176, %v3666
  %4180 = vst.msk [vmem:[%s3 + $0xc] sm:$0xf] %vm4176, %v3667
  %4181 = vst.msk [vmem:[%s3 + $0x10] sm:$0xf] %vm4176, %v3668
  %4182 = vst.msk [vmem:[%s3 + $0x14] sm:$0xf] %vm4176, %v3669
  %4183 = vst.msk [vmem:[%s3 + $0x18] sm:$0xf] %vm4176, %v3670
  %4184 = vst.msk [vmem:[%s3 + $0x1c] sm:$0xf] %vm4176, %v3671
  %4185 = vst.msk [vmem:[%s3 + $0x20] sm:$0xf] %vm4176, %v3672
  %4186 = vst.msk [vmem:[%s3 + $0x24] sm:$0xf] %vm4176, %v3673
  %4187 = vst.msk [vmem:[%s3 + $0x28] sm:$0xf] %vm4176, %v3674
  %4188 = vst.msk [vmem:[%s3 + $0x2c] sm:$0xf] %vm4176, %v3675
  %4189 = vst.msk [vmem:[%s3 + $0x30] sm:$0xf] %vm4176, %v3676
  %4190 = vst.msk [vmem:[%s3 + $0x34] sm:$0xf] %vm4176, %v3677
  %4191 = vst.msk [vmem:[%s3 + $0x38] sm:$0xf] %vm4176, %v3678
  %4192 = vst.msk [vmem:[%s3 + $0x3c] sm:$0xf] %vm4176, %v3679
  %4193 = vst.msk [vmem:[%s3 + $0x40] sm:$0xf] %vm4176, %v3680
  %4194 = vst.msk [vmem:[%s3 + $0x44] sm:$0xf] %vm4176, %v3681
  %4195 = vst.msk [vmem:[%s3 + $0x48] sm:$0xf] %vm4176, %v3682
  %4196 = vst.msk [vmem:[%s3 + $0x4c] sm:$0xf] %vm4176, %v3683
  %4197 = vst.msk [vmem:[%s3 + $0x50] sm:$0xf] %vm4176, %v3684
  %4198 = vst.msk [vmem:[%s3 + $0x54] sm:$0xf] %vm4176, %v3685
  %4199 = vst.msk [vmem:[%s3 + $0x58] sm:$0xf] %vm4176, %v3686
  %4200 = vst.msk [vmem:[%s3 + $0x5c] sm:$0xf] %vm4176, %v3687
  %4201 = vst.msk [vmem:[%s3 + $0x60] sm:$0xf] %vm4176, %v3688
  %4202 = vst.msk [vmem:[%s3 + $0x64] sm:$0xf] %vm4176, %v3689
  %4203 = vst.msk [vmem:[%s3 + $0x68] sm:$0xf] %vm4176, %v3690
  %4204 = vst.msk [vmem:[%s3 + $0x6c] sm:$0xf] %vm4176, %v3691
  %4205 = vst.msk [vmem:[%s3 + $0x70] sm:$0xf] %vm4176, %v3692
  %4206 = vst.msk [vmem:[%s3 + $0x74] sm:$0xf] %vm4176, %v3693
  %4207 = vst.msk [vmem:[%s3 + $0x78] sm:$0xf] %vm4176, %v3694
  %4208 = vst.msk [vmem:[%s3 + $0x7c] sm:$0xf] %vm4176, %v3695
  %4209 = vst.msk [vmem:[%s3 + $0x80] sm:$0xf] %vm4176, %v3696
  %4210 = vst.msk [vmem:[%s3 + $0x84] sm:$0xf] %vm4176, %v3697
  %4211 = vst.msk [vmem:[%s3 + $0x88] sm:$0xf] %vm4176, %v3698
  %4212 = vst.msk [vmem:[%s3 + $0x8c] sm:$0xf] %vm4176, %v3699
  %4213 = vst.msk [vmem:[%s3 + $0x90] sm:$0xf] %vm4176, %v3700
  %4214 = vst.msk [vmem:[%s3 + $0x94] sm:$0xf] %vm4176, %v3701
  %4215 = vst.msk [vmem:[%s3 + $0x98] sm:$0xf] %vm4176, %v3702
  %4216 = vst.msk [vmem:[%s3 + $0x9c] sm:$0xf] %vm4176, %v3703
  %4217 = vst.msk [vmem:[%s3 + $0xa0] sm:$0xf] %vm4176, %v3704
  %4218 = vst.msk [vmem:[%s3 + $0xa4] sm:$0xf] %vm4176, %v3705
  %4219 = vst.msk [vmem:[%s3 + $0xa8] sm:$0xf] %vm4176, %v3706
  %4220 = vst.msk [vmem:[%s3 + $0xac] sm:$0xf] %vm4176, %v3707
  %4221 = vst.msk [vmem:[%s3 + $0xb0] sm:$0xf] %vm4176, %v3708
  %4222 = vst.msk [vmem:[%s3 + $0xb4] sm:$0xf] %vm4176, %v3709
  %4223 = vst.msk [vmem:[%s3 + $0xb8] sm:$0xf] %vm4176, %v3710
  %4224 = vst.msk [vmem:[%s3 + $0xbc] sm:$0xf] %vm4176, %v3711
  %4225 = vst.msk [vmem:[%s3 + $0xc0] sm:$0xf] %vm4176, %v3712
  %4226 = vst.msk [vmem:[%s3 + $0xc4] sm:$0xf] %vm4176, %v3713
  %4227 = vst.msk [vmem:[%s3 + $0xc8] sm:$0xf] %vm4176, %v3714
  %4228 = vst.msk [vmem:[%s3 + $0xcc] sm:$0xf] %vm4176, %v3715
  %4229 = vst.msk [vmem:[%s3 + $0xd0] sm:$0xf] %vm4176, %v3716
  %4230 = vst.msk [vmem:[%s3 + $0xd4] sm:$0xf] %vm4176, %v3717
  %4231 = vst.msk [vmem:[%s3 + $0xd8] sm:$0xf] %vm4176, %v3718
  %4232 = vst.msk [vmem:[%s3 + $0xdc] sm:$0xf] %vm4176, %v3719
  %4233 = vst.msk [vmem:[%s3 + $0xe0] sm:$0xf] %vm4176, %v3720
  %4234 = vst.msk [vmem:[%s3 + $0xe4] sm:$0xf] %vm4176, %v3721
  %4235 = vst.msk [vmem:[%s3 + $0xe8] sm:$0xf] %vm4176, %v3722
  %4236 = vst.msk [vmem:[%s3 + $0xec] sm:$0xf] %vm4176, %v3723
  %4237 = vst.msk [vmem:[%s3 + $0xf0] sm:$0xf] %vm4176, %v3724
  %4238 = vst.msk [vmem:[%s3 + $0xf4] sm:$0xf] %vm4176, %v3725
  %4239 = vst.msk [vmem:[%s3 + $0xf8] sm:$0xf] %vm4176, %v3726
  %4240 = vst.msk [vmem:[%s3 + $0xfc] sm:$0xf] %vm4176, %v3727
  %4241 = vst.msk [vmem:[%s3 + $0x100] sm:$0xf] %vm4176, %v3728
  %4242 = vst.msk [vmem:[%s3 + $0x104] sm:$0xf] %vm4176, %v3729
  %4243 = vst.msk [vmem:[%s3 + $0x108] sm:$0xf] %vm4176, %v3730
  %4244 = vst.msk [vmem:[%s3 + $0x10c] sm:$0xf] %vm4176, %v3731
  %4245 = vst.msk [vmem:[%s3 + $0x110] sm:$0xf] %vm4176, %v3732
  %4246 = vst.msk [vmem:[%s3 + $0x114] sm:$0xf] %vm4176, %v3733
  %4247 = vst.msk [vmem:[%s3 + $0x118] sm:$0xf] %vm4176, %v3734
  %4248 = vst.msk [vmem:[%s3 + $0x11c] sm:$0xf] %vm4176, %v3735
  %4249 = vst.msk [vmem:[%s3 + $0x120] sm:$0xf] %vm4176, %v3736
  %4250 = vst.msk [vmem:[%s3 + $0x124] sm:$0xf] %vm4176, %v3737
  %4251 = vst.msk [vmem:[%s3 + $0x128] sm:$0xf] %vm4176, %v3738
  %4252 = vst.msk [vmem:[%s3 + $0x12c] sm:$0xf] %vm4176, %v3739
  %4253 = vst.msk [vmem:[%s3 + $0x130] sm:$0xf] %vm4176, %v3740
  %4254 = vst.msk [vmem:[%s3 + $0x134] sm:$0xf] %vm4176, %v3741
  %4255 = vst.msk [vmem:[%s3 + $0x138] sm:$0xf] %vm4176, %v3742
  %4256 = vst.msk [vmem:[%s3 + $0x13c] sm:$0xf] %vm4176, %v3743
  %4257 = vst.msk [vmem:[%s3 + $0x140] sm:$0xf] %vm4176, %v3744
  %4258 = vst.msk [vmem:[%s3 + $0x144] sm:$0xf] %vm4176, %v3745
  %4259 = vst.msk [vmem:[%s3 + $0x148] sm:$0xf] %vm4176, %v3746
  %4260 = vst.msk [vmem:[%s3 + $0x14c] sm:$0xf] %vm4176, %v3747
  %4261 = vst.msk [vmem:[%s3 + $0x150] sm:$0xf] %vm4176, %v3748
  %4262 = vst.msk [vmem:[%s3 + $0x154] sm:$0xf] %vm4176, %v3749
  %4263 = vst.msk [vmem:[%s3 + $0x158] sm:$0xf] %vm4176, %v3750
  %4264 = vst.msk [vmem:[%s3 + $0x15c] sm:$0xf] %vm4176, %v3751
  %4265 = vst.msk [vmem:[%s3 + $0x160] sm:$0xf] %vm4176, %v3752
  %4266 = vst.msk [vmem:[%s3 + $0x164] sm:$0xf] %vm4176, %v3753
  %4267 = vst.msk [vmem:[%s3 + $0x168] sm:$0xf] %vm4176, %v3754
  %4268 = vst.msk [vmem:[%s3 + $0x16c] sm:$0xf] %vm4176, %v3755
  %4269 = vst.msk [vmem:[%s3 + $0x170] sm:$0xf] %vm4176, %v3756
  %4270 = vst.msk [vmem:[%s3 + $0x174] sm:$0xf] %vm4176, %v3757
  %4271 = vst.msk [vmem:[%s3 + $0x178] sm:$0xf] %vm4176, %v3758
  %4272 = vst.msk [vmem:[%s3 + $0x17c] sm:$0xf] %vm4176, %v3759
  %4273 = vst.msk [vmem:[%s3 + $0x180] sm:$0xf] %vm4176, %v3760
  %4274 = vst.msk [vmem:[%s3 + $0x184] sm:$0xf] %vm4176, %v3761
  %4275 = vst.msk [vmem:[%s3 + $0x188] sm:$0xf] %vm4176, %v3762
  %4276 = vst.msk [vmem:[%s3 + $0x18c] sm:$0xf] %vm4176, %v3763
  %4277 = vst.msk [vmem:[%s3 + $0x190] sm:$0xf] %vm4176, %v3764
  %4278 = vst.msk [vmem:[%s3 + $0x194] sm:$0xf] %vm4176, %v3765
  %4279 = vst.msk [vmem:[%s3 + $0x198] sm:$0xf] %vm4176, %v3766
  %4280 = vst.msk [vmem:[%s3 + $0x19c] sm:$0xf] %vm4176, %v3767
  %4281 = vst.msk [vmem:[%s3 + $0x1a0] sm:$0xf] %vm4176, %v3768
  %4282 = vst.msk [vmem:[%s3 + $0x1a4] sm:$0xf] %vm4176, %v3769
  %4283 = vst.msk [vmem:[%s3 + $0x1a8] sm:$0xf] %vm4176, %v3770
  %4284 = vst.msk [vmem:[%s3 + $0x1ac] sm:$0xf] %vm4176, %v3771
  %4285 = vst.msk [vmem:[%s3 + $0x1b0] sm:$0xf] %vm4176, %v3772
  %4286 = vst.msk [vmem:[%s3 + $0x1b4] sm:$0xf] %vm4176, %v3773
  %4287 = vst.msk [vmem:[%s3 + $0x1b8] sm:$0xf] %vm4176, %v3774
  %4288 = vst.msk [vmem:[%s3 + $0x1bc] sm:$0xf] %vm4176, %v3775
  %4289 = vst.msk [vmem:[%s3 + $0x1c0] sm:$0xf] %vm4176, %v3776
  %4290 = vst.msk [vmem:[%s3 + $0x1c4] sm:$0xf] %vm4176, %v3777
  %4291 = vst.msk [vmem:[%s3 + $0x1c8] sm:$0xf] %vm4176, %v3778
  %4292 = vst.msk [vmem:[%s3 + $0x1cc] sm:$0xf] %vm4176, %v3779
  %4293 = vst.msk [vmem:[%s3 + $0x1d0] sm:$0xf] %vm4176, %v3780
  %4294 = vst.msk [vmem:[%s3 + $0x1d4] sm:$0xf] %vm4176, %v3781
  %4295 = vst.msk [vmem:[%s3 + $0x1d8] sm:$0xf] %vm4176, %v3782
  %4296 = vst.msk [vmem:[%s3 + $0x1dc] sm:$0xf] %vm4176, %v3783
  %4297 = vst.msk [vmem:[%s3 + $0x1e0] sm:$0xf] %vm4176, %v3784
  %4298 = vst.msk [vmem:[%s3 + $0x1e4] sm:$0xf] %vm4176, %v3785
  %4299 = vst.msk [vmem:[%s3 + $0x1e8] sm:$0xf] %vm4176, %v3786
  %4300 = vst.msk [vmem:[%s3 + $0x1ec] sm:$0xf] %vm4176, %v3787
  %4301 = vst.msk [vmem:[%s3 + $0x1f0] sm:$0xf] %vm4176, %v3788
  %4302 = vst.msk [vmem:[%s3 + $0x1f4] sm:$0xf] %vm4176, %v3789
  %4303 = vst.msk [vmem:[%s3 + $0x1f8] sm:$0xf] %vm4176, %v3790
  %4304 = vst.msk [vmem:[%s3 + $0x1fc] sm:$0xf] %vm4176, %v3791
  %4305 = vst.msk [vmem:[%s3 + $0x200] sm:$0xf] %vm4176, %v3792
  %4306 = vst.msk [vmem:[%s3 + $0x204] sm:$0xf] %vm4176, %v3793
  %4307 = vst.msk [vmem:[%s3 + $0x208] sm:$0xf] %vm4176, %v3794
  %4308 = vst.msk [vmem:[%s3 + $0x20c] sm:$0xf] %vm4176, %v3795
  %4309 = vst.msk [vmem:[%s3 + $0x210] sm:$0xf] %vm4176, %v3796
  %4310 = vst.msk [vmem:[%s3 + $0x214] sm:$0xf] %vm4176, %v3797
  %4311 = vst.msk [vmem:[%s3 + $0x218] sm:$0xf] %vm4176, %v3798
  %4312 = vst.msk [vmem:[%s3 + $0x21c] sm:$0xf] %vm4176, %v3799
  %4313 = vst.msk [vmem:[%s3 + $0x220] sm:$0xf] %vm4176, %v3800
  %4314 = vst.msk [vmem:[%s3 + $0x224] sm:$0xf] %vm4176, %v3801
  %4315 = vst.msk [vmem:[%s3 + $0x228] sm:$0xf] %vm4176, %v3802
  %4316 = vst.msk [vmem:[%s3 + $0x22c] sm:$0xf] %vm4176, %v3803
  %4317 = vst.msk [vmem:[%s3 + $0x230] sm:$0xf] %vm4176, %v3804
  %4318 = vst.msk [vmem:[%s3 + $0x234] sm:$0xf] %vm4176, %v3805
  %4319 = vst.msk [vmem:[%s3 + $0x238] sm:$0xf] %vm4176, %v3806
  %4320 = vst.msk [vmem:[%s3 + $0x23c] sm:$0xf] %vm4176, %v3807
  %4321 = vst.msk [vmem:[%s3 + $0x240] sm:$0xf] %vm4176, %v3808
  %4322 = vst.msk [vmem:[%s3 + $0x244] sm:$0xf] %vm4176, %v3809
  %4323 = vst.msk [vmem:[%s3 + $0x248] sm:$0xf] %vm4176, %v3810
  %4324 = vst.msk [vmem:[%s3 + $0x24c] sm:$0xf] %vm4176, %v3811
  %4325 = vst.msk [vmem:[%s3 + $0x250] sm:$0xf] %vm4176, %v3812
  %4326 = vst.msk [vmem:[%s3 + $0x254] sm:$0xf] %vm4176, %v3813
  %4327 = vst.msk [vmem:[%s3 + $0x258] sm:$0xf] %vm4176, %v3814
  %4328 = vst.msk [vmem:[%s3 + $0x25c] sm:$0xf] %vm4176, %v3815
  %4329 = vst.msk [vmem:[%s3 + $0x260] sm:$0xf] %vm4176, %v3816
  %4330 = vst.msk [vmem:[%s3 + $0x264] sm:$0xf] %vm4176, %v3817
  %4331 = vst.msk [vmem:[%s3 + $0x268] sm:$0xf] %vm4176, %v3818
  %4332 = vst.msk [vmem:[%s3 + $0x26c] sm:$0xf] %vm4176, %v3819
  %4333 = vst.msk [vmem:[%s3 + $0x270] sm:$0xf] %vm4176, %v3820
  %4334 = vst.msk [vmem:[%s3 + $0x274] sm:$0xf] %vm4176, %v3821
  %4335 = vst.msk [vmem:[%s3 + $0x278] sm:$0xf] %vm4176, %v3822
  %4336 = vst.msk [vmem:[%s3 + $0x27c] sm:$0xf] %vm4176, %v3823
  %4337 = vst.msk [vmem:[%s3 + $0x280] sm:$0xf] %vm4176, %v3824
  %4338 = vst.msk [vmem:[%s3 + $0x284] sm:$0xf] %vm4176, %v3825
  %4339 = vst.msk [vmem:[%s3 + $0x288] sm:$0xf] %vm4176, %v3826
  %4340 = vst.msk [vmem:[%s3 + $0x28c] sm:$0xf] %vm4176, %v3827
  %4341 = vst.msk [vmem:[%s3 + $0x290] sm:$0xf] %vm4176, %v3828
  %4342 = vst.msk [vmem:[%s3 + $0x294] sm:$0xf] %vm4176, %v3829
  %4343 = vst.msk [vmem:[%s3 + $0x298] sm:$0xf] %vm4176, %v3830
  %4344 = vst.msk [vmem:[%s3 + $0x29c] sm:$0xf] %vm4176, %v3831
  %4345 = vst.msk [vmem:[%s3 + $0x2a0] sm:$0xf] %vm4176, %v3832
  %4346 = vst.msk [vmem:[%s3 + $0x2a4] sm:$0xf] %vm4176, %v3833
  %4347 = vst.msk [vmem:[%s3 + $0x2a8] sm:$0xf] %vm4176, %v3834
  %4348 = vst.msk [vmem:[%s3 + $0x2ac] sm:$0xf] %vm4176, %v3835
  %4349 = vst.msk [vmem:[%s3 + $0x2b0] sm:$0xf] %vm4176, %v3836
  %4350 = vst.msk [vmem:[%s3 + $0x2b4] sm:$0xf] %vm4176, %v3837
  %4351 = vst.msk [vmem:[%s3 + $0x2b8] sm:$0xf] %vm4176, %v3838
  %4352 = vst.msk [vmem:[%s3 + $0x2bc] sm:$0xf] %vm4176, %v3839
  %4353 = vst.msk [vmem:[%s3 + $0x2c0] sm:$0xf] %vm4176, %v3840
  %4354 = vst.msk [vmem:[%s3 + $0x2c4] sm:$0xf] %vm4176, %v3841
  %4355 = vst.msk [vmem:[%s3 + $0x2c8] sm:$0xf] %vm4176, %v3842
  %4356 = vst.msk [vmem:[%s3 + $0x2cc] sm:$0xf] %vm4176, %v3843
  %4357 = vst.msk [vmem:[%s3 + $0x2d0] sm:$0xf] %vm4176, %v3844
  %4358 = vst.msk [vmem:[%s3 + $0x2d4] sm:$0xf] %vm4176, %v3845
  %4359 = vst.msk [vmem:[%s3 + $0x2d8] sm:$0xf] %vm4176, %v3846
  %4360 = vst.msk [vmem:[%s3 + $0x2dc] sm:$0xf] %vm4176, %v3847
  %4361 = vst.msk [vmem:[%s3 + $0x2e0] sm:$0xf] %vm4176, %v3848
  %4362 = vst.msk [vmem:[%s3 + $0x2e4] sm:$0xf] %vm4176, %v3849
  %4363 = vst.msk [vmem:[%s3 + $0x2e8] sm:$0xf] %vm4176, %v3850
  %4364 = vst.msk [vmem:[%s3 + $0x2ec] sm:$0xf] %vm4176, %v3851
  %4365 = vst.msk [vmem:[%s3 + $0x2f0] sm:$0xf] %vm4176, %v3852
  %4366 = vst.msk [vmem:[%s3 + $0x2f4] sm:$0xf] %vm4176, %v3853
  %4367 = vst.msk [vmem:[%s3 + $0x2f8] sm:$0xf] %vm4176, %v3854
  %4368 = vst.msk [vmem:[%s3 + $0x2fc] sm:$0xf] %vm4176, %v3855
  %4369 = vst.msk [vmem:[%s3 + $0x300] sm:$0xf] %vm4176, %v3856
  %4370 = vst.msk [vmem:[%s3 + $0x304] sm:$0xf] %vm4176, %v3857
  %4371 = vst.msk [vmem:[%s3 + $0x308] sm:$0xf] %vm4176, %v3858
  %4372 = vst.msk [vmem:[%s3 + $0x30c] sm:$0xf] %vm4176, %v3859
  %4373 = vst.msk [vmem:[%s3 + $0x310] sm:$0xf] %vm4176, %v3860
  %4374 = vst.msk [vmem:[%s3 + $0x314] sm:$0xf] %vm4176, %v3861
  %4375 = vst.msk [vmem:[%s3 + $0x318] sm:$0xf] %vm4176, %v3862
  %4376 = vst.msk [vmem:[%s3 + $0x31c] sm:$0xf] %vm4176, %v3863
  %4377 = vst.msk [vmem:[%s3 + $0x320] sm:$0xf] %vm4176, %v3864
  %4378 = vst.msk [vmem:[%s3 + $0x324] sm:$0xf] %vm4176, %v3865
  %4379 = vst.msk [vmem:[%s3 + $0x328] sm:$0xf] %vm4176, %v3866
  %4380 = vst.msk [vmem:[%s3 + $0x32c] sm:$0xf] %vm4176, %v3867
  %4381 = vst.msk [vmem:[%s3 + $0x330] sm:$0xf] %vm4176, %v3868
  %4382 = vst.msk [vmem:[%s3 + $0x334] sm:$0xf] %vm4176, %v3869
  %4383 = vst.msk [vmem:[%s3 + $0x338] sm:$0xf] %vm4176, %v3870
  %4384 = vst.msk [vmem:[%s3 + $0x33c] sm:$0xf] %vm4176, %v3871
  %4385 = vst.msk [vmem:[%s3 + $0x340] sm:$0xf] %vm4176, %v3872
  %4386 = vst.msk [vmem:[%s3 + $0x344] sm:$0xf] %vm4176, %v3873
  %4387 = vst.msk [vmem:[%s3 + $0x348] sm:$0xf] %vm4176, %v3874
  %4388 = vst.msk [vmem:[%s3 + $0x34c] sm:$0xf] %vm4176, %v3875
  %4389 = vst.msk [vmem:[%s3 + $0x350] sm:$0xf] %vm4176, %v3876
  %4390 = vst.msk [vmem:[%s3 + $0x354] sm:$0xf] %vm4176, %v3877
  %4391 = vst.msk [vmem:[%s3 + $0x358] sm:$0xf] %vm4176, %v3878
  %4392 = vst.msk [vmem:[%s3 + $0x35c] sm:$0xf] %vm4176, %v3879
  %4393 = vst.msk [vmem:[%s3 + $0x360] sm:$0xf] %vm4176, %v3880
  %4394 = vst.msk [vmem:[%s3 + $0x364] sm:$0xf] %vm4176, %v3881
  %4395 = vst.msk [vmem:[%s3 + $0x368] sm:$0xf] %vm4176, %v3882
  %4396 = vst.msk [vmem:[%s3 + $0x36c] sm:$0xf] %vm4176, %v3883
  %4397 = vst.msk [vmem:[%s3 + $0x370] sm:$0xf] %vm4176, %v3884
  %4398 = vst.msk [vmem:[%s3 + $0x374] sm:$0xf] %vm4176, %v3885
  %4399 = vst.msk [vmem:[%s3 + $0x378] sm:$0xf] %vm4176, %v3886
  %4400 = vst.msk [vmem:[%s3 + $0x37c] sm:$0xf] %vm4176, %v3887
  %4401 = vst.msk [vmem:[%s3 + $0x380] sm:$0xf] %vm4176, %v3888
  %4402 = vst.msk [vmem:[%s3 + $0x384] sm:$0xf] %vm4176, %v3889
  %4403 = vst.msk [vmem:[%s3 + $0x388] sm:$0xf] %vm4176, %v3890
  %4404 = vst.msk [vmem:[%s3 + $0x38c] sm:$0xf] %vm4176, %v3891
  %4405 = vst.msk [vmem:[%s3 + $0x390] sm:$0xf] %vm4176, %v3892
  %4406 = vst.msk [vmem:[%s3 + $0x394] sm:$0xf] %vm4176, %v3893
  %4407 = vst.msk [vmem:[%s3 + $0x398] sm:$0xf] %vm4176, %v3894
  %4408 = vst.msk [vmem:[%s3 + $0x39c] sm:$0xf] %vm4176, %v3895
  %4409 = vst.msk [vmem:[%s3 + $0x3a0] sm:$0xf] %vm4176, %v3896
  %4410 = vst.msk [vmem:[%s3 + $0x3a4] sm:$0xf] %vm4176, %v3897
  %4411 = vst.msk [vmem:[%s3 + $0x3a8] sm:$0xf] %vm4176, %v3898
  %4412 = vst.msk [vmem:[%s3 + $0x3ac] sm:$0xf] %vm4176, %v3899
  %4413 = vst.msk [vmem:[%s3 + $0x3b0] sm:$0xf] %vm4176, %v3900
  %4414 = vst.msk [vmem:[%s3 + $0x3b4] sm:$0xf] %vm4176, %v3901
  %4415 = vst.msk [vmem:[%s3 + $0x3b8] sm:$0xf] %vm4176, %v3902
  %4416 = vst.msk [vmem:[%s3 + $0x3bc] sm:$0xf] %vm4176, %v3903
  %4417 = vst.msk [vmem:[%s3 + $0x3c0] sm:$0xf] %vm4176, %v3904
  %4418 = vst.msk [vmem:[%s3 + $0x3c4] sm:$0xf] %vm4176, %v3905
  %4419 = vst.msk [vmem:[%s3 + $0x3c8] sm:$0xf] %vm4176, %v3906
  %4420 = vst.msk [vmem:[%s3 + $0x3cc] sm:$0xf] %vm4176, %v3907
  %4421 = vst.msk [vmem:[%s3 + $0x3d0] sm:$0xf] %vm4176, %v3908
  %4422 = vst.msk [vmem:[%s3 + $0x3d4] sm:$0xf] %vm4176, %v3909
  %4423 = vst.msk [vmem:[%s3 + $0x3d8] sm:$0xf] %vm4176, %v3910
  %4424 = vst.msk [vmem:[%s3 + $0x3dc] sm:$0xf] %vm4176, %v3911
  %4425 = vst.msk [vmem:[%s3 + $0x3e0] sm:$0xf] %vm4176, %v3912
  %4426 = vst.msk [vmem:[%s3 + $0x3e4] sm:$0xf] %vm4176, %v3913
  %4427 = vst.msk [vmem:[%s3 + $0x3e8] sm:$0xf] %vm4176, %v3914
  %4428 = vst.msk [vmem:[%s3 + $0x3ec] sm:$0xf] %vm4176, %v3915
  %4429 = vst.msk [vmem:[%s3 + $0x3f0] sm:$0xf] %vm4176, %v3916
  %4430 = vst.msk [vmem:[%s3 + $0x3f4] sm:$0xf] %vm4176, %v3917
  %4431 = vst.msk [vmem:[%s3 + $0x3f8] sm:$0xf] %vm4176, %v3918
  %4432 = vst.msk [vmem:[%s3 + $0x3fc] sm:$0xf] %vm4176, %v3919
  // Predicated region
  $region14: #{patchgan_forward.6} parent=0 // pred_check
    _
  $region15: #{patchgan_forward.6} parent=0 // pred_check_branch
    %4434 = sbr.rel (0) target = $region17
  $region16: #{patchgan_forward.6} parent=0 // pred_region
    _
  $region17: #{patchgan_forward.6} parent=0 // pred_fallthru
    _
  // Predicated region
  $region18: #{patchgan_forward.6} parent=0 // pred_check
    _
  $region19: #{patchgan_forward.6} parent=0 // pred_check_branch
    %4436 = sbr.rel (0) target = $region21
  $region20: #{patchgan_forward.6} parent=0 // pred_region
    _
  $region21: #{patchgan_forward.6} parent=0 // pred_fallthru
    _

// kernel: patchgan_forward.7
$region0: #{patchgan_forward.7}
  #allocation0 [shape = 'u32[]', space=smem, size = 0x4, offset = 0x4, fixed_abs, tag = 'smem constant byte address 0x4 - core index']
  #allocation1 [shape = 'u32[144,128]{1,0:T(1,128)}', space=vmem, size = 0x12000, scoped, tag = 'internal scratch']
  %s0 = inlined_call_operand.vmem [shape: bf16[512,256], index: 0, kind: input, shape index: {}]
  %s1 = inlined_call_operand.vmem [shape: bf16[256,32], index: 1, kind: input, shape index: {}]
  %s2 = inlined_call_operand.vmem [shape: bf16[512,32], index: 2, kind: output, shape index: {0}]
  %s3 = inlined_call_operand.vmem [shape: f32[1,1,32], index: 3, kind: output, shape index: {1}]
  %s4 = inlined_call_operand.vmem [shape: f32[1,1,32], index: 4, kind: output, shape index: {2}]
  %5 = xla_tuple %s2, %s3, %s4
  %s6 = sld [smem:[#allocation0]]
  $region34: #{patchgan_forward.7} parent=0
    _
  %s8 = ssub.s32 1, %s6
  %s9 = scalar_select 0, %s8, %s6
  // Predicated region
  $region2: #{patchgan_forward.7} parent=0 // pred_check
    _
  $region3: #{patchgan_forward.7} parent=0 // pred_check_branch
    %11 = sbr.rel (0) target = $region5
  $region4: #{patchgan_forward.7} parent=0 // pred_region
    _
  $region5: #{patchgan_forward.7} parent=0 // pred_fallthru
    _
  // Predicated region
  $region6: #{patchgan_forward.7} parent=0 // pred_check
    _
  $region7: #{patchgan_forward.7} parent=0 // pred_check_branch
    %13 = sbr.rel (0) target = $region9
  $region8: #{patchgan_forward.7} parent=0 // pred_region
    _
  $region9: #{patchgan_forward.7} parent=0 // pred_fallthru
    _
  %v15 = vld [vmem:[%s0] sm:$0xff]
  %v16 = vld [vmem:[%s0 + $0x8] sm:$0xff]
  %v17 = vld [vmem:[%s0 + $0x10] sm:$0xff]
  %v18 = vld [vmem:[%s0 + $0x18] sm:$0xff]
  %v19 = vld [vmem:[%s0 + $0x20] sm:$0xff]
  %v20 = vld [vmem:[%s0 + $0x28] sm:$0xff]
  %v21 = vld [vmem:[%s0 + $0x30] sm:$0xff]
  %v22 = vld [vmem:[%s0 + $0x38] sm:$0xff]
  %v23 = vld [vmem:[%s0 + $0x40] sm:$0xff]
  %v24 = vld [vmem:[%s0 + $0x48] sm:$0xff]
  %v25 = vld [vmem:[%s0 + $0x50] sm:$0xff]
  %v26 = vld [vmem:[%s0 + $0x58] sm:$0xff]
  %v27 = vld [vmem:[%s0 + $0x60] sm:$0xff]
  %v28 = vld [vmem:[%s0 + $0x68] sm:$0xff]
  %v29 = vld [vmem:[%s0 + $0x70] sm:$0xff]
  %v30 = vld [vmem:[%s0 + $0x78] sm:$0xff]
  %v31 = vld [vmem:[%s0 + $0x80] sm:$0xff]
  %v32 = vld [vmem:[%s0 + $0x88] sm:$0xff]
  %v33 = vld [vmem:[%s0 + $0x90] sm:$0xff]
  %v34 = vld [vmem:[%s0 + $0x98] sm:$0xff]
  %v35 = vld [vmem:[%s0 + $0xa0] sm:$0xff]
  %v36 = vld [vmem:[%s0 + $0xa8] sm:$0xff]
  %v37 = vld [vmem:[%s0 + $0xb0] sm:$0xff]
  %v38 = vld [vmem:[%s0 + $0xb8] sm:$0xff]
  %v39 = vld [vmem:[%s0 + $0xc0] sm:$0xff]
  %v40 = vld [vmem:[%s0 + $0xc8] sm:$0xff]
  %v41 = vld [vmem:[%s0 + $0xd0] sm:$0xff]
  %v42 = vld [vmem:[%s0 + $0xd8] sm:$0xff]
  %v43 = vld [vmem:[%s0 + $0xe0] sm:$0xff]
  %v44 = vld [vmem:[%s0 + $0xe8] sm:$0xff]
  %v45 = vld [vmem:[%s0 + $0xf0] sm:$0xff]
  %v46 = vld [vmem:[%s0 + $0xf8] sm:$0xff]
  %v47 = vld [vmem:[%s0 + $0x100] sm:$0xff]
  %v48 = vld [vmem:[%s0 + $0x108] sm:$0xff]
  %v49 = vld [vmem:[%s0 + $0x110] sm:$0xff]
  %v50 = vld [vmem:[%s0 + $0x118] sm:$0xff]
  %v51 = vld [vmem:[%s0 + $0x120] sm:$0xff]
  %v52 = vld [vmem:[%s0 + $0x128] sm:$0xff]
  %v53 = vld [vmem:[%s0 + $0x130] sm:$0xff]
  %v54 = vld [vmem:[%s0 + $0x138] sm:$0xff]
  %v55 = vld [vmem:[%s0 + $0x140] sm:$0xff]
  %v56 = vld [vmem:[%s0 + $0x148] sm:$0xff]
  %v57 = vld [vmem:[%s0 + $0x150] sm:$0xff]
  %v58 = vld [vmem:[%s0 + $0x158] sm:$0xff]
  %v59 = vld [vmem:[%s0 + $0x160] sm:$0xff]
  %v60 = vld [vmem:[%s0 + $0x168] sm:$0xff]
  %v61 = vld [vmem:[%s0 + $0x170] sm:$0xff]
  %v62 = vld [vmem:[%s0 + $0x178] sm:$0xff]
  %v63 = vld [vmem:[%s0 + $0x180] sm:$0xff]
  %v64 = vld [vmem:[%s0 + $0x188] sm:$0xff]
  %v65 = vld [vmem:[%s0 + $0x190] sm:$0xff]
  %v66 = vld [vmem:[%s0 + $0x198] sm:$0xff]
  %v67 = vld [vmem:[%s0 + $0x1a0] sm:$0xff]
  %v68 = vld [vmem:[%s0 + $0x1a8] sm:$0xff]
  %v69 = vld [vmem:[%s0 + $0x1b0] sm:$0xff]
  %v70 = vld [vmem:[%s0 + $0x1b8] sm:$0xff]
  %v71 = vld [vmem:[%s0 + $0x1c0] sm:$0xff]
  %v72 = vld [vmem:[%s0 + $0x1c8] sm:$0xff]
  %v73 = vld [vmem:[%s0 + $0x1d0] sm:$0xff]
  %v74 = vld [vmem:[%s0 + $0x1d8] sm:$0xff]
  %v75 = vld [vmem:[%s0 + $0x1e0] sm:$0xff]
  %v76 = vld [vmem:[%s0 + $0x1e8] sm:$0xff]
  %v77 = vld [vmem:[%s0 + $0x1f0] sm:$0xff]
  %v78 = vld [vmem:[%s0 + $0x1f8] sm:$0xff]
  %v79 = vld [vmem:[%s1] sm:$0xf]
  %v80 = vld [vmem:[%s1 + $0x4] sm:$0xf]
  %v81 = vld [vmem:[%s1 + $0x8] sm:$0xf]
  %v82 = vld [vmem:[%s1 + $0xc] sm:$0xf]
  %v83 = vld [vmem:[%s1 + $0x10] sm:$0xf]
  %v84 = vld [vmem:[%s1 + $0x14] sm:$0xf]
  %v85 = vld [vmem:[%s1 + $0x18] sm:$0xf]
  %v86 = vld [vmem:[%s1 + $0x1c] sm:$0xf]
  %v87 = vld [vmem:[%s1 + $0x20] sm:$0xf]
  %v88 = vld [vmem:[%s1 + $0x24] sm:$0xf]
  %v89 = vld [vmem:[%s1 + $0x28] sm:$0xf]
  %v90 = vld [vmem:[%s1 + $0x2c] sm:$0xf]
  %v91 = vld [vmem:[%s1 + $0x30] sm:$0xf]
  %v92 = vld [vmem:[%s1 + $0x34] sm:$0xf]
  %v93 = vld [vmem:[%s1 + $0x38] sm:$0xf]
  %v94 = vld [vmem:[%s1 + $0x3c] sm:$0xf]
  %v95 = vld [vmem:[%s1 + $0x40] sm:$0xf]
  %v96 = vld [vmem:[%s1 + $0x44] sm:$0xf]
  %v97 = vld [vmem:[%s1 + $0x48] sm:$0xf]
  %v98 = vld [vmem:[%s1 + $0x4c] sm:$0xf]
  %v99 = vld [vmem:[%s1 + $0x50] sm:$0xf]
  %v100 = vld [vmem:[%s1 + $0x54] sm:$0xf]
  %v101 = vld [vmem:[%s1 + $0x58] sm:$0xf]
  %v102 = vld [vmem:[%s1 + $0x5c] sm:$0xf]
  %v103 = vld [vmem:[%s1 + $0x60] sm:$0xf]
  %v104 = vld [vmem:[%s1 + $0x64] sm:$0xf]
  %v105 = vld [vmem:[%s1 + $0x68] sm:$0xf]
  %v106 = vld [vmem:[%s1 + $0x6c] sm:$0xf]
  %v107 = vld [vmem:[%s1 + $0x70] sm:$0xf]
  %v108 = vld [vmem:[%s1 + $0x74] sm:$0xf]
  %v109 = vld [vmem:[%s1 + $0x78] sm:$0xf]
  %v110 = vld [vmem:[%s1 + $0x7c] sm:$0xf]
  %v175 = vunpack.c.l.b16 %v15
  %v176 = vunpack.c.h.b16 %v15
  %v177 = vunpack.c.l.b16 %v16
  %v178 = vunpack.c.h.b16 %v16
  %v179 = vunpack.c.l.b16 %v17
  %v180 = vunpack.c.h.b16 %v17
  %v181 = vunpack.c.l.b16 %v18
  %v182 = vunpack.c.h.b16 %v18
  %v183 = vunpack.c.l.b16 %v19
  %v184 = vunpack.c.h.b16 %v19
  %v185 = vunpack.c.l.b16 %v20
  %v186 = vunpack.c.h.b16 %v20
  %v187 = vunpack.c.l.b16 %v21
  %v188 = vunpack.c.h.b16 %v21
  %v189 = vunpack.c.l.b16 %v22
  %v190 = vunpack.c.h.b16 %v22
  %v191 = vunpack.c.l.b16 %v23
  %v192 = vunpack.c.h.b16 %v23
  %v193 = vunpack.c.l.b16 %v24
  %v194 = vunpack.c.h.b16 %v24
  %v195 = vunpack.c.l.b16 %v25
  %v196 = vunpack.c.h.b16 %v25
  %v197 = vunpack.c.l.b16 %v26
  %v198 = vunpack.c.h.b16 %v26
  %v199 = vunpack.c.l.b16 %v27
  %v200 = vunpack.c.h.b16 %v27
  %v201 = vunpack.c.l.b16 %v28
  %v202 = vunpack.c.h.b16 %v28
  %v203 = vunpack.c.l.b16 %v29
  %v204 = vunpack.c.h.b16 %v29
  %v205 = vunpack.c.l.b16 %v30
  %v206 = vunpack.c.h.b16 %v30
  %v207 = vunpack.c.l.b16 %v31
  %v208 = vunpack.c.h.b16 %v31
  %v209 = vunpack.c.l.b16 %v32
  %v210 = vunpack.c.h.b16 %v32
  %v211 = vunpack.c.l.b16 %v33
  %v212 = vunpack.c.h.b16 %v33
  %v213 = vunpack.c.l.b16 %v34
  %v214 = vunpack.c.h.b16 %v34
  %v215 = vunpack.c.l.b16 %v35
  %v216 = vunpack.c.h.b16 %v35
  %v217 = vunpack.c.l.b16 %v36
  %v218 = vunpack.c.h.b16 %v36
  %v219 = vunpack.c.l.b16 %v37
  %v220 = vunpack.c.h.b16 %v37
  %v221 = vunpack.c.l.b16 %v38
  %v222 = vunpack.c.h.b16 %v38
  %v223 = vunpack.c.l.b16 %v39
  %v224 = vunpack.c.h.b16 %v39
  %v225 = vunpack.c.l.b16 %v40
  %v226 = vunpack.c.h.b16 %v40
  %v227 = vunpack.c.l.b16 %v41
  %v228 = vunpack.c.h.b16 %v41
  %v229 = vunpack.c.l.b16 %v42
  %v230 = vunpack.c.h.b16 %v42
  %v231 = vunpack.c.l.b16 %v43
  %v232 = vunpack.c.h.b16 %v43
  %v233 = vunpack.c.l.b16 %v44
  %v234 = vunpack.c.h.b16 %v44
  %v235 = vunpack.c.l.b16 %v45
  %v236 = vunpack.c.h.b16 %v45
  %v237 = vunpack.c.l.b16 %v46
  %v238 = vunpack.c.h.b16 %v46
  %v239 = vunpack.c.l.b16 %v47
  %v240 = vunpack.c.h.b16 %v47
  %v241 = vunpack.c.l.b16 %v48
  %v242 = vunpack.c.h.b16 %v48
  %v243 = vunpack.c.l.b16 %v49
  %v244 = vunpack.c.h.b16 %v49
  %v245 = vunpack.c.l.b16 %v50
  %v246 = vunpack.c.h.b16 %v50
  %v247 = vunpack.c.l.b16 %v51
  %v248 = vunpack.c.h.b16 %v51
  %v249 = vunpack.c.l.b16 %v52
  %v250 = vunpack.c.h.b16 %v52
  %v251 = vunpack.c.l.b16 %v53
  %v252 = vunpack.c.h.b16 %v53
  %v253 = vunpack.c.l.b16 %v54
  %v254 = vunpack.c.h.b16 %v54
  %v255 = vunpack.c.l.b16 %v55
  %v256 = vunpack.c.h.b16 %v55
  %v257 = vunpack.c.l.b16 %v56
  %v258 = vunpack.c.h.b16 %v56
  %v259 = vunpack.c.l.b16 %v57
  %v260 = vunpack.c.h.b16 %v57
  %v261 = vunpack.c.l.b16 %v58
  %v262 = vunpack.c.h.b16 %v58
  %v263 = vunpack.c.l.b16 %v59
  %v264 = vunpack.c.h.b16 %v59
  %v265 = vunpack.c.l.b16 %v60
  %v266 = vunpack.c.h.b16 %v60
  %v267 = vunpack.c.l.b16 %v61
  %v268 = vunpack.c.h.b16 %v61
  %v269 = vunpack.c.l.b16 %v62
  %v270 = vunpack.c.h.b16 %v62
  %v271 = vunpack.c.l.b16 %v63
  %v272 = vunpack.c.h.b16 %v63
  %v273 = vunpack.c.l.b16 %v64
  %v274 = vunpack.c.h.b16 %v64
  %v275 = vunpack.c.l.b16 %v65
  %v276 = vunpack.c.h.b16 %v65
  %v277 = vunpack.c.l.b16 %v66
  %v278 = vunpack.c.h.b16 %v66
  %v279 = vunpack.c.l.b16 %v67
  %v280 = vunpack.c.h.b16 %v67
  %v281 = vunpack.c.l.b16 %v68
  %v282 = vunpack.c.h.b16 %v68
  %v283 = vunpack.c.l.b16 %v69
  %v284 = vunpack.c.h.b16 %v69
  %v285 = vunpack.c.l.b16 %v70
  %v286 = vunpack.c.h.b16 %v70
  %v287 = vunpack.c.l.b16 %v71
  %v288 = vunpack.c.h.b16 %v71
  %v289 = vunpack.c.l.b16 %v72
  %v290 = vunpack.c.h.b16 %v72
  %v291 = vunpack.c.l.b16 %v73
  %v292 = vunpack.c.h.b16 %v73
  %v293 = vunpack.c.l.b16 %v74
  %v294 = vunpack.c.h.b16 %v74
  %v295 = vunpack.c.l.b16 %v75
  %v296 = vunpack.c.h.b16 %v75
  %v297 = vunpack.c.l.b16 %v76
  %v298 = vunpack.c.h.b16 %v76
  %v299 = vunpack.c.l.b16 %v77
  %v300 = vunpack.c.h.b16 %v77
  %v301 = vunpack.c.l.b16 %v78
  %v302 = vunpack.c.h.b16 %v78
  %v303 = vpack.c.b16 %v177, %v175
  %v304 = vpack.c.b16 %v178, %v176
  %v305 = vpack.c.b16 %v181, %v179
  %v306 = vpack.c.b16 %v182, %v180
  %v307 = vpack.c.b16 %v185, %v183
  %v308 = vpack.c.b16 %v186, %v184
  %v309 = vpack.c.b16 %v189, %v187
  %v310 = vpack.c.b16 %v190, %v188
  %v311 = vpack.c.b16 %v193, %v191
  %v312 = vpack.c.b16 %v194, %v192
  %v313 = vpack.c.b16 %v197, %v195
  %v314 = vpack.c.b16 %v198, %v196
  %v315 = vpack.c.b16 %v201, %v199
  %v316 = vpack.c.b16 %v202, %v200
  %v317 = vpack.c.b16 %v205, %v203
  %v318 = vpack.c.b16 %v206, %v204
  %v319 = vpack.c.b16 %v209, %v207
  %v320 = vpack.c.b16 %v210, %v208
  %v321 = vpack.c.b16 %v213, %v211
  %v322 = vpack.c.b16 %v214, %v212
  %v323 = vpack.c.b16 %v217, %v215
  %v324 = vpack.c.b16 %v218, %v216
  %v325 = vpack.c.b16 %v221, %v219
  %v326 = vpack.c.b16 %v222, %v220
  %v327 = vpack.c.b16 %v225, %v223
  %v328 = vpack.c.b16 %v226, %v224
  %v329 = vpack.c.b16 %v229, %v227
  %v330 = vpack.c.b16 %v230, %v228
  %v331 = vpack.c.b16 %v233, %v231
  %v332 = vpack.c.b16 %v234, %v232
  %v333 = vpack.c.b16 %v237, %v235
  %v334 = vpack.c.b16 %v238, %v236
  %v335 = vpack.c.b16 %v241, %v239
  %v336 = vpack.c.b16 %v242, %v240
  %v337 = vpack.c.b16 %v245, %v243
  %v338 = vpack.c.b16 %v246, %v244
  %v339 = vpack.c.b16 %v249, %v247
  %v340 = vpack.c.b16 %v250, %v248
  %v341 = vpack.c.b16 %v253, %v251
  %v342 = vpack.c.b16 %v254, %v252
  %v343 = vpack.c.b16 %v257, %v255
  %v344 = vpack.c.b16 %v258, %v256
  %v345 = vpack.c.b16 %v261, %v259
  %v346 = vpack.c.b16 %v262, %v260
  %v347 = vpack.c.b16 %v265, %v263
  %v348 = vpack.c.b16 %v266, %v264
  %v349 = vpack.c.b16 %v269, %v267
  %v350 = vpack.c.b16 %v270, %v268
  %v351 = vpack.c.b16 %v273, %v271
  %v352 = vpack.c.b16 %v274, %v272
  %v353 = vpack.c.b16 %v277, %v275
  %v354 = vpack.c.b16 %v278, %v276
  %v355 = vpack.c.b16 %v281, %v279
  %v356 = vpack.c.b16 %v282, %v280
  %v357 = vpack.c.b16 %v285, %v283
  %v358 = vpack.c.b16 %v286, %v284
  %v359 = vpack.c.b16 %v289, %v287
  %v360 = vpack.c.b16 %v290, %v288
  %v361 = vpack.c.b16 %v293, %v291
  %v362 = vpack.c.b16 %v294, %v292
  %v363 = vpack.c.b16 %v297, %v295
  %v364 = vpack.c.b16 %v298, %v296
  %v365 = vpack.c.b16 %v301, %v299
  %v366 = vpack.c.b16 %v302, %v300
  %v463 = vunpack.c.l.b16 %v79
  %v464 = vunpack.c.l.b16 %v80
  %v465 = vunpack.c.l.b16 %v81
  %v466 = vunpack.c.l.b16 %v82
  %v467 = vunpack.c.l.b16 %v83
  %v468 = vunpack.c.l.b16 %v84
  %v469 = vunpack.c.l.b16 %v85
  %v470 = vunpack.c.l.b16 %v86
  %v471 = vunpack.c.l.b16 %v87
  %v472 = vunpack.c.l.b16 %v88
  %v473 = vunpack.c.l.b16 %v89
  %v474 = vunpack.c.l.b16 %v90
  %v475 = vunpack.c.l.b16 %v91
  %v476 = vunpack.c.l.b16 %v92
  %v477 = vunpack.c.l.b16 %v93
  %v478 = vunpack.c.l.b16 %v94
  %v479 = vunpack.c.l.b16 %v95
  %v480 = vunpack.c.l.b16 %v96
  %v481 = vunpack.c.l.b16 %v97
  %v482 = vunpack.c.l.b16 %v98
  %v483 = vunpack.c.l.b16 %v99
  %v484 = vunpack.c.l.b16 %v100
  %v485 = vunpack.c.l.b16 %v101
  %v486 = vunpack.c.l.b16 %v102
  %v487 = vunpack.c.l.b16 %v103
  %v488 = vunpack.c.l.b16 %v104
  %v489 = vunpack.c.l.b16 %v105
  %v490 = vunpack.c.l.b16 %v106
  %v491 = vunpack.c.l.b16 %v107
  %v492 = vunpack.c.l.b16 %v108
  %v493 = vunpack.c.l.b16 %v109
  %v494 = vunpack.c.l.b16 %v110
  %v495 = vpack.c.b16 %v464, %v463
  %v496 = vpack.c.b16 %v466, %v465
  %v497 = vpack.c.b16 %v468, %v467
  %v498 = vpack.c.b16 %v470, %v469
  %v499 = vpack.c.b16 %v472, %v471
  %v500 = vpack.c.b16 %v474, %v473
  %v501 = vpack.c.b16 %v476, %v475
  %v502 = vpack.c.b16 %v478, %v477
  %v503 = vpack.c.b16 %v480, %v479
  %v504 = vpack.c.b16 %v482, %v481
  %v505 = vpack.c.b16 %v484, %v483
  %v506 = vpack.c.b16 %v486, %v485
  %v507 = vpack.c.b16 %v488, %v487
  %v508 = vpack.c.b16 %v490, %v489
  %v509 = vpack.c.b16 %v492, %v491
  %v510 = vpack.c.b16 %v494, %v493
  %527 = vmatprep.subr.bf16.mxu0 0
  %528 = vmatpush1.bf16.msra.mxu0 %v502
  %529 = vmatprep.subr.bf16.mxu0 0
  %530 = vmatpush1.bf16.msra.mxu0 %v501
  %531 = vmatprep.subr.bf16.mxu0 0
  %532 = vmatpush1.bf16.msra.mxu0 %v500
  %533 = vmatprep.subr.bf16.mxu0 0
  %534 = vmatpush1.bf16.msra.mxu0 %v499
  %535 = vmatprep.subr.bf16.mxu0 0
  %536 = vmatpush1.bf16.msra.mxu0 %v498
  %537 = vmatprep.subr.bf16.mxu0 0
  %538 = vmatpush1.bf16.msra.mxu0 %v497
  %539 = vmatprep.subr.bf16.mxu0 0
  %540 = vmatpush1.bf16.msra.mxu0 %v496
  %541 = vmatprep.subr.bf16.mxu0 0
  %542 = vmatpush1.bf16.msra.mxu0 %v495
  %543 = vmatprep.subr.bf16.mxu0 0
  %544 = vmatpush2.bf16.msra.mxu0 %v510
  %545 = vmatprep.subr.bf16.mxu0 0
  %546 = vmatpush2.bf16.msra.mxu0 %v509
  %547 = vmatprep.subr.bf16.mxu0 0
  %548 = vmatpush2.bf16.msra.mxu0 %v508
  %549 = vmatprep.subr.bf16.mxu0 0
  %550 = vmatpush2.bf16.msra.mxu0 %v507
  %551 = vmatprep.subr.bf16.mxu0 0
  %552 = vmatpush2.bf16.msra.mxu0 %v506
  %553 = vmatprep.subr.bf16.mxu0 0
  %554 = vmatpush2.bf16.msra.mxu0 %v505
  %555 = vmatprep.subr.bf16.mxu0 0
  %556 = vmatpush2.bf16.msra.mxu0 %v504
  %557 = vmatprep.subr.bf16.mxu0 0
  %558 = vmatpush2.bf16.msra.mxu0 %v503
  %559 = vmatprep.mubr.bf16.mxu0 %v304
  %560 = vmatmul.mubr.bf16.gmra.mxu0 %v303
  %v561 = vpop.f32.mrf.mxu0
  %v562 = vadd.f32 0.0, %v561
  %v563 = vpop.f32.mrf.mxu0
  %v564 = vpop.f32.mrf.mxu0
  %v565 = vadd.f32 0.0, %v564
  %v566 = vpop.f32.mrf.mxu0
  %567 = vmatprep.mubr.bf16.mxu0 %v306
  %568 = vmatmul.mubr.bf16.gmra.mxu0 %v305
  %v569 = vpop.f32.mrf.mxu0
  %v570 = vadd.f32 0.0, %v569
  %v571 = vpop.f32.mrf.mxu0
  %v572 = vpop.f32.mrf.mxu0
  %v573 = vadd.f32 0.0, %v572
  %v574 = vpop.f32.mrf.mxu0
  %575 = vmatprep.mubr.bf16.mxu0 %v308
  %576 = vmatmul.mubr.bf16.gmra.mxu0 %v307
  %v577 = vpop.f32.mrf.mxu0
  %v578 = vadd.f32 0.0, %v577
  %v579 = vpop.f32.mrf.mxu0
  %v580 = vpop.f32.mrf.mxu0
  %v581 = vadd.f32 0.0, %v580
  %v582 = vpop.f32.mrf.mxu0
  %583 = vmatprep.mubr.bf16.mxu0 %v310
  %584 = vmatmul.mubr.bf16.gmra.mxu0 %v309
  %v585 = vpop.f32.mrf.mxu0
  %v586 = vadd.f32 0.0, %v585
  %v587 = vpop.f32.mrf.mxu0
  %v588 = vpop.f32.mrf.mxu0
  %v589 = vadd.f32 0.0, %v588
  %v590 = vpop.f32.mrf.mxu0
  %591 = vmatprep.mubr.bf16.mxu0 %v312
  %592 = vmatmul.mubr.bf16.gmra.mxu0 %v311
  %v593 = vpop.f32.mrf.mxu0
  %v594 = vadd.f32 0.0, %v593
  %v595 = vpop.f32.mrf.mxu0
  %v596 = vpop.f32.mrf.mxu0
  %v597 = vadd.f32 0.0, %v596
  %v598 = vpop.f32.mrf.mxu0
  %599 = vmatprep.mubr.bf16.mxu0 %v314
  %600 = vmatmul.mubr.bf16.gmra.mxu0 %v313
  %v601 = vpop.f32.mrf.mxu0
  %v602 = vadd.f32 0.0, %v601
  %v603 = vpop.f32.mrf.mxu0
  %v604 = vpop.f32.mrf.mxu0
  %v605 = vadd.f32 0.0, %v604
  %v606 = vpop.f32.mrf.mxu0
  %607 = vmatprep.mubr.bf16.mxu0 %v316
  %608 = vmatmul.mubr.bf16.gmra.mxu0 %v315
  %v609 = vpop.f32.mrf.mxu0
  %v610 = vadd.f32 0.0, %v609
  %v611 = vpop.f32.mrf.mxu0
  %v612 = vpop.f32.mrf.mxu0
  %v613 = vadd.f32 0.0, %v612
  %v614 = vpop.f32.mrf.mxu0
  %615 = vmatprep.mubr.bf16.mxu0 %v318
  %616 = vmatmul.mubr.bf16.gmra.mxu0 %v317
  %v617 = vpop.f32.mrf.mxu0
  %v618 = vadd.f32 0.0, %v617
  %v619 = vpop.f32.mrf.mxu0
  %v620 = vpop.f32.mrf.mxu0
  %v621 = vadd.f32 0.0, %v620
  %v622 = vpop.f32.mrf.mxu0
  %623 = vmatprep.mubr.bf16.mxu0 %v320
  %624 = vmatmul.mubr.bf16.gmra.mxu0 %v319
  %v625 = vpop.f32.mrf.mxu0
  %v626 = vadd.f32 0.0, %v625
  %v627 = vpop.f32.mrf.mxu0
  %v628 = vpop.f32.mrf.mxu0
  %v629 = vadd.f32 0.0, %v628
  %v630 = vpop.f32.mrf.mxu0
  %631 = vmatprep.mubr.bf16.mxu0 %v322
  %632 = vmatmul.mubr.bf16.gmra.mxu0 %v321
  %v633 = vpop.f32.mrf.mxu0
  %v634 = vadd.f32 0.0, %v633
  %v635 = vpop.f32.mrf.mxu0
  %v636 = vpop.f32.mrf.mxu0
  %v637 = vadd.f32 0.0, %v636
  %v638 = vpop.f32.mrf.mxu0
  %639 = vmatprep.mubr.bf16.mxu0 %v324
  %640 = vmatmul.mubr.bf16.gmra.mxu0 %v323
  %v641 = vpop.f32.mrf.mxu0
  %v642 = vadd.f32 0.0, %v641
  %v643 = vpop.f32.mrf.mxu0
  %v644 = vpop.f32.mrf.mxu0
  %v645 = vadd.f32 0.0, %v644
  %v646 = vpop.f32.mrf.mxu0
  %647 = vmatprep.mubr.bf16.mxu0 %v326
  %648 = vmatmul.mubr.bf16.gmra.mxu0 %v325
  %v649 = vpop.f32.mrf.mxu0
  %v650 = vadd.f32 0.0, %v649
  %v651 = vpop.f32.mrf.mxu0
  %v652 = vpop.f32.mrf.mxu0
  %v653 = vadd.f32 0.0, %v652
  %v654 = vpop.f32.mrf.mxu0
  %655 = vmatprep.mubr.bf16.mxu0 %v328
  %656 = vmatmul.mubr.bf16.gmra.mxu0 %v327
  %v657 = vpop.f32.mrf.mxu0
  %v658 = vadd.f32 0.0, %v657
  %v659 = vpop.f32.mrf.mxu0
  %v660 = vpop.f32.mrf.mxu0
  %v661 = vadd.f32 0.0, %v660
  %v662 = vpop.f32.mrf.mxu0
  %663 = vmatprep.mubr.bf16.mxu0 %v330
  %664 = vmatmul.mubr.bf16.gmra.mxu0 %v329
  %v665 = vpop.f32.mrf.mxu0
  %v666 = vadd.f32 0.0, %v665
  %v667 = vpop.f32.mrf.mxu0
  %v668 = vpop.f32.mrf.mxu0
  %v669 = vadd.f32 0.0, %v668
  %v670 = vpop.f32.mrf.mxu0
  %671 = vmatprep.mubr.bf16.mxu0 %v332
  %672 = vmatmul.mubr.bf16.gmra.mxu0 %v331
  %v673 = vpop.f32.mrf.mxu0
  %v674 = vadd.f32 0.0, %v673
  %v675 = vpop.f32.mrf.mxu0
  %v676 = vpop.f32.mrf.mxu0
  %v677 = vadd.f32 0.0, %v676
  %v678 = vpop.f32.mrf.mxu0
  %679 = vmatprep.mubr.bf16.mxu0 %v334
  %680 = vmatmul.mubr.bf16.gmra.mxu0 %v333
  %v681 = vpop.f32.mrf.mxu0
  %v682 = vadd.f32 0.0, %v681
  %v683 = vpop.f32.mrf.mxu0
  %v684 = vpop.f32.mrf.mxu0
  %v685 = vadd.f32 0.0, %v684
  %v686 = vpop.f32.mrf.mxu0
  %687 = vmatprep.mubr.bf16.mxu0 %v336
  %688 = vmatmul.mubr.bf16.gmra.mxu0 %v335
  %v689 = vpop.f32.mrf.mxu0
  %v690 = vadd.f32 0.0, %v689
  %v691 = vpop.f32.mrf.mxu0
  %v692 = vpop.f32.mrf.mxu0
  %v693 = vadd.f32 0.0, %v692
  %v694 = vpop.f32.mrf.mxu0
  %695 = vmatprep.mubr.bf16.mxu0 %v338
  %696 = vmatmul.mubr.bf16.gmra.mxu0 %v337
  %v697 = vpop.f32.mrf.mxu0
  %v698 = vadd.f32 0.0, %v697
  %v699 = vpop.f32.mrf.mxu0
  %v700 = vpop.f32.mrf.mxu0
  %v701 = vadd.f32 0.0, %v700
  %v702 = vpop.f32.mrf.mxu0
  %703 = vmatprep.mubr.bf16.mxu0 %v340
  %704 = vmatmul.mubr.bf16.gmra.mxu0 %v339
  %v705 = vpop.f32.mrf.mxu0
  %v706 = vadd.f32 0.0, %v705
  %v707 = vpop.f32.mrf.mxu0
  %v708 = vpop.f32.mrf.mxu0
  %v709 = vadd.f32 0.0, %v708
  %v710 = vpop.f32.mrf.mxu0
  %711 = vmatprep.mubr.bf16.mxu0 %v342
  %712 = vmatmul.mubr.bf16.gmra.mxu0 %v341
  %v713 = vpop.f32.mrf.mxu0
  %v714 = vadd.f32 0.0, %v713
  %v715 = vpop.f32.mrf.mxu0
  %v716 = vpop.f32.mrf.mxu0
  %v717 = vadd.f32 0.0, %v716
  %v718 = vpop.f32.mrf.mxu0
  %719 = vmatprep.mubr.bf16.mxu0 %v344
  %720 = vmatmul.mubr.bf16.gmra.mxu0 %v343
  %v721 = vpop.f32.mrf.mxu0
  %v722 = vadd.f32 0.0, %v721
  %v723 = vpop.f32.mrf.mxu0
  %v724 = vpop.f32.mrf.mxu0
  %v725 = vadd.f32 0.0, %v724
  %v726 = vpop.f32.mrf.mxu0
  %727 = vmatprep.mubr.bf16.mxu0 %v346
  %728 = vmatmul.mubr.bf16.gmra.mxu0 %v345
  %v729 = vpop.f32.mrf.mxu0
  %v730 = vadd.f32 0.0, %v729
  %v731 = vpop.f32.mrf.mxu0
  %v732 = vpop.f32.mrf.mxu0
  %v733 = vadd.f32 0.0, %v732
  %v734 = vpop.f32.mrf.mxu0
  %735 = vmatprep.mubr.bf16.mxu0 %v348
  %736 = vmatmul.mubr.bf16.gmra.mxu0 %v347
  %v737 = vpop.f32.mrf.mxu0
  %v738 = vadd.f32 0.0, %v737
  %v739 = vpop.f32.mrf.mxu0
  %v740 = vpop.f32.mrf.mxu0
  %v741 = vadd.f32 0.0, %v740
  %v742 = vpop.f32.mrf.mxu0
  %743 = vmatprep.mubr.bf16.mxu0 %v350
  %744 = vmatmul.mubr.bf16.gmra.mxu0 %v349
  %v745 = vpop.f32.mrf.mxu0
  %v746 = vadd.f32 0.0, %v745
  %v747 = vpop.f32.mrf.mxu0
  %v748 = vpop.f32.mrf.mxu0
  %v749 = vadd.f32 0.0, %v748
  %v750 = vpop.f32.mrf.mxu0
  %751 = vmatprep.mubr.bf16.mxu0 %v352
  %752 = vmatmul.mubr.bf16.gmra.mxu0 %v351
  %v753 = vpop.f32.mrf.mxu0
  %v754 = vadd.f32 0.0, %v753
  %v755 = vpop.f32.mrf.mxu0
  %v756 = vpop.f32.mrf.mxu0
  %v757 = vadd.f32 0.0, %v756
  %v758 = vpop.f32.mrf.mxu0
  %759 = vmatprep.mubr.bf16.mxu0 %v354
  %760 = vmatmul.mubr.bf16.gmra.mxu0 %v353
  %v761 = vpop.f32.mrf.mxu0
  %v762 = vadd.f32 0.0, %v761
  %v763 = vpop.f32.mrf.mxu0
  %v764 = vpop.f32.mrf.mxu0
  %v765 = vadd.f32 0.0, %v764
  %v766 = vpop.f32.mrf.mxu0
  %767 = vmatprep.mubr.bf16.mxu0 %v356
  %768 = vmatmul.mubr.bf16.gmra.mxu0 %v355
  %v769 = vpop.f32.mrf.mxu0
  %v770 = vadd.f32 0.0, %v769
  %v771 = vpop.f32.mrf.mxu0
  %v772 = vpop.f32.mrf.mxu0
  %v773 = vadd.f32 0.0, %v772
  %v774 = vpop.f32.mrf.mxu0
  %775 = vmatprep.mubr.bf16.mxu0 %v358
  %776 = vmatmul.mubr.bf16.gmra.mxu0 %v357
  %v777 = vpop.f32.mrf.mxu0
  %v778 = vadd.f32 0.0, %v777
  %v779 = vpop.f32.mrf.mxu0
  %v780 = vpop.f32.mrf.mxu0
  %v781 = vadd.f32 0.0, %v780
  %v782 = vpop.f32.mrf.mxu0
  %783 = vmatprep.mubr.bf16.mxu0 %v360
  %784 = vmatmul.mubr.bf16.gmra.mxu0 %v359
  %v785 = vpop.f32.mrf.mxu0
  %v786 = vadd.f32 0.0, %v785
  %v787 = vpop.f32.mrf.mxu0
  %v788 = vpop.f32.mrf.mxu0
  %v789 = vadd.f32 0.0, %v788
  %v790 = vpop.f32.mrf.mxu0
  %791 = vmatprep.mubr.bf16.mxu0 %v362
  %792 = vmatmul.mubr.bf16.gmra.mxu0 %v361
  %v793 = vpop.f32.mrf.mxu0
  %v794 = vadd.f32 0.0, %v793
  %v795 = vpop.f32.mrf.mxu0
  %v796 = vpop.f32.mrf.mxu0
  %v797 = vadd.f32 0.0, %v796
  %v798 = vpop.f32.mrf.mxu0
  %799 = vmatprep.mubr.bf16.mxu0 %v364
  %800 = vmatmul.mubr.bf16.gmra.mxu0 %v363
  %v801 = vpop.f32.mrf.mxu0
  %v802 = vadd.f32 0.0, %v801
  %v803 = vpop.f32.mrf.mxu0
  %v804 = vpop.f32.mrf.mxu0
  %v805 = vadd.f32 0.0, %v804
  %v806 = vpop.f32.mrf.mxu0
  %807 = vmatprep.mubr.bf16.mxu0 %v366
  %808 = vmatmul.mubr.bf16.gmra.mxu0 %v365
  %v809 = vpop.f32.mrf.mxu0
  %v810 = vadd.f32 0.0, %v809
  %v811 = vpop.f32.mrf.mxu0
  %v812 = vpop.f32.mrf.mxu0
  %v813 = vadd.f32 0.0, %v812
  %v814 = vpop.f32.mrf.mxu0
  %815 = vdwg.mxu0
  %v816 = vpack.c.bf16 %v565, %v562
  %v817 = vpack.c.bf16 %v573, %v570
  %v818 = vpack.c.bf16 %v581, %v578
  %v819 = vpack.c.bf16 %v589, %v586
  %v820 = vpack.c.bf16 %v597, %v594
  %v821 = vpack.c.bf16 %v605, %v602
  %v822 = vpack.c.bf16 %v613, %v610
  %v823 = vpack.c.bf16 %v621, %v618
  %v824 = vpack.c.bf16 %v629, %v626
  %v825 = vpack.c.bf16 %v637, %v634
  %v826 = vpack.c.bf16 %v645, %v642
  %v827 = vpack.c.bf16 %v653, %v650
  %v828 = vpack.c.bf16 %v661, %v658
  %v829 = vpack.c.bf16 %v669, %v666
  %v830 = vpack.c.bf16 %v677, %v674
  %v831 = vpack.c.bf16 %v685, %v682
  %v832 = vpack.c.bf16 %v693, %v690
  %v833 = vpack.c.bf16 %v701, %v698
  %v834 = vpack.c.bf16 %v709, %v706
  %v835 = vpack.c.bf16 %v717, %v714
  %v836 = vpack.c.bf16 %v725, %v722
  %v837 = vpack.c.bf16 %v733, %v730
  %v838 = vpack.c.bf16 %v741, %v738
  %v839 = vpack.c.bf16 %v749, %v746
  %v840 = vpack.c.bf16 %v757, %v754
  %v841 = vpack.c.bf16 %v765, %v762
  %v842 = vpack.c.bf16 %v773, %v770
  %v843 = vpack.c.bf16 %v781, %v778
  %v844 = vpack.c.bf16 %v789, %v786
  %v845 = vpack.c.bf16 %v797, %v794
  %v846 = vpack.c.bf16 %v805, %v802
  %v847 = vpack.c.bf16 %v813, %v810
  %v880 = vunpack.c.l.b16 %v816
  %v881 = vunpack.c.h.b16 %v816
  %v882 = vunpack.c.l.b16 %v817
  %v883 = vunpack.c.h.b16 %v817
  %v884 = vunpack.c.l.b16 %v818
  %v885 = vunpack.c.h.b16 %v818
  %v886 = vunpack.c.l.b16 %v819
  %v887 = vunpack.c.h.b16 %v819
  %v888 = vunpack.c.l.b16 %v820
  %v889 = vunpack.c.h.b16 %v820
  %v890 = vunpack.c.l.b16 %v821
  %v891 = vunpack.c.h.b16 %v821
  %v892 = vunpack.c.l.b16 %v822
  %v893 = vunpack.c.h.b16 %v822
  %v894 = vunpack.c.l.b16 %v823
  %v895 = vunpack.c.h.b16 %v823
  %v896 = vunpack.c.l.b16 %v824
  %v897 = vunpack.c.h.b16 %v824
  %v898 = vunpack.c.l.b16 %v825
  %v899 = vunpack.c.h.b16 %v825
  %v900 = vunpack.c.l.b16 %v826
  %v901 = vunpack.c.h.b16 %v826
  %v902 = vunpack.c.l.b16 %v827
  %v903 = vunpack.c.h.b16 %v827
  %v904 = vunpack.c.l.b16 %v828
  %v905 = vunpack.c.h.b16 %v828
  %v906 = vunpack.c.l.b16 %v829
  %v907 = vunpack.c.h.b16 %v829
  %v908 = vunpack.c.l.b16 %v830
  %v909 = vunpack.c.h.b16 %v830
  %v910 = vunpack.c.l.b16 %v831
  %v911 = vunpack.c.h.b16 %v831
  %v912 = vunpack.c.l.b16 %v832
  %v913 = vunpack.c.h.b16 %v832
  %v914 = vunpack.c.l.b16 %v833
  %v915 = vunpack.c.h.b16 %v833
  %v916 = vunpack.c.l.b16 %v834
  %v917 = vunpack.c.h.b16 %v834
  %v918 = vunpack.c.l.b16 %v835
  %v919 = vunpack.c.h.b16 %v835
  %v920 = vunpack.c.l.b16 %v836
  %v921 = vunpack.c.h.b16 %v836
  %v922 = vunpack.c.l.b16 %v837
  %v923 = vunpack.c.h.b16 %v837
  %v924 = vunpack.c.l.b16 %v838
  %v925 = vunpack.c.h.b16 %v838
  %v926 = vunpack.c.l.b16 %v839
  %v927 = vunpack.c.h.b16 %v839
  %v928 = vunpack.c.l.b16 %v840
  %v929 = vunpack.c.h.b16 %v840
  %v930 = vunpack.c.l.b16 %v841
  %v931 = vunpack.c.h.b16 %v841
  %v932 = vunpack.c.l.b16 %v842
  %v933 = vunpack.c.h.b16 %v842
  %v934 = vunpack.c.l.b16 %v843
  %v935 = vunpack.c.h.b16 %v843
  %v936 = vunpack.c.l.b16 %v844
  %v937 = vunpack.c.h.b16 %v844
  %v938 = vunpack.c.l.b16 %v845
  %v939 = vunpack.c.h.b16 %v845
  %v940 = vunpack.c.l.b16 %v846
  %v941 = vunpack.c.h.b16 %v846
  %v942 = vunpack.c.l.b16 %v847
  %v943 = vunpack.c.h.b16 %v847
  %v944 = vpack.c.b16 %v880, %v880
  %v945 = vpack.c.b16 %v881, %v881
  %v946 = vpack.c.b16 %v882, %v882
  %v947 = vpack.c.b16 %v883, %v883
  %v948 = vpack.c.b16 %v884, %v884
  %v949 = vpack.c.b16 %v885, %v885
  %v950 = vpack.c.b16 %v886, %v886
  %v951 = vpack.c.b16 %v887, %v887
  %v952 = vpack.c.b16 %v888, %v888
  %v953 = vpack.c.b16 %v889, %v889
  %v954 = vpack.c.b16 %v890, %v890
  %v955 = vpack.c.b16 %v891, %v891
  %v956 = vpack.c.b16 %v892, %v892
  %v957 = vpack.c.b16 %v893, %v893
  %v958 = vpack.c.b16 %v894, %v894
  %v959 = vpack.c.b16 %v895, %v895
  %v960 = vpack.c.b16 %v896, %v896
  %v961 = vpack.c.b16 %v897, %v897
  %v962 = vpack.c.b16 %v898, %v898
  %v963 = vpack.c.b16 %v899, %v899
  %v964 = vpack.c.b16 %v900, %v900
  %v965 = vpack.c.b16 %v901, %v901
  %v966 = vpack.c.b16 %v902, %v902
  %v967 = vpack.c.b16 %v903, %v903
  %v968 = vpack.c.b16 %v904, %v904
  %v969 = vpack.c.b16 %v905, %v905
  %v970 = vpack.c.b16 %v906, %v906
  %v971 = vpack.c.b16 %v907, %v907
  %v972 = vpack.c.b16 %v908, %v908
  %v973 = vpack.c.b16 %v909, %v909
  %v974 = vpack.c.b16 %v910, %v910
  %v975 = vpack.c.b16 %v911, %v911
  %v976 = vpack.c.b16 %v912, %v912
  %v977 = vpack.c.b16 %v913, %v913
  %v978 = vpack.c.b16 %v914, %v914
  %v979 = vpack.c.b16 %v915, %v915
  %v980 = vpack.c.b16 %v916, %v916
  %v981 = vpack.c.b16 %v917, %v917
  %v982 = vpack.c.b16 %v918, %v918
  %v983 = vpack.c.b16 %v919, %v919
  %v984 = vpack.c.b16 %v920, %v920
  %v985 = vpack.c.b16 %v921, %v921
  %v986 = vpack.c.b16 %v922, %v922
  %v987 = vpack.c.b16 %v923, %v923
  %v988 = vpack.c.b16 %v924, %v924
  %v989 = vpack.c.b16 %v925, %v925
  %v990 = vpack.c.b16 %v926, %v926
  %v991 = vpack.c.b16 %v927, %v927
  %v992 = vpack.c.b16 %v928, %v928
  %v993 = vpack.c.b16 %v929, %v929
  %v994 = vpack.c.b16 %v930, %v930
  %v995 = vpack.c.b16 %v931, %v931
  %v996 = vpack.c.b16 %v932, %v932
  %v997 = vpack.c.b16 %v933, %v933
  %v998 = vpack.c.b16 %v934, %v934
  %v999 = vpack.c.b16 %v935, %v935
  %v1000 = vpack.c.b16 %v936, %v936
  %v1001 = vpack.c.b16 %v937, %v937
  %v1002 = vpack.c.b16 %v938, %v938
  %v1003 = vpack.c.b16 %v939, %v939
  %v1004 = vpack.c.b16 %v940, %v940
  %v1005 = vpack.c.b16 %v941, %v941
  %v1006 = vpack.c.b16 %v942, %v942
  %v1007 = vpack.c.b16 %v943, %v943
  %vm1072 = vcmask 257024
  %1073 = vst.msk [vmem:[%s2] sm:$0xf] %vm1072, %v944
  %1074 = vst.msk [vmem:[%s2 + $0x4] sm:$0xf] %vm1072, %v945
  %1075 = vst.msk [vmem:[%s2 + $0x8] sm:$0xf] %vm1072, %v946
  %1076 = vst.msk [vmem:[%s2 + $0xc] sm:$0xf] %vm1072, %v947
  %1077 = vst.msk [vmem:[%s2 + $0x10] sm:$0xf] %vm1072, %v948
  %1078 = vst.msk [vmem:[%s2 + $0x14] sm:$0xf] %vm1072, %v949
  %1079 = vst.msk [vmem:[%s2 + $0x18] sm:$0xf] %vm1072, %v950
  %1080 = vst.msk [vmem:[%s2 + $0x1c] sm:$0xf] %vm1072, %v951
  %1081 = vst.msk [vmem:[%s2 + $0x20] sm:$0xf] %vm1072, %v952
  %1082 = vst.msk [vmem:[%s2 + $0x24] sm:$0xf] %vm1072, %v953
  %1083 = vst.msk [vmem:[%s2 + $0x28] sm:$0xf] %vm1072, %v954
  %1084 = vst.msk [vmem:[%s2 + $0x2c] sm:$0xf] %vm1072, %v955
  %1085 = vst.msk [vmem:[%s2 + $0x30] sm:$0xf] %vm1072, %v956
  %1086 = vst.msk [vmem:[%s2 + $0x34] sm:$0xf] %vm1072, %v957
  %1087 = vst.msk [vmem:[%s2 + $0x38] sm:$0xf] %vm1072, %v958
  %1088 = vst.msk [vmem:[%s2 + $0x3c] sm:$0xf] %vm1072, %v959
  %1089 = vst.msk [vmem:[%s2 + $0x40] sm:$0xf] %vm1072, %v960
  %1090 = vst.msk [vmem:[%s2 + $0x44] sm:$0xf] %vm1072, %v961
  %1091 = vst.msk [vmem:[%s2 + $0x48] sm:$0xf] %vm1072, %v962
  %1092 = vst.msk [vmem:[%s2 + $0x4c] sm:$0xf] %vm1072, %v963
  %1093 = vst.msk [vmem:[%s2 + $0x50] sm:$0xf] %vm1072, %v964
  %1094 = vst.msk [vmem:[%s2 + $0x54] sm:$0xf] %vm1072, %v965
  %1095 = vst.msk [vmem:[%s2 + $0x58] sm:$0xf] %vm1072, %v966
  %1096 = vst.msk [vmem:[%s2 + $0x5c] sm:$0xf] %vm1072, %v967
  %1097 = vst.msk [vmem:[%s2 + $0x60] sm:$0xf] %vm1072, %v968
  %1098 = vst.msk [vmem:[%s2 + $0x64] sm:$0xf] %vm1072, %v969
  %1099 = vst.msk [vmem:[%s2 + $0x68] sm:$0xf] %vm1072, %v970
  %1100 = vst.msk [vmem:[%s2 + $0x6c] sm:$0xf] %vm1072, %v971
  %1101 = vst.msk [vmem:[%s2 + $0x70] sm:$0xf] %vm1072, %v972
  %1102 = vst.msk [vmem:[%s2 + $0x74] sm:$0xf] %vm1072, %v973
  %1103 = vst.msk [vmem:[%s2 + $0x78] sm:$0xf] %vm1072, %v974
  %1104 = vst.msk [vmem:[%s2 + $0x7c] sm:$0xf] %vm1072, %v975
  %1105 = vst.msk [vmem:[%s2 + $0x80] sm:$0xf] %vm1072, %v976
  %1106 = vst.msk [vmem:[%s2 + $0x84] sm:$0xf] %vm1072, %v977
  %1107 = vst.msk [vmem:[%s2 + $0x88] sm:$0xf] %vm1072, %v978
  %1108 = vst.msk [vmem:[%s2 + $0x8c] sm:$0xf] %vm1072, %v979
  %1109 = vst.msk [vmem:[%s2 + $0x90] sm:$0xf] %vm1072, %v980
  %1110 = vst.msk [vmem:[%s2 + $0x94] sm:$0xf] %vm1072, %v981
  %1111 = vst.msk [vmem:[%s2 + $0x98] sm:$0xf] %vm1072, %v982
  %1112 = vst.msk [vmem:[%s2 + $0x9c] sm:$0xf] %vm1072, %v983
  %1113 = vst.msk [vmem:[%s2 + $0xa0] sm:$0xf] %vm1072, %v984
  %1114 = vst.msk [vmem:[%s2 + $0xa4] sm:$0xf] %vm1072, %v985
  %1115 = vst.msk [vmem:[%s2 + $0xa8] sm:$0xf] %vm1072, %v986
  %1116 = vst.msk [vmem:[%s2 + $0xac] sm:$0xf] %vm1072, %v987
  %1117 = vst.msk [vmem:[%s2 + $0xb0] sm:$0xf] %vm1072, %v988
  %1118 = vst.msk [vmem:[%s2 + $0xb4] sm:$0xf] %vm1072, %v989
  %1119 = vst.msk [vmem:[%s2 + $0xb8] sm:$0xf] %vm1072, %v990
  %1120 = vst.msk [vmem:[%s2 + $0xbc] sm:$0xf] %vm1072, %v991
  %1121 = vst.msk [vmem:[%s2 + $0xc0] sm:$0xf] %vm1072, %v992
  %1122 = vst.msk [vmem:[%s2 + $0xc4] sm:$0xf] %vm1072, %v993
  %1123 = vst.msk [vmem:[%s2 + $0xc8] sm:$0xf] %vm1072, %v994
  %1124 = vst.msk [vmem:[%s2 + $0xcc] sm:$0xf] %vm1072, %v995
  %1125 = vst.msk [vmem:[%s2 + $0xd0] sm:$0xf] %vm1072, %v996
  %1126 = vst.msk [vmem:[%s2 + $0xd4] sm:$0xf] %vm1072, %v997
  %1127 = vst.msk [vmem:[%s2 + $0xd8] sm:$0xf] %vm1072, %v998
  %1128 = vst.msk [vmem:[%s2 + $0xdc] sm:$0xf] %vm1072, %v999
  %1129 = vst.msk [vmem:[%s2 + $0xe0] sm:$0xf] %vm1072, %v1000
  %1130 = vst.msk [vmem:[%s2 + $0xe4] sm:$0xf] %vm1072, %v1001
  %1131 = vst.msk [vmem:[%s2 + $0xe8] sm:$0xf] %vm1072, %v1002
  %1132 = vst.msk [vmem:[%s2 + $0xec] sm:$0xf] %vm1072, %v1003
  %1133 = vst.msk [vmem:[%s2 + $0xf0] sm:$0xf] %vm1072, %v1004
  %1134 = vst.msk [vmem:[%s2 + $0xf4] sm:$0xf] %vm1072, %v1005
  %1135 = vst.msk [vmem:[%s2 + $0xf8] sm:$0xf] %vm1072, %v1006
  %1136 = vst.msk [vmem:[%s2 + $0xfc] sm:$0xf] %vm1072, %v1007
  %vm1137 = vcmask 261120
  %v1138 = vsel %vm1137, %v562, 0.0
  %v1139 = vsel %vm1137, %v565, 0.0
  %v1140 = vadd.f32 %v1138, %v1139
  %v1141 = vsel %vm1137, %v570, 0.0
  %v1142 = vadd.f32 %v1140, %v1141
  %v1143 = vsel %vm1137, %v573, 0.0
  %v1144 = vadd.f32 %v1142, %v1143
  %v1145 = vsel %vm1137, %v578, 0.0
  %v1146 = vadd.f32 %v1144, %v1145
  %v1147 = vsel %vm1137, %v581, 0.0
  %v1148 = vadd.f32 %v1146, %v1147
  %v1149 = vsel %vm1137, %v586, 0.0
  %v1150 = vadd.f32 %v1148, %v1149
  %v1151 = vsel %vm1137, %v589, 0.0
  %v1152 = vadd.f32 %v1150, %v1151
  %v1153 = vsel %vm1137, %v594, 0.0
  %v1154 = vadd.f32 %v1152, %v1153
  %v1155 = vsel %vm1137, %v597, 0.0
  %v1156 = vadd.f32 %v1154, %v1155
  %v1157 = vsel %vm1137, %v602, 0.0
  %v1158 = vadd.f32 %v1156, %v1157
  %v1159 = vsel %vm1137, %v605, 0.0
  %v1160 = vadd.f32 %v1158, %v1159
  %v1161 = vsel %vm1137, %v610, 0.0
  %v1162 = vadd.f32 %v1160, %v1161
  %v1163 = vsel %vm1137, %v613, 0.0
  %v1164 = vadd.f32 %v1162, %v1163
  %v1165 = vsel %vm1137, %v618, 0.0
  %v1166 = vadd.f32 %v1164, %v1165
  %v1167 = vsel %vm1137, %v621, 0.0
  %v1168 = vadd.f32 %v1166, %v1167
  %v1169 = vsel %vm1137, %v626, 0.0
  %v1170 = vadd.f32 %v1168, %v1169
  %v1171 = vsel %vm1137, %v629, 0.0
  %v1172 = vadd.f32 %v1170, %v1171
  %v1173 = vsel %vm1137, %v634, 0.0
  %v1174 = vadd.f32 %v1172, %v1173
  %v1175 = vsel %vm1137, %v637, 0.0
  %v1176 = vadd.f32 %v1174, %v1175
  %v1177 = vsel %vm1137, %v642, 0.0
  %v1178 = vadd.f32 %v1176, %v1177
  %v1179 = vsel %vm1137, %v645, 0.0
  %v1180 = vadd.f32 %v1178, %v1179
  %v1181 = vsel %vm1137, %v650, 0.0
  %v1182 = vadd.f32 %v1180, %v1181
  %v1183 = vsel %vm1137, %v653, 0.0
  %v1184 = vadd.f32 %v1182, %v1183
  %v1185 = vsel %vm1137, %v658, 0.0
  %v1186 = vadd.f32 %v1184, %v1185
  %v1187 = vsel %vm1137, %v661, 0.0
  %v1188 = vadd.f32 %v1186, %v1187
  %v1189 = vsel %vm1137, %v666, 0.0
  %v1190 = vadd.f32 %v1188, %v1189
  %v1191 = vsel %vm1137, %v669, 0.0
  %v1192 = vadd.f32 %v1190, %v1191
  %v1193 = vsel %vm1137, %v674, 0.0
  %v1194 = vadd.f32 %v1192, %v1193
  %v1195 = vsel %vm1137, %v677, 0.0
  %v1196 = vadd.f32 %v1194, %v1195
  %v1197 = vsel %vm1137, %v682, 0.0
  %v1198 = vadd.f32 %v1196, %v1197
  %v1199 = vsel %vm1137, %v685, 0.0
  %v1200 = vadd.f32 %v1198, %v1199
  %v1201 = vsel %vm1137, %v690, 0.0
  %v1202 = vadd.f32 %v1200, %v1201
  %v1203 = vsel %vm1137, %v693, 0.0
  %v1204 = vadd.f32 %v1202, %v1203
  %v1205 = vsel %vm1137, %v698, 0.0
  %v1206 = vadd.f32 %v1204, %v1205
  %v1207 = vsel %vm1137, %v701, 0.0
  %v1208 = vadd.f32 %v1206, %v1207
  %v1209 = vsel %vm1137, %v706, 0.0
  %v1210 = vadd.f32 %v1208, %v1209
  %v1211 = vsel %vm1137, %v709, 0.0
  %v1212 = vadd.f32 %v1210, %v1211
  %v1213 = vsel %vm1137, %v714, 0.0
  %v1214 = vadd.f32 %v1212, %v1213
  %v1215 = vsel %vm1137, %v717, 0.0
  %v1216 = vadd.f32 %v1214, %v1215
  %v1217 = vsel %vm1137, %v722, 0.0
  %v1218 = vadd.f32 %v1216, %v1217
  %v1219 = vsel %vm1137, %v725, 0.0
  %v1220 = vadd.f32 %v1218, %v1219
  %v1221 = vsel %vm1137, %v730, 0.0
  %v1222 = vadd.f32 %v1220, %v1221
  %v1223 = vsel %vm1137, %v733, 0.0
  %v1224 = vadd.f32 %v1222, %v1223
  %v1225 = vsel %vm1137, %v738, 0.0
  %v1226 = vadd.f32 %v1224, %v1225
  %v1227 = vsel %vm1137, %v741, 0.0
  %v1228 = vadd.f32 %v1226, %v1227
  %v1229 = vsel %vm1137, %v746, 0.0
  %v1230 = vadd.f32 %v1228, %v1229
  %v1231 = vsel %vm1137, %v749, 0.0
  %v1232 = vadd.f32 %v1230, %v1231
  %v1233 = vsel %vm1137, %v754, 0.0
  %v1234 = vadd.f32 %v1232, %v1233
  %v1235 = vsel %vm1137, %v757, 0.0
  %v1236 = vadd.f32 %v1234, %v1235
  %v1237 = vsel %vm1137, %v762, 0.0
  %v1238 = vadd.f32 %v1236, %v1237
  %v1239 = vsel %vm1137, %v765, 0.0
  %v1240 = vadd.f32 %v1238, %v1239
  %v1241 = vsel %vm1137, %v770, 0.0
  %v1242 = vadd.f32 %v1240, %v1241
  %v1243 = vsel %vm1137, %v773, 0.0
  %v1244 = vadd.f32 %v1242, %v1243
  %v1245 = vsel %vm1137, %v778, 0.0
  %v1246 = vadd.f32 %v1244, %v1245
  %v1247 = vsel %vm1137, %v781, 0.0
  %v1248 = vadd.f32 %v1246, %v1247
  %v1249 = vsel %vm1137, %v786, 0.0
  %v1250 = vadd.f32 %v1248, %v1249
  %v1251 = vsel %vm1137, %v789, 0.0
  %v1252 = vadd.f32 %v1250, %v1251
  %v1253 = vsel %vm1137, %v794, 0.0
  %v1254 = vadd.f32 %v1252, %v1253
  %v1255 = vsel %vm1137, %v797, 0.0
  %v1256 = vadd.f32 %v1254, %v1255
  %v1257 = vsel %vm1137, %v802, 0.0
  %v1258 = vadd.f32 %v1256, %v1257
  %v1259 = vsel %vm1137, %v805, 0.0
  %v1260 = vadd.f32 %v1258, %v1259
  %v1261 = vsel %vm1137, %v810, 0.0
  %v1262 = vadd.f32 %v1260, %v1261
  %v1263 = vsel %vm1137, %v813, 0.0
  %v1264 = vadd.f32 %v1262, %v1263
  %v1265 = vrot.slane %v1264, 4
  %v1266 = vadd.f32 %v1264, %v1265
  %v1267 = vrot.slane %v1266, 2
  %v1268 = vadd.f32 %v1266, %v1267
  %v1269 = vrot.slane %v1268, 1
  %v1270 = vadd.f32 %v1268, %v1269
  %vm1271 = vcmask 253952
  %1272 = vst.msk [vmem:[%s3] sm:$0x1] %vm1271, %v1270
  %v1273 = vmul.f32 %v562, %v562
  %v1274 = vmul.f32 %v565, %v565
  %v1275 = vmul.f32 %v570, %v570
  %v1276 = vmul.f32 %v573, %v573
  %v1277 = vmul.f32 %v578, %v578
  %v1278 = vmul.f32 %v581, %v581
  %v1279 = vmul.f32 %v586, %v586
  %v1280 = vmul.f32 %v589, %v589
  %v1281 = vmul.f32 %v594, %v594
  %v1282 = vmul.f32 %v597, %v597
  %v1283 = vmul.f32 %v602, %v602
  %v1284 = vmul.f32 %v605, %v605
  %v1285 = vmul.f32 %v610, %v610
  %v1286 = vmul.f32 %v613, %v613
  %v1287 = vmul.f32 %v618, %v618
  %v1288 = vmul.f32 %v621, %v621
  %v1289 = vmul.f32 %v626, %v626
  %v1290 = vmul.f32 %v629, %v629
  %v1291 = vmul.f32 %v634, %v634
  %v1292 = vmul.f32 %v637, %v637
  %v1293 = vmul.f32 %v642, %v642
  %v1294 = vmul.f32 %v645, %v645
  %v1295 = vmul.f32 %v650, %v650
  %v1296 = vmul.f32 %v653, %v653
  %v1297 = vmul.f32 %v658, %v658
  %v1298 = vmul.f32 %v661, %v661
  %v1299 = vmul.f32 %v666, %v666
  %v1300 = vmul.f32 %v669, %v669
  %v1301 = vmul.f32 %v674, %v674
  %v1302 = vmul.f32 %v677, %v677
  %v1303 = vmul.f32 %v682, %v682
  %v1304 = vmul.f32 %v685, %v685
  %v1305 = vmul.f32 %v690, %v690
  %v1306 = vmul.f32 %v693, %v693
  %v1307 = vmul.f32 %v698, %v698
  %v1308 = vmul.f32 %v701, %v701
  %v1309 = vmul.f32 %v706, %v706
  %v1310 = vmul.f32 %v709, %v709
  %v1311 = vmul.f32 %v714, %v714
  %v1312 = vmul.f32 %v717, %v717
  %v1313 = vmul.f32 %v722, %v722
  %v1314 = vmul.f32 %v725, %v725
  %v1315 = vmul.f32 %v730, %v730
  %v1316 = vmul.f32 %v733, %v733
  %v1317 = vmul.f32 %v738, %v738
  %v1318 = vmul.f32 %v741, %v741
  %v1319 = vmul.f32 %v746, %v746
  %v1320 = vmul.f32 %v749, %v749
  %v1321 = vmul.f32 %v754, %v754
  %v1322 = vmul.f32 %v757, %v757
  %v1323 = vmul.f32 %v762, %v762
  %v1324 = vmul.f32 %v765, %v765
  %v1325 = vmul.f32 %v770, %v770
  %v1326 = vmul.f32 %v773, %v773
  %v1327 = vmul.f32 %v778, %v778
  %v1328 = vmul.f32 %v781, %v781
  %v1329 = vmul.f32 %v786, %v786
  %v1330 = vmul.f32 %v789, %v789
  %v1331 = vmul.f32 %v794, %v794
  %v1332 = vmul.f32 %v797, %v797
  %v1333 = vmul.f32 %v802, %v802
  %v1334 = vmul.f32 %v805, %v805
  %v1335 = vmul.f32 %v810, %v810
  %v1336 = vmul.f32 %v813, %v813
  %v1337 = vsel %vm1137, %v1273, 0.0
  %v1338 = vsel %vm1137, %v1274, 0.0
  %v1339 = vadd.f32 %v1337, %v1338
  %v1340 = vsel %vm1137, %v1275, 0.0
  %v1341 = vadd.f32 %v1339, %v1340
  %v1342 = vsel %vm1137, %v1276, 0.0
  %v1343 = vadd.f32 %v1341, %v1342
  %v1344 = vsel %vm1137, %v1277, 0.0
  %v1345 = vadd.f32 %v1343, %v1344
  %v1346 = vsel %vm1137, %v1278, 0.0
  %v1347 = vadd.f32 %v1345, %v1346
  %v1348 = vsel %vm1137, %v1279, 0.0
  %v1349 = vadd.f32 %v1347, %v1348
  %v1350 = vsel %vm1137, %v1280, 0.0
  %v1351 = vadd.f32 %v1349, %v1350
  %v1352 = vsel %vm1137, %v1281, 0.0
  %v1353 = vadd.f32 %v1351, %v1352
  %v1354 = vsel %vm1137, %v1282, 0.0
  %v1355 = vadd.f32 %v1353, %v1354
  %v1356 = vsel %vm1137, %v1283, 0.0
  %v1357 = vadd.f32 %v1355, %v1356
  %v1358 = vsel %vm1137, %v1284, 0.0
  %v1359 = vadd.f32 %v1357, %v1358
  %v1360 = vsel %vm1137, %v1285, 0.0
  %v1361 = vadd.f32 %v1359, %v1360
  %v1362 = vsel %vm1137, %v1286, 0.0
  %v1363 = vadd.f32 %v1361, %v1362
  %v1364 = vsel %vm1137, %v1287, 0.0
  %v1365 = vadd.f32 %v1363, %v1364
  %v1366 = vsel %vm1137, %v1288, 0.0
  %v1367 = vadd.f32 %v1365, %v1366
  %v1368 = vsel %vm1137, %v1289, 0.0
  %v1369 = vadd.f32 %v1367, %v1368
  %v1370 = vsel %vm1137, %v1290, 0.0
  %v1371 = vadd.f32 %v1369, %v1370
  %v1372 = vsel %vm1137, %v1291, 0.0
  %v1373 = vadd.f32 %v1371, %v1372
  %v1374 = vsel %vm1137, %v1292, 0.0
  %v1375 = vadd.f32 %v1373, %v1374
  %v1376 = vsel %vm1137, %v1293, 0.0
  %v1377 = vadd.f32 %v1375, %v1376
  %v1378 = vsel %vm1137, %v1294, 0.0
  %v1379 = vadd.f32 %v1377, %v1378
  %v1380 = vsel %vm1137, %v1295, 0.0
  %v1381 = vadd.f32 %v1379, %v1380
  %v1382 = vsel %vm1137, %v1296, 0.0
  %v1383 = vadd.f32 %v1381, %v1382
  %v1384 = vsel %vm1137, %v1297, 0.0
  %v1385 = vadd.f32 %v1383, %v1384
  %v1386 = vsel %vm1137, %v1298, 0.0
  %v1387 = vadd.f32 %v1385, %v1386
  %v1388 = vsel %vm1137, %v1299, 0.0
  %v1389 = vadd.f32 %v1387, %v1388
  %v1390 = vsel %vm1137, %v1300, 0.0
  %v1391 = vadd.f32 %v1389, %v1390
  %v1392 = vsel %vm1137, %v1301, 0.0
  %v1393 = vadd.f32 %v1391, %v1392
  %v1394 = vsel %vm1137, %v1302, 0.0
  %v1395 = vadd.f32 %v1393, %v1394
  %v1396 = vsel %vm1137, %v1303, 0.0
  %v1397 = vadd.f32 %v1395, %v1396
  %v1398 = vsel %vm1137, %v1304, 0.0
  %v1399 = vadd.f32 %v1397, %v1398
  %v1400 = vsel %vm1137, %v1305, 0.0
  %v1401 = vadd.f32 %v1399, %v1400
  %v1402 = vsel %vm1137, %v1306, 0.0
  %v1403 = vadd.f32 %v1401, %v1402
  %v1404 = vsel %vm1137, %v1307, 0.0
  %v1405 = vadd.f32 %v1403, %v1404
  %v1406 = vsel %vm1137, %v1308, 0.0
  %v1407 = vadd.f32 %v1405, %v1406
  %v1408 = vsel %vm1137, %v1309, 0.0
  %v1409 = vadd.f32 %v1407, %v1408
  %v1410 = vsel %vm1137, %v1310, 0.0
  %v1411 = vadd.f32 %v1409, %v1410
  %v1412 = vsel %vm1137, %v1311, 0.0
  %v1413 = vadd.f32 %v1411, %v1412
  %v1414 = vsel %vm1137, %v1312, 0.0
  %v1415 = vadd.f32 %v1413, %v1414
  %v1416 = vsel %vm1137, %v1313, 0.0
  %v1417 = vadd.f32 %v1415, %v1416
  %v1418 = vsel %vm1137, %v1314, 0.0
  %v1419 = vadd.f32 %v1417, %v1418
  %v1420 = vsel %vm1137, %v1315, 0.0
  %v1421 = vadd.f32 %v1419, %v1420
  %v1422 = vsel %vm1137, %v1316, 0.0
  %v1423 = vadd.f32 %v1421, %v1422
  %v1424 = vsel %vm1137, %v1317, 0.0
  %v1425 = vadd.f32 %v1423, %v1424
  %v1426 = vsel %vm1137, %v1318, 0.0
  %v1427 = vadd.f32 %v1425, %v1426
  %v1428 = vsel %vm1137, %v1319, 0.0
  %v1429 = vadd.f32 %v1427, %v1428
  %v1430 = vsel %vm1137, %v1320, 0.0
  %v1431 = vadd.f32 %v1429, %v1430
  %v1432 = vsel %vm1137, %v1321, 0.0
  %v1433 = vadd.f32 %v1431, %v1432
  %v1434 = vsel %vm1137, %v1322, 0.0
  %v1435 = vadd.f32 %v1433, %v1434
  %v1436 = vsel %vm1137, %v1323, 0.0
  %v1437 = vadd.f32 %v1435, %v1436
  %v1438 = vsel %vm1137, %v1324, 0.0
  %v1439 = vadd.f32 %v1437, %v1438
  %v1440 = vsel %vm1137, %v1325, 0.0
  %v1441 = vadd.f32 %v1439, %v1440
  %v1442 = vsel %vm1137, %v1326, 0.0
  %v1443 = vadd.f32 %v1441, %v1442
  %v1444 = vsel %vm1137, %v1327, 0.0
  %v1445 = vadd.f32 %v1443, %v1444
  %v1446 = vsel %vm1137, %v1328, 0.0
  %v1447 = vadd.f32 %v1445, %v1446
  %v1448 = vsel %vm1137, %v1329, 0.0
  %v1449 = vadd.f32 %v1447, %v1448
  %v1450 = vsel %vm1137, %v1330, 0.0
  %v1451 = vadd.f32 %v1449, %v1450
  %v1452 = vsel %vm1137, %v1331, 0.0
  %v1453 = vadd.f32 %v1451, %v1452
  %v1454 = vsel %vm1137, %v1332, 0.0
  %v1455 = vadd.f32 %v1453, %v1454
  %v1456 = vsel %vm1137, %v1333, 0.0
  %v1457 = vadd.f32 %v1455, %v1456
  %v1458 = vsel %vm1137, %v1334, 0.0
  %v1459 = vadd.f32 %v1457, %v1458
  %v1460 = vsel %vm1137, %v1335, 0.0
  %v1461 = vadd.f32 %v1459, %v1460
  %v1462 = vsel %vm1137, %v1336, 0.0
  %v1463 = vadd.f32 %v1461, %v1462
  %v1464 = vrot.slane %v1463, 4
  %v1465 = vadd.f32 %v1463, %v1464
  %v1466 = vrot.slane %v1465, 2
  %v1467 = vadd.f32 %v1465, %v1466
  %v1468 = vrot.slane %v1467, 1
  %v1469 = vadd.f32 %v1467, %v1468
  %1470 = vst.msk [vmem:[%s4] sm:$0x1] %vm1271, %v1469
  // Predicated region
  $region10: #{patchgan_forward.7} parent=0 // pred_check
    _
  $region11: #{patchgan_forward.7} parent=0 // pred_check_branch
    %1472 = sbr.rel (0) target = $region13
  $region12: #{patchgan_forward.7} parent=0 // pred_region
    _
  $region13: #{patchgan_forward.7} parent=0 // pred_fallthru
    _
  // Predicated region
  $region14: #{patchgan_forward.7} parent=0 // pred_check
    _
  $region15: #{patchgan_forward.7} parent=0 // pred_check_branch
    %1474 = sbr.rel (0) target = $region17
  $region16: #{patchgan_forward.7} parent=0 // pred_region
    _
  $region17: #{patchgan_forward.7} parent=0 // pred_fallthru
    _
  // Predicated region
  $region18: #{patchgan_forward.7} parent=0 // pred_check
    _
  $region19: #{patchgan_forward.7} parent=0 // pred_check_branch
    %1476 = sbr.rel (0) target = $region21
  $region20: #{patchgan_forward.7} parent=0 // pred_region
    _
  $region21: #{patchgan_forward.7} parent=0 // pred_fallthru
    _
  // Predicated region
  $region22: #{patchgan_forward.7} parent=0 // pred_check
    _
  $region23: #{patchgan_forward.7} parent=0 // pred_check_branch
    %1478 = sbr.rel (0) target = $region25
  $region24: #{patchgan_forward.7} parent=0 // pred_region
    _
  $region25: #{patchgan_forward.7} parent=0 // pred_fallthru
    _
  // Predicated region
  $region26: #{patchgan_forward.7} parent=0 // pred_check
    _
  $region27: #{patchgan_forward.7} parent=0 // pred_check_branch
    %1480 = sbr.rel (0) target = $region29
  $region28: #{patchgan_forward.7} parent=0 // pred_region
    _
  $region29: #{patchgan_forward.7} parent=0 // pred_fallthru
    _
  // Predicated region
  $region30: #{patchgan_forward.7} parent=0 // pred_check
    _
  $region31: #{patchgan_forward.7} parent=0 // pred_check_branch
    %1482 = sbr.rel (0) target = $region33
  $region32: #{patchgan_forward.7} parent=0 // pred_region
    _
  $region33: #{patchgan_forward.7} parent=0 // pred_fallthru
    _

// kernel: patchgan_forward.8
$region0: #{patchgan_forward.8}
  #allocation0 [shape = 'u32[]', space=smem, size = 0x4, offset = 0x4, fixed_abs, tag = 'smem constant byte address 0x4 - core index']
  #allocation1 [shape = 'u32[144,128]{1,0:T(1,128)}', space=vmem, size = 0x12000, scoped, tag = 'internal scratch']
  %s0 = inlined_call_operand.vmem [shape: bf16[128,512], index: 0, kind: input, shape index: {}]
  %s1 = inlined_call_operand.vmem [shape: bf16[512,64], index: 1, kind: input, shape index: {}]
  %s2 = inlined_call_operand.vmem [shape: bf16[128,64], index: 2, kind: output, shape index: {0}]
  %s3 = inlined_call_operand.vmem [shape: f32[1,1,64], index: 3, kind: output, shape index: {1}]
  %s4 = inlined_call_operand.vmem [shape: f32[1,1,64], index: 4, kind: output, shape index: {2}]
  %5 = xla_tuple %s2, %s3, %s4
  %s6 = sld [smem:[#allocation0]]
  $region34: #{patchgan_forward.8} parent=0
    _
  %s8 = ssub.s32 1, %s6
  %s9 = scalar_select 0, %s8, %s6
  // Predicated region
  $region2: #{patchgan_forward.8} parent=0 // pred_check
    _
  $region3: #{patchgan_forward.8} parent=0 // pred_check_branch
    %11 = sbr.rel (0) target = $region5
  $region4: #{patchgan_forward.8} parent=0 // pred_region
    _
  $region5: #{patchgan_forward.8} parent=0 // pred_fallthru
    _
  // Predicated region
  $region6: #{patchgan_forward.8} parent=0 // pred_check
    _
  $region7: #{patchgan_forward.8} parent=0 // pred_check_branch
    %13 = sbr.rel (0) target = $region9
  $region8: #{patchgan_forward.8} parent=0 // pred_region
    _
  $region9: #{patchgan_forward.8} parent=0 // pred_fallthru
    _
  %v15 = vld [vmem:[%s0] sm:$0xff]
  %v16 = vld [vmem:[%s0 + $0x8] sm:$0xff]
  %v17 = vld [vmem:[%s0 + $0x10] sm:$0xff]
  %v18 = vld [vmem:[%s0 + $0x18] sm:$0xff]
  %v19 = vld [vmem:[%s0 + $0x20] sm:$0xff]
  %v20 = vld [vmem:[%s0 + $0x28] sm:$0xff]
  %v21 = vld [vmem:[%s0 + $0x30] sm:$0xff]
  %v22 = vld [vmem:[%s0 + $0x38] sm:$0xff]
  %v23 = vld [vmem:[%s0 + $0x40] sm:$0xff]
  %v24 = vld [vmem:[%s0 + $0x48] sm:$0xff]
  %v25 = vld [vmem:[%s0 + $0x50] sm:$0xff]
  %v26 = vld [vmem:[%s0 + $0x58] sm:$0xff]
  %v27 = vld [vmem:[%s0 + $0x60] sm:$0xff]
  %v28 = vld [vmem:[%s0 + $0x68] sm:$0xff]
  %v29 = vld [vmem:[%s0 + $0x70] sm:$0xff]
  %v30 = vld [vmem:[%s0 + $0x78] sm:$0xff]
  %v31 = vld [vmem:[%s0 + $0x80] sm:$0xff]
  %v32 = vld [vmem:[%s0 + $0x88] sm:$0xff]
  %v33 = vld [vmem:[%s0 + $0x90] sm:$0xff]
  %v34 = vld [vmem:[%s0 + $0x98] sm:$0xff]
  %v35 = vld [vmem:[%s0 + $0xa0] sm:$0xff]
  %v36 = vld [vmem:[%s0 + $0xa8] sm:$0xff]
  %v37 = vld [vmem:[%s0 + $0xb0] sm:$0xff]
  %v38 = vld [vmem:[%s0 + $0xb8] sm:$0xff]
  %v39 = vld [vmem:[%s0 + $0xc0] sm:$0xff]
  %v40 = vld [vmem:[%s0 + $0xc8] sm:$0xff]
  %v41 = vld [vmem:[%s0 + $0xd0] sm:$0xff]
  %v42 = vld [vmem:[%s0 + $0xd8] sm:$0xff]
  %v43 = vld [vmem:[%s0 + $0xe0] sm:$0xff]
  %v44 = vld [vmem:[%s0 + $0xe8] sm:$0xff]
  %v45 = vld [vmem:[%s0 + $0xf0] sm:$0xff]
  %v46 = vld [vmem:[%s0 + $0xf8] sm:$0xff]
  %v47 = vld [vmem:[%s1] sm:$0xf]
  %v48 = vld [vmem:[%s1 + $0x4] sm:$0xf]
  %v49 = vld [vmem:[%s1 + $0x8] sm:$0xf]
  %v50 = vld [vmem:[%s1 + $0xc] sm:$0xf]
  %v51 = vld [vmem:[%s1 + $0x10] sm:$0xf]
  %v52 = vld [vmem:[%s1 + $0x14] sm:$0xf]
  %v53 = vld [vmem:[%s1 + $0x18] sm:$0xf]
  %v54 = vld [vmem:[%s1 + $0x1c] sm:$0xf]
  %v55 = vld [vmem:[%s1 + $0x20] sm:$0xf]
  %v56 = vld [vmem:[%s1 + $0x24] sm:$0xf]
  %v57 = vld [vmem:[%s1 + $0x28] sm:$0xf]
  %v58 = vld [vmem:[%s1 + $0x2c] sm:$0xf]
  %v59 = vld [vmem:[%s1 + $0x30] sm:$0xf]
  %v60 = vld [vmem:[%s1 + $0x34] sm:$0xf]
  %v61 = vld [vmem:[%s1 + $0x38] sm:$0xf]
  %v62 = vld [vmem:[%s1 + $0x3c] sm:$0xf]
  %v63 = vld [vmem:[%s1 + $0x40] sm:$0xf]
  %v64 = vld [vmem:[%s1 + $0x44] sm:$0xf]
  %v65 = vld [vmem:[%s1 + $0x48] sm:$0xf]
  %v66 = vld [vmem:[%s1 + $0x4c] sm:$0xf]
  %v67 = vld [vmem:[%s1 + $0x50] sm:$0xf]
  %v68 = vld [vmem:[%s1 + $0x54] sm:$0xf]
  %v69 = vld [vmem:[%s1 + $0x58] sm:$0xf]
  %v70 = vld [vmem:[%s1 + $0x5c] sm:$0xf]
  %v71 = vld [vmem:[%s1 + $0x60] sm:$0xf]
  %v72 = vld [vmem:[%s1 + $0x64] sm:$0xf]
  %v73 = vld [vmem:[%s1 + $0x68] sm:$0xf]
  %v74 = vld [vmem:[%s1 + $0x6c] sm:$0xf]
  %v75 = vld [vmem:[%s1 + $0x70] sm:$0xf]
  %v76 = vld [vmem:[%s1 + $0x74] sm:$0xf]
  %v77 = vld [vmem:[%s1 + $0x78] sm:$0xf]
  %v78 = vld [vmem:[%s1 + $0x7c] sm:$0xf]
  %v79 = vld [vmem:[%s1 + $0x80] sm:$0xf]
  %v80 = vld [vmem:[%s1 + $0x84] sm:$0xf]
  %v81 = vld [vmem:[%s1 + $0x88] sm:$0xf]
  %v82 = vld [vmem:[%s1 + $0x8c] sm:$0xf]
  %v83 = vld [vmem:[%s1 + $0x90] sm:$0xf]
  %v84 = vld [vmem:[%s1 + $0x94] sm:$0xf]
  %v85 = vld [vmem:[%s1 + $0x98] sm:$0xf]
  %v86 = vld [vmem:[%s1 + $0x9c] sm:$0xf]
  %v87 = vld [vmem:[%s1 + $0xa0] sm:$0xf]
  %v88 = vld [vmem:[%s1 + $0xa4] sm:$0xf]
  %v89 = vld [vmem:[%s1 + $0xa8] sm:$0xf]
  %v90 = vld [vmem:[%s1 + $0xac] sm:$0xf]
  %v91 = vld [vmem:[%s1 + $0xb0] sm:$0xf]
  %v92 = vld [vmem:[%s1 + $0xb4] sm:$0xf]
  %v93 = vld [vmem:[%s1 + $0xb8] sm:$0xf]
  %v94 = vld [vmem:[%s1 + $0xbc] sm:$0xf]
  %v95 = vld [vmem:[%s1 + $0xc0] sm:$0xf]
  %v96 = vld [vmem:[%s1 + $0xc4] sm:$0xf]
  %v97 = vld [vmem:[%s1 + $0xc8] sm:$0xf]
  %v98 = vld [vmem:[%s1 + $0xcc] sm:$0xf]
  %v99 = vld [vmem:[%s1 + $0xd0] sm:$0xf]
  %v100 = vld [vmem:[%s1 + $0xd4] sm:$0xf]
  %v101 = vld [vmem:[%s1 + $0xd8] sm:$0xf]
  %v102 = vld [vmem:[%s1 + $0xdc] sm:$0xf]
  %v103 = vld [vmem:[%s1 + $0xe0] sm:$0xf]
  %v104 = vld [vmem:[%s1 + $0xe4] sm:$0xf]
  %v105 = vld [vmem:[%s1 + $0xe8] sm:$0xf]
  %v106 = vld [vmem:[%s1 + $0xec] sm:$0xf]
  %v107 = vld [vmem:[%s1 + $0xf0] sm:$0xf]
  %v108 = vld [vmem:[%s1 + $0xf4] sm:$0xf]
  %v109 = vld [vmem:[%s1 + $0xf8] sm:$0xf]
  %v110 = vld [vmem:[%s1 + $0xfc] sm:$0xf]
  %v143 = vunpack.c.l.b16 %v15
  %v144 = vunpack.c.h.b16 %v15
  %v145 = vunpack.c.l.b16 %v16
  %v146 = vunpack.c.h.b16 %v16
  %v147 = vunpack.c.l.b16 %v17
  %v148 = vunpack.c.h.b16 %v17
  %v149 = vunpack.c.l.b16 %v18
  %v150 = vunpack.c.h.b16 %v18
  %v151 = vunpack.c.l.b16 %v19
  %v152 = vunpack.c.h.b16 %v19
  %v153 = vunpack.c.l.b16 %v20
  %v154 = vunpack.c.h.b16 %v20
  %v155 = vunpack.c.l.b16 %v21
  %v156 = vunpack.c.h.b16 %v21
  %v157 = vunpack.c.l.b16 %v22
  %v158 = vunpack.c.h.b16 %v22
  %v159 = vunpack.c.l.b16 %v23
  %v160 = vunpack.c.h.b16 %v23
  %v161 = vunpack.c.l.b16 %v24
  %v162 = vunpack.c.h.b16 %v24
  %v163 = vunpack.c.l.b16 %v25
  %v164 = vunpack.c.h.b16 %v25
  %v165 = vunpack.c.l.b16 %v26
  %v166 = vunpack.c.h.b16 %v26
  %v167 = vunpack.c.l.b16 %v27
  %v168 = vunpack.c.h.b16 %v27
  %v169 = vunpack.c.l.b16 %v28
  %v170 = vunpack.c.h.b16 %v28
  %v171 = vunpack.c.l.b16 %v29
  %v172 = vunpack.c.h.b16 %v29
  %v173 = vunpack.c.l.b16 %v30
  %v174 = vunpack.c.h.b16 %v30
  %v175 = vunpack.c.l.b16 %v31
  %v176 = vunpack.c.h.b16 %v31
  %v177 = vunpack.c.l.b16 %v32
  %v178 = vunpack.c.h.b16 %v32
  %v179 = vunpack.c.l.b16 %v33
  %v180 = vunpack.c.h.b16 %v33
  %v181 = vunpack.c.l.b16 %v34
  %v182 = vunpack.c.h.b16 %v34
  %v183 = vunpack.c.l.b16 %v35
  %v184 = vunpack.c.h.b16 %v35
  %v185 = vunpack.c.l.b16 %v36
  %v186 = vunpack.c.h.b16 %v36
  %v187 = vunpack.c.l.b16 %v37
  %v188 = vunpack.c.h.b16 %v37
  %v189 = vunpack.c.l.b16 %v38
  %v190 = vunpack.c.h.b16 %v38
  %v191 = vunpack.c.l.b16 %v39
  %v192 = vunpack.c.h.b16 %v39
  %v193 = vunpack.c.l.b16 %v40
  %v194 = vunpack.c.h.b16 %v40
  %v195 = vunpack.c.l.b16 %v41
  %v196 = vunpack.c.h.b16 %v41
  %v197 = vunpack.c.l.b16 %v42
  %v198 = vunpack.c.h.b16 %v42
  %v199 = vunpack.c.l.b16 %v43
  %v200 = vunpack.c.h.b16 %v43
  %v201 = vunpack.c.l.b16 %v44
  %v202 = vunpack.c.h.b16 %v44
  %v203 = vunpack.c.l.b16 %v45
  %v204 = vunpack.c.h.b16 %v45
  %v205 = vunpack.c.l.b16 %v46
  %v206 = vunpack.c.h.b16 %v46
  %v207 = vpack.c.b16 %v147, %v143
  %v208 = vpack.c.b16 %v148, %v144
  %v209 = vpack.c.b16 %v149, %v145
  %v210 = vpack.c.b16 %v150, %v146
  %v211 = vpack.c.b16 %v155, %v151
  %v212 = vpack.c.b16 %v156, %v152
  %v213 = vpack.c.b16 %v157, %v153
  %v214 = vpack.c.b16 %v158, %v154
  %v215 = vpack.c.b16 %v163, %v159
  %v216 = vpack.c.b16 %v164, %v160
  %v217 = vpack.c.b16 %v165, %v161
  %v218 = vpack.c.b16 %v166, %v162
  %v219 = vpack.c.b16 %v171, %v167
  %v220 = vpack.c.b16 %v172, %v168
  %v221 = vpack.c.b16 %v173, %v169
  %v222 = vpack.c.b16 %v174, %v170
  %v223 = vpack.c.b16 %v179, %v175
  %v224 = vpack.c.b16 %v180, %v176
  %v225 = vpack.c.b16 %v181, %v177
  %v226 = vpack.c.b16 %v182, %v178
  %v227 = vpack.c.b16 %v187, %v183
  %v228 = vpack.c.b16 %v188, %v184
  %v229 = vpack.c.b16 %v189, %v185
  %v230 = vpack.c.b16 %v190, %v186
  %v231 = vpack.c.b16 %v195, %v191
  %v232 = vpack.c.b16 %v196, %v192
  %v233 = vpack.c.b16 %v197, %v193
  %v234 = vpack.c.b16 %v198, %v194
  %v235 = vpack.c.b16 %v203, %v199
  %v236 = vpack.c.b16 %v204, %v200
  %v237 = vpack.c.b16 %v205, %v201
  %v238 = vpack.c.b16 %v206, %v202
  %v335 = vunpack.c.l.b16 %v47
  %v336 = vunpack.c.l.b16 %v48
  %v337 = vunpack.c.l.b16 %v49
  %v338 = vunpack.c.l.b16 %v50
  %v339 = vunpack.c.l.b16 %v51
  %v340 = vunpack.c.l.b16 %v52
  %v341 = vunpack.c.l.b16 %v53
  %v342 = vunpack.c.l.b16 %v54
  %v343 = vunpack.c.l.b16 %v55
  %v344 = vunpack.c.l.b16 %v56
  %v345 = vunpack.c.l.b16 %v57
  %v346 = vunpack.c.l.b16 %v58
  %v347 = vunpack.c.l.b16 %v59
  %v348 = vunpack.c.l.b16 %v60
  %v349 = vunpack.c.l.b16 %v61
  %v350 = vunpack.c.l.b16 %v62
  %v351 = vunpack.c.l.b16 %v63
  %v352 = vunpack.c.l.b16 %v64
  %v353 = vunpack.c.l.b16 %v65
  %v354 = vunpack.c.l.b16 %v66
  %v355 = vunpack.c.l.b16 %v67
  %v356 = vunpack.c.l.b16 %v68
  %v357 = vunpack.c.l.b16 %v69
  %v358 = vunpack.c.l.b16 %v70
  %v359 = vunpack.c.l.b16 %v71
  %v360 = vunpack.c.l.b16 %v72
  %v361 = vunpack.c.l.b16 %v73
  %v362 = vunpack.c.l.b16 %v74
  %v363 = vunpack.c.l.b16 %v75
  %v364 = vunpack.c.l.b16 %v76
  %v365 = vunpack.c.l.b16 %v77
  %v366 = vunpack.c.l.b16 %v78
  %v367 = vunpack.c.l.b16 %v79
  %v368 = vunpack.c.l.b16 %v80
  %v369 = vunpack.c.l.b16 %v81
  %v370 = vunpack.c.l.b16 %v82
  %v371 = vunpack.c.l.b16 %v83
  %v372 = vunpack.c.l.b16 %v84
  %v373 = vunpack.c.l.b16 %v85
  %v374 = vunpack.c.l.b16 %v86
  %v375 = vunpack.c.l.b16 %v87
  %v376 = vunpack.c.l.b16 %v88
  %v377 = vunpack.c.l.b16 %v89
  %v378 = vunpack.c.l.b16 %v90
  %v379 = vunpack.c.l.b16 %v91
  %v380 = vunpack.c.l.b16 %v92
  %v381 = vunpack.c.l.b16 %v93
  %v382 = vunpack.c.l.b16 %v94
  %v383 = vunpack.c.l.b16 %v95
  %v384 = vunpack.c.l.b16 %v96
  %v385 = vunpack.c.l.b16 %v97
  %v386 = vunpack.c.l.b16 %v98
  %v387 = vunpack.c.l.b16 %v99
  %v388 = vunpack.c.l.b16 %v100
  %v389 = vunpack.c.l.b16 %v101
  %v390 = vunpack.c.l.b16 %v102
  %v391 = vunpack.c.l.b16 %v103
  %v392 = vunpack.c.l.b16 %v104
  %v393 = vunpack.c.l.b16 %v105
  %v394 = vunpack.c.l.b16 %v106
  %v395 = vunpack.c.l.b16 %v107
  %v396 = vunpack.c.l.b16 %v108
  %v397 = vunpack.c.l.b16 %v109
  %v398 = vunpack.c.l.b16 %v110
  %v399 = vpack.c.b16 %v336, %v335
  %v400 = vpack.c.b16 %v338, %v337
  %v401 = vpack.c.b16 %v340, %v339
  %v402 = vpack.c.b16 %v342, %v341
  %v403 = vpack.c.b16 %v344, %v343
  %v404 = vpack.c.b16 %v346, %v345
  %v405 = vpack.c.b16 %v348, %v347
  %v406 = vpack.c.b16 %v350, %v349
  %v407 = vpack.c.b16 %v352, %v351
  %v408 = vpack.c.b16 %v354, %v353
  %v409 = vpack.c.b16 %v356, %v355
  %v410 = vpack.c.b16 %v358, %v357
  %v411 = vpack.c.b16 %v360, %v359
  %v412 = vpack.c.b16 %v362, %v361
  %v413 = vpack.c.b16 %v364, %v363
  %v414 = vpack.c.b16 %v366, %v365
  %v415 = vpack.c.b16 %v368, %v367
  %v416 = vpack.c.b16 %v370, %v369
  %v417 = vpack.c.b16 %v372, %v371
  %v418 = vpack.c.b16 %v374, %v373
  %v419 = vpack.c.b16 %v376, %v375
  %v420 = vpack.c.b16 %v378, %v377
  %v421 = vpack.c.b16 %v380, %v379
  %v422 = vpack.c.b16 %v382, %v381
  %v423 = vpack.c.b16 %v384, %v383
  %v424 = vpack.c.b16 %v386, %v385
  %v425 = vpack.c.b16 %v388, %v387
  %v426 = vpack.c.b16 %v390, %v389
  %v427 = vpack.c.b16 %v392, %v391
  %v428 = vpack.c.b16 %v394, %v393
  %v429 = vpack.c.b16 %v396, %v395
  %v430 = vpack.c.b16 %v398, %v397
  %463 = vmatprep.subr.bf16.mxu0 0
  %464 = vmatpush1.bf16.msra.mxu0 %v406
  %465 = vmatprep.subr.bf16.mxu0 0
  %466 = vmatpush1.bf16.msra.mxu0 %v405
  %467 = vmatprep.subr.bf16.mxu0 0
  %468 = vmatpush1.bf16.msra.mxu0 %v404
  %469 = vmatprep.subr.bf16.mxu0 0
  %470 = vmatpush1.bf16.msra.mxu0 %v403
  %471 = vmatprep.subr.bf16.mxu0 0
  %472 = vmatpush1.bf16.msra.mxu0 %v402
  %473 = vmatprep.subr.bf16.mxu0 0
  %474 = vmatpush1.bf16.msra.mxu0 %v401
  %475 = vmatprep.subr.bf16.mxu0 0
  %476 = vmatpush1.bf16.msra.mxu0 %v400
  %477 = vmatprep.subr.bf16.mxu0 0
  %478 = vmatpush1.bf16.msra.mxu0 %v399
  %479 = vmatprep.subr.bf16.mxu0 0
  %480 = vmatpush2.bf16.msra.mxu0 %v414
  %481 = vmatprep.subr.bf16.mxu0 0
  %482 = vmatpush2.bf16.msra.mxu0 %v413
  %483 = vmatprep.subr.bf16.mxu0 0
  %484 = vmatpush2.bf16.msra.mxu0 %v412
  %485 = vmatprep.subr.bf16.mxu0 0
  %486 = vmatpush2.bf16.msra.mxu0 %v411
  %487 = vmatprep.subr.bf16.mxu0 0
  %488 = vmatpush2.bf16.msra.mxu0 %v410
  %489 = vmatprep.subr.bf16.mxu0 0
  %490 = vmatpush2.bf16.msra.mxu0 %v409
  %491 = vmatprep.subr.bf16.mxu0 0
  %492 = vmatpush2.bf16.msra.mxu0 %v408
  %493 = vmatprep.subr.bf16.mxu0 0
  %494 = vmatpush2.bf16.msra.mxu0 %v407
  %495 = vmatprep.mubr.bf16.mxu0 %v208
  %496 = vmatmul.mubr.bf16.gmra.mxu0 %v207
  %v497 = vpop.f32.mrf.mxu0
  %v498 = vadd.f32 0.0, %v497
  %v499 = vpop.f32.mrf.mxu0
  %v500 = vpop.f32.mrf.mxu0
  %v501 = vadd.f32 0.0, %v500
  %v502 = vpop.f32.mrf.mxu0
  %503 = vmatprep.mubr.bf16.mxu0 %v212
  %504 = vmatmul.mubr.bf16.gmra.mxu0 %v211
  %v505 = vpop.f32.mrf.mxu0
  %v506 = vadd.f32 0.0, %v505
  %v507 = vpop.f32.mrf.mxu0
  %v508 = vpop.f32.mrf.mxu0
  %v509 = vadd.f32 0.0, %v508
  %v510 = vpop.f32.mrf.mxu0
  %511 = vmatprep.mubr.bf16.mxu0 %v216
  %512 = vmatmul.mubr.bf16.gmra.mxu0 %v215
  %v513 = vpop.f32.mrf.mxu0
  %v514 = vadd.f32 0.0, %v513
  %v515 = vpop.f32.mrf.mxu0
  %v516 = vpop.f32.mrf.mxu0
  %v517 = vadd.f32 0.0, %v516
  %v518 = vpop.f32.mrf.mxu0
  %519 = vmatprep.mubr.bf16.mxu0 %v220
  %520 = vmatmul.mubr.bf16.gmra.mxu0 %v219
  %v521 = vpop.f32.mrf.mxu0
  %v522 = vadd.f32 0.0, %v521
  %v523 = vpop.f32.mrf.mxu0
  %v524 = vpop.f32.mrf.mxu0
  %v525 = vadd.f32 0.0, %v524
  %v526 = vpop.f32.mrf.mxu0
  %527 = vmatprep.mubr.bf16.mxu0 %v224
  %528 = vmatmul.mubr.bf16.gmra.mxu0 %v223
  %v529 = vpop.f32.mrf.mxu0
  %v530 = vadd.f32 0.0, %v529
  %v531 = vpop.f32.mrf.mxu0
  %v532 = vpop.f32.mrf.mxu0
  %v533 = vadd.f32 0.0, %v532
  %v534 = vpop.f32.mrf.mxu0
  %535 = vmatprep.mubr.bf16.mxu0 %v228
  %536 = vmatmul.mubr.bf16.gmra.mxu0 %v227
  %v537 = vpop.f32.mrf.mxu0
  %v538 = vadd.f32 0.0, %v537
  %v539 = vpop.f32.mrf.mxu0
  %v540 = vpop.f32.mrf.mxu0
  %v541 = vadd.f32 0.0, %v540
  %v542 = vpop.f32.mrf.mxu0
  %543 = vmatprep.mubr.bf16.mxu0 %v232
  %544 = vmatmul.mubr.bf16.gmra.mxu0 %v231
  %v545 = vpop.f32.mrf.mxu0
  %v546 = vadd.f32 0.0, %v545
  %v547 = vpop.f32.mrf.mxu0
  %v548 = vpop.f32.mrf.mxu0
  %v549 = vadd.f32 0.0, %v548
  %v550 = vpop.f32.mrf.mxu0
  %551 = vmatprep.mubr.bf16.mxu0 %v236
  %552 = vmatmul.mubr.bf16.gmra.mxu0 %v235
  %v553 = vpop.f32.mrf.mxu0
  %v554 = vadd.f32 0.0, %v553
  %v555 = vpop.f32.mrf.mxu0
  %v556 = vpop.f32.mrf.mxu0
  %v557 = vadd.f32 0.0, %v556
  %v558 = vpop.f32.mrf.mxu0
  %559 = vdwg.mxu0
  %560 = vmatprep.subr.bf16.mxu0 0
  %561 = vmatpush1.bf16.msra.mxu0 %v422
  %562 = vmatprep.subr.bf16.mxu0 0
  %563 = vmatpush1.bf16.msra.mxu0 %v421
  %564 = vmatprep.subr.bf16.mxu0 0
  %565 = vmatpush1.bf16.msra.mxu0 %v420
  %566 = vmatprep.subr.bf16.mxu0 0
  %567 = vmatpush1.bf16.msra.mxu0 %v419
  %568 = vmatprep.subr.bf16.mxu0 0
  %569 = vmatpush1.bf16.msra.mxu0 %v418
  %570 = vmatprep.subr.bf16.mxu0 0
  %571 = vmatpush1.bf16.msra.mxu0 %v417
  %572 = vmatprep.subr.bf16.mxu0 0
  %573 = vmatpush1.bf16.msra.mxu0 %v416
  %574 = vmatprep.subr.bf16.mxu0 0
  %575 = vmatpush1.bf16.msra.mxu0 %v415
  %576 = vmatprep.subr.bf16.mxu0 0
  %577 = vmatpush2.bf16.msra.mxu0 %v430
  %578 = vmatprep.subr.bf16.mxu0 0
  %579 = vmatpush2.bf16.msra.mxu0 %v429
  %580 = vmatprep.subr.bf16.mxu0 0
  %581 = vmatpush2.bf16.msra.mxu0 %v428
  %582 = vmatprep.subr.bf16.mxu0 0
  %583 = vmatpush2.bf16.msra.mxu0 %v427
  %584 = vmatprep.subr.bf16.mxu0 0
  %585 = vmatpush2.bf16.msra.mxu0 %v426
  %586 = vmatprep.subr.bf16.mxu0 0
  %587 = vmatpush2.bf16.msra.mxu0 %v425
  %588 = vmatprep.subr.bf16.mxu0 0
  %589 = vmatpush2.bf16.msra.mxu0 %v424
  %590 = vmatprep.subr.bf16.mxu0 0
  %591 = vmatpush2.bf16.msra.mxu0 %v423
  %592 = vmatprep.mubr.bf16.mxu0 %v210
  %593 = vmatmul.mubr.bf16.gmra.mxu0 %v209
  %v594 = vpop.f32.mrf.mxu0
  %v595 = vadd.f32 %v498, %v594
  %v596 = vpop.f32.mrf.mxu0
  %v597 = vpop.f32.mrf.mxu0
  %v598 = vadd.f32 %v501, %v597
  %v599 = vpop.f32.mrf.mxu0
  %600 = vmatprep.mubr.bf16.mxu0 %v214
  %601 = vmatmul.mubr.bf16.gmra.mxu0 %v213
  %v602 = vpop.f32.mrf.mxu0
  %v603 = vadd.f32 %v506, %v602
  %v604 = vpop.f32.mrf.mxu0
  %v605 = vpop.f32.mrf.mxu0
  %v606 = vadd.f32 %v509, %v605
  %v607 = vpop.f32.mrf.mxu0
  %608 = vmatprep.mubr.bf16.mxu0 %v218
  %609 = vmatmul.mubr.bf16.gmra.mxu0 %v217
  %v610 = vpop.f32.mrf.mxu0
  %v611 = vadd.f32 %v514, %v610
  %v612 = vpop.f32.mrf.mxu0
  %v613 = vpop.f32.mrf.mxu0
  %v614 = vadd.f32 %v517, %v613
  %v615 = vpop.f32.mrf.mxu0
  %616 = vmatprep.mubr.bf16.mxu0 %v222
  %617 = vmatmul.mubr.bf16.gmra.mxu0 %v221
  %v618 = vpop.f32.mrf.mxu0
  %v619 = vadd.f32 %v522, %v618
  %v620 = vpop.f32.mrf.mxu0
  %v621 = vpop.f32.mrf.mxu0
  %v622 = vadd.f32 %v525, %v621
  %v623 = vpop.f32.mrf.mxu0
  %624 = vmatprep.mubr.bf16.mxu0 %v226
  %625 = vmatmul.mubr.bf16.gmra.mxu0 %v225
  %v626 = vpop.f32.mrf.mxu0
  %v627 = vadd.f32 %v530, %v626
  %v628 = vpop.f32.mrf.mxu0
  %v629 = vpop.f32.mrf.mxu0
  %v630 = vadd.f32 %v533, %v629
  %v631 = vpop.f32.mrf.mxu0
  %632 = vmatprep.mubr.bf16.mxu0 %v230
  %633 = vmatmul.mubr.bf16.gmra.mxu0 %v229
  %v634 = vpop.f32.mrf.mxu0
  %v635 = vadd.f32 %v538, %v634
  %v636 = vpop.f32.mrf.mxu0
  %v637 = vpop.f32.mrf.mxu0
  %v638 = vadd.f32 %v541, %v637
  %v639 = vpop.f32.mrf.mxu0
  %640 = vmatprep.mubr.bf16.mxu0 %v234
  %641 = vmatmul.mubr.bf16.gmra.mxu0 %v233
  %v642 = vpop.f32.mrf.mxu0
  %v643 = vadd.f32 %v546, %v642
  %v644 = vpop.f32.mrf.mxu0
  %v645 = vpop.f32.mrf.mxu0
  %v646 = vadd.f32 %v549, %v645
  %v647 = vpop.f32.mrf.mxu0
  %648 = vmatprep.mubr.bf16.mxu0 %v238
  %649 = vmatmul.mubr.bf16.gmra.mxu0 %v237
  %v650 = vpop.f32.mrf.mxu0
  %v651 = vadd.f32 %v554, %v650
  %v652 = vpop.f32.mrf.mxu0
  %v653 = vpop.f32.mrf.mxu0
  %v654 = vadd.f32 %v557, %v653
  %v655 = vpop.f32.mrf.mxu0
  %656 = vdwg.mxu0
  %v657 = vpack.c.bf16 %v598, %v595
  %v658 = vpack.c.bf16 %v606, %v603
  %v659 = vpack.c.bf16 %v614, %v611
  %v660 = vpack.c.bf16 %v622, %v619
  %v661 = vpack.c.bf16 %v630, %v627
  %v662 = vpack.c.bf16 %v638, %v635
  %v663 = vpack.c.bf16 %v646, %v643
  %v664 = vpack.c.bf16 %v654, %v651
  %v673 = vunpack.c.l.b16 %v657
  %v674 = vunpack.c.h.b16 %v657
  %v675 = vunpack.c.l.b16 %v658
  %v676 = vunpack.c.h.b16 %v658
  %v677 = vunpack.c.l.b16 %v659
  %v678 = vunpack.c.h.b16 %v659
  %v679 = vunpack.c.l.b16 %v660
  %v680 = vunpack.c.h.b16 %v660
  %v681 = vunpack.c.l.b16 %v661
  %v682 = vunpack.c.h.b16 %v661
  %v683 = vunpack.c.l.b16 %v662
  %v684 = vunpack.c.h.b16 %v662
  %v685 = vunpack.c.l.b16 %v663
  %v686 = vunpack.c.h.b16 %v663
  %v687 = vunpack.c.l.b16 %v664
  %v688 = vunpack.c.h.b16 %v664
  %v689 = vpack.c.b16 %v673, %v673
  %v690 = vpack.c.b16 %v674, %v674
  %v691 = vpack.c.b16 %v675, %v675
  %v692 = vpack.c.b16 %v676, %v676
  %v693 = vpack.c.b16 %v677, %v677
  %v694 = vpack.c.b16 %v678, %v678
  %v695 = vpack.c.b16 %v679, %v679
  %v696 = vpack.c.b16 %v680, %v680
  %v697 = vpack.c.b16 %v681, %v681
  %v698 = vpack.c.b16 %v682, %v682
  %v699 = vpack.c.b16 %v683, %v683
  %v700 = vpack.c.b16 %v684, %v684
  %v701 = vpack.c.b16 %v685, %v685
  %v702 = vpack.c.b16 %v686, %v686
  %v703 = vpack.c.b16 %v687, %v687
  %v704 = vpack.c.b16 %v688, %v688
  %vm721 = vcmask 519168
  %722 = vst.msk [vmem:[%s2] sm:$0xf] %vm721, %v689
  %723 = vst.msk [vmem:[%s2 + $0x4] sm:$0xf] %vm721, %v690
  %724 = vst.msk [vmem:[%s2 + $0x8] sm:$0xf] %vm721, %v691
  %725 = vst.msk [vmem:[%s2 + $0xc] sm:$0xf] %vm721, %v692
  %726 = vst.msk [vmem:[%s2 + $0x10] sm:$0xf] %vm721, %v693
  %727 = vst.msk [vmem:[%s2 + $0x14] sm:$0xf] %vm721, %v694
  %728 = vst.msk [vmem:[%s2 + $0x18] sm:$0xf] %vm721, %v695
  %729 = vst.msk [vmem:[%s2 + $0x1c] sm:$0xf] %vm721, %v696
  %730 = vst.msk [vmem:[%s2 + $0x20] sm:$0xf] %vm721, %v697
  %731 = vst.msk [vmem:[%s2 + $0x24] sm:$0xf] %vm721, %v698
  %732 = vst.msk [vmem:[%s2 + $0x28] sm:$0xf] %vm721, %v699
  %733 = vst.msk [vmem:[%s2 + $0x2c] sm:$0xf] %vm721, %v700
  %734 = vst.msk [vmem:[%s2 + $0x30] sm:$0xf] %vm721, %v701
  %735 = vst.msk [vmem:[%s2 + $0x34] sm:$0xf] %vm721, %v702
  %736 = vst.msk [vmem:[%s2 + $0x38] sm:$0xf] %vm721, %v703
  %737 = vst.msk [vmem:[%s2 + $0x3c] sm:$0xf] %vm721, %v704
  %vm738 = vcmask 523264
  %v739 = vsel %vm738, %v595, 0.0
  %v740 = vsel %vm738, %v598, 0.0
  %v741 = vadd.f32 %v739, %v740
  %v742 = vsel %vm738, %v603, 0.0
  %v743 = vadd.f32 %v741, %v742
  %v744 = vsel %vm738, %v606, 0.0
  %v745 = vadd.f32 %v743, %v744
  %v746 = vsel %vm738, %v611, 0.0
  %v747 = vadd.f32 %v745, %v746
  %v748 = vsel %vm738, %v614, 0.0
  %v749 = vadd.f32 %v747, %v748
  %v750 = vsel %vm738, %v619, 0.0
  %v751 = vadd.f32 %v749, %v750
  %v752 = vsel %vm738, %v622, 0.0
  %v753 = vadd.f32 %v751, %v752
  %v754 = vsel %vm738, %v627, 0.0
  %v755 = vadd.f32 %v753, %v754
  %v756 = vsel %vm738, %v630, 0.0
  %v757 = vadd.f32 %v755, %v756
  %v758 = vsel %vm738, %v635, 0.0
  %v759 = vadd.f32 %v757, %v758
  %v760 = vsel %vm738, %v638, 0.0
  %v761 = vadd.f32 %v759, %v760
  %v762 = vsel %vm738, %v643, 0.0
  %v763 = vadd.f32 %v761, %v762
  %v764 = vsel %vm738, %v646, 0.0
  %v765 = vadd.f32 %v763, %v764
  %v766 = vsel %vm738, %v651, 0.0
  %v767 = vadd.f32 %v765, %v766
  %v768 = vsel %vm738, %v654, 0.0
  %v769 = vadd.f32 %v767, %v768
  %v770 = vrot.slane %v769, 4
  %v771 = vadd.f32 %v769, %v770
  %v772 = vrot.slane %v771, 2
  %v773 = vadd.f32 %v771, %v772
  %v774 = vrot.slane %v773, 1
  %v775 = vadd.f32 %v773, %v774
  %vm776 = vcmask 516096
  %777 = vst.msk [vmem:[%s3] sm:$0x1] %vm776, %v775
  %v778 = vmul.f32 %v595, %v595
  %v779 = vmul.f32 %v598, %v598
  %v780 = vmul.f32 %v603, %v603
  %v781 = vmul.f32 %v606, %v606
  %v782 = vmul.f32 %v611, %v611
  %v783 = vmul.f32 %v614, %v614
  %v784 = vmul.f32 %v619, %v619
  %v785 = vmul.f32 %v622, %v622
  %v786 = vmul.f32 %v627, %v627
  %v787 = vmul.f32 %v630, %v630
  %v788 = vmul.f32 %v635, %v635
  %v789 = vmul.f32 %v638, %v638
  %v790 = vmul.f32 %v643, %v643
  %v791 = vmul.f32 %v646, %v646
  %v792 = vmul.f32 %v651, %v651
  %v793 = vmul.f32 %v654, %v654
  %v794 = vsel %vm738, %v778, 0.0
  %v795 = vsel %vm738, %v779, 0.0
  %v796 = vadd.f32 %v794, %v795
  %v797 = vsel %vm738, %v780, 0.0
  %v798 = vadd.f32 %v796, %v797
  %v799 = vsel %vm738, %v781, 0.0
  %v800 = vadd.f32 %v798, %v799
  %v801 = vsel %vm738, %v782, 0.0
  %v802 = vadd.f32 %v800, %v801
  %v803 = vsel %vm738, %v783, 0.0
  %v804 = vadd.f32 %v802, %v803
  %v805 = vsel %vm738, %v784, 0.0
  %v806 = vadd.f32 %v804, %v805
  %v807 = vsel %vm738, %v785, 0.0
  %v808 = vadd.f32 %v806, %v807
  %v809 = vsel %vm738, %v786, 0.0
  %v810 = vadd.f32 %v808, %v809
  %v811 = vsel %vm738, %v787, 0.0
  %v812 = vadd.f32 %v810, %v811
  %v813 = vsel %vm738, %v788, 0.0
  %v814 = vadd.f32 %v812, %v813
  %v815 = vsel %vm738, %v789, 0.0
  %v816 = vadd.f32 %v814, %v815
  %v817 = vsel %vm738, %v790, 0.0
  %v818 = vadd.f32 %v816, %v817
  %v819 = vsel %vm738, %v791, 0.0
  %v820 = vadd.f32 %v818, %v819
  %v821 = vsel %vm738, %v792, 0.0
  %v822 = vadd.f32 %v820, %v821
  %v823 = vsel %vm738, %v793, 0.0
  %v824 = vadd.f32 %v822, %v823
  %v825 = vrot.slane %v824, 4
  %v826 = vadd.f32 %v824, %v825
  %v827 = vrot.slane %v826, 2
  %v828 = vadd.f32 %v826, %v827
  %v829 = vrot.slane %v828, 1
  %v830 = vadd.f32 %v828, %v829
  %831 = vst.msk [vmem:[%s4] sm:$0x1] %vm776, %v830
  // Predicated region
  $region10: #{patchgan_forward.8} parent=0 // pred_check
    _
  $region11: #{patchgan_forward.8} parent=0 // pred_check_branch
    %833 = sbr.rel (0) target = $region13
  $region12: #{patchgan_forward.8} parent=0 // pred_region
    _
  $region13: #{patchgan_forward.8} parent=0 // pred_fallthru
    _
  // Predicated region
  $region14: #{patchgan_forward.8} parent=0 // pred_check
    _
  $region15: #{patchgan_forward.8} parent=0 // pred_check_branch
    %835 = sbr.rel (0) target = $region17
  $region16: #{patchgan_forward.8} parent=0 // pred_region
    _
  $region17: #{patchgan_forward.8} parent=0 // pred_fallthru
    _
  // Predicated region
  $region18: #{patchgan_forward.8} parent=0 // pred_check
    _
  $region19: #{patchgan_forward.8} parent=0 // pred_check_branch
    %837 = sbr.rel (0) target = $region21
  $region20: #{patchgan_forward.8} parent=0 // pred_region
    _
  $region21: #{patchgan_forward.8} parent=0 // pred_fallthru
    _
  // Predicated region
  $region22: #{patchgan_forward.8} parent=0 // pred_check
    _
  $region23: #{patchgan_forward.8} parent=0 // pred_check_branch
    %839 = sbr.rel (0) target = $region25
  $region24: #{patchgan_forward.8} parent=0 // pred_region
    _
  $region25: #{patchgan_forward.8} parent=0 // pred_fallthru
    _
  // Predicated region
  $region26: #{patchgan_forward.8} parent=0 // pred_check
    _
  $region27: #{patchgan_forward.8} parent=0 // pred_check_branch
    %841 = sbr.rel (0) target = $region29
  $region28: #{patchgan_forward.8} parent=0 // pred_region
    _
  $region29: #{patchgan_forward.8} parent=0 // pred_fallthru
    _
  // Predicated region
  $region30: #{patchgan_forward.8} parent=0 // pred_check
    _
  $region31: #{patchgan_forward.8} parent=0 // pred_check_branch
    %843 = sbr.rel (0) target = $region33
  $region32: #{patchgan_forward.8} parent=0 // pred_region
    _
  $region33: #{patchgan_forward.8} parent=0 // pred_fallthru
    _

// kernel: patchgan_forward.9
$region0: #{patchgan_forward.9}
  #allocation0 [shape = 'u32[]', space=smem, size = 0x4, offset = 0x4, fixed_abs, tag = 'smem constant byte address 0x4 - core index']
  #allocation1 [shape = 'u32[144,128]{1,0:T(1,128)}', space=vmem, size = 0x12000, scoped, tag = 'internal scratch']
  %s0 = inlined_call_operand.vmem [shape: bf16[128,1024], index: 0, kind: input, shape index: {}]
  %s1 = inlined_call_operand.vmem [shape: bf16[1024,128], index: 1, kind: input, shape index: {}]
  %s2 = inlined_call_operand.vmem [shape: bf16[128,128], index: 2, kind: output, shape index: {0}]
  %s3 = inlined_call_operand.vmem [shape: f32[1,1,128], index: 3, kind: output, shape index: {1}]
  %s4 = inlined_call_operand.vmem [shape: f32[1,1,128], index: 4, kind: output, shape index: {2}]
  %5 = xla_tuple %s2, %s3, %s4
  %s6 = sld [smem:[#allocation0]]
  $region34: #{patchgan_forward.9} parent=0
    _
  %s8 = ssub.s32 1, %s6
  %s9 = scalar_select 0, %s8, %s6
  // Predicated region
  $region2: #{patchgan_forward.9} parent=0 // pred_check
    _
  $region3: #{patchgan_forward.9} parent=0 // pred_check_branch
    %11 = sbr.rel (0) target = $region5
  $region4: #{patchgan_forward.9} parent=0 // pred_region
    _
  $region5: #{patchgan_forward.9} parent=0 // pred_fallthru
    _
  // Predicated region
  $region6: #{patchgan_forward.9} parent=0 // pred_check
    _
  $region7: #{patchgan_forward.9} parent=0 // pred_check_branch
    %13 = sbr.rel (0) target = $region9
  $region8: #{patchgan_forward.9} parent=0 // pred_region
    _
  $region9: #{patchgan_forward.9} parent=0 // pred_fallthru
    _
  %v15 = vld [vmem:[%s0] sm:$0xff]
  %v16 = vld [vmem:[%s0 + $0x8] sm:$0xff]
  %v17 = vld [vmem:[%s0 + $0x10] sm:$0xff]
  %v18 = vld [vmem:[%s0 + $0x18] sm:$0xff]
  %v19 = vld [vmem:[%s0 + $0x20] sm:$0xff]
  %v20 = vld [vmem:[%s0 + $0x28] sm:$0xff]
  %v21 = vld [vmem:[%s0 + $0x30] sm:$0xff]
  %v22 = vld [vmem:[%s0 + $0x38] sm:$0xff]
  %v23 = vld [vmem:[%s0 + $0x40] sm:$0xff]
  %v24 = vld [vmem:[%s0 + $0x48] sm:$0xff]
  %v25 = vld [vmem:[%s0 + $0x50] sm:$0xff]
  %v26 = vld [vmem:[%s0 + $0x58] sm:$0xff]
  %v27 = vld [vmem:[%s0 + $0x60] sm:$0xff]
  %v28 = vld [vmem:[%s0 + $0x68] sm:$0xff]
  %v29 = vld [vmem:[%s0 + $0x70] sm:$0xff]
  %v30 = vld [vmem:[%s0 + $0x78] sm:$0xff]
  %v31 = vld [vmem:[%s0 + $0x80] sm:$0xff]
  %v32 = vld [vmem:[%s0 + $0x88] sm:$0xff]
  %v33 = vld [vmem:[%s0 + $0x90] sm:$0xff]
  %v34 = vld [vmem:[%s0 + $0x98] sm:$0xff]
  %v35 = vld [vmem:[%s0 + $0xa0] sm:$0xff]
  %v36 = vld [vmem:[%s0 + $0xa8] sm:$0xff]
  %v37 = vld [vmem:[%s0 + $0xb0] sm:$0xff]
  %v38 = vld [vmem:[%s0 + $0xb8] sm:$0xff]
  %v39 = vld [vmem:[%s0 + $0xc0] sm:$0xff]
  %v40 = vld [vmem:[%s0 + $0xc8] sm:$0xff]
  %v41 = vld [vmem:[%s0 + $0xd0] sm:$0xff]
  %v42 = vld [vmem:[%s0 + $0xd8] sm:$0xff]
  %v43 = vld [vmem:[%s0 + $0xe0] sm:$0xff]
  %v44 = vld [vmem:[%s0 + $0xe8] sm:$0xff]
  %v45 = vld [vmem:[%s0 + $0xf0] sm:$0xff]
  %v46 = vld [vmem:[%s0 + $0xf8] sm:$0xff]
  %v47 = vld [vmem:[%s0 + $0x100] sm:$0xff]
  %v48 = vld [vmem:[%s0 + $0x108] sm:$0xff]
  %v49 = vld [vmem:[%s0 + $0x110] sm:$0xff]
  %v50 = vld [vmem:[%s0 + $0x118] sm:$0xff]
  %v51 = vld [vmem:[%s0 + $0x120] sm:$0xff]
  %v52 = vld [vmem:[%s0 + $0x128] sm:$0xff]
  %v53 = vld [vmem:[%s0 + $0x130] sm:$0xff]
  %v54 = vld [vmem:[%s0 + $0x138] sm:$0xff]
  %v55 = vld [vmem:[%s0 + $0x140] sm:$0xff]
  %v56 = vld [vmem:[%s0 + $0x148] sm:$0xff]
  %v57 = vld [vmem:[%s0 + $0x150] sm:$0xff]
  %v58 = vld [vmem:[%s0 + $0x158] sm:$0xff]
  %v59 = vld [vmem:[%s0 + $0x160] sm:$0xff]
  %v60 = vld [vmem:[%s0 + $0x168] sm:$0xff]
  %v61 = vld [vmem:[%s0 + $0x170] sm:$0xff]
  %v62 = vld [vmem:[%s0 + $0x178] sm:$0xff]
  %v63 = vld [vmem:[%s0 + $0x180] sm:$0xff]
  %v64 = vld [vmem:[%s0 + $0x188] sm:$0xff]
  %v65 = vld [vmem:[%s0 + $0x190] sm:$0xff]
  %v66 = vld [vmem:[%s0 + $0x198] sm:$0xff]
  %v67 = vld [vmem:[%s0 + $0x1a0] sm:$0xff]
  %v68 = vld [vmem:[%s0 + $0x1a8] sm:$0xff]
  %v69 = vld [vmem:[%s0 + $0x1b0] sm:$0xff]
  %v70 = vld [vmem:[%s0 + $0x1b8] sm:$0xff]
  %v71 = vld [vmem:[%s0 + $0x1c0] sm:$0xff]
  %v72 = vld [vmem:[%s0 + $0x1c8] sm:$0xff]
  %v73 = vld [vmem:[%s0 + $0x1d0] sm:$0xff]
  %v74 = vld [vmem:[%s0 + $0x1d8] sm:$0xff]
  %v75 = vld [vmem:[%s0 + $0x1e0] sm:$0xff]
  %v76 = vld [vmem:[%s0 + $0x1e8] sm:$0xff]
  %v77 = vld [vmem:[%s0 + $0x1f0] sm:$0xff]
  %v78 = vld [vmem:[%s0 + $0x1f8] sm:$0xff]
  %v79 = vld [vmem:[%s1] sm:$0xf]
  %v80 = vld [vmem:[%s1 + $0x4] sm:$0xf]
  %v81 = vld [vmem:[%s1 + $0x8] sm:$0xf]
  %v82 = vld [vmem:[%s1 + $0xc] sm:$0xf]
  %v83 = vld [vmem:[%s1 + $0x10] sm:$0xf]
  %v84 = vld [vmem:[%s1 + $0x14] sm:$0xf]
  %v85 = vld [vmem:[%s1 + $0x18] sm:$0xf]
  %v86 = vld [vmem:[%s1 + $0x1c] sm:$0xf]
  %v87 = vld [vmem:[%s1 + $0x20] sm:$0xf]
  %v88 = vld [vmem:[%s1 + $0x24] sm:$0xf]
  %v89 = vld [vmem:[%s1 + $0x28] sm:$0xf]
  %v90 = vld [vmem:[%s1 + $0x2c] sm:$0xf]
  %v91 = vld [vmem:[%s1 + $0x30] sm:$0xf]
  %v92 = vld [vmem:[%s1 + $0x34] sm:$0xf]
  %v93 = vld [vmem:[%s1 + $0x38] sm:$0xf]
  %v94 = vld [vmem:[%s1 + $0x3c] sm:$0xf]
  %v95 = vld [vmem:[%s1 + $0x40] sm:$0xf]
  %v96 = vld [vmem:[%s1 + $0x44] sm:$0xf]
  %v97 = vld [vmem:[%s1 + $0x48] sm:$0xf]
  %v98 = vld [vmem:[%s1 + $0x4c] sm:$0xf]
  %v99 = vld [vmem:[%s1 + $0x50] sm:$0xf]
  %v100 = vld [vmem:[%s1 + $0x54] sm:$0xf]
  %v101 = vld [vmem:[%s1 + $0x58] sm:$0xf]
  %v102 = vld [vmem:[%s1 + $0x5c] sm:$0xf]
  %v103 = vld [vmem:[%s1 + $0x60] sm:$0xf]
  %v104 = vld [vmem:[%s1 + $0x64] sm:$0xf]
  %v105 = vld [vmem:[%s1 + $0x68] sm:$0xf]
  %v106 = vld [vmem:[%s1 + $0x6c] sm:$0xf]
  %v107 = vld [vmem:[%s1 + $0x70] sm:$0xf]
  %v108 = vld [vmem:[%s1 + $0x74] sm:$0xf]
  %v109 = vld [vmem:[%s1 + $0x78] sm:$0xf]
  %v110 = vld [vmem:[%s1 + $0x7c] sm:$0xf]
  %v111 = vld [vmem:[%s1 + $0x80] sm:$0xf]
  %v112 = vld [vmem:[%s1 + $0x84] sm:$0xf]
  %v113 = vld [vmem:[%s1 + $0x88] sm:$0xf]
  %v114 = vld [vmem:[%s1 + $0x8c] sm:$0xf]
  %v115 = vld [vmem:[%s1 + $0x90] sm:$0xf]
  %v116 = vld [vmem:[%s1 + $0x94] sm:$0xf]
  %v117 = vld [vmem:[%s1 + $0x98] sm:$0xf]
  %v118 = vld [vmem:[%s1 + $0x9c] sm:$0xf]
  %v119 = vld [vmem:[%s1 + $0xa0] sm:$0xf]
  %v120 = vld [vmem:[%s1 + $0xa4] sm:$0xf]
  %v121 = vld [vmem:[%s1 + $0xa8] sm:$0xf]
  %v122 = vld [vmem:[%s1 + $0xac] sm:$0xf]
  %v123 = vld [vmem:[%s1 + $0xb0] sm:$0xf]
  %v124 = vld [vmem:[%s1 + $0xb4] sm:$0xf]
  %v125 = vld [vmem:[%s1 + $0xb8] sm:$0xf]
  %v126 = vld [vmem:[%s1 + $0xbc] sm:$0xf]
  %v127 = vld [vmem:[%s1 + $0xc0] sm:$0xf]
  %v128 = vld [vmem:[%s1 + $0xc4] sm:$0xf]
  %v129 = vld [vmem:[%s1 + $0xc8] sm:$0xf]
  %v130 = vld [vmem:[%s1 + $0xcc] sm:$0xf]
  %v131 = vld [vmem:[%s1 + $0xd0] sm:$0xf]
  %v132 = vld [vmem:[%s1 + $0xd4] sm:$0xf]
  %v133 = vld [vmem:[%s1 + $0xd8] sm:$0xf]
  %v134 = vld [vmem:[%s1 + $0xdc] sm:$0xf]
  %v135 = vld [vmem:[%s1 + $0xe0] sm:$0xf]
  %v136 = vld [vmem:[%s1 + $0xe4] sm:$0xf]
  %v137 = vld [vmem:[%s1 + $0xe8] sm:$0xf]
  %v138 = vld [vmem:[%s1 + $0xec] sm:$0xf]
  %v139 = vld [vmem:[%s1 + $0xf0] sm:$0xf]
  %v140 = vld [vmem:[%s1 + $0xf4] sm:$0xf]
  %v141 = vld [vmem:[%s1 + $0xf8] sm:$0xf]
  %v142 = vld [vmem:[%s1 + $0xfc] sm:$0xf]
  %v143 = vld [vmem:[%s1 + $0x100] sm:$0xf]
  %v144 = vld [vmem:[%s1 + $0x104] sm:$0xf]
  %v145 = vld [vmem:[%s1 + $0x108] sm:$0xf]
  %v146 = vld [vmem:[%s1 + $0x10c] sm:$0xf]
  %v147 = vld [vmem:[%s1 + $0x110] sm:$0xf]
  %v148 = vld [vmem:[%s1 + $0x114] sm:$0xf]
  %v149 = vld [vmem:[%s1 + $0x118] sm:$0xf]
  %v150 = vld [vmem:[%s1 + $0x11c] sm:$0xf]
  %v151 = vld [vmem:[%s1 + $0x120] sm:$0xf]
  %v152 = vld [vmem:[%s1 + $0x124] sm:$0xf]
  %v153 = vld [vmem:[%s1 + $0x128] sm:$0xf]
  %v154 = vld [vmem:[%s1 + $0x12c] sm:$0xf]
  %v155 = vld [vmem:[%s1 + $0x130] sm:$0xf]
  %v156 = vld [vmem:[%s1 + $0x134] sm:$0xf]
  %v157 = vld [vmem:[%s1 + $0x138] sm:$0xf]
  %v158 = vld [vmem:[%s1 + $0x13c] sm:$0xf]
  %v159 = vld [vmem:[%s1 + $0x140] sm:$0xf]
  %v160 = vld [vmem:[%s1 + $0x144] sm:$0xf]
  %v161 = vld [vmem:[%s1 + $0x148] sm:$0xf]
  %v162 = vld [vmem:[%s1 + $0x14c] sm:$0xf]
  %v163 = vld [vmem:[%s1 + $0x150] sm:$0xf]
  %v164 = vld [vmem:[%s1 + $0x154] sm:$0xf]
  %v165 = vld [vmem:[%s1 + $0x158] sm:$0xf]
  %v166 = vld [vmem:[%s1 + $0x15c] sm:$0xf]
  %v167 = vld [vmem:[%s1 + $0x160] sm:$0xf]
  %v168 = vld [vmem:[%s1 + $0x164] sm:$0xf]
  %v169 = vld [vmem:[%s1 + $0x168] sm:$0xf]
  %v170 = vld [vmem:[%s1 + $0x16c] sm:$0xf]
  %v171 = vld [vmem:[%s1 + $0x170] sm:$0xf]
  %v172 = vld [vmem:[%s1 + $0x174] sm:$0xf]
  %v173 = vld [vmem:[%s1 + $0x178] sm:$0xf]
  %v174 = vld [vmem:[%s1 + $0x17c] sm:$0xf]
  %v175 = vld [vmem:[%s1 + $0x180] sm:$0xf]
  %v176 = vld [vmem:[%s1 + $0x184] sm:$0xf]
  %v177 = vld [vmem:[%s1 + $0x188] sm:$0xf]
  %v178 = vld [vmem:[%s1 + $0x18c] sm:$0xf]
  %v179 = vld [vmem:[%s1 + $0x190] sm:$0xf]
  %v180 = vld [vmem:[%s1 + $0x194] sm:$0xf]
  %v181 = vld [vmem:[%s1 + $0x198] sm:$0xf]
  %v182 = vld [vmem:[%s1 + $0x19c] sm:$0xf]
  %v183 = vld [vmem:[%s1 + $0x1a0] sm:$0xf]
  %v184 = vld [vmem:[%s1 + $0x1a4] sm:$0xf]
  %v185 = vld [vmem:[%s1 + $0x1a8] sm:$0xf]
  %v186 = vld [vmem:[%s1 + $0x1ac] sm:$0xf]
  %v187 = vld [vmem:[%s1 + $0x1b0] sm:$0xf]
  %v188 = vld [vmem:[%s1 + $0x1b4] sm:$0xf]
  %v189 = vld [vmem:[%s1 + $0x1b8] sm:$0xf]
  %v190 = vld [vmem:[%s1 + $0x1bc] sm:$0xf]
  %v191 = vld [vmem:[%s1 + $0x1c0] sm:$0xf]
  %v192 = vld [vmem:[%s1 + $0x1c4] sm:$0xf]
  %v193 = vld [vmem:[%s1 + $0x1c8] sm:$0xf]
  %v194 = vld [vmem:[%s1 + $0x1cc] sm:$0xf]
  %v195 = vld [vmem:[%s1 + $0x1d0] sm:$0xf]
  %v196 = vld [vmem:[%s1 + $0x1d4] sm:$0xf]
  %v197 = vld [vmem:[%s1 + $0x1d8] sm:$0xf]
  %v198 = vld [vmem:[%s1 + $0x1dc] sm:$0xf]
  %v199 = vld [vmem:[%s1 + $0x1e0] sm:$0xf]
  %v200 = vld [vmem:[%s1 + $0x1e4] sm:$0xf]
  %v201 = vld [vmem:[%s1 + $0x1e8] sm:$0xf]
  %v202 = vld [vmem:[%s1 + $0x1ec] sm:$0xf]
  %v203 = vld [vmem:[%s1 + $0x1f0] sm:$0xf]
  %v204 = vld [vmem:[%s1 + $0x1f4] sm:$0xf]
  %v205 = vld [vmem:[%s1 + $0x1f8] sm:$0xf]
  %v206 = vld [vmem:[%s1 + $0x1fc] sm:$0xf]
  %v271 = vunpack.c.l.b16 %v15
  %v272 = vunpack.c.h.b16 %v15
  %v273 = vunpack.c.l.b16 %v16
  %v274 = vunpack.c.h.b16 %v16
  %v275 = vunpack.c.l.b16 %v17
  %v276 = vunpack.c.h.b16 %v17
  %v277 = vunpack.c.l.b16 %v18
  %v278 = vunpack.c.h.b16 %v18
  %v279 = vunpack.c.l.b16 %v19
  %v280 = vunpack.c.h.b16 %v19
  %v281 = vunpack.c.l.b16 %v20
  %v282 = vunpack.c.h.b16 %v20
  %v283 = vunpack.c.l.b16 %v21
  %v284 = vunpack.c.h.b16 %v21
  %v285 = vunpack.c.l.b16 %v22
  %v286 = vunpack.c.h.b16 %v22
  %v287 = vunpack.c.l.b16 %v23
  %v288 = vunpack.c.h.b16 %v23
  %v289 = vunpack.c.l.b16 %v24
  %v290 = vunpack.c.h.b16 %v24
  %v291 = vunpack.c.l.b16 %v25
  %v292 = vunpack.c.h.b16 %v25
  %v293 = vunpack.c.l.b16 %v26
  %v294 = vunpack.c.h.b16 %v26
  %v295 = vunpack.c.l.b16 %v27
  %v296 = vunpack.c.h.b16 %v27
  %v297 = vunpack.c.l.b16 %v28
  %v298 = vunpack.c.h.b16 %v28
  %v299 = vunpack.c.l.b16 %v29
  %v300 = vunpack.c.h.b16 %v29
  %v301 = vunpack.c.l.b16 %v30
  %v302 = vunpack.c.h.b16 %v30
  %v303 = vunpack.c.l.b16 %v31
  %v304 = vunpack.c.h.b16 %v31
  %v305 = vunpack.c.l.b16 %v32
  %v306 = vunpack.c.h.b16 %v32
  %v307 = vunpack.c.l.b16 %v33
  %v308 = vunpack.c.h.b16 %v33
  %v309 = vunpack.c.l.b16 %v34
  %v310 = vunpack.c.h.b16 %v34
  %v311 = vunpack.c.l.b16 %v35
  %v312 = vunpack.c.h.b16 %v35
  %v313 = vunpack.c.l.b16 %v36
  %v314 = vunpack.c.h.b16 %v36
  %v315 = vunpack.c.l.b16 %v37
  %v316 = vunpack.c.h.b16 %v37
  %v317 = vunpack.c.l.b16 %v38
  %v318 = vunpack.c.h.b16 %v38
  %v319 = vunpack.c.l.b16 %v39
  %v320 = vunpack.c.h.b16 %v39
  %v321 = vunpack.c.l.b16 %v40
  %v322 = vunpack.c.h.b16 %v40
  %v323 = vunpack.c.l.b16 %v41
  %v324 = vunpack.c.h.b16 %v41
  %v325 = vunpack.c.l.b16 %v42
  %v326 = vunpack.c.h.b16 %v42
  %v327 = vunpack.c.l.b16 %v43
  %v328 = vunpack.c.h.b16 %v43
  %v329 = vunpack.c.l.b16 %v44
  %v330 = vunpack.c.h.b16 %v44
  %v331 = vunpack.c.l.b16 %v45
  %v332 = vunpack.c.h.b16 %v45
  %v333 = vunpack.c.l.b16 %v46
  %v334 = vunpack.c.h.b16 %v46
  %v335 = vunpack.c.l.b16 %v47
  %v336 = vunpack.c.h.b16 %v47
  %v337 = vunpack.c.l.b16 %v48
  %v338 = vunpack.c.h.b16 %v48
  %v339 = vunpack.c.l.b16 %v49
  %v340 = vunpack.c.h.b16 %v49
  %v341 = vunpack.c.l.b16 %v50
  %v342 = vunpack.c.h.b16 %v50
  %v343 = vunpack.c.l.b16 %v51
  %v344 = vunpack.c.h.b16 %v51
  %v345 = vunpack.c.l.b16 %v52
  %v346 = vunpack.c.h.b16 %v52
  %v347 = vunpack.c.l.b16 %v53
  %v348 = vunpack.c.h.b16 %v53
  %v349 = vunpack.c.l.b16 %v54
  %v350 = vunpack.c.h.b16 %v54
  %v351 = vunpack.c.l.b16 %v55
  %v352 = vunpack.c.h.b16 %v55
  %v353 = vunpack.c.l.b16 %v56
  %v354 = vunpack.c.h.b16 %v56
  %v355 = vunpack.c.l.b16 %v57
  %v356 = vunpack.c.h.b16 %v57
  %v357 = vunpack.c.l.b16 %v58
  %v358 = vunpack.c.h.b16 %v58
  %v359 = vunpack.c.l.b16 %v59
  %v360 = vunpack.c.h.b16 %v59
  %v361 = vunpack.c.l.b16 %v60
  %v362 = vunpack.c.h.b16 %v60
  %v363 = vunpack.c.l.b16 %v61
  %v364 = vunpack.c.h.b16 %v61
  %v365 = vunpack.c.l.b16 %v62
  %v366 = vunpack.c.h.b16 %v62
  %v367 = vunpack.c.l.b16 %v63
  %v368 = vunpack.c.h.b16 %v63
  %v369 = vunpack.c.l.b16 %v64
  %v370 = vunpack.c.h.b16 %v64
  %v371 = vunpack.c.l.b16 %v65
  %v372 = vunpack.c.h.b16 %v65
  %v373 = vunpack.c.l.b16 %v66
  %v374 = vunpack.c.h.b16 %v66
  %v375 = vunpack.c.l.b16 %v67
  %v376 = vunpack.c.h.b16 %v67
  %v377 = vunpack.c.l.b16 %v68
  %v378 = vunpack.c.h.b16 %v68
  %v379 = vunpack.c.l.b16 %v69
  %v380 = vunpack.c.h.b16 %v69
  %v381 = vunpack.c.l.b16 %v70
  %v382 = vunpack.c.h.b16 %v70
  %v383 = vunpack.c.l.b16 %v71
  %v384 = vunpack.c.h.b16 %v71
  %v385 = vunpack.c.l.b16 %v72
  %v386 = vunpack.c.h.b16 %v72
  %v387 = vunpack.c.l.b16 %v73
  %v388 = vunpack.c.h.b16 %v73
  %v389 = vunpack.c.l.b16 %v74
  %v390 = vunpack.c.h.b16 %v74
  %v391 = vunpack.c.l.b16 %v75
  %v392 = vunpack.c.h.b16 %v75
  %v393 = vunpack.c.l.b16 %v76
  %v394 = vunpack.c.h.b16 %v76
  %v395 = vunpack.c.l.b16 %v77
  %v396 = vunpack.c.h.b16 %v77
  %v397 = vunpack.c.l.b16 %v78
  %v398 = vunpack.c.h.b16 %v78
  %v399 = vpack.c.b16 %v279, %v271
  %v400 = vpack.c.b16 %v280, %v272
  %v401 = vpack.c.b16 %v281, %v273
  %v402 = vpack.c.b16 %v282, %v274
  %v403 = vpack.c.b16 %v283, %v275
  %v404 = vpack.c.b16 %v284, %v276
  %v405 = vpack.c.b16 %v285, %v277
  %v406 = vpack.c.b16 %v286, %v278
  %v407 = vpack.c.b16 %v295, %v287
  %v408 = vpack.c.b16 %v296, %v288
  %v409 = vpack.c.b16 %v297, %v289
  %v410 = vpack.c.b16 %v298, %v290
  %v411 = vpack.c.b16 %v299, %v291
  %v412 = vpack.c.b16 %v300, %v292
  %v413 = vpack.c.b16 %v301, %v293
  %v414 = vpack.c.b16 %v302, %v294
  %v415 = vpack.c.b16 %v311, %v303
  %v416 = vpack.c.b16 %v312, %v304
  %v417 = vpack.c.b16 %v313, %v305
  %v418 = vpack.c.b16 %v314, %v306
  %v419 = vpack.c.b16 %v315, %v307
  %v420 = vpack.c.b16 %v316, %v308
  %v421 = vpack.c.b16 %v317, %v309
  %v422 = vpack.c.b16 %v318, %v310
  %v423 = vpack.c.b16 %v327, %v319
  %v424 = vpack.c.b16 %v328, %v320
  %v425 = vpack.c.b16 %v329, %v321
  %v426 = vpack.c.b16 %v330, %v322
  %v427 = vpack.c.b16 %v331, %v323
  %v428 = vpack.c.b16 %v332, %v324
  %v429 = vpack.c.b16 %v333, %v325
  %v430 = vpack.c.b16 %v334, %v326
  %v431 = vpack.c.b16 %v343, %v335
  %v432 = vpack.c.b16 %v344, %v336
  %v433 = vpack.c.b16 %v345, %v337
  %v434 = vpack.c.b16 %v346, %v338
  %v435 = vpack.c.b16 %v347, %v339
  %v436 = vpack.c.b16 %v348, %v340
  %v437 = vpack.c.b16 %v349, %v341
  %v438 = vpack.c.b16 %v350, %v342
  %v439 = vpack.c.b16 %v359, %v351
  %v440 = vpack.c.b16 %v360, %v352
  %v441 = vpack.c.b16 %v361, %v353
  %v442 = vpack.c.b16 %v362, %v354
  %v443 = vpack.c.b16 %v363, %v355
  %v444 = vpack.c.b16 %v364, %v356
  %v445 = vpack.c.b16 %v365, %v357
  %v446 = vpack.c.b16 %v366, %v358
  %v447 = vpack.c.b16 %v375, %v367
  %v448 = vpack.c.b16 %v376, %v368
  %v449 = vpack.c.b16 %v377, %v369
  %v450 = vpack.c.b16 %v378, %v370
  %v451 = vpack.c.b16 %v379, %v371
  %v452 = vpack.c.b16 %v380, %v372
  %v453 = vpack.c.b16 %v381, %v373
  %v454 = vpack.c.b16 %v382, %v374
  %v455 = vpack.c.b16 %v391, %v383
  %v456 = vpack.c.b16 %v392, %v384
  %v457 = vpack.c.b16 %v393, %v385
  %v458 = vpack.c.b16 %v394, %v386
  %v459 = vpack.c.b16 %v395, %v387
  %v460 = vpack.c.b16 %v396, %v388
  %v461 = vpack.c.b16 %v397, %v389
  %v462 = vpack.c.b16 %v398, %v390
  %v655 = vunpack.c.l.b16 %v79
  %v656 = vunpack.c.l.b16 %v80
  %v657 = vunpack.c.l.b16 %v81
  %v658 = vunpack.c.l.b16 %v82
  %v659 = vunpack.c.l.b16 %v83
  %v660 = vunpack.c.l.b16 %v84
  %v661 = vunpack.c.l.b16 %v85
  %v662 = vunpack.c.l.b16 %v86
  %v663 = vunpack.c.l.b16 %v87
  %v664 = vunpack.c.l.b16 %v88
  %v665 = vunpack.c.l.b16 %v89
  %v666 = vunpack.c.l.b16 %v90
  %v667 = vunpack.c.l.b16 %v91
  %v668 = vunpack.c.l.b16 %v92
  %v669 = vunpack.c.l.b16 %v93
  %v670 = vunpack.c.l.b16 %v94
  %v671 = vunpack.c.l.b16 %v95
  %v672 = vunpack.c.l.b16 %v96
  %v673 = vunpack.c.l.b16 %v97
  %v674 = vunpack.c.l.b16 %v98
  %v675 = vunpack.c.l.b16 %v99
  %v676 = vunpack.c.l.b16 %v100
  %v677 = vunpack.c.l.b16 %v101
  %v678 = vunpack.c.l.b16 %v102
  %v679 = vunpack.c.l.b16 %v103
  %v680 = vunpack.c.l.b16 %v104
  %v681 = vunpack.c.l.b16 %v105
  %v682 = vunpack.c.l.b16 %v106
  %v683 = vunpack.c.l.b16 %v107
  %v684 = vunpack.c.l.b16 %v108
  %v685 = vunpack.c.l.b16 %v109
  %v686 = vunpack.c.l.b16 %v110
  %v687 = vunpack.c.l.b16 %v111
  %v688 = vunpack.c.l.b16 %v112
  %v689 = vunpack.c.l.b16 %v113
  %v690 = vunpack.c.l.b16 %v114
  %v691 = vunpack.c.l.b16 %v115
  %v692 = vunpack.c.l.b16 %v116
  %v693 = vunpack.c.l.b16 %v117
  %v694 = vunpack.c.l.b16 %v118
  %v695 = vunpack.c.l.b16 %v119
  %v696 = vunpack.c.l.b16 %v120
  %v697 = vunpack.c.l.b16 %v121
  %v698 = vunpack.c.l.b16 %v122
  %v699 = vunpack.c.l.b16 %v123
  %v700 = vunpack.c.l.b16 %v124
  %v701 = vunpack.c.l.b16 %v125
  %v702 = vunpack.c.l.b16 %v126
  %v703 = vunpack.c.l.b16 %v127
  %v704 = vunpack.c.l.b16 %v128
  %v705 = vunpack.c.l.b16 %v129
  %v706 = vunpack.c.l.b16 %v130
  %v707 = vunpack.c.l.b16 %v131
  %v708 = vunpack.c.l.b16 %v132
  %v709 = vunpack.c.l.b16 %v133
  %v710 = vunpack.c.l.b16 %v134
  %v711 = vunpack.c.l.b16 %v135
  %v712 = vunpack.c.l.b16 %v136
  %v713 = vunpack.c.l.b16 %v137
  %v714 = vunpack.c.l.b16 %v138
  %v715 = vunpack.c.l.b16 %v139
  %v716 = vunpack.c.l.b16 %v140
  %v717 = vunpack.c.l.b16 %v141
  %v718 = vunpack.c.l.b16 %v142
  %v719 = vunpack.c.l.b16 %v143
  %v720 = vunpack.c.l.b16 %v144
  %v721 = vunpack.c.l.b16 %v145
  %v722 = vunpack.c.l.b16 %v146
  %v723 = vunpack.c.l.b16 %v147
  %v724 = vunpack.c.l.b16 %v148
  %v725 = vunpack.c.l.b16 %v149
  %v726 = vunpack.c.l.b16 %v150
  %v727 = vunpack.c.l.b16 %v151
  %v728 = vunpack.c.l.b16 %v152
  %v729 = vunpack.c.l.b16 %v153
  %v730 = vunpack.c.l.b16 %v154
  %v731 = vunpack.c.l.b16 %v155
  %v732 = vunpack.c.l.b16 %v156
  %v733 = vunpack.c.l.b16 %v157
  %v734 = vunpack.c.l.b16 %v158
  %v735 = vunpack.c.l.b16 %v159
  %v736 = vunpack.c.l.b16 %v160
  %v737 = vunpack.c.l.b16 %v161
  %v738 = vunpack.c.l.b16 %v162
  %v739 = vunpack.c.l.b16 %v163
  %v740 = vunpack.c.l.b16 %v164
  %v741 = vunpack.c.l.b16 %v165
  %v742 = vunpack.c.l.b16 %v166
  %v743 = vunpack.c.l.b16 %v167
  %v744 = vunpack.c.l.b16 %v168
  %v745 = vunpack.c.l.b16 %v169
  %v746 = vunpack.c.l.b16 %v170
  %v747 = vunpack.c.l.b16 %v171
  %v748 = vunpack.c.l.b16 %v172
  %v749 = vunpack.c.l.b16 %v173
  %v750 = vunpack.c.l.b16 %v174
  %v751 = vunpack.c.l.b16 %v175
  %v752 = vunpack.c.l.b16 %v176
  %v753 = vunpack.c.l.b16 %v177
  %v754 = vunpack.c.l.b16 %v178
  %v755 = vunpack.c.l.b16 %v179
  %v756 = vunpack.c.l.b16 %v180
  %v757 = vunpack.c.l.b16 %v181
  %v758 = vunpack.c.l.b16 %v182
  %v759 = vunpack.c.l.b16 %v183
  %v760 = vunpack.c.l.b16 %v184
  %v761 = vunpack.c.l.b16 %v185
  %v762 = vunpack.c.l.b16 %v186
  %v763 = vunpack.c.l.b16 %v187
  %v764 = vunpack.c.l.b16 %v188
  %v765 = vunpack.c.l.b16 %v189
  %v766 = vunpack.c.l.b16 %v190
  %v767 = vunpack.c.l.b16 %v191
  %v768 = vunpack.c.l.b16 %v192
  %v769 = vunpack.c.l.b16 %v193
  %v770 = vunpack.c.l.b16 %v194
  %v771 = vunpack.c.l.b16 %v195
  %v772 = vunpack.c.l.b16 %v196
  %v773 = vunpack.c.l.b16 %v197
  %v774 = vunpack.c.l.b16 %v198
  %v775 = vunpack.c.l.b16 %v199
  %v776 = vunpack.c.l.b16 %v200
  %v777 = vunpack.c.l.b16 %v201
  %v778 = vunpack.c.l.b16 %v202
  %v779 = vunpack.c.l.b16 %v203
  %v780 = vunpack.c.l.b16 %v204
  %v781 = vunpack.c.l.b16 %v205
  %v782 = vunpack.c.l.b16 %v206
  %v783 = vpack.c.b16 %v656, %v655
  %v784 = vpack.c.b16 %v658, %v657
  %v785 = vpack.c.b16 %v660, %v659
  %v786 = vpack.c.b16 %v662, %v661
  %v787 = vpack.c.b16 %v664, %v663
  %v788 = vpack.c.b16 %v666, %v665
  %v789 = vpack.c.b16 %v668, %v667
  %v790 = vpack.c.b16 %v670, %v669
  %v791 = vpack.c.b16 %v672, %v671
  %v792 = vpack.c.b16 %v674, %v673
  %v793 = vpack.c.b16 %v676, %v675
  %v794 = vpack.c.b16 %v678, %v677
  %v795 = vpack.c.b16 %v680, %v679
  %v796 = vpack.c.b16 %v682, %v681
  %v797 = vpack.c.b16 %v684, %v683
  %v798 = vpack.c.b16 %v686, %v685
  %v799 = vpack.c.b16 %v688, %v687
  %v800 = vpack.c.b16 %v690, %v689
  %v801 = vpack.c.b16 %v692, %v691
  %v802 = vpack.c.b16 %v694, %v693
  %v803 = vpack.c.b16 %v696, %v695
  %v804 = vpack.c.b16 %v698, %v697
  %v805 = vpack.c.b16 %v700, %v699
  %v806 = vpack.c.b16 %v702, %v701
  %v807 = vpack.c.b16 %v704, %v703
  %v808 = vpack.c.b16 %v706, %v705
  %v809 = vpack.c.b16 %v708, %v707
  %v810 = vpack.c.b16 %v710, %v709
  %v811 = vpack.c.b16 %v712, %v711
  %v812 = vpack.c.b16 %v714, %v713
  %v813 = vpack.c.b16 %v716, %v715
  %v814 = vpack.c.b16 %v718, %v717
  %v815 = vpack.c.b16 %v720, %v719
  %v816 = vpack.c.b16 %v722, %v721
  %v817 = vpack.c.b16 %v724, %v723
  %v818 = vpack.c.b16 %v726, %v725
  %v819 = vpack.c.b16 %v728, %v727
  %v820 = vpack.c.b16 %v730, %v729
  %v821 = vpack.c.b16 %v732, %v731
  %v822 = vpack.c.b16 %v734, %v733
  %v823 = vpack.c.b16 %v736, %v735
  %v824 = vpack.c.b16 %v738, %v737
  %v825 = vpack.c.b16 %v740, %v739
  %v826 = vpack.c.b16 %v742, %v741
  %v827 = vpack.c.b16 %v744, %v743
  %v828 = vpack.c.b16 %v746, %v745
  %v829 = vpack.c.b16 %v748, %v747
  %v830 = vpack.c.b16 %v750, %v749
  %v831 = vpack.c.b16 %v752, %v751
  %v832 = vpack.c.b16 %v754, %v753
  %v833 = vpack.c.b16 %v756, %v755
  %v834 = vpack.c.b16 %v758, %v757
  %v835 = vpack.c.b16 %v760, %v759
  %v836 = vpack.c.b16 %v762, %v761
  %v837 = vpack.c.b16 %v764, %v763
  %v838 = vpack.c.b16 %v766, %v765
  %v839 = vpack.c.b16 %v768, %v767
  %v840 = vpack.c.b16 %v770, %v769
  %v841 = vpack.c.b16 %v772, %v771
  %v842 = vpack.c.b16 %v774, %v773
  %v843 = vpack.c.b16 %v776, %v775
  %v844 = vpack.c.b16 %v778, %v777
  %v845 = vpack.c.b16 %v780, %v779
  %v846 = vpack.c.b16 %v782, %v781
  %911 = vmatprep.subr.bf16.mxu0 0
  %912 = vmatpush1.bf16.msra.mxu0 %v790
  %913 = vmatprep.subr.bf16.mxu0 0
  %914 = vmatpush1.bf16.msra.mxu0 %v789
  %915 = vmatprep.subr.bf16.mxu0 0
  %916 = vmatpush1.bf16.msra.mxu0 %v788
  %917 = vmatprep.subr.bf16.mxu0 0
  %918 = vmatpush1.bf16.msra.mxu0 %v787
  %919 = vmatprep.subr.bf16.mxu0 0
  %920 = vmatpush1.bf16.msra.mxu0 %v786
  %921 = vmatprep.subr.bf16.mxu0 0
  %922 = vmatpush1.bf16.msra.mxu0 %v785
  %923 = vmatprep.subr.bf16.mxu0 0
  %924 = vmatpush1.bf16.msra.mxu0 %v784
  %925 = vmatprep.subr.bf16.mxu0 0
  %926 = vmatpush1.bf16.msra.mxu0 %v783
  %927 = vmatprep.subr.bf16.mxu0 0
  %928 = vmatpush2.bf16.msra.mxu0 %v798
  %929 = vmatprep.subr.bf16.mxu0 0
  %930 = vmatpush2.bf16.msra.mxu0 %v797
  %931 = vmatprep.subr.bf16.mxu0 0
  %932 = vmatpush2.bf16.msra.mxu0 %v796
  %933 = vmatprep.subr.bf16.mxu0 0
  %934 = vmatpush2.bf16.msra.mxu0 %v795
  %935 = vmatprep.subr.bf16.mxu0 0
  %936 = vmatpush2.bf16.msra.mxu0 %v794
  %937 = vmatprep.subr.bf16.mxu0 0
  %938 = vmatpush2.bf16.msra.mxu0 %v793
  %939 = vmatprep.subr.bf16.mxu0 0
  %940 = vmatpush2.bf16.msra.mxu0 %v792
  %941 = vmatprep.subr.bf16.mxu0 0
  %942 = vmatpush2.bf16.msra.mxu0 %v791
  %943 = vmatprep.mubr.bf16.mxu0 %v400
  %944 = vmatmul.mubr.bf16.gmra.mxu0 %v399
  %v945 = vpop.f32.mrf.mxu0
  %v946 = vadd.f32 0.0, %v945
  %v947 = vpop.f32.mrf.mxu0
  %v948 = vpop.f32.mrf.mxu0
  %v949 = vadd.f32 0.0, %v948
  %v950 = vpop.f32.mrf.mxu0
  %951 = vmatprep.mubr.bf16.mxu0 %v408
  %952 = vmatmul.mubr.bf16.gmra.mxu0 %v407
  %v953 = vpop.f32.mrf.mxu0
  %v954 = vadd.f32 0.0, %v953
  %v955 = vpop.f32.mrf.mxu0
  %v956 = vpop.f32.mrf.mxu0
  %v957 = vadd.f32 0.0, %v956
  %v958 = vpop.f32.mrf.mxu0
  %959 = vmatprep.mubr.bf16.mxu0 %v416
  %960 = vmatmul.mubr.bf16.gmra.mxu0 %v415
  %v961 = vpop.f32.mrf.mxu0
  %v962 = vadd.f32 0.0, %v961
  %v963 = vpop.f32.mrf.mxu0
  %v964 = vpop.f32.mrf.mxu0
  %v965 = vadd.f32 0.0, %v964
  %v966 = vpop.f32.mrf.mxu0
  %967 = vmatprep.mubr.bf16.mxu0 %v424
  %968 = vmatmul.mubr.bf16.gmra.mxu0 %v423
  %v969 = vpop.f32.mrf.mxu0
  %v970 = vadd.f32 0.0, %v969
  %v971 = vpop.f32.mrf.mxu0
  %v972 = vpop.f32.mrf.mxu0
  %v973 = vadd.f32 0.0, %v972
  %v974 = vpop.f32.mrf.mxu0
  %975 = vmatprep.mubr.bf16.mxu0 %v432
  %976 = vmatmul.mubr.bf16.gmra.mxu0 %v431
  %v977 = vpop.f32.mrf.mxu0
  %v978 = vadd.f32 0.0, %v977
  %v979 = vpop.f32.mrf.mxu0
  %v980 = vpop.f32.mrf.mxu0
  %v981 = vadd.f32 0.0, %v980
  %v982 = vpop.f32.mrf.mxu0
  %983 = vmatprep.mubr.bf16.mxu0 %v440
  %984 = vmatmul.mubr.bf16.gmra.mxu0 %v439
  %v985 = vpop.f32.mrf.mxu0
  %v986 = vadd.f32 0.0, %v985
  %v987 = vpop.f32.mrf.mxu0
  %v988 = vpop.f32.mrf.mxu0
  %v989 = vadd.f32 0.0, %v988
  %v990 = vpop.f32.mrf.mxu0
  %991 = vmatprep.mubr.bf16.mxu0 %v448
  %992 = vmatmul.mubr.bf16.gmra.mxu0 %v447
  %v993 = vpop.f32.mrf.mxu0
  %v994 = vadd.f32 0.0, %v993
  %v995 = vpop.f32.mrf.mxu0
  %v996 = vpop.f32.mrf.mxu0
  %v997 = vadd.f32 0.0, %v996
  %v998 = vpop.f32.mrf.mxu0
  %999 = vmatprep.mubr.bf16.mxu0 %v456
  %1000 = vmatmul.mubr.bf16.gmra.mxu0 %v455
  %v1001 = vpop.f32.mrf.mxu0
  %v1002 = vadd.f32 0.0, %v1001
  %v1003 = vpop.f32.mrf.mxu0
  %v1004 = vpop.f32.mrf.mxu0
  %v1005 = vadd.f32 0.0, %v1004
  %v1006 = vpop.f32.mrf.mxu0
  %1007 = vdwg.mxu0
  %1008 = vmatprep.subr.bf16.mxu0 0
  %1009 = vmatpush1.bf16.msra.mxu0 %v806
  %1010 = vmatprep.subr.bf16.mxu0 0
  %1011 = vmatpush1.bf16.msra.mxu0 %v805
  %1012 = vmatprep.subr.bf16.mxu0 0
  %1013 = vmatpush1.bf16.msra.mxu0 %v804
  %1014 = vmatprep.subr.bf16.mxu0 0
  %1015 = vmatpush1.bf16.msra.mxu0 %v803
  %1016 = vmatprep.subr.bf16.mxu0 0
  %1017 = vmatpush1.bf16.msra.mxu0 %v802
  %1018 = vmatprep.subr.bf16.mxu0 0
  %1019 = vmatpush1.bf16.msra.mxu0 %v801
  %1020 = vmatprep.subr.bf16.mxu0 0
  %1021 = vmatpush1.bf16.msra.mxu0 %v800
  %1022 = vmatprep.subr.bf16.mxu0 0
  %1023 = vmatpush1.bf16.msra.mxu0 %v799
  %1024 = vmatprep.subr.bf16.mxu0 0
  %1025 = vmatpush2.bf16.msra.mxu0 %v814
  %1026 = vmatprep.subr.bf16.mxu0 0
  %1027 = vmatpush2.bf16.msra.mxu0 %v813
  %1028 = vmatprep.subr.bf16.mxu0 0
  %1029 = vmatpush2.bf16.msra.mxu0 %v812
  %1030 = vmatprep.subr.bf16.mxu0 0
  %1031 = vmatpush2.bf16.msra.mxu0 %v811
  %1032 = vmatprep.subr.bf16.mxu0 0
  %1033 = vmatpush2.bf16.msra.mxu0 %v810
  %1034 = vmatprep.subr.bf16.mxu0 0
  %1035 = vmatpush2.bf16.msra.mxu0 %v809
  %1036 = vmatprep.subr.bf16.mxu0 0
  %1037 = vmatpush2.bf16.msra.mxu0 %v808
  %1038 = vmatprep.subr.bf16.mxu0 0
  %1039 = vmatpush2.bf16.msra.mxu0 %v807
  %1040 = vmatprep.mubr.bf16.mxu0 %v402
  %1041 = vmatmul.mubr.bf16.gmra.mxu0 %v401
  %v1042 = vpop.f32.mrf.mxu0
  %v1043 = vadd.f32 %v946, %v1042
  %v1044 = vpop.f32.mrf.mxu0
  %v1045 = vpop.f32.mrf.mxu0
  %v1046 = vadd.f32 %v949, %v1045
  %v1047 = vpop.f32.mrf.mxu0
  %1048 = vmatprep.mubr.bf16.mxu0 %v410
  %1049 = vmatmul.mubr.bf16.gmra.mxu0 %v409
  %v1050 = vpop.f32.mrf.mxu0
  %v1051 = vadd.f32 %v954, %v1050
  %v1052 = vpop.f32.mrf.mxu0
  %v1053 = vpop.f32.mrf.mxu0
  %v1054 = vadd.f32 %v957, %v1053
  %v1055 = vpop.f32.mrf.mxu0
  %1056 = vmatprep.mubr.bf16.mxu0 %v418
  %1057 = vmatmul.mubr.bf16.gmra.mxu0 %v417
  %v1058 = vpop.f32.mrf.mxu0
  %v1059 = vadd.f32 %v962, %v1058
  %v1060 = vpop.f32.mrf.mxu0
  %v1061 = vpop.f32.mrf.mxu0
  %v1062 = vadd.f32 %v965, %v1061
  %v1063 = vpop.f32.mrf.mxu0
  %1064 = vmatprep.mubr.bf16.mxu0 %v426
  %1065 = vmatmul.mubr.bf16.gmra.mxu0 %v425
  %v1066 = vpop.f32.mrf.mxu0
  %v1067 = vadd.f32 %v970, %v1066
  %v1068 = vpop.f32.mrf.mxu0
  %v1069 = vpop.f32.mrf.mxu0
  %v1070 = vadd.f32 %v973, %v1069
  %v1071 = vpop.f32.mrf.mxu0
  %1072 = vmatprep.mubr.bf16.mxu0 %v434
  %1073 = vmatmul.mubr.bf16.gmra.mxu0 %v433
  %v1074 = vpop.f32.mrf.mxu0
  %v1075 = vadd.f32 %v978, %v1074
  %v1076 = vpop.f32.mrf.mxu0
  %v1077 = vpop.f32.mrf.mxu0
  %v1078 = vadd.f32 %v981, %v1077
  %v1079 = vpop.f32.mrf.mxu0
  %1080 = vmatprep.mubr.bf16.mxu0 %v442
  %1081 = vmatmul.mubr.bf16.gmra.mxu0 %v441
  %v1082 = vpop.f32.mrf.mxu0
  %v1083 = vadd.f32 %v986, %v1082
  %v1084 = vpop.f32.mrf.mxu0
  %v1085 = vpop.f32.mrf.mxu0
  %v1086 = vadd.f32 %v989, %v1085
  %v1087 = vpop.f32.mrf.mxu0
  %1088 = vmatprep.mubr.bf16.mxu0 %v450
  %1089 = vmatmul.mubr.bf16.gmra.mxu0 %v449
  %v1090 = vpop.f32.mrf.mxu0
  %v1091 = vadd.f32 %v994, %v1090
  %v1092 = vpop.f32.mrf.mxu0
  %v1093 = vpop.f32.mrf.mxu0
  %v1094 = vadd.f32 %v997, %v1093
  %v1095 = vpop.f32.mrf.mxu0
  %1096 = vmatprep.mubr.bf16.mxu0 %v458
  %1097 = vmatmul.mubr.bf16.gmra.mxu0 %v457
  %v1098 = vpop.f32.mrf.mxu0
  %v1099 = vadd.f32 %v1002, %v1098
  %v1100 = vpop.f32.mrf.mxu0
  %v1101 = vpop.f32.mrf.mxu0
  %v1102 = vadd.f32 %v1005, %v1101
  %v1103 = vpop.f32.mrf.mxu0
  %1104 = vdwg.mxu0
  %1105 = vmatprep.subr.bf16.mxu0 0
  %1106 = vmatpush1.bf16.msra.mxu0 %v822
  %1107 = vmatprep.subr.bf16.mxu0 0
  %1108 = vmatpush1.bf16.msra.mxu0 %v821
  %1109 = vmatprep.subr.bf16.mxu0 0
  %1110 = vmatpush1.bf16.msra.mxu0 %v820
  %1111 = vmatprep.subr.bf16.mxu0 0
  %1112 = vmatpush1.bf16.msra.mxu0 %v819
  %1113 = vmatprep.subr.bf16.mxu0 0
  %1114 = vmatpush1.bf16.msra.mxu0 %v818
  %1115 = vmatprep.subr.bf16.mxu0 0
  %1116 = vmatpush1.bf16.msra.mxu0 %v817
  %1117 = vmatprep.subr.bf16.mxu0 0
  %1118 = vmatpush1.bf16.msra.mxu0 %v816
  %1119 = vmatprep.subr.bf16.mxu0 0
  %1120 = vmatpush1.bf16.msra.mxu0 %v815
  %1121 = vmatprep.subr.bf16.mxu0 0
  %1122 = vmatpush2.bf16.msra.mxu0 %v830
  %1123 = vmatprep.subr.bf16.mxu0 0
  %1124 = vmatpush2.bf16.msra.mxu0 %v829
  %1125 = vmatprep.subr.bf16.mxu0 0
  %1126 = vmatpush2.bf16.msra.mxu0 %v828
  %1127 = vmatprep.subr.bf16.mxu0 0
  %1128 = vmatpush2.bf16.msra.mxu0 %v827
  %1129 = vmatprep.subr.bf16.mxu0 0
  %1130 = vmatpush2.bf16.msra.mxu0 %v826
  %1131 = vmatprep.subr.bf16.mxu0 0
  %1132 = vmatpush2.bf16.msra.mxu0 %v825
  %1133 = vmatprep.subr.bf16.mxu0 0
  %1134 = vmatpush2.bf16.msra.mxu0 %v824
  %1135 = vmatprep.subr.bf16.mxu0 0
  %1136 = vmatpush2.bf16.msra.mxu0 %v823
  %1137 = vmatprep.mubr.bf16.mxu0 %v404
  %1138 = vmatmul.mubr.bf16.gmra.mxu0 %v403
  %v1139 = vpop.f32.mrf.mxu0
  %v1140 = vadd.f32 %v1043, %v1139
  %v1141 = vpop.f32.mrf.mxu0
  %v1142 = vpop.f32.mrf.mxu0
  %v1143 = vadd.f32 %v1046, %v1142
  %v1144 = vpop.f32.mrf.mxu0
  %1145 = vmatprep.mubr.bf16.mxu0 %v412
  %1146 = vmatmul.mubr.bf16.gmra.mxu0 %v411
  %v1147 = vpop.f32.mrf.mxu0
  %v1148 = vadd.f32 %v1051, %v1147
  %v1149 = vpop.f32.mrf.mxu0
  %v1150 = vpop.f32.mrf.mxu0
  %v1151 = vadd.f32 %v1054, %v1150
  %v1152 = vpop.f32.mrf.mxu0
  %1153 = vmatprep.mubr.bf16.mxu0 %v420
  %1154 = vmatmul.mubr.bf16.gmra.mxu0 %v419
  %v1155 = vpop.f32.mrf.mxu0
  %v1156 = vadd.f32 %v1059, %v1155
  %v1157 = vpop.f32.mrf.mxu0
  %v1158 = vpop.f32.mrf.mxu0
  %v1159 = vadd.f32 %v1062, %v1158
  %v1160 = vpop.f32.mrf.mxu0
  %1161 = vmatprep.mubr.bf16.mxu0 %v428
  %1162 = vmatmul.mubr.bf16.gmra.mxu0 %v427
  %v1163 = vpop.f32.mrf.mxu0
  %v1164 = vadd.f32 %v1067, %v1163
  %v1165 = vpop.f32.mrf.mxu0
  %v1166 = vpop.f32.mrf.mxu0
  %v1167 = vadd.f32 %v1070, %v1166
  %v1168 = vpop.f32.mrf.mxu0
  %1169 = vmatprep.mubr.bf16.mxu0 %v436
  %1170 = vmatmul.mubr.bf16.gmra.mxu0 %v435
  %v1171 = vpop.f32.mrf.mxu0
  %v1172 = vadd.f32 %v1075, %v1171
  %v1173 = vpop.f32.mrf.mxu0
  %v1174 = vpop.f32.mrf.mxu0
  %v1175 = vadd.f32 %v1078, %v1174
  %v1176 = vpop.f32.mrf.mxu0
  %1177 = vmatprep.mubr.bf16.mxu0 %v444
  %1178 = vmatmul.mubr.bf16.gmra.mxu0 %v443
  %v1179 = vpop.f32.mrf.mxu0
  %v1180 = vadd.f32 %v1083, %v1179
  %v1181 = vpop.f32.mrf.mxu0
  %v1182 = vpop.f32.mrf.mxu0
  %v1183 = vadd.f32 %v1086, %v1182
  %v1184 = vpop.f32.mrf.mxu0
  %1185 = vmatprep.mubr.bf16.mxu0 %v452
  %1186 = vmatmul.mubr.bf16.gmra.mxu0 %v451
  %v1187 = vpop.f32.mrf.mxu0
  %v1188 = vadd.f32 %v1091, %v1187
  %v1189 = vpop.f32.mrf.mxu0
  %v1190 = vpop.f32.mrf.mxu0
  %v1191 = vadd.f32 %v1094, %v1190
  %v1192 = vpop.f32.mrf.mxu0
  %1193 = vmatprep.mubr.bf16.mxu0 %v460
  %1194 = vmatmul.mubr.bf16.gmra.mxu0 %v459
  %v1195 = vpop.f32.mrf.mxu0
  %v1196 = vadd.f32 %v1099, %v1195
  %v1197 = vpop.f32.mrf.mxu0
  %v1198 = vpop.f32.mrf.mxu0
  %v1199 = vadd.f32 %v1102, %v1198
  %v1200 = vpop.f32.mrf.mxu0
  %1201 = vdwg.mxu0
  %1202 = vmatprep.subr.bf16.mxu0 0
  %1203 = vmatpush1.bf16.msra.mxu0 %v838
  %1204 = vmatprep.subr.bf16.mxu0 0
  %1205 = vmatpush1.bf16.msra.mxu0 %v837
  %1206 = vmatprep.subr.bf16.mxu0 0
  %1207 = vmatpush1.bf16.msra.mxu0 %v836
  %1208 = vmatprep.subr.bf16.mxu0 0
  %1209 = vmatpush1.bf16.msra.mxu0 %v835
  %1210 = vmatprep.subr.bf16.mxu0 0
  %1211 = vmatpush1.bf16.msra.mxu0 %v834
  %1212 = vmatprep.subr.bf16.mxu0 0
  %1213 = vmatpush1.bf16.msra.mxu0 %v833
  %1214 = vmatprep.subr.bf16.mxu0 0
  %1215 = vmatpush1.bf16.msra.mxu0 %v832
  %1216 = vmatprep.subr.bf16.mxu0 0
  %1217 = vmatpush1.bf16.msra.mxu0 %v831
  %1218 = vmatprep.subr.bf16.mxu0 0
  %1219 = vmatpush2.bf16.msra.mxu0 %v846
  %1220 = vmatprep.subr.bf16.mxu0 0
  %1221 = vmatpush2.bf16.msra.mxu0 %v845
  %1222 = vmatprep.subr.bf16.mxu0 0
  %1223 = vmatpush2.bf16.msra.mxu0 %v844
  %1224 = vmatprep.subr.bf16.mxu0 0
  %1225 = vmatpush2.bf16.msra.mxu0 %v843
  %1226 = vmatprep.subr.bf16.mxu0 0
  %1227 = vmatpush2.bf16.msra.mxu0 %v842
  %1228 = vmatprep.subr.bf16.mxu0 0
  %1229 = vmatpush2.bf16.msra.mxu0 %v841
  %1230 = vmatprep.subr.bf16.mxu0 0
  %1231 = vmatpush2.bf16.msra.mxu0 %v840
  %1232 = vmatprep.subr.bf16.mxu0 0
  %1233 = vmatpush2.bf16.msra.mxu0 %v839
  %1234 = vmatprep.mubr.bf16.mxu0 %v406
  %1235 = vmatmul.mubr.bf16.gmra.mxu0 %v405
  %v1236 = vpop.f32.mrf.mxu0
  %v1237 = vadd.f32 %v1140, %v1236
  %v1238 = vpop.f32.mrf.mxu0
  %v1239 = vpop.f32.mrf.mxu0
  %v1240 = vadd.f32 %v1143, %v1239
  %v1241 = vpop.f32.mrf.mxu0
  %1242 = vmatprep.mubr.bf16.mxu0 %v414
  %1243 = vmatmul.mubr.bf16.gmra.mxu0 %v413
  %v1244 = vpop.f32.mrf.mxu0
  %v1245 = vadd.f32 %v1148, %v1244
  %v1246 = vpop.f32.mrf.mxu0
  %v1247 = vpop.f32.mrf.mxu0
  %v1248 = vadd.f32 %v1151, %v1247
  %v1249 = vpop.f32.mrf.mxu0
  %1250 = vmatprep.mubr.bf16.mxu0 %v422
  %1251 = vmatmul.mubr.bf16.gmra.mxu0 %v421
  %v1252 = vpop.f32.mrf.mxu0
  %v1253 = vadd.f32 %v1156, %v1252
  %v1254 = vpop.f32.mrf.mxu0
  %v1255 = vpop.f32.mrf.mxu0
  %v1256 = vadd.f32 %v1159, %v1255
  %v1257 = vpop.f32.mrf.mxu0
  %1258 = vmatprep.mubr.bf16.mxu0 %v430
  %1259 = vmatmul.mubr.bf16.gmra.mxu0 %v429
  %v1260 = vpop.f32.mrf.mxu0
  %v1261 = vadd.f32 %v1164, %v1260
  %v1262 = vpop.f32.mrf.mxu0
  %v1263 = vpop.f32.mrf.mxu0
  %v1264 = vadd.f32 %v1167, %v1263
  %v1265 = vpop.f32.mrf.mxu0
  %1266 = vmatprep.mubr.bf16.mxu0 %v438
  %1267 = vmatmul.mubr.bf16.gmra.mxu0 %v437
  %v1268 = vpop.f32.mrf.mxu0
  %v1269 = vadd.f32 %v1172, %v1268
  %v1270 = vpop.f32.mrf.mxu0
  %v1271 = vpop.f32.mrf.mxu0
  %v1272 = vadd.f32 %v1175, %v1271
  %v1273 = vpop.f32.mrf.mxu0
  %1274 = vmatprep.mubr.bf16.mxu0 %v446
  %1275 = vmatmul.mubr.bf16.gmra.mxu0 %v445
  %v1276 = vpop.f32.mrf.mxu0
  %v1277 = vadd.f32 %v1180, %v1276
  %v1278 = vpop.f32.mrf.mxu0
  %v1279 = vpop.f32.mrf.mxu0
  %v1280 = vadd.f32 %v1183, %v1279
  %v1281 = vpop.f32.mrf.mxu0
  %1282 = vmatprep.mubr.bf16.mxu0 %v454
  %1283 = vmatmul.mubr.bf16.gmra.mxu0 %v453
  %v1284 = vpop.f32.mrf.mxu0
  %v1285 = vadd.f32 %v1188, %v1284
  %v1286 = vpop.f32.mrf.mxu0
  %v1287 = vpop.f32.mrf.mxu0
  %v1288 = vadd.f32 %v1191, %v1287
  %v1289 = vpop.f32.mrf.mxu0
  %1290 = vmatprep.mubr.bf16.mxu0 %v462
  %1291 = vmatmul.mubr.bf16.gmra.mxu0 %v461
  %v1292 = vpop.f32.mrf.mxu0
  %v1293 = vadd.f32 %v1196, %v1292
  %v1294 = vpop.f32.mrf.mxu0
  %v1295 = vpop.f32.mrf.mxu0
  %v1296 = vadd.f32 %v1199, %v1295
  %v1297 = vpop.f32.mrf.mxu0
  %1298 = vdwg.mxu0
  %v1299 = vpack.c.bf16 %v1240, %v1237
  %v1300 = vpack.c.bf16 %v1248, %v1245
  %v1301 = vpack.c.bf16 %v1256, %v1253
  %v1302 = vpack.c.bf16 %v1264, %v1261
  %v1303 = vpack.c.bf16 %v1272, %v1269
  %v1304 = vpack.c.bf16 %v1280, %v1277
  %v1305 = vpack.c.bf16 %v1288, %v1285
  %v1306 = vpack.c.bf16 %v1296, %v1293
  %v1315 = vunpack.c.l.b16 %v1299
  %v1316 = vunpack.c.h.b16 %v1299
  %v1317 = vunpack.c.l.b16 %v1300
  %v1318 = vunpack.c.h.b16 %v1300
  %v1319 = vunpack.c.l.b16 %v1301
  %v1320 = vunpack.c.h.b16 %v1301
  %v1321 = vunpack.c.l.b16 %v1302
  %v1322 = vunpack.c.h.b16 %v1302
  %v1323 = vunpack.c.l.b16 %v1303
  %v1324 = vunpack.c.h.b16 %v1303
  %v1325 = vunpack.c.l.b16 %v1304
  %v1326 = vunpack.c.h.b16 %v1304
  %v1327 = vunpack.c.l.b16 %v1305
  %v1328 = vunpack.c.h.b16 %v1305
  %v1329 = vunpack.c.l.b16 %v1306
  %v1330 = vunpack.c.h.b16 %v1306
  %v1331 = vpack.c.b16 %v1315, %v1315
  %v1332 = vpack.c.b16 %v1316, %v1316
  %v1333 = vpack.c.b16 %v1317, %v1317
  %v1334 = vpack.c.b16 %v1318, %v1318
  %v1335 = vpack.c.b16 %v1319, %v1319
  %v1336 = vpack.c.b16 %v1320, %v1320
  %v1337 = vpack.c.b16 %v1321, %v1321
  %v1338 = vpack.c.b16 %v1322, %v1322
  %v1339 = vpack.c.b16 %v1323, %v1323
  %v1340 = vpack.c.b16 %v1324, %v1324
  %v1341 = vpack.c.b16 %v1325, %v1325
  %v1342 = vpack.c.b16 %v1326, %v1326
  %v1343 = vpack.c.b16 %v1327, %v1327
  %v1344 = vpack.c.b16 %v1328, %v1328
  %v1345 = vpack.c.b16 %v1329, %v1329
  %v1346 = vpack.c.b16 %v1330, %v1330
  %1363 = vst [vmem:[%s2] sm:$0xf] %v1331
  %1364 = vst [vmem:[%s2 + $0x4] sm:$0xf] %v1332
  %1365 = vst [vmem:[%s2 + $0x8] sm:$0xf] %v1333
  %1366 = vst [vmem:[%s2 + $0xc] sm:$0xf] %v1334
  %1367 = vst [vmem:[%s2 + $0x10] sm:$0xf] %v1335
  %1368 = vst [vmem:[%s2 + $0x14] sm:$0xf] %v1336
  %1369 = vst [vmem:[%s2 + $0x18] sm:$0xf] %v1337
  %1370 = vst [vmem:[%s2 + $0x1c] sm:$0xf] %v1338
  %1371 = vst [vmem:[%s2 + $0x20] sm:$0xf] %v1339
  %1372 = vst [vmem:[%s2 + $0x24] sm:$0xf] %v1340
  %1373 = vst [vmem:[%s2 + $0x28] sm:$0xf] %v1341
  %1374 = vst [vmem:[%s2 + $0x2c] sm:$0xf] %v1342
  %1375 = vst [vmem:[%s2 + $0x30] sm:$0xf] %v1343
  %1376 = vst [vmem:[%s2 + $0x34] sm:$0xf] %v1344
  %1377 = vst [vmem:[%s2 + $0x38] sm:$0xf] %v1345
  %1378 = vst [vmem:[%s2 + $0x3c] sm:$0xf] %v1346
  %v1379 = vadd.f32 %v1237, %v1240
  %v1380 = vadd.f32 %v1379, %v1245
  %v1381 = vadd.f32 %v1380, %v1248
  %v1382 = vadd.f32 %v1381, %v1253
  %v1383 = vadd.f32 %v1382, %v1256
  %v1384 = vadd.f32 %v1383, %v1261
  %v1385 = vadd.f32 %v1384, %v1264
  %v1386 = vadd.f32 %v1385, %v1269
  %v1387 = vadd.f32 %v1386, %v1272
  %v1388 = vadd.f32 %v1387, %v1277
  %v1389 = vadd.f32 %v1388, %v1280
  %v1390 = vadd.f32 %v1389, %v1285
  %v1391 = vadd.f32 %v1390, %v1288
  %v1392 = vadd.f32 %v1391, %v1293
  %v1393 = vadd.f32 %v1392, %v1296
  %v1394 = vrot.slane %v1393, 4
  %v1395 = vadd.f32 %v1393, %v1394
  %v1396 = vrot.slane %v1395, 2
  %v1397 = vadd.f32 %v1395, %v1396
  %v1398 = vrot.slane %v1397, 1
  %v1399 = vadd.f32 %v1397, %v1398
  %1400 = vst [vmem:[%s3] sm:$0x1] %v1399
  %v1401 = vmul.f32 %v1237, %v1237
  %v1402 = vmul.f32 %v1240, %v1240
  %v1403 = vmul.f32 %v1245, %v1245
  %v1404 = vmul.f32 %v1248, %v1248
  %v1405 = vmul.f32 %v1253, %v1253
  %v1406 = vmul.f32 %v1256, %v1256
  %v1407 = vmul.f32 %v1261, %v1261
  %v1408 = vmul.f32 %v1264, %v1264
  %v1409 = vmul.f32 %v1269, %v1269
  %v1410 = vmul.f32 %v1272, %v1272
  %v1411 = vmul.f32 %v1277, %v1277
  %v1412 = vmul.f32 %v1280, %v1280
  %v1413 = vmul.f32 %v1285, %v1285
  %v1414 = vmul.f32 %v1288, %v1288
  %v1415 = vmul.f32 %v1293, %v1293
  %v1416 = vmul.f32 %v1296, %v1296
  %v1417 = vadd.f32 %v1401, %v1402
  %v1418 = vadd.f32 %v1417, %v1403
  %v1419 = vadd.f32 %v1418, %v1404
  %v1420 = vadd.f32 %v1419, %v1405
  %v1421 = vadd.f32 %v1420, %v1406
  %v1422 = vadd.f32 %v1421, %v1407
  %v1423 = vadd.f32 %v1422, %v1408
  %v1424 = vadd.f32 %v1423, %v1409
  %v1425 = vadd.f32 %v1424, %v1410
  %v1426 = vadd.f32 %v1425, %v1411
  %v1427 = vadd.f32 %v1426, %v1412
  %v1428 = vadd.f32 %v1427, %v1413
  %v1429 = vadd.f32 %v1428, %v1414
  %v1430 = vadd.f32 %v1429, %v1415
  %v1431 = vadd.f32 %v1430, %v1416
  %v1432 = vrot.slane %v1431, 4
  %v1433 = vadd.f32 %v1431, %v1432
  %v1434 = vrot.slane %v1433, 2
  %v1435 = vadd.f32 %v1433, %v1434
  %v1436 = vrot.slane %v1435, 1
  %v1437 = vadd.f32 %v1435, %v1436
  %1438 = vst [vmem:[%s4] sm:$0x1] %v1437
  // Predicated region
  $region10: #{patchgan_forward.9} parent=0 // pred_check
    _
  $region11: #{patchgan_forward.9} parent=0 // pred_check_branch
    %1440 = sbr.rel (0) target = $region13
  $region12: #{patchgan_forward.9} parent=0 // pred_region
    _
  $region13: #{patchgan_forward.9} parent=0 // pred_fallthru
    _
  // Predicated region
  $region14: #{patchgan_forward.9} parent=0 // pred_check
    _
  $region15: #{patchgan_forward.9} parent=0 // pred_check_branch
    %1442 = sbr.rel (0) target = $region17
  $region16: #{patchgan_forward.9} parent=0 // pred_region
    _
  $region17: #{patchgan_forward.9} parent=0 // pred_fallthru
    _
  // Predicated region
  $region18: #{patchgan_forward.9} parent=0 // pred_check
    _
  $region19: #{patchgan_forward.9} parent=0 // pred_check_branch
    %1444 = sbr.rel (0) target = $region21
  $region20: #{patchgan_forward.9} parent=0 // pred_region
    _
  $region21: #{patchgan_forward.9} parent=0 // pred_fallthru
    _
  // Predicated region
  $region22: #{patchgan_forward.9} parent=0 // pred_check
    _
  $region23: #{patchgan_forward.9} parent=0 // pred_check_branch
    %1446 = sbr.rel (0) target = $region25
  $region24: #{patchgan_forward.9} parent=0 // pred_region
    _
  $region25: #{patchgan_forward.9} parent=0 // pred_fallthru
    _
  // Predicated region
  $region26: #{patchgan_forward.9} parent=0 // pred_check
    _
  $region27: #{patchgan_forward.9} parent=0 // pred_check_branch
    %1448 = sbr.rel (0) target = $region29
  $region28: #{patchgan_forward.9} parent=0 // pred_region
    _
  $region29: #{patchgan_forward.9} parent=0 // pred_fallthru
    _
  // Predicated region
  $region30: #{patchgan_forward.9} parent=0 // pred_check
    _
  $region31: #{patchgan_forward.9} parent=0 // pred_check_branch
    %1450 = sbr.rel (0) target = $region33
  $region32: #{patchgan_forward.9} parent=0 // pred_region
    _
  $region33: #{patchgan_forward.9} parent=0 // pred_fallthru
    _

// kernel: patchgan_forward.10
$region0: #{patchgan_forward.10}
  #allocation0 [shape = 'u32[]', space=smem, size = 0x4, offset = 0x4, fixed_abs, tag = 'smem constant byte address 0x4 - core index']
  #allocation1 [shape = 'u32[144,128]{1,0:T(1,128)}', space=vmem, size = 0x12000, scoped, tag = 'internal scratch']
  %s0 = inlined_call_operand.vmem [shape: bf16[2,16,128], index: 0, kind: input, shape index: {}]
  %s1 = inlined_call_operand.vmem [shape: bf16[128,128], index: 1, kind: input, shape index: {}]
  %s2 = inlined_call_operand.vmem [shape: f32[1,128], index: 2, kind: input, shape index: {}]
  %s3 = inlined_call_operand.vmem [shape: f32[2,128], index: 3, kind: output, shape index: {}]
  %s4 = sld [smem:[#allocation0]]
  $region22: #{patchgan_forward.10} parent=0
    _
  %s6 = ssub.s32 1, %s4
  %s7 = scalar_select 0, %s6, %s4
  // Predicated region
  $region2: #{patchgan_forward.10} parent=0 // pred_check
    _
  $region3: #{patchgan_forward.10} parent=0 // pred_check_branch
    %9 = sbr.rel (0) target = $region5
  $region4: #{patchgan_forward.10} parent=0 // pred_region
    _
  $region5: #{patchgan_forward.10} parent=0 // pred_fallthru
    _
  // Predicated region
  $region6: #{patchgan_forward.10} parent=0 // pred_check
    _
  $region7: #{patchgan_forward.10} parent=0 // pred_check_branch
    %11 = sbr.rel (0) target = $region9
  $region8: #{patchgan_forward.10} parent=0 // pred_region
    _
  $region9: #{patchgan_forward.10} parent=0 // pred_fallthru
    _
  // Predicated region
  $region10: #{patchgan_forward.10} parent=0 // pred_check
    _
  $region11: #{patchgan_forward.10} parent=0 // pred_check_branch
    %13 = sbr.rel (0) target = $region13
  $region12: #{patchgan_forward.10} parent=0 // pred_region
    _
  $region13: #{patchgan_forward.10} parent=0 // pred_fallthru
    _
  %v15 = vld [vmem:[%s0] sm:$0xf]
  %v16 = vld [vmem:[%s0 + $0x4] sm:$0xf]
  %v17 = vld [vmem:[%s0 + $0x8] sm:$0xf]
  %v18 = vld [vmem:[%s0 + $0xc] sm:$0xf]
  %v19 = vunpack.c.l.bf16 %v15
  %v20 = vunpack.c.l.bf16 %v16
  %v21 = vunpack.c.l.bf16 %v17
  %v22 = vunpack.c.l.bf16 %v18
  %v23 = vadd.f32 %v19, %v20
  %v24 = vrot.slane %v23, 4
  %v25 = vadd.f32 %v23, %v24
  %v26 = vrot.slane %v25, 2
  %v27 = vadd.f32 %v25, %v26
  %v28 = vrot.slane %v27, 1
  %v29 = vadd.f32 %v27, %v28
  %v30 = vadd.f32 %v21, %v22
  %v31 = vrot.slane %v30, 4
  %v32 = vadd.f32 %v30, %v31
  %v33 = vrot.slane %v32, 2
  %v34 = vadd.f32 %v32, %v33
  %v35 = vrot.slane %v34, 1
  %v36 = vadd.f32 %v34, %v35
  %v37 = vmul.f32 %v29, 0.0625
  %v38 = vmul.f32 %v36, 0.0625
  %v39 = vpack.c.bf16 %v37, %v37
  %v40 = vpack.c.bf16 %v38, %v38
  %v41 = vld [vmem:[%s1] sm:$0xf]
  %v42 = vld [vmem:[%s1 + $0x4] sm:$0xf]
  %v43 = vld [vmem:[%s1 + $0x8] sm:$0xf]
  %v44 = vld [vmem:[%s1 + $0xc] sm:$0xf]
  %v45 = vld [vmem:[%s1 + $0x10] sm:$0xf]
  %v46 = vld [vmem:[%s1 + $0x14] sm:$0xf]
  %v47 = vld [vmem:[%s1 + $0x18] sm:$0xf]
  %v48 = vld [vmem:[%s1 + $0x1c] sm:$0xf]
  %v49 = vld [vmem:[%s1 + $0x20] sm:$0xf]
  %v50 = vld [vmem:[%s1 + $0x24] sm:$0xf]
  %v51 = vld [vmem:[%s1 + $0x28] sm:$0xf]
  %v52 = vld [vmem:[%s1 + $0x2c] sm:$0xf]
  %v53 = vld [vmem:[%s1 + $0x30] sm:$0xf]
  %v54 = vld [vmem:[%s1 + $0x34] sm:$0xf]
  %v55 = vld [vmem:[%s1 + $0x38] sm:$0xf]
  %v56 = vld [vmem:[%s1 + $0x3c] sm:$0xf]
  %v57 = vld [vmem:[%s2] sm:$0x1]
  %v59 = vlaneseq
  %v60 = vshrl.u32 %v59, 7
  %v61 = vsub.s32 0, %v60
  %v62 = vrot.slane %v57, %v61
  %v66 = vunpack.c.l.b16 %v39
  %v67 = vunpack.c.l.b16 %v40
  %vm68 = vcmask 1041409
  %v69 = vsel %vm68, %v67, %v66
  %v70 = vpack.c.b16 %v69, %v69
  %v88 = vunpack.c.l.b16 %v41
  %v89 = vunpack.c.l.b16 %v42
  %v90 = vunpack.c.l.b16 %v43
  %v91 = vunpack.c.l.b16 %v44
  %v92 = vunpack.c.l.b16 %v45
  %v93 = vunpack.c.l.b16 %v46
  %v94 = vunpack.c.l.b16 %v47
  %v95 = vunpack.c.l.b16 %v48
  %v96 = vunpack.c.l.b16 %v49
  %v97 = vunpack.c.l.b16 %v50
  %v98 = vunpack.c.l.b16 %v51
  %v99 = vunpack.c.l.b16 %v52
  %v100 = vunpack.c.l.b16 %v53
  %v101 = vunpack.c.l.b16 %v54
  %v102 = vunpack.c.l.b16 %v55
  %v103 = vunpack.c.l.b16 %v56
  %v104 = vpack.c.b16 %v89, %v88
  %v105 = vpack.c.b16 %v91, %v90
  %v106 = vpack.c.b16 %v93, %v92
  %v107 = vpack.c.b16 %v95, %v94
  %v108 = vpack.c.b16 %v97, %v96
  %v109 = vpack.c.b16 %v99, %v98
  %v110 = vpack.c.b16 %v101, %v100
  %v111 = vpack.c.b16 %v103, %v102
  %120 = vmatprep.subr.bf16.mxu0 0
  %121 = vmatpush1.bf16.msra.mxu0 %v111
  %122 = vmatprep.subr.bf16.mxu0 0
  %123 = vmatpush1.bf16.msra.mxu0 %v110
  %124 = vmatprep.subr.bf16.mxu0 0
  %125 = vmatpush1.bf16.msra.mxu0 %v109
  %126 = vmatprep.subr.bf16.mxu0 0
  %127 = vmatpush1.bf16.msra.mxu0 %v108
  %128 = vmatprep.subr.bf16.mxu0 0
  %129 = vmatpush1.bf16.msra.mxu0 %v107
  %130 = vmatprep.subr.bf16.mxu0 0
  %131 = vmatpush1.bf16.msra.mxu0 %v106
  %132 = vmatprep.subr.bf16.mxu0 0
  %133 = vmatpush1.bf16.msra.mxu0 %v105
  %134 = vmatprep.subr.bf16.mxu0 0
  %135 = vmatpush1.bf16.msra.mxu0 %v104
  %136 = vmatprep.subr.bf16.mxu0 0
  %137 = vmatpush2.bf16.msra.mxu0 0
  %138 = vmatprep.subr.bf16.mxu0 0
  %139 = vmatpush2.bf16.msra.mxu0 0
  %140 = vmatprep.subr.bf16.mxu0 0
  %141 = vmatpush2.bf16.msra.mxu0 0
  %142 = vmatprep.subr.bf16.mxu0 0
  %143 = vmatpush2.bf16.msra.mxu0 0
  %144 = vmatprep.subr.bf16.mxu0 0
  %145 = vmatpush2.bf16.msra.mxu0 0
  %146 = vmatprep.subr.bf16.mxu0 0
  %147 = vmatpush2.bf16.msra.mxu0 0
  %148 = vmatprep.subr.bf16.mxu0 0
  %149 = vmatpush2.bf16.msra.mxu0 0
  %150 = vmatprep.subr.bf16.mxu0 0
  %151 = vmatpush2.bf16.msra.mxu0 0
  %152 = vmatprep.mubr.bf16.mxu0 0
  %153 = vmatmul.mubr.bf16.gmra.mxu0 %v70
  %v154 = vpop.f32.mrf.mxu0
  %v155 = vadd.f32 %v62, %v154
  %v156 = vpop.f32.mrf.mxu0
  %v157 = vpop.f32.mrf.mxu0
  %v158 = vpop.f32.mrf.mxu0
  %159 = vdwg.mxu0
  %160 = vst [vmem:[%s3] sm:$0x3] %v155
  // Predicated region
  $region14: #{patchgan_forward.10} parent=0 // pred_check
    _
  $region15: #{patchgan_forward.10} parent=0 // pred_check_branch
    %162 = sbr.rel (0) target = $region17
  $region16: #{patchgan_forward.10} parent=0 // pred_region
    _
  $region17: #{patchgan_forward.10} parent=0 // pred_fallthru
    _
  // Predicated region
  $region18: #{patchgan_forward.10} parent=0 // pred_check
    _
  $region19: #{patchgan_forward.10} parent=0 // pred_check_branch
    %164 = sbr.rel (0) target = $region21
  $region20: #{patchgan_forward.10} parent=0 // pred_region
    _
  $region21: #{patchgan_forward.10} parent=0 // pred_fallthru
    _

// kernel: patchgan_forward.11
$region0: #{patchgan_forward.11}
  #allocation0 [shape = 'u32[]', space=smem, size = 0x4, offset = 0x4, fixed_abs, tag = 'smem constant byte address 0x4 - core index']
  #allocation1 [shape = 'u32[144,128]{1,0:T(1,128)}', space=vmem, size = 0x12000, scoped, tag = 'internal scratch']
  #allocation2 [shape = 'f32[1,1]{1,0:T(1,128)S(1)}', space=vmem, size = 0x200, scoped, tag = 'scoped memory for patchgan_forward.11']
  %s0 = inlined_call_operand.vmem [shape: bf16[128,2048], index: 0, kind: input, shape index: {}]
  %s1 = inlined_call_operand.vmem [shape: bf16[2048,1], index: 1, kind: input, shape index: {}]
  %s2 = inlined_call_operand.<no memory space> [shape: f32[1,1], index: 2, kind: input, shape index: {}]
  %s3 = inlined_call_operand.vmem [shape: f32[128,1], index: 3, kind: output, shape index: {}]
  %s4 = sld [smem:[#allocation0]]
  $region22: #{patchgan_forward.11} parent=0
    _
  %s6 = ssub.s32 1, %s4
  %s7 = scalar_select 0, %s6, %s4
  %v8 = vstv %s2
  %9 = vst [vmem:[#allocation2] sm:$0x1] %v8
  // Predicated region
  $region2: #{patchgan_forward.11} parent=0 // pred_check
    _
  $region3: #{patchgan_forward.11} parent=0 // pred_check_branch
    %11 = sbr.rel (0) target = $region5
  $region4: #{patchgan_forward.11} parent=0 // pred_region
    _
  $region5: #{patchgan_forward.11} parent=0 // pred_fallthru
    _
  // Predicated region
  $region6: #{patchgan_forward.11} parent=0 // pred_check
    _
  $region7: #{patchgan_forward.11} parent=0 // pred_check_branch
    %13 = sbr.rel (0) target = $region9
  $region8: #{patchgan_forward.11} parent=0 // pred_region
    _
  $region9: #{patchgan_forward.11} parent=0 // pred_fallthru
    _
  // Predicated region
  $region10: #{patchgan_forward.11} parent=0 // pred_check
    _
  $region11: #{patchgan_forward.11} parent=0 // pred_check_branch
    %15 = sbr.rel (0) target = $region13
  $region12: #{patchgan_forward.11} parent=0 // pred_region
    _
  $region13: #{patchgan_forward.11} parent=0 // pred_fallthru
    _
  %v17 = vld [vmem:[%s0] sm:$0xff]
  %v18 = vld [vmem:[%s0 + $0x8] sm:$0xff]
  %v19 = vld [vmem:[%s0 + $0x10] sm:$0xff]
  %v20 = vld [vmem:[%s0 + $0x18] sm:$0xff]
  %v21 = vld [vmem:[%s0 + $0x20] sm:$0xff]
  %v22 = vld [vmem:[%s0 + $0x28] sm:$0xff]
  %v23 = vld [vmem:[%s0 + $0x30] sm:$0xff]
  %v24 = vld [vmem:[%s0 + $0x38] sm:$0xff]
  %v25 = vld [vmem:[%s0 + $0x40] sm:$0xff]
  %v26 = vld [vmem:[%s0 + $0x48] sm:$0xff]
  %v27 = vld [vmem:[%s0 + $0x50] sm:$0xff]
  %v28 = vld [vmem:[%s0 + $0x58] sm:$0xff]
  %v29 = vld [vmem:[%s0 + $0x60] sm:$0xff]
  %v30 = vld [vmem:[%s0 + $0x68] sm:$0xff]
  %v31 = vld [vmem:[%s0 + $0x70] sm:$0xff]
  %v32 = vld [vmem:[%s0 + $0x78] sm:$0xff]
  %v33 = vld [vmem:[%s0 + $0x80] sm:$0xff]
  %v34 = vld [vmem:[%s0 + $0x88] sm:$0xff]
  %v35 = vld [vmem:[%s0 + $0x90] sm:$0xff]
  %v36 = vld [vmem:[%s0 + $0x98] sm:$0xff]
  %v37 = vld [vmem:[%s0 + $0xa0] sm:$0xff]
  %v38 = vld [vmem:[%s0 + $0xa8] sm:$0xff]
  %v39 = vld [vmem:[%s0 + $0xb0] sm:$0xff]
  %v40 = vld [vmem:[%s0 + $0xb8] sm:$0xff]
  %v41 = vld [vmem:[%s0 + $0xc0] sm:$0xff]
  %v42 = vld [vmem:[%s0 + $0xc8] sm:$0xff]
  %v43 = vld [vmem:[%s0 + $0xd0] sm:$0xff]
  %v44 = vld [vmem:[%s0 + $0xd8] sm:$0xff]
  %v45 = vld [vmem:[%s0 + $0xe0] sm:$0xff]
  %v46 = vld [vmem:[%s0 + $0xe8] sm:$0xff]
  %v47 = vld [vmem:[%s0 + $0xf0] sm:$0xff]
  %v48 = vld [vmem:[%s0 + $0xf8] sm:$0xff]
  %v49 = vld [vmem:[%s0 + $0x100] sm:$0xff]
  %v50 = vld [vmem:[%s0 + $0x108] sm:$0xff]
  %v51 = vld [vmem:[%s0 + $0x110] sm:$0xff]
  %v52 = vld [vmem:[%s0 + $0x118] sm:$0xff]
  %v53 = vld [vmem:[%s0 + $0x120] sm:$0xff]
  %v54 = vld [vmem:[%s0 + $0x128] sm:$0xff]
  %v55 = vld [vmem:[%s0 + $0x130] sm:$0xff]
  %v56 = vld [vmem:[%s0 + $0x138] sm:$0xff]
  %v57 = vld [vmem:[%s0 + $0x140] sm:$0xff]
  %v58 = vld [vmem:[%s0 + $0x148] sm:$0xff]
  %v59 = vld [vmem:[%s0 + $0x150] sm:$0xff]
  %v60 = vld [vmem:[%s0 + $0x158] sm:$0xff]
  %v61 = vld [vmem:[%s0 + $0x160] sm:$0xff]
  %v62 = vld [vmem:[%s0 + $0x168] sm:$0xff]
  %v63 = vld [vmem:[%s0 + $0x170] sm:$0xff]
  %v64 = vld [vmem:[%s0 + $0x178] sm:$0xff]
  %v65 = vld [vmem:[%s0 + $0x180] sm:$0xff]
  %v66 = vld [vmem:[%s0 + $0x188] sm:$0xff]
  %v67 = vld [vmem:[%s0 + $0x190] sm:$0xff]
  %v68 = vld [vmem:[%s0 + $0x198] sm:$0xff]
  %v69 = vld [vmem:[%s0 + $0x1a0] sm:$0xff]
  %v70 = vld [vmem:[%s0 + $0x1a8] sm:$0xff]
  %v71 = vld [vmem:[%s0 + $0x1b0] sm:$0xff]
  %v72 = vld [vmem:[%s0 + $0x1b8] sm:$0xff]
  %v73 = vld [vmem:[%s0 + $0x1c0] sm:$0xff]
  %v74 = vld [vmem:[%s0 + $0x1c8] sm:$0xff]
  %v75 = vld [vmem:[%s0 + $0x1d0] sm:$0xff]
  %v76 = vld [vmem:[%s0 + $0x1d8] sm:$0xff]
  %v77 = vld [vmem:[%s0 + $0x1e0] sm:$0xff]
  %v78 = vld [vmem:[%s0 + $0x1e8] sm:$0xff]
  %v79 = vld [vmem:[%s0 + $0x1f0] sm:$0xff]
  %v80 = vld [vmem:[%s0 + $0x1f8] sm:$0xff]
  %v81 = vld [vmem:[%s0 + $0x200] sm:$0xff]
  %v82 = vld [vmem:[%s0 + $0x208] sm:$0xff]
  %v83 = vld [vmem:[%s0 + $0x210] sm:$0xff]
  %v84 = vld [vmem:[%s0 + $0x218] sm:$0xff]
  %v85 = vld [vmem:[%s0 + $0x220] sm:$0xff]
  %v86 = vld [vmem:[%s0 + $0x228] sm:$0xff]
  %v87 = vld [vmem:[%s0 + $0x230] sm:$0xff]
  %v88 = vld [vmem:[%s0 + $0x238] sm:$0xff]
  %v89 = vld [vmem:[%s0 + $0x240] sm:$0xff]
  %v90 = vld [vmem:[%s0 + $0x248] sm:$0xff]
  %v91 = vld [vmem:[%s0 + $0x250] sm:$0xff]
  %v92 = vld [vmem:[%s0 + $0x258] sm:$0xff]
  %v93 = vld [vmem:[%s0 + $0x260] sm:$0xff]
  %v94 = vld [vmem:[%s0 + $0x268] sm:$0xff]
  %v95 = vld [vmem:[%s0 + $0x270] sm:$0xff]
  %v96 = vld [vmem:[%s0 + $0x278] sm:$0xff]
  %v97 = vld [vmem:[%s0 + $0x280] sm:$0xff]
  %v98 = vld [vmem:[%s0 + $0x288] sm:$0xff]
  %v99 = vld [vmem:[%s0 + $0x290] sm:$0xff]
  %v100 = vld [vmem:[%s0 + $0x298] sm:$0xff]
  %v101 = vld [vmem:[%s0 + $0x2a0] sm:$0xff]
  %v102 = vld [vmem:[%s0 + $0x2a8] sm:$0xff]
  %v103 = vld [vmem:[%s0 + $0x2b0] sm:$0xff]
  %v104 = vld [vmem:[%s0 + $0x2b8] sm:$0xff]
  %v105 = vld [vmem:[%s0 + $0x2c0] sm:$0xff]
  %v106 = vld [vmem:[%s0 + $0x2c8] sm:$0xff]
  %v107 = vld [vmem:[%s0 + $0x2d0] sm:$0xff]
  %v108 = vld [vmem:[%s0 + $0x2d8] sm:$0xff]
  %v109 = vld [vmem:[%s0 + $0x2e0] sm:$0xff]
  %v110 = vld [vmem:[%s0 + $0x2e8] sm:$0xff]
  %v111 = vld [vmem:[%s0 + $0x2f0] sm:$0xff]
  %v112 = vld [vmem:[%s0 + $0x2f8] sm:$0xff]
  %v113 = vld [vmem:[%s0 + $0x300] sm:$0xff]
  %v114 = vld [vmem:[%s0 + $0x308] sm:$0xff]
  %v115 = vld [vmem:[%s0 + $0x310] sm:$0xff]
  %v116 = vld [vmem:[%s0 + $0x318] sm:$0xff]
  %v117 = vld [vmem:[%s0 + $0x320] sm:$0xff]
  %v118 = vld [vmem:[%s0 + $0x328] sm:$0xff]
  %v119 = vld [vmem:[%s0 + $0x330] sm:$0xff]
  %v120 = vld [vmem:[%s0 + $0x338] sm:$0xff]
  %v121 = vld [vmem:[%s0 + $0x340] sm:$0xff]
  %v122 = vld [vmem:[%s0 + $0x348] sm:$0xff]
  %v123 = vld [vmem:[%s0 + $0x350] sm:$0xff]
  %v124 = vld [vmem:[%s0 + $0x358] sm:$0xff]
  %v125 = vld [vmem:[%s0 + $0x360] sm:$0xff]
  %v126 = vld [vmem:[%s0 + $0x368] sm:$0xff]
  %v127 = vld [vmem:[%s0 + $0x370] sm:$0xff]
  %v128 = vld [vmem:[%s0 + $0x378] sm:$0xff]
  %v129 = vld [vmem:[%s0 + $0x380] sm:$0xff]
  %v130 = vld [vmem:[%s0 + $0x388] sm:$0xff]
  %v131 = vld [vmem:[%s0 + $0x390] sm:$0xff]
  %v132 = vld [vmem:[%s0 + $0x398] sm:$0xff]
  %v133 = vld [vmem:[%s0 + $0x3a0] sm:$0xff]
  %v134 = vld [vmem:[%s0 + $0x3a8] sm:$0xff]
  %v135 = vld [vmem:[%s0 + $0x3b0] sm:$0xff]
  %v136 = vld [vmem:[%s0 + $0x3b8] sm:$0xff]
  %v137 = vld [vmem:[%s0 + $0x3c0] sm:$0xff]
  %v138 = vld [vmem:[%s0 + $0x3c8] sm:$0xff]
  %v139 = vld [vmem:[%s0 + $0x3d0] sm:$0xff]
  %v140 = vld [vmem:[%s0 + $0x3d8] sm:$0xff]
  %v141 = vld [vmem:[%s0 + $0x3e0] sm:$0xff]
  %v142 = vld [vmem:[%s0 + $0x3e8] sm:$0xff]
  %v143 = vld [vmem:[%s0 + $0x3f0] sm:$0xff]
  %v144 = vld [vmem:[%s0 + $0x3f8] sm:$0xff]
  %v145 = vld [vmem:[%s1] sm:$0xf]
  %v146 = vld [vmem:[%s1 + $0x4] sm:$0xf]
  %v147 = vld [vmem:[%s1 + $0x8] sm:$0xf]
  %v148 = vld [vmem:[%s1 + $0xc] sm:$0xf]
  %v149 = vld [vmem:[%s1 + $0x10] sm:$0xf]
  %v150 = vld [vmem:[%s1 + $0x14] sm:$0xf]
  %v151 = vld [vmem:[%s1 + $0x18] sm:$0xf]
  %v152 = vld [vmem:[%s1 + $0x1c] sm:$0xf]
  %v153 = vld [vmem:[%s1 + $0x20] sm:$0xf]
  %v154 = vld [vmem:[%s1 + $0x24] sm:$0xf]
  %v155 = vld [vmem:[%s1 + $0x28] sm:$0xf]
  %v156 = vld [vmem:[%s1 + $0x2c] sm:$0xf]
  %v157 = vld [vmem:[%s1 + $0x30] sm:$0xf]
  %v158 = vld [vmem:[%s1 + $0x34] sm:$0xf]
  %v159 = vld [vmem:[%s1 + $0x38] sm:$0xf]
  %v160 = vld [vmem:[%s1 + $0x3c] sm:$0xf]
  %v161 = vld [vmem:[%s1 + $0x40] sm:$0xf]
  %v162 = vld [vmem:[%s1 + $0x44] sm:$0xf]
  %v163 = vld [vmem:[%s1 + $0x48] sm:$0xf]
  %v164 = vld [vmem:[%s1 + $0x4c] sm:$0xf]
  %v165 = vld [vmem:[%s1 + $0x50] sm:$0xf]
  %v166 = vld [vmem:[%s1 + $0x54] sm:$0xf]
  %v167 = vld [vmem:[%s1 + $0x58] sm:$0xf]
  %v168 = vld [vmem:[%s1 + $0x5c] sm:$0xf]
  %v169 = vld [vmem:[%s1 + $0x60] sm:$0xf]
  %v170 = vld [vmem:[%s1 + $0x64] sm:$0xf]
  %v171 = vld [vmem:[%s1 + $0x68] sm:$0xf]
  %v172 = vld [vmem:[%s1 + $0x6c] sm:$0xf]
  %v173 = vld [vmem:[%s1 + $0x70] sm:$0xf]
  %v174 = vld [vmem:[%s1 + $0x74] sm:$0xf]
  %v175 = vld [vmem:[%s1 + $0x78] sm:$0xf]
  %v176 = vld [vmem:[%s1 + $0x7c] sm:$0xf]
  %v177 = vld [vmem:[%s1 + $0x80] sm:$0xf]
  %v178 = vld [vmem:[%s1 + $0x84] sm:$0xf]
  %v179 = vld [vmem:[%s1 + $0x88] sm:$0xf]
  %v180 = vld [vmem:[%s1 + $0x8c] sm:$0xf]
  %v181 = vld [vmem:[%s1 + $0x90] sm:$0xf]
  %v182 = vld [vmem:[%s1 + $0x94] sm:$0xf]
  %v183 = vld [vmem:[%s1 + $0x98] sm:$0xf]
  %v184 = vld [vmem:[%s1 + $0x9c] sm:$0xf]
  %v185 = vld [vmem:[%s1 + $0xa0] sm:$0xf]
  %v186 = vld [vmem:[%s1 + $0xa4] sm:$0xf]
  %v187 = vld [vmem:[%s1 + $0xa8] sm:$0xf]
  %v188 = vld [vmem:[%s1 + $0xac] sm:$0xf]
  %v189 = vld [vmem:[%s1 + $0xb0] sm:$0xf]
  %v190 = vld [vmem:[%s1 + $0xb4] sm:$0xf]
  %v191 = vld [vmem:[%s1 + $0xb8] sm:$0xf]
  %v192 = vld [vmem:[%s1 + $0xbc] sm:$0xf]
  %v193 = vld [vmem:[%s1 + $0xc0] sm:$0xf]
  %v194 = vld [vmem:[%s1 + $0xc4] sm:$0xf]
  %v195 = vld [vmem:[%s1 + $0xc8] sm:$0xf]
  %v196 = vld [vmem:[%s1 + $0xcc] sm:$0xf]
  %v197 = vld [vmem:[%s1 + $0xd0] sm:$0xf]
  %v198 = vld [vmem:[%s1 + $0xd4] sm:$0xf]
  %v199 = vld [vmem:[%s1 + $0xd8] sm:$0xf]
  %v200 = vld [vmem:[%s1 + $0xdc] sm:$0xf]
  %v201 = vld [vmem:[%s1 + $0xe0] sm:$0xf]
  %v202 = vld [vmem:[%s1 + $0xe4] sm:$0xf]
  %v203 = vld [vmem:[%s1 + $0xe8] sm:$0xf]
  %v204 = vld [vmem:[%s1 + $0xec] sm:$0xf]
  %v205 = vld [vmem:[%s1 + $0xf0] sm:$0xf]
  %v206 = vld [vmem:[%s1 + $0xf4] sm:$0xf]
  %v207 = vld [vmem:[%s1 + $0xf8] sm:$0xf]
  %v208 = vld [vmem:[%s1 + $0xfc] sm:$0xf]
  %v209 = vld [vmem:[%s1 + $0x100] sm:$0xf]
  %v210 = vld [vmem:[%s1 + $0x104] sm:$0xf]
  %v211 = vld [vmem:[%s1 + $0x108] sm:$0xf]
  %v212 = vld [vmem:[%s1 + $0x10c] sm:$0xf]
  %v213 = vld [vmem:[%s1 + $0x110] sm:$0xf]
  %v214 = vld [vmem:[%s1 + $0x114] sm:$0xf]
  %v215 = vld [vmem:[%s1 + $0x118] sm:$0xf]
  %v216 = vld [vmem:[%s1 + $0x11c] sm:$0xf]
  %v217 = vld [vmem:[%s1 + $0x120] sm:$0xf]
  %v218 = vld [vmem:[%s1 + $0x124] sm:$0xf]
  %v219 = vld [vmem:[%s1 + $0x128] sm:$0xf]
  %v220 = vld [vmem:[%s1 + $0x12c] sm:$0xf]
  %v221 = vld [vmem:[%s1 + $0x130] sm:$0xf]
  %v222 = vld [vmem:[%s1 + $0x134] sm:$0xf]
  %v223 = vld [vmem:[%s1 + $0x138] sm:$0xf]
  %v224 = vld [vmem:[%s1 + $0x13c] sm:$0xf]
  %v225 = vld [vmem:[%s1 + $0x140] sm:$0xf]
  %v226 = vld [vmem:[%s1 + $0x144] sm:$0xf]
  %v227 = vld [vmem:[%s1 + $0x148] sm:$0xf]
  %v228 = vld [vmem:[%s1 + $0x14c] sm:$0xf]
  %v229 = vld [vmem:[%s1 + $0x150] sm:$0xf]
  %v230 = vld [vmem:[%s1 + $0x154] sm:$0xf]
  %v231 = vld [vmem:[%s1 + $0x158] sm:$0xf]
  %v232 = vld [vmem:[%s1 + $0x15c] sm:$0xf]
  %v233 = vld [vmem:[%s1 + $0x160] sm:$0xf]
  %v234 = vld [vmem:[%s1 + $0x164] sm:$0xf]
  %v235 = vld [vmem:[%s1 + $0x168] sm:$0xf]
  %v236 = vld [vmem:[%s1 + $0x16c] sm:$0xf]
  %v237 = vld [vmem:[%s1 + $0x170] sm:$0xf]
  %v238 = vld [vmem:[%s1 + $0x174] sm:$0xf]
  %v239 = vld [vmem:[%s1 + $0x178] sm:$0xf]
  %v240 = vld [vmem:[%s1 + $0x17c] sm:$0xf]
  %v241 = vld [vmem:[%s1 + $0x180] sm:$0xf]
  %v242 = vld [vmem:[%s1 + $0x184] sm:$0xf]
  %v243 = vld [vmem:[%s1 + $0x188] sm:$0xf]
  %v244 = vld [vmem:[%s1 + $0x18c] sm:$0xf]
  %v245 = vld [vmem:[%s1 + $0x190] sm:$0xf]
  %v246 = vld [vmem:[%s1 + $0x194] sm:$0xf]
  %v247 = vld [vmem:[%s1 + $0x198] sm:$0xf]
  %v248 = vld [vmem:[%s1 + $0x19c] sm:$0xf]
  %v249 = vld [vmem:[%s1 + $0x1a0] sm:$0xf]
  %v250 = vld [vmem:[%s1 + $0x1a4] sm:$0xf]
  %v251 = vld [vmem:[%s1 + $0x1a8] sm:$0xf]
  %v252 = vld [vmem:[%s1 + $0x1ac] sm:$0xf]
  %v253 = vld [vmem:[%s1 + $0x1b0] sm:$0xf]
  %v254 = vld [vmem:[%s1 + $0x1b4] sm:$0xf]
  %v255 = vld [vmem:[%s1 + $0x1b8] sm:$0xf]
  %v256 = vld [vmem:[%s1 + $0x1bc] sm:$0xf]
  %v257 = vld [vmem:[%s1 + $0x1c0] sm:$0xf]
  %v258 = vld [vmem:[%s1 + $0x1c4] sm:$0xf]
  %v259 = vld [vmem:[%s1 + $0x1c8] sm:$0xf]
  %v260 = vld [vmem:[%s1 + $0x1cc] sm:$0xf]
  %v261 = vld [vmem:[%s1 + $0x1d0] sm:$0xf]
  %v262 = vld [vmem:[%s1 + $0x1d4] sm:$0xf]
  %v263 = vld [vmem:[%s1 + $0x1d8] sm:$0xf]
  %v264 = vld [vmem:[%s1 + $0x1dc] sm:$0xf]
  %v265 = vld [vmem:[%s1 + $0x1e0] sm:$0xf]
  %v266 = vld [vmem:[%s1 + $0x1e4] sm:$0xf]
  %v267 = vld [vmem:[%s1 + $0x1e8] sm:$0xf]
  %v268 = vld [vmem:[%s1 + $0x1ec] sm:$0xf]
  %v269 = vld [vmem:[%s1 + $0x1f0] sm:$0xf]
  %v270 = vld [vmem:[%s1 + $0x1f4] sm:$0xf]
  %v271 = vld [vmem:[%s1 + $0x1f8] sm:$0xf]
  %v272 = vld [vmem:[%s1 + $0x1fc] sm:$0xf]
  %v273 = vld [vmem:[%s1 + $0x200] sm:$0xf]
  %v274 = vld [vmem:[%s1 + $0x204] sm:$0xf]
  %v275 = vld [vmem:[%s1 + $0x208] sm:$0xf]
  %v276 = vld [vmem:[%s1 + $0x20c] sm:$0xf]
  %v277 = vld [vmem:[%s1 + $0x210] sm:$0xf]
  %v278 = vld [vmem:[%s1 + $0x214] sm:$0xf]
  %v279 = vld [vmem:[%s1 + $0x218] sm:$0xf]
  %v280 = vld [vmem:[%s1 + $0x21c] sm:$0xf]
  %v281 = vld [vmem:[%s1 + $0x220] sm:$0xf]
  %v282 = vld [vmem:[%s1 + $0x224] sm:$0xf]
  %v283 = vld [vmem:[%s1 + $0x228] sm:$0xf]
  %v284 = vld [vmem:[%s1 + $0x22c] sm:$0xf]
  %v285 = vld [vmem:[%s1 + $0x230] sm:$0xf]
  %v286 = vld [vmem:[%s1 + $0x234] sm:$0xf]
  %v287 = vld [vmem:[%s1 + $0x238] sm:$0xf]
  %v288 = vld [vmem:[%s1 + $0x23c] sm:$0xf]
  %v289 = vld [vmem:[%s1 + $0x240] sm:$0xf]
  %v290 = vld [vmem:[%s1 + $0x244] sm:$0xf]
  %v291 = vld [vmem:[%s1 + $0x248] sm:$0xf]
  %v292 = vld [vmem:[%s1 + $0x24c] sm:$0xf]
  %v293 = vld [vmem:[%s1 + $0x250] sm:$0xf]
  %v294 = vld [vmem:[%s1 + $0x254] sm:$0xf]
  %v295 = vld [vmem:[%s1 + $0x258] sm:$0xf]
  %v296 = vld [vmem:[%s1 + $0x25c] sm:$0xf]
  %v297 = vld [vmem:[%s1 + $0x260] sm:$0xf]
  %v298 = vld [vmem:[%s1 + $0x264] sm:$0xf]
  %v299 = vld [vmem:[%s1 + $0x268] sm:$0xf]
  %v300 = vld [vmem:[%s1 + $0x26c] sm:$0xf]
  %v301 = vld [vmem:[%s1 + $0x270] sm:$0xf]
  %v302 = vld [vmem:[%s1 + $0x274] sm:$0xf]
  %v303 = vld [vmem:[%s1 + $0x278] sm:$0xf]
  %v304 = vld [vmem:[%s1 + $0x27c] sm:$0xf]
  %v305 = vld [vmem:[%s1 + $0x280] sm:$0xf]
  %v306 = vld [vmem:[%s1 + $0x284] sm:$0xf]
  %v307 = vld [vmem:[%s1 + $0x288] sm:$0xf]
  %v308 = vld [vmem:[%s1 + $0x28c] sm:$0xf]
  %v309 = vld [vmem:[%s1 + $0x290] sm:$0xf]
  %v310 = vld [vmem:[%s1 + $0x294] sm:$0xf]
  %v311 = vld [vmem:[%s1 + $0x298] sm:$0xf]
  %v312 = vld [vmem:[%s1 + $0x29c] sm:$0xf]
  %v313 = vld [vmem:[%s1 + $0x2a0] sm:$0xf]
  %v314 = vld [vmem:[%s1 + $0x2a4] sm:$0xf]
  %v315 = vld [vmem:[%s1 + $0x2a8] sm:$0xf]
  %v316 = vld [vmem:[%s1 + $0x2ac] sm:$0xf]
  %v317 = vld [vmem:[%s1 + $0x2b0] sm:$0xf]
  %v318 = vld [vmem:[%s1 + $0x2b4] sm:$0xf]
  %v319 = vld [vmem:[%s1 + $0x2b8] sm:$0xf]
  %v320 = vld [vmem:[%s1 + $0x2bc] sm:$0xf]
  %v321 = vld [vmem:[%s1 + $0x2c0] sm:$0xf]
  %v322 = vld [vmem:[%s1 + $0x2c4] sm:$0xf]
  %v323 = vld [vmem:[%s1 + $0x2c8] sm:$0xf]
  %v324 = vld [vmem:[%s1 + $0x2cc] sm:$0xf]
  %v325 = vld [vmem:[%s1 + $0x2d0] sm:$0xf]
  %v326 = vld [vmem:[%s1 + $0x2d4] sm:$0xf]
  %v327 = vld [vmem:[%s1 + $0x2d8] sm:$0xf]
  %v328 = vld [vmem:[%s1 + $0x2dc] sm:$0xf]
  %v329 = vld [vmem:[%s1 + $0x2e0] sm:$0xf]
  %v330 = vld [vmem:[%s1 + $0x2e4] sm:$0xf]
  %v331 = vld [vmem:[%s1 + $0x2e8] sm:$0xf]
  %v332 = vld [vmem:[%s1 + $0x2ec] sm:$0xf]
  %v333 = vld [vmem:[%s1 + $0x2f0] sm:$0xf]
  %v334 = vld [vmem:[%s1 + $0x2f4] sm:$0xf]
  %v335 = vld [vmem:[%s1 + $0x2f8] sm:$0xf]
  %v336 = vld [vmem:[%s1 + $0x2fc] sm:$0xf]
  %v337 = vld [vmem:[%s1 + $0x300] sm:$0xf]
  %v338 = vld [vmem:[%s1 + $0x304] sm:$0xf]
  %v339 = vld [vmem:[%s1 + $0x308] sm:$0xf]
  %v340 = vld [vmem:[%s1 + $0x30c] sm:$0xf]
  %v341 = vld [vmem:[%s1 + $0x310] sm:$0xf]
  %v342 = vld [vmem:[%s1 + $0x314] sm:$0xf]
  %v343 = vld [vmem:[%s1 + $0x318] sm:$0xf]
  %v344 = vld [vmem:[%s1 + $0x31c] sm:$0xf]
  %v345 = vld [vmem:[%s1 + $0x320] sm:$0xf]
  %v346 = vld [vmem:[%s1 + $0x324] sm:$0xf]
  %v347 = vld [vmem:[%s1 + $0x328] sm:$0xf]
  %v348 = vld [vmem:[%s1 + $0x32c] sm:$0xf]
  %v349 = vld [vmem:[%s1 + $0x330] sm:$0xf]
  %v350 = vld [vmem:[%s1 + $0x334] sm:$0xf]
  %v351 = vld [vmem:[%s1 + $0x338] sm:$0xf]
  %v352 = vld [vmem:[%s1 + $0x33c] sm:$0xf]
  %v353 = vld [vmem:[%s1 + $0x340] sm:$0xf]
  %v354 = vld [vmem:[%s1 + $0x344] sm:$0xf]
  %v355 = vld [vmem:[%s1 + $0x348] sm:$0xf]
  %v356 = vld [vmem:[%s1 + $0x34c] sm:$0xf]
  %v357 = vld [vmem:[%s1 + $0x350] sm:$0xf]
  %v358 = vld [vmem:[%s1 + $0x354] sm:$0xf]
  %v359 = vld [vmem:[%s1 + $0x358] sm:$0xf]
  %v360 = vld [vmem:[%s1 + $0x35c] sm:$0xf]
  %v361 = vld [vmem:[%s1 + $0x360] sm:$0xf]
  %v362 = vld [vmem:[%s1 + $0x364] sm:$0xf]
  %v363 = vld [vmem:[%s1 + $0x368] sm:$0xf]
  %v364 = vld [vmem:[%s1 + $0x36c] sm:$0xf]
  %v365 = vld [vmem:[%s1 + $0x370] sm:$0xf]
  %v366 = vld [vmem:[%s1 + $0x374] sm:$0xf]
  %v367 = vld [vmem:[%s1 + $0x378] sm:$0xf]
  %v368 = vld [vmem:[%s1 + $0x37c] sm:$0xf]
  %v369 = vld [vmem:[%s1 + $0x380] sm:$0xf]
  %v370 = vld [vmem:[%s1 + $0x384] sm:$0xf]
  %v371 = vld [vmem:[%s1 + $0x388] sm:$0xf]
  %v372 = vld [vmem:[%s1 + $0x38c] sm:$0xf]
  %v373 = vld [vmem:[%s1 + $0x390] sm:$0xf]
  %v374 = vld [vmem:[%s1 + $0x394] sm:$0xf]
  %v375 = vld [vmem:[%s1 + $0x398] sm:$0xf]
  %v376 = vld [vmem:[%s1 + $0x39c] sm:$0xf]
  %v377 = vld [vmem:[%s1 + $0x3a0] sm:$0xf]
  %v378 = vld [vmem:[%s1 + $0x3a4] sm:$0xf]
  %v379 = vld [vmem:[%s1 + $0x3a8] sm:$0xf]
  %v380 = vld [vmem:[%s1 + $0x3ac] sm:$0xf]
  %v381 = vld [vmem:[%s1 + $0x3b0] sm:$0xf]
  %v382 = vld [vmem:[%s1 + $0x3b4] sm:$0xf]
  %v383 = vld [vmem:[%s1 + $0x3b8] sm:$0xf]
  %v384 = vld [vmem:[%s1 + $0x3bc] sm:$0xf]
  %v385 = vld [vmem:[%s1 + $0x3c0] sm:$0xf]
  %v386 = vld [vmem:[%s1 + $0x3c4] sm:$0xf]
  %v387 = vld [vmem:[%s1 + $0x3c8] sm:$0xf]
  %v388 = vld [vmem:[%s1 + $0x3cc] sm:$0xf]
  %v389 = vld [vmem:[%s1 + $0x3d0] sm:$0xf]
  %v390 = vld [vmem:[%s1 + $0x3d4] sm:$0xf]
  %v391 = vld [vmem:[%s1 + $0x3d8] sm:$0xf]
  %v392 = vld [vmem:[%s1 + $0x3dc] sm:$0xf]
  %v393 = vld [vmem:[%s1 + $0x3e0] sm:$0xf]
  %v394 = vld [vmem:[%s1 + $0x3e4] sm:$0xf]
  %v395 = vld [vmem:[%s1 + $0x3e8] sm:$0xf]
  %v396 = vld [vmem:[%s1 + $0x3ec] sm:$0xf]
  %v397 = vld [vmem:[%s1 + $0x3f0] sm:$0xf]
  %v398 = vld [vmem:[%s1 + $0x3f4] sm:$0xf]
  %v399 = vld [vmem:[%s1 + $0x3f8] sm:$0xf]
  %v400 = vld [vmem:[%s1 + $0x3fc] sm:$0xf]
  %v401 = vld [vmem:[#allocation2] sm:$0x1]
  %v403 = vlaneseq
  %v404 = vshrl.u32 %v403, 7
  %v405 = vsub.s32 0, %v404
  %v406 = vrot.slane %v401, %v405
  %v536 = vunpack.c.l.b16 %v17
  %v537 = vunpack.c.h.b16 %v17
  %v538 = vunpack.c.l.b16 %v18
  %v539 = vunpack.c.h.b16 %v18
  %v540 = vunpack.c.l.b16 %v19
  %v541 = vunpack.c.h.b16 %v19
  %v542 = vunpack.c.l.b16 %v20
  %v543 = vunpack.c.h.b16 %v20
  %v544 = vunpack.c.l.b16 %v21
  %v545 = vunpack.c.h.b16 %v21
  %v546 = vunpack.c.l.b16 %v22
  %v547 = vunpack.c.h.b16 %v22
  %v548 = vunpack.c.l.b16 %v23
  %v549 = vunpack.c.h.b16 %v23
  %v550 = vunpack.c.l.b16 %v24
  %v551 = vunpack.c.h.b16 %v24
  %v552 = vunpack.c.l.b16 %v25
  %v553 = vunpack.c.h.b16 %v25
  %v554 = vunpack.c.l.b16 %v26
  %v555 = vunpack.c.h.b16 %v26
  %v556 = vunpack.c.l.b16 %v27
  %v557 = vunpack.c.h.b16 %v27
  %v558 = vunpack.c.l.b16 %v28
  %v559 = vunpack.c.h.b16 %v28
  %v560 = vunpack.c.l.b16 %v29
  %v561 = vunpack.c.h.b16 %v29
  %v562 = vunpack.c.l.b16 %v30
  %v563 = vunpack.c.h.b16 %v30
  %v564 = vunpack.c.l.b16 %v31
  %v565 = vunpack.c.h.b16 %v31
  %v566 = vunpack.c.l.b16 %v32
  %v567 = vunpack.c.h.b16 %v32
  %v568 = vunpack.c.l.b16 %v33
  %v569 = vunpack.c.h.b16 %v33
  %v570 = vunpack.c.l.b16 %v34
  %v571 = vunpack.c.h.b16 %v34
  %v572 = vunpack.c.l.b16 %v35
  %v573 = vunpack.c.h.b16 %v35
  %v574 = vunpack.c.l.b16 %v36
  %v575 = vunpack.c.h.b16 %v36
  %v576 = vunpack.c.l.b16 %v37
  %v577 = vunpack.c.h.b16 %v37
  %v578 = vunpack.c.l.b16 %v38
  %v579 = vunpack.c.h.b16 %v38
  %v580 = vunpack.c.l.b16 %v39
  %v581 = vunpack.c.h.b16 %v39
  %v582 = vunpack.c.l.b16 %v40
  %v583 = vunpack.c.h.b16 %v40
  %v584 = vunpack.c.l.b16 %v41
  %v585 = vunpack.c.h.b16 %v41
  %v586 = vunpack.c.l.b16 %v42
  %v587 = vunpack.c.h.b16 %v42
  %v588 = vunpack.c.l.b16 %v43
  %v589 = vunpack.c.h.b16 %v43
  %v590 = vunpack.c.l.b16 %v44
  %v591 = vunpack.c.h.b16 %v44
  %v592 = vunpack.c.l.b16 %v45
  %v593 = vunpack.c.h.b16 %v45
  %v594 = vunpack.c.l.b16 %v46
  %v595 = vunpack.c.h.b16 %v46
  %v596 = vunpack.c.l.b16 %v47
  %v597 = vunpack.c.h.b16 %v47
  %v598 = vunpack.c.l.b16 %v48
  %v599 = vunpack.c.h.b16 %v48
  %v600 = vunpack.c.l.b16 %v49
  %v601 = vunpack.c.h.b16 %v49
  %v602 = vunpack.c.l.b16 %v50
  %v603 = vunpack.c.h.b16 %v50
  %v604 = vunpack.c.l.b16 %v51
  %v605 = vunpack.c.h.b16 %v51
  %v606 = vunpack.c.l.b16 %v52
  %v607 = vunpack.c.h.b16 %v52
  %v608 = vunpack.c.l.b16 %v53
  %v609 = vunpack.c.h.b16 %v53
  %v610 = vunpack.c.l.b16 %v54
  %v611 = vunpack.c.h.b16 %v54
  %v612 = vunpack.c.l.b16 %v55
  %v613 = vunpack.c.h.b16 %v55
  %v614 = vunpack.c.l.b16 %v56
  %v615 = vunpack.c.h.b16 %v56
  %v616 = vunpack.c.l.b16 %v57
  %v617 = vunpack.c.h.b16 %v57
  %v618 = vunpack.c.l.b16 %v58
  %v619 = vunpack.c.h.b16 %v58
  %v620 = vunpack.c.l.b16 %v59
  %v621 = vunpack.c.h.b16 %v59
  %v622 = vunpack.c.l.b16 %v60
  %v623 = vunpack.c.h.b16 %v60
  %v624 = vunpack.c.l.b16 %v61
  %v625 = vunpack.c.h.b16 %v61
  %v626 = vunpack.c.l.b16 %v62
  %v627 = vunpack.c.h.b16 %v62
  %v628 = vunpack.c.l.b16 %v63
  %v629 = vunpack.c.h.b16 %v63
  %v630 = vunpack.c.l.b16 %v64
  %v631 = vunpack.c.h.b16 %v64
  %v632 = vunpack.c.l.b16 %v65
  %v633 = vunpack.c.h.b16 %v65
  %v634 = vunpack.c.l.b16 %v66
  %v635 = vunpack.c.h.b16 %v66
  %v636 = vunpack.c.l.b16 %v67
  %v637 = vunpack.c.h.b16 %v67
  %v638 = vunpack.c.l.b16 %v68
  %v639 = vunpack.c.h.b16 %v68
  %v640 = vunpack.c.l.b16 %v69
  %v641 = vunpack.c.h.b16 %v69
  %v642 = vunpack.c.l.b16 %v70
  %v643 = vunpack.c.h.b16 %v70
  %v644 = vunpack.c.l.b16 %v71
  %v645 = vunpack.c.h.b16 %v71
  %v646 = vunpack.c.l.b16 %v72
  %v647 = vunpack.c.h.b16 %v72
  %v648 = vunpack.c.l.b16 %v73
  %v649 = vunpack.c.h.b16 %v73
  %v650 = vunpack.c.l.b16 %v74
  %v651 = vunpack.c.h.b16 %v74
  %v652 = vunpack.c.l.b16 %v75
  %v653 = vunpack.c.h.b16 %v75
  %v654 = vunpack.c.l.b16 %v76
  %v655 = vunpack.c.h.b16 %v76
  %v656 = vunpack.c.l.b16 %v77
  %v657 = vunpack.c.h.b16 %v77
  %v658 = vunpack.c.l.b16 %v78
  %v659 = vunpack.c.h.b16 %v78
  %v660 = vunpack.c.l.b16 %v79
  %v661 = vunpack.c.h.b16 %v79
  %v662 = vunpack.c.l.b16 %v80
  %v663 = vunpack.c.h.b16 %v80
  %v664 = vunpack.c.l.b16 %v81
  %v665 = vunpack.c.h.b16 %v81
  %v666 = vunpack.c.l.b16 %v82
  %v667 = vunpack.c.h.b16 %v82
  %v668 = vunpack.c.l.b16 %v83
  %v669 = vunpack.c.h.b16 %v83
  %v670 = vunpack.c.l.b16 %v84
  %v671 = vunpack.c.h.b16 %v84
  %v672 = vunpack.c.l.b16 %v85
  %v673 = vunpack.c.h.b16 %v85
  %v674 = vunpack.c.l.b16 %v86
  %v675 = vunpack.c.h.b16 %v86
  %v676 = vunpack.c.l.b16 %v87
  %v677 = vunpack.c.h.b16 %v87
  %v678 = vunpack.c.l.b16 %v88
  %v679 = vunpack.c.h.b16 %v88
  %v680 = vunpack.c.l.b16 %v89
  %v681 = vunpack.c.h.b16 %v89
  %v682 = vunpack.c.l.b16 %v90
  %v683 = vunpack.c.h.b16 %v90
  %v684 = vunpack.c.l.b16 %v91
  %v685 = vunpack.c.h.b16 %v91
  %v686 = vunpack.c.l.b16 %v92
  %v687 = vunpack.c.h.b16 %v92
  %v688 = vunpack.c.l.b16 %v93
  %v689 = vunpack.c.h.b16 %v93
  %v690 = vunpack.c.l.b16 %v94
  %v691 = vunpack.c.h.b16 %v94
  %v692 = vunpack.c.l.b16 %v95
  %v693 = vunpack.c.h.b16 %v95
  %v694 = vunpack.c.l.b16 %v96
  %v695 = vunpack.c.h.b16 %v96
  %v696 = vunpack.c.l.b16 %v97
  %v697 = vunpack.c.h.b16 %v97
  %v698 = vunpack.c.l.b16 %v98
  %v699 = vunpack.c.h.b16 %v98
  %v700 = vunpack.c.l.b16 %v99
  %v701 = vunpack.c.h.b16 %v99
  %v702 = vunpack.c.l.b16 %v100
  %v703 = vunpack.c.h.b16 %v100
  %v704 = vunpack.c.l.b16 %v101
  %v705 = vunpack.c.h.b16 %v101
  %v706 = vunpack.c.l.b16 %v102
  %v707 = vunpack.c.h.b16 %v102
  %v708 = vunpack.c.l.b16 %v103
  %v709 = vunpack.c.h.b16 %v103
  %v710 = vunpack.c.l.b16 %v104
  %v711 = vunpack.c.h.b16 %v104
  %v712 = vunpack.c.l.b16 %v105
  %v713 = vunpack.c.h.b16 %v105
  %v714 = vunpack.c.l.b16 %v106
  %v715 = vunpack.c.h.b16 %v106
  %v716 = vunpack.c.l.b16 %v107
  %v717 = vunpack.c.h.b16 %v107
  %v718 = vunpack.c.l.b16 %v108
  %v719 = vunpack.c.h.b16 %v108
  %v720 = vunpack.c.l.b16 %v109
  %v721 = vunpack.c.h.b16 %v109
  %v722 = vunpack.c.l.b16 %v110
  %v723 = vunpack.c.h.b16 %v110
  %v724 = vunpack.c.l.b16 %v111
  %v725 = vunpack.c.h.b16 %v111
  %v726 = vunpack.c.l.b16 %v112
  %v727 = vunpack.c.h.b16 %v112
  %v728 = vunpack.c.l.b16 %v113
  %v729 = vunpack.c.h.b16 %v113
  %v730 = vunpack.c.l.b16 %v114
  %v731 = vunpack.c.h.b16 %v114
  %v732 = vunpack.c.l.b16 %v115
  %v733 = vunpack.c.h.b16 %v115
  %v734 = vunpack.c.l.b16 %v116
  %v735 = vunpack.c.h.b16 %v116
  %v736 = vunpack.c.l.b16 %v117
  %v737 = vunpack.c.h.b16 %v117
  %v738 = vunpack.c.l.b16 %v118
  %v739 = vunpack.c.h.b16 %v118
  %v740 = vunpack.c.l.b16 %v119
  %v741 = vunpack.c.h.b16 %v119
  %v742 = vunpack.c.l.b16 %v120
  %v743 = vunpack.c.h.b16 %v120
  %v744 = vunpack.c.l.b16 %v121
  %v745 = vunpack.c.h.b16 %v121
  %v746 = vunpack.c.l.b16 %v122
  %v747 = vunpack.c.h.b16 %v122
  %v748 = vunpack.c.l.b16 %v123
  %v749 = vunpack.c.h.b16 %v123
  %v750 = vunpack.c.l.b16 %v124
  %v751 = vunpack.c.h.b16 %v124
  %v752 = vunpack.c.l.b16 %v125
  %v753 = vunpack.c.h.b16 %v125
  %v754 = vunpack.c.l.b16 %v126
  %v755 = vunpack.c.h.b16 %v126
  %v756 = vunpack.c.l.b16 %v127
  %v757 = vunpack.c.h.b16 %v127
  %v758 = vunpack.c.l.b16 %v128
  %v759 = vunpack.c.h.b16 %v128
  %v760 = vunpack.c.l.b16 %v129
  %v761 = vunpack.c.h.b16 %v129
  %v762 = vunpack.c.l.b16 %v130
  %v763 = vunpack.c.h.b16 %v130
  %v764 = vunpack.c.l.b16 %v131
  %v765 = vunpack.c.h.b16 %v131
  %v766 = vunpack.c.l.b16 %v132
  %v767 = vunpack.c.h.b16 %v132
  %v768 = vunpack.c.l.b16 %v133
  %v769 = vunpack.c.h.b16 %v133
  %v770 = vunpack.c.l.b16 %v134
  %v771 = vunpack.c.h.b16 %v134
  %v772 = vunpack.c.l.b16 %v135
  %v773 = vunpack.c.h.b16 %v135
  %v774 = vunpack.c.l.b16 %v136
  %v775 = vunpack.c.h.b16 %v136
  %v776 = vunpack.c.l.b16 %v137
  %v777 = vunpack.c.h.b16 %v137
  %v778 = vunpack.c.l.b16 %v138
  %v779 = vunpack.c.h.b16 %v138
  %v780 = vunpack.c.l.b16 %v139
  %v781 = vunpack.c.h.b16 %v139
  %v782 = vunpack.c.l.b16 %v140
  %v783 = vunpack.c.h.b16 %v140
  %v784 = vunpack.c.l.b16 %v141
  %v785 = vunpack.c.h.b16 %v141
  %v786 = vunpack.c.l.b16 %v142
  %v787 = vunpack.c.h.b16 %v142
  %v788 = vunpack.c.l.b16 %v143
  %v789 = vunpack.c.h.b16 %v143
  %v790 = vunpack.c.l.b16 %v144
  %v791 = vunpack.c.h.b16 %v144
  %v792 = vpack.c.b16 %v552, %v536
  %v793 = vpack.c.b16 %v553, %v537
  %v794 = vpack.c.b16 %v554, %v538
  %v795 = vpack.c.b16 %v555, %v539
  %v796 = vpack.c.b16 %v556, %v540
  %v797 = vpack.c.b16 %v557, %v541
  %v798 = vpack.c.b16 %v558, %v542
  %v799 = vpack.c.b16 %v559, %v543
  %v800 = vpack.c.b16 %v560, %v544
  %v801 = vpack.c.b16 %v561, %v545
  %v802 = vpack.c.b16 %v562, %v546
  %v803 = vpack.c.b16 %v563, %v547
  %v804 = vpack.c.b16 %v564, %v548
  %v805 = vpack.c.b16 %v565, %v549
  %v806 = vpack.c.b16 %v566, %v550
  %v807 = vpack.c.b16 %v567, %v551
  %v808 = vpack.c.b16 %v584, %v568
  %v809 = vpack.c.b16 %v585, %v569
  %v810 = vpack.c.b16 %v586, %v570
  %v811 = vpack.c.b16 %v587, %v571
  %v812 = vpack.c.b16 %v588, %v572
  %v813 = vpack.c.b16 %v589, %v573
  %v814 = vpack.c.b16 %v590, %v574
  %v815 = vpack.c.b16 %v591, %v575
  %v816 = vpack.c.b16 %v592, %v576
  %v817 = vpack.c.b16 %v593, %v577
  %v818 = vpack.c.b16 %v594, %v578
  %v819 = vpack.c.b16 %v595, %v579
  %v820 = vpack.c.b16 %v596, %v580
  %v821 = vpack.c.b16 %v597, %v581
  %v822 = vpack.c.b16 %v598, %v582
  %v823 = vpack.c.b16 %v599, %v583
  %v824 = vpack.c.b16 %v616, %v600
  %v825 = vpack.c.b16 %v617, %v601
  %v826 = vpack.c.b16 %v618, %v602
  %v827 = vpack.c.b16 %v619, %v603
  %v828 = vpack.c.b16 %v620, %v604
  %v829 = vpack.c.b16 %v621, %v605
  %v830 = vpack.c.b16 %v622, %v606
  %v831 = vpack.c.b16 %v623, %v607
  %v832 = vpack.c.b16 %v624, %v608
  %v833 = vpack.c.b16 %v625, %v609
  %v834 = vpack.c.b16 %v626, %v610
  %v835 = vpack.c.b16 %v627, %v611
  %v836 = vpack.c.b16 %v628, %v612
  %v837 = vpack.c.b16 %v629, %v613
  %v838 = vpack.c.b16 %v630, %v614
  %v839 = vpack.c.b16 %v631, %v615
  %v840 = vpack.c.b16 %v648, %v632
  %v841 = vpack.c.b16 %v649, %v633
  %v842 = vpack.c.b16 %v650, %v634
  %v843 = vpack.c.b16 %v651, %v635
  %v844 = vpack.c.b16 %v652, %v636
  %v845 = vpack.c.b16 %v653, %v637
  %v846 = vpack.c.b16 %v654, %v638
  %v847 = vpack.c.b16 %v655, %v639
  %v848 = vpack.c.b16 %v656, %v640
  %v849 = vpack.c.b16 %v657, %v641
  %v850 = vpack.c.b16 %v658, %v642
  %v851 = vpack.c.b16 %v659, %v643
  %v852 = vpack.c.b16 %v660, %v644
  %v853 = vpack.c.b16 %v661, %v645
  %v854 = vpack.c.b16 %v662, %v646
  %v855 = vpack.c.b16 %v663, %v647
  %v856 = vpack.c.b16 %v680, %v664
  %v857 = vpack.c.b16 %v681, %v665
  %v858 = vpack.c.b16 %v682, %v666
  %v859 = vpack.c.b16 %v683, %v667
  %v860 = vpack.c.b16 %v684, %v668
  %v861 = vpack.c.b16 %v685, %v669
  %v862 = vpack.c.b16 %v686, %v670
  %v863 = vpack.c.b16 %v687, %v671
  %v864 = vpack.c.b16 %v688, %v672
  %v865 = vpack.c.b16 %v689, %v673
  %v866 = vpack.c.b16 %v690, %v674
  %v867 = vpack.c.b16 %v691, %v675
  %v868 = vpack.c.b16 %v692, %v676
  %v869 = vpack.c.b16 %v693, %v677
  %v870 = vpack.c.b16 %v694, %v678
  %v871 = vpack.c.b16 %v695, %v679
  %v872 = vpack.c.b16 %v712, %v696
  %v873 = vpack.c.b16 %v713, %v697
  %v874 = vpack.c.b16 %v714, %v698
  %v875 = vpack.c.b16 %v715, %v699
  %v876 = vpack.c.b16 %v716, %v700
  %v877 = vpack.c.b16 %v717, %v701
  %v878 = vpack.c.b16 %v718, %v702
  %v879 = vpack.c.b16 %v719, %v703
  %v880 = vpack.c.b16 %v720, %v704
  %v881 = vpack.c.b16 %v721, %v705
  %v882 = vpack.c.b16 %v722, %v706
  %v883 = vpack.c.b16 %v723, %v707
  %v884 = vpack.c.b16 %v724, %v708
  %v885 = vpack.c.b16 %v725, %v709
  %v886 = vpack.c.b16 %v726, %v710
  %v887 = vpack.c.b16 %v727, %v711
  %v888 = vpack.c.b16 %v744, %v728
  %v889 = vpack.c.b16 %v745, %v729
  %v890 = vpack.c.b16 %v746, %v730
  %v891 = vpack.c.b16 %v747, %v731
  %v892 = vpack.c.b16 %v748, %v732
  %v893 = vpack.c.b16 %v749, %v733
  %v894 = vpack.c.b16 %v750, %v734
  %v895 = vpack.c.b16 %v751, %v735
  %v896 = vpack.c.b16 %v752, %v736
  %v897 = vpack.c.b16 %v753, %v737
  %v898 = vpack.c.b16 %v754, %v738
  %v899 = vpack.c.b16 %v755, %v739
  %v900 = vpack.c.b16 %v756, %v740
  %v901 = vpack.c.b16 %v757, %v741
  %v902 = vpack.c.b16 %v758, %v742
  %v903 = vpack.c.b16 %v759, %v743
  %v904 = vpack.c.b16 %v776, %v760
  %v905 = vpack.c.b16 %v777, %v761
  %v906 = vpack.c.b16 %v778, %v762
  %v907 = vpack.c.b16 %v779, %v763
  %v908 = vpack.c.b16 %v780, %v764
  %v909 = vpack.c.b16 %v781, %v765
  %v910 = vpack.c.b16 %v782, %v766
  %v911 = vpack.c.b16 %v783, %v767
  %v912 = vpack.c.b16 %v784, %v768
  %v913 = vpack.c.b16 %v785, %v769
  %v914 = vpack.c.b16 %v786, %v770
  %v915 = vpack.c.b16 %v787, %v771
  %v916 = vpack.c.b16 %v788, %v772
  %v917 = vpack.c.b16 %v789, %v773
  %v918 = vpack.c.b16 %v790, %v774
  %v919 = vpack.c.b16 %v791, %v775
  %v1304 = vunpack.c.l.b16 %v145
  %v1305 = vunpack.c.l.b16 %v146
  %v1306 = vunpack.c.l.b16 %v147
  %v1307 = vunpack.c.l.b16 %v148
  %v1308 = vunpack.c.l.b16 %v149
  %v1309 = vunpack.c.l.b16 %v150
  %v1310 = vunpack.c.l.b16 %v151
  %v1311 = vunpack.c.l.b16 %v152
  %v1312 = vunpack.c.l.b16 %v153
  %v1313 = vunpack.c.l.b16 %v154
  %v1314 = vunpack.c.l.b16 %v155
  %v1315 = vunpack.c.l.b16 %v156
  %v1316 = vunpack.c.l.b16 %v157
  %v1317 = vunpack.c.l.b16 %v158
  %v1318 = vunpack.c.l.b16 %v159
  %v1319 = vunpack.c.l.b16 %v160
  %v1320 = vunpack.c.l.b16 %v161
  %v1321 = vunpack.c.l.b16 %v162
  %v1322 = vunpack.c.l.b16 %v163
  %v1323 = vunpack.c.l.b16 %v164
  %v1324 = vunpack.c.l.b16 %v165
  %v1325 = vunpack.c.l.b16 %v166
  %v1326 = vunpack.c.l.b16 %v167
  %v1327 = vunpack.c.l.b16 %v168
  %v1328 = vunpack.c.l.b16 %v169
  %v1329 = vunpack.c.l.b16 %v170
  %v1330 = vunpack.c.l.b16 %v171
  %v1331 = vunpack.c.l.b16 %v172
  %v1332 = vunpack.c.l.b16 %v173
  %v1333 = vunpack.c.l.b16 %v174
  %v1334 = vunpack.c.l.b16 %v175
  %v1335 = vunpack.c.l.b16 %v176
  %v1336 = vunpack.c.l.b16 %v177
  %v1337 = vunpack.c.l.b16 %v178
  %v1338 = vunpack.c.l.b16 %v179
  %v1339 = vunpack.c.l.b16 %v180
  %v1340 = vunpack.c.l.b16 %v181
  %v1341 = vunpack.c.l.b16 %v182
  %v1342 = vunpack.c.l.b16 %v183
  %v1343 = vunpack.c.l.b16 %v184
  %v1344 = vunpack.c.l.b16 %v185
  %v1345 = vunpack.c.l.b16 %v186
  %v1346 = vunpack.c.l.b16 %v187
  %v1347 = vunpack.c.l.b16 %v188
  %v1348 = vunpack.c.l.b16 %v189
  %v1349 = vunpack.c.l.b16 %v190
  %v1350 = vunpack.c.l.b16 %v191
  %v1351 = vunpack.c.l.b16 %v192
  %v1352 = vunpack.c.l.b16 %v193
  %v1353 = vunpack.c.l.b16 %v194
  %v1354 = vunpack.c.l.b16 %v195
  %v1355 = vunpack.c.l.b16 %v196
  %v1356 = vunpack.c.l.b16 %v197
  %v1357 = vunpack.c.l.b16 %v198
  %v1358 = vunpack.c.l.b16 %v199
  %v1359 = vunpack.c.l.b16 %v200
  %v1360 = vunpack.c.l.b16 %v201
  %v1361 = vunpack.c.l.b16 %v202
  %v1362 = vunpack.c.l.b16 %v203
  %v1363 = vunpack.c.l.b16 %v204
  %v1364 = vunpack.c.l.b16 %v205
  %v1365 = vunpack.c.l.b16 %v206
  %v1366 = vunpack.c.l.b16 %v207
  %v1367 = vunpack.c.l.b16 %v208
  %v1368 = vunpack.c.l.b16 %v209
  %v1369 = vunpack.c.l.b16 %v210
  %v1370 = vunpack.c.l.b16 %v211
  %v1371 = vunpack.c.l.b16 %v212
  %v1372 = vunpack.c.l.b16 %v213
  %v1373 = vunpack.c.l.b16 %v214
  %v1374 = vunpack.c.l.b16 %v215
  %v1375 = vunpack.c.l.b16 %v216
  %v1376 = vunpack.c.l.b16 %v217
  %v1377 = vunpack.c.l.b16 %v218
  %v1378 = vunpack.c.l.b16 %v219
  %v1379 = vunpack.c.l.b16 %v220
  %v1380 = vunpack.c.l.b16 %v221
  %v1381 = vunpack.c.l.b16 %v222
  %v1382 = vunpack.c.l.b16 %v223
  %v1383 = vunpack.c.l.b16 %v224
  %v1384 = vunpack.c.l.b16 %v225
  %v1385 = vunpack.c.l.b16 %v226
  %v1386 = vunpack.c.l.b16 %v227
  %v1387 = vunpack.c.l.b16 %v228
  %v1388 = vunpack.c.l.b16 %v229
  %v1389 = vunpack.c.l.b16 %v230
  %v1390 = vunpack.c.l.b16 %v231
  %v1391 = vunpack.c.l.b16 %v232
  %v1392 = vunpack.c.l.b16 %v233
  %v1393 = vunpack.c.l.b16 %v234
  %v1394 = vunpack.c.l.b16 %v235
  %v1395 = vunpack.c.l.b16 %v236
  %v1396 = vunpack.c.l.b16 %v237
  %v1397 = vunpack.c.l.b16 %v238
  %v1398 = vunpack.c.l.b16 %v239
  %v1399 = vunpack.c.l.b16 %v240
  %v1400 = vunpack.c.l.b16 %v241
  %v1401 = vunpack.c.l.b16 %v242
  %v1402 = vunpack.c.l.b16 %v243
  %v1403 = vunpack.c.l.b16 %v244
  %v1404 = vunpack.c.l.b16 %v245
  %v1405 = vunpack.c.l.b16 %v246
  %v1406 = vunpack.c.l.b16 %v247
  %v1407 = vunpack.c.l.b16 %v248
  %v1408 = vunpack.c.l.b16 %v249
  %v1409 = vunpack.c.l.b16 %v250
  %v1410 = vunpack.c.l.b16 %v251
  %v1411 = vunpack.c.l.b16 %v252
  %v1412 = vunpack.c.l.b16 %v253
  %v1413 = vunpack.c.l.b16 %v254
  %v1414 = vunpack.c.l.b16 %v255
  %v1415 = vunpack.c.l.b16 %v256
  %v1416 = vunpack.c.l.b16 %v257
  %v1417 = vunpack.c.l.b16 %v258
  %v1418 = vunpack.c.l.b16 %v259
  %v1419 = vunpack.c.l.b16 %v260
  %v1420 = vunpack.c.l.b16 %v261
  %v1421 = vunpack.c.l.b16 %v262
  %v1422 = vunpack.c.l.b16 %v263
  %v1423 = vunpack.c.l.b16 %v264
  %v1424 = vunpack.c.l.b16 %v265
  %v1425 = vunpack.c.l.b16 %v266
  %v1426 = vunpack.c.l.b16 %v267
  %v1427 = vunpack.c.l.b16 %v268
  %v1428 = vunpack.c.l.b16 %v269
  %v1429 = vunpack.c.l.b16 %v270
  %v1430 = vunpack.c.l.b16 %v271
  %v1431 = vunpack.c.l.b16 %v272
  %v1432 = vunpack.c.l.b16 %v273
  %v1433 = vunpack.c.l.b16 %v274
  %v1434 = vunpack.c.l.b16 %v275
  %v1435 = vunpack.c.l.b16 %v276
  %v1436 = vunpack.c.l.b16 %v277
  %v1437 = vunpack.c.l.b16 %v278
  %v1438 = vunpack.c.l.b16 %v279
  %v1439 = vunpack.c.l.b16 %v280
  %v1440 = vunpack.c.l.b16 %v281
  %v1441 = vunpack.c.l.b16 %v282
  %v1442 = vunpack.c.l.b16 %v283
  %v1443 = vunpack.c.l.b16 %v284
  %v1444 = vunpack.c.l.b16 %v285
  %v1445 = vunpack.c.l.b16 %v286
  %v1446 = vunpack.c.l.b16 %v287
  %v1447 = vunpack.c.l.b16 %v288
  %v1448 = vunpack.c.l.b16 %v289
  %v1449 = vunpack.c.l.b16 %v290
  %v1450 = vunpack.c.l.b16 %v291
  %v1451 = vunpack.c.l.b16 %v292
  %v1452 = vunpack.c.l.b16 %v293
  %v1453 = vunpack.c.l.b16 %v294
  %v1454 = vunpack.c.l.b16 %v295
  %v1455 = vunpack.c.l.b16 %v296
  %v1456 = vunpack.c.l.b16 %v297
  %v1457 = vunpack.c.l.b16 %v298
  %v1458 = vunpack.c.l.b16 %v299
  %v1459 = vunpack.c.l.b16 %v300
  %v1460 = vunpack.c.l.b16 %v301
  %v1461 = vunpack.c.l.b16 %v302
  %v1462 = vunpack.c.l.b16 %v303
  %v1463 = vunpack.c.l.b16 %v304
  %v1464 = vunpack.c.l.b16 %v305
  %v1465 = vunpack.c.l.b16 %v306
  %v1466 = vunpack.c.l.b16 %v307
  %v1467 = vunpack.c.l.b16 %v308
  %v1468 = vunpack.c.l.b16 %v309
  %v1469 = vunpack.c.l.b16 %v310
  %v1470 = vunpack.c.l.b16 %v311
  %v1471 = vunpack.c.l.b16 %v312
  %v1472 = vunpack.c.l.b16 %v313
  %v1473 = vunpack.c.l.b16 %v314
  %v1474 = vunpack.c.l.b16 %v315
  %v1475 = vunpack.c.l.b16 %v316
  %v1476 = vunpack.c.l.b16 %v317
  %v1477 = vunpack.c.l.b16 %v318
  %v1478 = vunpack.c.l.b16 %v319
  %v1479 = vunpack.c.l.b16 %v320
  %v1480 = vunpack.c.l.b16 %v321
  %v1481 = vunpack.c.l.b16 %v322
  %v1482 = vunpack.c.l.b16 %v323
  %v1483 = vunpack.c.l.b16 %v324
  %v1484 = vunpack.c.l.b16 %v325
  %v1485 = vunpack.c.l.b16 %v326
  %v1486 = vunpack.c.l.b16 %v327
  %v1487 = vunpack.c.l.b16 %v328
  %v1488 = vunpack.c.l.b16 %v329
  %v1489 = vunpack.c.l.b16 %v330
  %v1490 = vunpack.c.l.b16 %v331
  %v1491 = vunpack.c.l.b16 %v332
  %v1492 = vunpack.c.l.b16 %v333
  %v1493 = vunpack.c.l.b16 %v334
  %v1494 = vunpack.c.l.b16 %v335
  %v1495 = vunpack.c.l.b16 %v336
  %v1496 = vunpack.c.l.b16 %v337
  %v1497 = vunpack.c.l.b16 %v338
  %v1498 = vunpack.c.l.b16 %v339
  %v1499 = vunpack.c.l.b16 %v340
  %v1500 = vunpack.c.l.b16 %v341
  %v1501 = vunpack.c.l.b16 %v342
  %v1502 = vunpack.c.l.b16 %v343
  %v1503 = vunpack.c.l.b16 %v344
  %v1504 = vunpack.c.l.b16 %v345
  %v1505 = vunpack.c.l.b16 %v346
  %v1506 = vunpack.c.l.b16 %v347
  %v1507 = vunpack.c.l.b16 %v348
  %v1508 = vunpack.c.l.b16 %v349
  %v1509 = vunpack.c.l.b16 %v350
  %v1510 = vunpack.c.l.b16 %v351
  %v1511 = vunpack.c.l.b16 %v352
  %v1512 = vunpack.c.l.b16 %v353
  %v1513 = vunpack.c.l.b16 %v354
  %v1514 = vunpack.c.l.b16 %v355
  %v1515 = vunpack.c.l.b16 %v356
  %v1516 = vunpack.c.l.b16 %v357
  %v1517 = vunpack.c.l.b16 %v358
  %v1518 = vunpack.c.l.b16 %v359
  %v1519 = vunpack.c.l.b16 %v360
  %v1520 = vunpack.c.l.b16 %v361
  %v1521 = vunpack.c.l.b16 %v362
  %v1522 = vunpack.c.l.b16 %v363
  %v1523 = vunpack.c.l.b16 %v364
  %v1524 = vunpack.c.l.b16 %v365
  %v1525 = vunpack.c.l.b16 %v366
  %v1526 = vunpack.c.l.b16 %v367
  %v1527 = vunpack.c.l.b16 %v368
  %v1528 = vunpack.c.l.b16 %v369
  %v1529 = vunpack.c.l.b16 %v370
  %v1530 = vunpack.c.l.b16 %v371
  %v1531 = vunpack.c.l.b16 %v372
  %v1532 = vunpack.c.l.b16 %v373
  %v1533 = vunpack.c.l.b16 %v374
  %v1534 = vunpack.c.l.b16 %v375
  %v1535 = vunpack.c.l.b16 %v376
  %v1536 = vunpack.c.l.b16 %v377
  %v1537 = vunpack.c.l.b16 %v378
  %v1538 = vunpack.c.l.b16 %v379
  %v1539 = vunpack.c.l.b16 %v380
  %v1540 = vunpack.c.l.b16 %v381
  %v1541 = vunpack.c.l.b16 %v382
  %v1542 = vunpack.c.l.b16 %v383
  %v1543 = vunpack.c.l.b16 %v384
  %v1544 = vunpack.c.l.b16 %v385
  %v1545 = vunpack.c.l.b16 %v386
  %v1546 = vunpack.c.l.b16 %v387
  %v1547 = vunpack.c.l.b16 %v388
  %v1548 = vunpack.c.l.b16 %v389
  %v1549 = vunpack.c.l.b16 %v390
  %v1550 = vunpack.c.l.b16 %v391
  %v1551 = vunpack.c.l.b16 %v392
  %v1552 = vunpack.c.l.b16 %v393
  %v1553 = vunpack.c.l.b16 %v394
  %v1554 = vunpack.c.l.b16 %v395
  %v1555 = vunpack.c.l.b16 %v396
  %v1556 = vunpack.c.l.b16 %v397
  %v1557 = vunpack.c.l.b16 %v398
  %v1558 = vunpack.c.l.b16 %v399
  %v1559 = vunpack.c.l.b16 %v400
  %v1560 = vpack.c.b16 %v1305, %v1304
  %v1561 = vpack.c.b16 %v1307, %v1306
  %v1562 = vpack.c.b16 %v1309, %v1308
  %v1563 = vpack.c.b16 %v1311, %v1310
  %v1564 = vpack.c.b16 %v1313, %v1312
  %v1565 = vpack.c.b16 %v1315, %v1314
  %v1566 = vpack.c.b16 %v1317, %v1316
  %v1567 = vpack.c.b16 %v1319, %v1318
  %v1568 = vpack.c.b16 %v1321, %v1320
  %v1569 = vpack.c.b16 %v1323, %v1322
  %v1570 = vpack.c.b16 %v1325, %v1324
  %v1571 = vpack.c.b16 %v1327, %v1326
  %v1572 = vpack.c.b16 %v1329, %v1328
  %v1573 = vpack.c.b16 %v1331, %v1330
  %v1574 = vpack.c.b16 %v1333, %v1332
  %v1575 = vpack.c.b16 %v1335, %v1334
  %v1576 = vpack.c.b16 %v1337, %v1336
  %v1577 = vpack.c.b16 %v1339, %v1338
  %v1578 = vpack.c.b16 %v1341, %v1340
  %v1579 = vpack.c.b16 %v1343, %v1342
  %v1580 = vpack.c.b16 %v1345, %v1344
  %v1581 = vpack.c.b16 %v1347, %v1346
  %v1582 = vpack.c.b16 %v1349, %v1348
  %v1583 = vpack.c.b16 %v1351, %v1350
  %v1584 = vpack.c.b16 %v1353, %v1352
  %v1585 = vpack.c.b16 %v1355, %v1354
  %v1586 = vpack.c.b16 %v1357, %v1356
  %v1587 = vpack.c.b16 %v1359, %v1358
  %v1588 = vpack.c.b16 %v1361, %v1360
  %v1589 = vpack.c.b16 %v1363, %v1362
  %v1590 = vpack.c.b16 %v1365, %v1364
  %v1591 = vpack.c.b16 %v1367, %v1366
  %v1592 = vpack.c.b16 %v1369, %v1368
  %v1593 = vpack.c.b16 %v1371, %v1370
  %v1594 = vpack.c.b16 %v1373, %v1372
  %v1595 = vpack.c.b16 %v1375, %v1374
  %v1596 = vpack.c.b16 %v1377, %v1376
  %v1597 = vpack.c.b16 %v1379, %v1378
  %v1598 = vpack.c.b16 %v1381, %v1380
  %v1599 = vpack.c.b16 %v1383, %v1382
  %v1600 = vpack.c.b16 %v1385, %v1384
  %v1601 = vpack.c.b16 %v1387, %v1386
  %v1602 = vpack.c.b16 %v1389, %v1388
  %v1603 = vpack.c.b16 %v1391, %v1390
  %v1604 = vpack.c.b16 %v1393, %v1392
  %v1605 = vpack.c.b16 %v1395, %v1394
  %v1606 = vpack.c.b16 %v1397, %v1396
  %v1607 = vpack.c.b16 %v1399, %v1398
  %v1608 = vpack.c.b16 %v1401, %v1400
  %v1609 = vpack.c.b16 %v1403, %v1402
  %v1610 = vpack.c.b16 %v1405, %v1404
  %v1611 = vpack.c.b16 %v1407, %v1406
  %v1612 = vpack.c.b16 %v1409, %v1408
  %v1613 = vpack.c.b16 %v1411, %v1410
  %v1614 = vpack.c.b16 %v1413, %v1412
  %v1615 = vpack.c.b16 %v1415, %v1414
  %v1616 = vpack.c.b16 %v1417, %v1416
  %v1617 = vpack.c.b16 %v1419, %v1418
  %v1618 = vpack.c.b16 %v1421, %v1420
  %v1619 = vpack.c.b16 %v1423, %v1422
  %v1620 = vpack.c.b16 %v1425, %v1424
  %v1621 = vpack.c.b16 %v1427, %v1426
  %v1622 = vpack.c.b16 %v1429, %v1428
  %v1623 = vpack.c.b16 %v1431, %v1430
  %v1624 = vpack.c.b16 %v1433, %v1432
  %v1625 = vpack.c.b16 %v1435, %v1434
  %v1626 = vpack.c.b16 %v1437, %v1436
  %v1627 = vpack.c.b16 %v1439, %v1438
  %v1628 = vpack.c.b16 %v1441, %v1440
  %v1629 = vpack.c.b16 %v1443, %v1442
  %v1630 = vpack.c.b16 %v1445, %v1444
  %v1631 = vpack.c.b16 %v1447, %v1446
  %v1632 = vpack.c.b16 %v1449, %v1448
  %v1633 = vpack.c.b16 %v1451, %v1450
  %v1634 = vpack.c.b16 %v1453, %v1452
  %v1635 = vpack.c.b16 %v1455, %v1454
  %v1636 = vpack.c.b16 %v1457, %v1456
  %v1637 = vpack.c.b16 %v1459, %v1458
  %v1638 = vpack.c.b16 %v1461, %v1460
  %v1639 = vpack.c.b16 %v1463, %v1462
  %v1640 = vpack.c.b16 %v1465, %v1464
  %v1641 = vpack.c.b16 %v1467, %v1466
  %v1642 = vpack.c.b16 %v1469, %v1468
  %v1643 = vpack.c.b16 %v1471, %v1470
  %v1644 = vpack.c.b16 %v1473, %v1472
  %v1645 = vpack.c.b16 %v1475, %v1474
  %v1646 = vpack.c.b16 %v1477, %v1476
  %v1647 = vpack.c.b16 %v1479, %v1478
  %v1648 = vpack.c.b16 %v1481, %v1480
  %v1649 = vpack.c.b16 %v1483, %v1482
  %v1650 = vpack.c.b16 %v1485, %v1484
  %v1651 = vpack.c.b16 %v1487, %v1486
  %v1652 = vpack.c.b16 %v1489, %v1488
  %v1653 = vpack.c.b16 %v1491, %v1490
  %v1654 = vpack.c.b16 %v1493, %v1492
  %v1655 = vpack.c.b16 %v1495, %v1494
  %v1656 = vpack.c.b16 %v1497, %v1496
  %v1657 = vpack.c.b16 %v1499, %v1498
  %v1658 = vpack.c.b16 %v1501, %v1500
  %v1659 = vpack.c.b16 %v1503, %v1502
  %v1660 = vpack.c.b16 %v1505, %v1504
  %v1661 = vpack.c.b16 %v1507, %v1506
  %v1662 = vpack.c.b16 %v1509, %v1508
  %v1663 = vpack.c.b16 %v1511, %v1510
  %v1664 = vpack.c.b16 %v1513, %v1512
  %v1665 = vpack.c.b16 %v1515, %v1514
  %v1666 = vpack.c.b16 %v1517, %v1516
  %v1667 = vpack.c.b16 %v1519, %v1518
  %v1668 = vpack.c.b16 %v1521, %v1520
  %v1669 = vpack.c.b16 %v1523, %v1522
  %v1670 = vpack.c.b16 %v1525, %v1524
  %v1671 = vpack.c.b16 %v1527, %v1526
  %v1672 = vpack.c.b16 %v1529, %v1528
  %v1673 = vpack.c.b16 %v1531, %v1530
  %v1674 = vpack.c.b16 %v1533, %v1532
  %v1675 = vpack.c.b16 %v1535, %v1534
  %v1676 = vpack.c.b16 %v1537, %v1536
  %v1677 = vpack.c.b16 %v1539, %v1538
  %v1678 = vpack.c.b16 %v1541, %v1540
  %v1679 = vpack.c.b16 %v1543, %v1542
  %v1680 = vpack.c.b16 %v1545, %v1544
  %v1681 = vpack.c.b16 %v1547, %v1546
  %v1682 = vpack.c.b16 %v1549, %v1548
  %v1683 = vpack.c.b16 %v1551, %v1550
  %v1684 = vpack.c.b16 %v1553, %v1552
  %v1685 = vpack.c.b16 %v1555, %v1554
  %v1686 = vpack.c.b16 %v1557, %v1556
  %v1687 = vpack.c.b16 %v1559, %v1558
  %1816 = vmatprep.subr.bf16.mxu0 0
  %1817 = vmatpush1.bf16.msra.mxu0 %v1567
  %1818 = vmatprep.subr.bf16.mxu0 0
  %1819 = vmatpush1.bf16.msra.mxu0 %v1566
  %1820 = vmatprep.subr.bf16.mxu0 0
  %1821 = vmatpush1.bf16.msra.mxu0 %v1565
  %1822 = vmatprep.subr.bf16.mxu0 0
  %1823 = vmatpush1.bf16.msra.mxu0 %v1564
  %1824 = vmatprep.subr.bf16.mxu0 0
  %1825 = vmatpush1.bf16.msra.mxu0 %v1563
  %1826 = vmatprep.subr.bf16.mxu0 0
  %1827 = vmatpush1.bf16.msra.mxu0 %v1562
  %1828 = vmatprep.subr.bf16.mxu0 0
  %1829 = vmatpush1.bf16.msra.mxu0 %v1561
  %1830 = vmatprep.subr.bf16.mxu0 0
  %1831 = vmatpush1.bf16.msra.mxu0 %v1560
  %1832 = vmatprep.subr.bf16.mxu0 0
  %1833 = vmatpush2.bf16.msra.mxu0 %v1575
  %1834 = vmatprep.subr.bf16.mxu0 0
  %1835 = vmatpush2.bf16.msra.mxu0 %v1574
  %1836 = vmatprep.subr.bf16.mxu0 0
  %1837 = vmatpush2.bf16.msra.mxu0 %v1573
  %1838 = vmatprep.subr.bf16.mxu0 0
  %1839 = vmatpush2.bf16.msra.mxu0 %v1572
  %1840 = vmatprep.subr.bf16.mxu0 0
  %1841 = vmatpush2.bf16.msra.mxu0 %v1571
  %1842 = vmatprep.subr.bf16.mxu0 0
  %1843 = vmatpush2.bf16.msra.mxu0 %v1570
  %1844 = vmatprep.subr.bf16.mxu0 0
  %1845 = vmatpush2.bf16.msra.mxu0 %v1569
  %1846 = vmatprep.subr.bf16.mxu0 0
  %1847 = vmatpush2.bf16.msra.mxu0 %v1568
  %1848 = vmatprep.mubr.bf16.mxu0 %v793
  %1849 = vmatmul.mubr.bf16.gmra.mxu0 %v792
  %v1850 = vpop.f32.mrf.mxu0
  %v1851 = vadd.f32 %v406, %v1850
  %v1852 = vpop.f32.mrf.mxu0
  %v1853 = vpop.f32.mrf.mxu0
  %v1854 = vadd.f32 %v406, %v1853
  %v1855 = vpop.f32.mrf.mxu0
  %1856 = vmatprep.mubr.bf16.mxu0 %v809
  %1857 = vmatmul.mubr.bf16.gmra.mxu0 %v808
  %v1858 = vpop.f32.mrf.mxu0
  %v1859 = vadd.f32 %v406, %v1858
  %v1860 = vpop.f32.mrf.mxu0
  %v1861 = vpop.f32.mrf.mxu0
  %v1862 = vadd.f32 %v406, %v1861
  %v1863 = vpop.f32.mrf.mxu0
  %1864 = vmatprep.mubr.bf16.mxu0 %v825
  %1865 = vmatmul.mubr.bf16.gmra.mxu0 %v824
  %v1866 = vpop.f32.mrf.mxu0
  %v1867 = vadd.f32 %v406, %v1866
  %v1868 = vpop.f32.mrf.mxu0
  %v1869 = vpop.f32.mrf.mxu0
  %v1870 = vadd.f32 %v406, %v1869
  %v1871 = vpop.f32.mrf.mxu0
  %1872 = vmatprep.mubr.bf16.mxu0 %v841
  %1873 = vmatmul.mubr.bf16.gmra.mxu0 %v840
  %v1874 = vpop.f32.mrf.mxu0
  %v1875 = vadd.f32 %v406, %v1874
  %v1876 = vpop.f32.mrf.mxu0
  %v1877 = vpop.f32.mrf.mxu0
  %v1878 = vadd.f32 %v406, %v1877
  %v1879 = vpop.f32.mrf.mxu0
  %1880 = vmatprep.mubr.bf16.mxu0 %v857
  %1881 = vmatmul.mubr.bf16.gmra.mxu0 %v856
  %v1882 = vpop.f32.mrf.mxu0
  %v1883 = vadd.f32 %v406, %v1882
  %v1884 = vpop.f32.mrf.mxu0
  %v1885 = vpop.f32.mrf.mxu0
  %v1886 = vadd.f32 %v406, %v1885
  %v1887 = vpop.f32.mrf.mxu0
  %1888 = vmatprep.mubr.bf16.mxu0 %v873
  %1889 = vmatmul.mubr.bf16.gmra.mxu0 %v872
  %v1890 = vpop.f32.mrf.mxu0
  %v1891 = vadd.f32 %v406, %v1890
  %v1892 = vpop.f32.mrf.mxu0
  %v1893 = vpop.f32.mrf.mxu0
  %v1894 = vadd.f32 %v406, %v1893
  %v1895 = vpop.f32.mrf.mxu0
  %1896 = vmatprep.mubr.bf16.mxu0 %v889
  %1897 = vmatmul.mubr.bf16.gmra.mxu0 %v888
  %v1898 = vpop.f32.mrf.mxu0
  %v1899 = vadd.f32 %v406, %v1898
  %v1900 = vpop.f32.mrf.mxu0
  %v1901 = vpop.f32.mrf.mxu0
  %v1902 = vadd.f32 %v406, %v1901
  %v1903 = vpop.f32.mrf.mxu0
  %1904 = vmatprep.mubr.bf16.mxu0 %v905
  %1905 = vmatmul.mubr.bf16.gmra.mxu0 %v904
  %v1906 = vpop.f32.mrf.mxu0
  %v1907 = vadd.f32 %v406, %v1906
  %v1908 = vpop.f32.mrf.mxu0
  %v1909 = vpop.f32.mrf.mxu0
  %v1910 = vadd.f32 %v406, %v1909
  %v1911 = vpop.f32.mrf.mxu0
  %1912 = vdwg.mxu0
  %1913 = vmatprep.subr.bf16.mxu0 0
  %1914 = vmatpush1.bf16.msra.mxu0 %v1583
  %1915 = vmatprep.subr.bf16.mxu0 0
  %1916 = vmatpush1.bf16.msra.mxu0 %v1582
  %1917 = vmatprep.subr.bf16.mxu0 0
  %1918 = vmatpush1.bf16.msra.mxu0 %v1581
  %1919 = vmatprep.subr.bf16.mxu0 0
  %1920 = vmatpush1.bf16.msra.mxu0 %v1580
  %1921 = vmatprep.subr.bf16.mxu0 0
  %1922 = vmatpush1.bf16.msra.mxu0 %v1579
  %1923 = vmatprep.subr.bf16.mxu0 0
  %1924 = vmatpush1.bf16.msra.mxu0 %v1578
  %1925 = vmatprep.subr.bf16.mxu0 0
  %1926 = vmatpush1.bf16.msra.mxu0 %v1577
  %1927 = vmatprep.subr.bf16.mxu0 0
  %1928 = vmatpush1.bf16.msra.mxu0 %v1576
  %1929 = vmatprep.subr.bf16.mxu0 0
  %1930 = vmatpush2.bf16.msra.mxu0 %v1591
  %1931 = vmatprep.subr.bf16.mxu0 0
  %1932 = vmatpush2.bf16.msra.mxu0 %v1590
  %1933 = vmatprep.subr.bf16.mxu0 0
  %1934 = vmatpush2.bf16.msra.mxu0 %v1589
  %1935 = vmatprep.subr.bf16.mxu0 0
  %1936 = vmatpush2.bf16.msra.mxu0 %v1588
  %1937 = vmatprep.subr.bf16.mxu0 0
  %1938 = vmatpush2.bf16.msra.mxu0 %v1587
  %1939 = vmatprep.subr.bf16.mxu0 0
  %1940 = vmatpush2.bf16.msra.mxu0 %v1586
  %1941 = vmatprep.subr.bf16.mxu0 0
  %1942 = vmatpush2.bf16.msra.mxu0 %v1585
  %1943 = vmatprep.subr.bf16.mxu0 0
  %1944 = vmatpush2.bf16.msra.mxu0 %v1584
  %1945 = vmatprep.mubr.bf16.mxu0 %v795
  %1946 = vmatmul.mubr.bf16.gmra.mxu0 %v794
  %v1947 = vpop.f32.mrf.mxu0
  %v1948 = vadd.f32 %v1851, %v1947
  %v1949 = vpop.f32.mrf.mxu0
  %v1950 = vpop.f32.mrf.mxu0
  %v1951 = vadd.f32 %v1854, %v1950
  %v1952 = vpop.f32.mrf.mxu0
  %1953 = vmatprep.mubr.bf16.mxu0 %v811
  %1954 = vmatmul.mubr.bf16.gmra.mxu0 %v810
  %v1955 = vpop.f32.mrf.mxu0
  %v1956 = vadd.f32 %v1859, %v1955
  %v1957 = vpop.f32.mrf.mxu0
  %v1958 = vpop.f32.mrf.mxu0
  %v1959 = vadd.f32 %v1862, %v1958
  %v1960 = vpop.f32.mrf.mxu0
  %1961 = vmatprep.mubr.bf16.mxu0 %v827
  %1962 = vmatmul.mubr.bf16.gmra.mxu0 %v826
  %v1963 = vpop.f32.mrf.mxu0
  %v1964 = vadd.f32 %v1867, %v1963
  %v1965 = vpop.f32.mrf.mxu0
  %v1966 = vpop.f32.mrf.mxu0
  %v1967 = vadd.f32 %v1870, %v1966
  %v1968 = vpop.f32.mrf.mxu0
  %1969 = vmatprep.mubr.bf16.mxu0 %v843
  %1970 = vmatmul.mubr.bf16.gmra.mxu0 %v842
  %v1971 = vpop.f32.mrf.mxu0
  %v1972 = vadd.f32 %v1875, %v1971
  %v1973 = vpop.f32.mrf.mxu0
  %v1974 = vpop.f32.mrf.mxu0
  %v1975 = vadd.f32 %v1878, %v1974
  %v1976 = vpop.f32.mrf.mxu0
  %1977 = vmatprep.mubr.bf16.mxu0 %v859
  %1978 = vmatmul.mubr.bf16.gmra.mxu0 %v858
  %v1979 = vpop.f32.mrf.mxu0
  %v1980 = vadd.f32 %v1883, %v1979
  %v1981 = vpop.f32.mrf.mxu0
  %v1982 = vpop.f32.mrf.mxu0
  %v1983 = vadd.f32 %v1886, %v1982
  %v1984 = vpop.f32.mrf.mxu0
  %1985 = vmatprep.mubr.bf16.mxu0 %v875
  %1986 = vmatmul.mubr.bf16.gmra.mxu0 %v874
  %v1987 = vpop.f32.mrf.mxu0
  %v1988 = vadd.f32 %v1891, %v1987
  %v1989 = vpop.f32.mrf.mxu0
  %v1990 = vpop.f32.mrf.mxu0
  %v1991 = vadd.f32 %v1894, %v1990
  %v1992 = vpop.f32.mrf.mxu0
  %1993 = vmatprep.mubr.bf16.mxu0 %v891
  %1994 = vmatmul.mubr.bf16.gmra.mxu0 %v890
  %v1995 = vpop.f32.mrf.mxu0
  %v1996 = vadd.f32 %v1899, %v1995
  %v1997 = vpop.f32.mrf.mxu0
  %v1998 = vpop.f32.mrf.mxu0
  %v1999 = vadd.f32 %v1902, %v1998
  %v2000 = vpop.f32.mrf.mxu0
  %2001 = vmatprep.mubr.bf16.mxu0 %v907
  %2002 = vmatmul.mubr.bf16.gmra.mxu0 %v906
  %v2003 = vpop.f32.mrf.mxu0
  %v2004 = vadd.f32 %v1907, %v2003
  %v2005 = vpop.f32.mrf.mxu0
  %v2006 = vpop.f32.mrf.mxu0
  %v2007 = vadd.f32 %v1910, %v2006
  %v2008 = vpop.f32.mrf.mxu0
  %2009 = vdwg.mxu0
  %2010 = vmatprep.subr.bf16.mxu0 0
  %2011 = vmatpush1.bf16.msra.mxu0 %v1599
  %2012 = vmatprep.subr.bf16.mxu0 0
  %2013 = vmatpush1.bf16.msra.mxu0 %v1598
  %2014 = vmatprep.subr.bf16.mxu0 0
  %2015 = vmatpush1.bf16.msra.mxu0 %v1597
  %2016 = vmatprep.subr.bf16.mxu0 0
  %2017 = vmatpush1.bf16.msra.mxu0 %v1596
  %2018 = vmatprep.subr.bf16.mxu0 0
  %2019 = vmatpush1.bf16.msra.mxu0 %v1595
  %2020 = vmatprep.subr.bf16.mxu0 0
  %2021 = vmatpush1.bf16.msra.mxu0 %v1594
  %2022 = vmatprep.subr.bf16.mxu0 0
  %2023 = vmatpush1.bf16.msra.mxu0 %v1593
  %2024 = vmatprep.subr.bf16.mxu0 0
  %2025 = vmatpush1.bf16.msra.mxu0 %v1592
  %2026 = vmatprep.subr.bf16.mxu0 0
  %2027 = vmatpush2.bf16.msra.mxu0 %v1607
  %2028 = vmatprep.subr.bf16.mxu0 0
  %2029 = vmatpush2.bf16.msra.mxu0 %v1606
  %2030 = vmatprep.subr.bf16.mxu0 0
  %2031 = vmatpush2.bf16.msra.mxu0 %v1605
  %2032 = vmatprep.subr.bf16.mxu0 0
  %2033 = vmatpush2.bf16.msra.mxu0 %v1604
  %2034 = vmatprep.subr.bf16.mxu0 0
  %2035 = vmatpush2.bf16.msra.mxu0 %v1603
  %2036 = vmatprep.subr.bf16.mxu0 0
  %2037 = vmatpush2.bf16.msra.mxu0 %v1602
  %2038 = vmatprep.subr.bf16.mxu0 0
  %2039 = vmatpush2.bf16.msra.mxu0 %v1601
  %2040 = vmatprep.subr.bf16.mxu0 0
  %2041 = vmatpush2.bf16.msra.mxu0 %v1600
  %2042 = vmatprep.mubr.bf16.mxu0 %v797
  %2043 = vmatmul.mubr.bf16.gmra.mxu0 %v796
  %v2044 = vpop.f32.mrf.mxu0
  %v2045 = vadd.f32 %v1948, %v2044
  %v2046 = vpop.f32.mrf.mxu0
  %v2047 = vpop.f32.mrf.mxu0
  %v2048 = vadd.f32 %v1951, %v2047
  %v2049 = vpop.f32.mrf.mxu0
  %2050 = vmatprep.mubr.bf16.mxu0 %v813
  %2051 = vmatmul.mubr.bf16.gmra.mxu0 %v812
  %v2052 = vpop.f32.mrf.mxu0
  %v2053 = vadd.f32 %v1956, %v2052
  %v2054 = vpop.f32.mrf.mxu0
  %v2055 = vpop.f32.mrf.mxu0
  %v2056 = vadd.f32 %v1959, %v2055
  %v2057 = vpop.f32.mrf.mxu0
  %2058 = vmatprep.mubr.bf16.mxu0 %v829
  %2059 = vmatmul.mubr.bf16.gmra.mxu0 %v828
  %v2060 = vpop.f32.mrf.mxu0
  %v2061 = vadd.f32 %v1964, %v2060
  %v2062 = vpop.f32.mrf.mxu0
  %v2063 = vpop.f32.mrf.mxu0
  %v2064 = vadd.f32 %v1967, %v2063
  %v2065 = vpop.f32.mrf.mxu0
  %2066 = vmatprep.mubr.bf16.mxu0 %v845
  %2067 = vmatmul.mubr.bf16.gmra.mxu0 %v844
  %v2068 = vpop.f32.mrf.mxu0
  %v2069 = vadd.f32 %v1972, %v2068
  %v2070 = vpop.f32.mrf.mxu0
  %v2071 = vpop.f32.mrf.mxu0
  %v2072 = vadd.f32 %v1975, %v2071
  %v2073 = vpop.f32.mrf.mxu0
  %2074 = vmatprep.mubr.bf16.mxu0 %v861
  %2075 = vmatmul.mubr.bf16.gmra.mxu0 %v860
  %v2076 = vpop.f32.mrf.mxu0
  %v2077 = vadd.f32 %v1980, %v2076
  %v2078 = vpop.f32.mrf.mxu0
  %v2079 = vpop.f32.mrf.mxu0
  %v2080 = vadd.f32 %v1983, %v2079
  %v2081 = vpop.f32.mrf.mxu0
  %2082 = vmatprep.mubr.bf16.mxu0 %v877
  %2083 = vmatmul.mubr.bf16.gmra.mxu0 %v876
  %v2084 = vpop.f32.mrf.mxu0
  %v2085 = vadd.f32 %v1988, %v2084
  %v2086 = vpop.f32.mrf.mxu0
  %v2087 = vpop.f32.mrf.mxu0
  %v2088 = vadd.f32 %v1991, %v2087
  %v2089 = vpop.f32.mrf.mxu0
  %2090 = vmatprep.mubr.bf16.mxu0 %v893
  %2091 = vmatmul.mubr.bf16.gmra.mxu0 %v892
  %v2092 = vpop.f32.mrf.mxu0
  %v2093 = vadd.f32 %v1996, %v2092
  %v2094 = vpop.f32.mrf.mxu0
  %v2095 = vpop.f32.mrf.mxu0
  %v2096 = vadd.f32 %v1999, %v2095
  %v2097 = vpop.f32.mrf.mxu0
  %2098 = vmatprep.mubr.bf16.mxu0 %v909
  %2099 = vmatmul.mubr.bf16.gmra.mxu0 %v908
  %v2100 = vpop.f32.mrf.mxu0
  %v2101 = vadd.f32 %v2004, %v2100
  %v2102 = vpop.f32.mrf.mxu0
  %v2103 = vpop.f32.mrf.mxu0
  %v2104 = vadd.f32 %v2007, %v2103
  %v2105 = vpop.f32.mrf.mxu0
  %2106 = vdwg.mxu0
  %2107 = vmatprep.subr.bf16.mxu0 0
  %2108 = vmatpush1.bf16.msra.mxu0 %v1615
  %2109 = vmatprep.subr.bf16.mxu0 0
  %2110 = vmatpush1.bf16.msra.mxu0 %v1614
  %2111 = vmatprep.subr.bf16.mxu0 0
  %2112 = vmatpush1.bf16.msra.mxu0 %v1613
  %2113 = vmatprep.subr.bf16.mxu0 0
  %2114 = vmatpush1.bf16.msra.mxu0 %v1612
  %2115 = vmatprep.subr.bf16.mxu0 0
  %2116 = vmatpush1.bf16.msra.mxu0 %v1611
  %2117 = vmatprep.subr.bf16.mxu0 0
  %2118 = vmatpush1.bf16.msra.mxu0 %v1610
  %2119 = vmatprep.subr.bf16.mxu0 0
  %2120 = vmatpush1.bf16.msra.mxu0 %v1609
  %2121 = vmatprep.subr.bf16.mxu0 0
  %2122 = vmatpush1.bf16.msra.mxu0 %v1608
  %2123 = vmatprep.subr.bf16.mxu0 0
  %2124 = vmatpush2.bf16.msra.mxu0 %v1623
  %2125 = vmatprep.subr.bf16.mxu0 0
  %2126 = vmatpush2.bf16.msra.mxu0 %v1622
  %2127 = vmatprep.subr.bf16.mxu0 0
  %2128 = vmatpush2.bf16.msra.mxu0 %v1621
  %2129 = vmatprep.subr.bf16.mxu0 0
  %2130 = vmatpush2.bf16.msra.mxu0 %v1620
  %2131 = vmatprep.subr.bf16.mxu0 0
  %2132 = vmatpush2.bf16.msra.mxu0 %v1619
  %2133 = vmatprep.subr.bf16.mxu0 0
  %2134 = vmatpush2.bf16.msra.mxu0 %v1618
  %2135 = vmatprep.subr.bf16.mxu0 0
  %2136 = vmatpush2.bf16.msra.mxu0 %v1617
  %2137 = vmatprep.subr.bf16.mxu0 0
  %2138 = vmatpush2.bf16.msra.mxu0 %v1616
  %2139 = vmatprep.mubr.bf16.mxu0 %v799
  %2140 = vmatmul.mubr.bf16.gmra.mxu0 %v798
  %v2141 = vpop.f32.mrf.mxu0
  %v2142 = vadd.f32 %v2045, %v2141
  %v2143 = vpop.f32.mrf.mxu0
  %v2144 = vpop.f32.mrf.mxu0
  %v2145 = vadd.f32 %v2048, %v2144
  %v2146 = vpop.f32.mrf.mxu0
  %2147 = vmatprep.mubr.bf16.mxu0 %v815
  %2148 = vmatmul.mubr.bf16.gmra.mxu0 %v814
  %v2149 = vpop.f32.mrf.mxu0
  %v2150 = vadd.f32 %v2053, %v2149
  %v2151 = vpop.f32.mrf.mxu0
  %v2152 = vpop.f32.mrf.mxu0
  %v2153 = vadd.f32 %v2056, %v2152
  %v2154 = vpop.f32.mrf.mxu0
  %2155 = vmatprep.mubr.bf16.mxu0 %v831
  %2156 = vmatmul.mubr.bf16.gmra.mxu0 %v830
  %v2157 = vpop.f32.mrf.mxu0
  %v2158 = vadd.f32 %v2061, %v2157
  %v2159 = vpop.f32.mrf.mxu0
  %v2160 = vpop.f32.mrf.mxu0
  %v2161 = vadd.f32 %v2064, %v2160
  %v2162 = vpop.f32.mrf.mxu0
  %2163 = vmatprep.mubr.bf16.mxu0 %v847
  %2164 = vmatmul.mubr.bf16.gmra.mxu0 %v846
  %v2165 = vpop.f32.mrf.mxu0
  %v2166 = vadd.f32 %v2069, %v2165
  %v2167 = vpop.f32.mrf.mxu0
  %v2168 = vpop.f32.mrf.mxu0
  %v2169 = vadd.f32 %v2072, %v2168
  %v2170 = vpop.f32.mrf.mxu0
  %2171 = vmatprep.mubr.bf16.mxu0 %v863
  %2172 = vmatmul.mubr.bf16.gmra.mxu0 %v862
  %v2173 = vpop.f32.mrf.mxu0
  %v2174 = vadd.f32 %v2077, %v2173
  %v2175 = vpop.f32.mrf.mxu0
  %v2176 = vpop.f32.mrf.mxu0
  %v2177 = vadd.f32 %v2080, %v2176
  %v2178 = vpop.f32.mrf.mxu0
  %2179 = vmatprep.mubr.bf16.mxu0 %v879
  %2180 = vmatmul.mubr.bf16.gmra.mxu0 %v878
  %v2181 = vpop.f32.mrf.mxu0
  %v2182 = vadd.f32 %v2085, %v2181
  %v2183 = vpop.f32.mrf.mxu0
  %v2184 = vpop.f32.mrf.mxu0
  %v2185 = vadd.f32 %v2088, %v2184
  %v2186 = vpop.f32.mrf.mxu0
  %2187 = vmatprep.mubr.bf16.mxu0 %v895
  %2188 = vmatmul.mubr.bf16.gmra.mxu0 %v894
  %v2189 = vpop.f32.mrf.mxu0
  %v2190 = vadd.f32 %v2093, %v2189
  %v2191 = vpop.f32.mrf.mxu0
  %v2192 = vpop.f32.mrf.mxu0
  %v2193 = vadd.f32 %v2096, %v2192
  %v2194 = vpop.f32.mrf.mxu0
  %2195 = vmatprep.mubr.bf16.mxu0 %v911
  %2196 = vmatmul.mubr.bf16.gmra.mxu0 %v910
  %v2197 = vpop.f32.mrf.mxu0
  %v2198 = vadd.f32 %v2101, %v2197
  %v2199 = vpop.f32.mrf.mxu0
  %v2200 = vpop.f32.mrf.mxu0
  %v2201 = vadd.f32 %v2104, %v2200
  %v2202 = vpop.f32.mrf.mxu0
  %2203 = vdwg.mxu0
  %2204 = vmatprep.subr.bf16.mxu0 0
  %2205 = vmatpush1.bf16.msra.mxu0 %v1631
  %2206 = vmatprep.subr.bf16.mxu0 0
  %2207 = vmatpush1.bf16.msra.mxu0 %v1630
  %2208 = vmatprep.subr.bf16.mxu0 0
  %2209 = vmatpush1.bf16.msra.mxu0 %v1629
  %2210 = vmatprep.subr.bf16.mxu0 0
  %2211 = vmatpush1.bf16.msra.mxu0 %v1628
  %2212 = vmatprep.subr.bf16.mxu0 0
  %2213 = vmatpush1.bf16.msra.mxu0 %v1627
  %2214 = vmatprep.subr.bf16.mxu0 0
  %2215 = vmatpush1.bf16.msra.mxu0 %v1626
  %2216 = vmatprep.subr.bf16.mxu0 0
  %2217 = vmatpush1.bf16.msra.mxu0 %v1625
  %2218 = vmatprep.subr.bf16.mxu0 0
  %2219 = vmatpush1.bf16.msra.mxu0 %v1624
  %2220 = vmatprep.subr.bf16.mxu0 0
  %2221 = vmatpush2.bf16.msra.mxu0 %v1639
  %2222 = vmatprep.subr.bf16.mxu0 0
  %2223 = vmatpush2.bf16.msra.mxu0 %v1638
  %2224 = vmatprep.subr.bf16.mxu0 0
  %2225 = vmatpush2.bf16.msra.mxu0 %v1637
  %2226 = vmatprep.subr.bf16.mxu0 0
  %2227 = vmatpush2.bf16.msra.mxu0 %v1636
  %2228 = vmatprep.subr.bf16.mxu0 0
  %2229 = vmatpush2.bf16.msra.mxu0 %v1635
  %2230 = vmatprep.subr.bf16.mxu0 0
  %2231 = vmatpush2.bf16.msra.mxu0 %v1634
  %2232 = vmatprep.subr.bf16.mxu0 0
  %2233 = vmatpush2.bf16.msra.mxu0 %v1633
  %2234 = vmatprep.subr.bf16.mxu0 0
  %2235 = vmatpush2.bf16.msra.mxu0 %v1632
  %2236 = vmatprep.mubr.bf16.mxu0 %v801
  %2237 = vmatmul.mubr.bf16.gmra.mxu0 %v800
  %v2238 = vpop.f32.mrf.mxu0
  %v2239 = vadd.f32 %v2142, %v2238
  %v2240 = vpop.f32.mrf.mxu0
  %v2241 = vpop.f32.mrf.mxu0
  %v2242 = vadd.f32 %v2145, %v2241
  %v2243 = vpop.f32.mrf.mxu0
  %2244 = vmatprep.mubr.bf16.mxu0 %v817
  %2245 = vmatmul.mubr.bf16.gmra.mxu0 %v816
  %v2246 = vpop.f32.mrf.mxu0
  %v2247 = vadd.f32 %v2150, %v2246
  %v2248 = vpop.f32.mrf.mxu0
  %v2249 = vpop.f32.mrf.mxu0
  %v2250 = vadd.f32 %v2153, %v2249
  %v2251 = vpop.f32.mrf.mxu0
  %2252 = vmatprep.mubr.bf16.mxu0 %v833
  %2253 = vmatmul.mubr.bf16.gmra.mxu0 %v832
  %v2254 = vpop.f32.mrf.mxu0
  %v2255 = vadd.f32 %v2158, %v2254
  %v2256 = vpop.f32.mrf.mxu0
  %v2257 = vpop.f32.mrf.mxu0
  %v2258 = vadd.f32 %v2161, %v2257
  %v2259 = vpop.f32.mrf.mxu0
  %2260 = vmatprep.mubr.bf16.mxu0 %v849
  %2261 = vmatmul.mubr.bf16.gmra.mxu0 %v848
  %v2262 = vpop.f32.mrf.mxu0
  %v2263 = vadd.f32 %v2166, %v2262
  %v2264 = vpop.f32.mrf.mxu0
  %v2265 = vpop.f32.mrf.mxu0
  %v2266 = vadd.f32 %v2169, %v2265
  %v2267 = vpop.f32.mrf.mxu0
  %2268 = vmatprep.mubr.bf16.mxu0 %v865
  %2269 = vmatmul.mubr.bf16.gmra.mxu0 %v864
  %v2270 = vpop.f32.mrf.mxu0
  %v2271 = vadd.f32 %v2174, %v2270
  %v2272 = vpop.f32.mrf.mxu0
  %v2273 = vpop.f32.mrf.mxu0
  %v2274 = vadd.f32 %v2177, %v2273
  %v2275 = vpop.f32.mrf.mxu0
  %2276 = vmatprep.mubr.bf16.mxu0 %v881
  %2277 = vmatmul.mubr.bf16.gmra.mxu0 %v880
  %v2278 = vpop.f32.mrf.mxu0
  %v2279 = vadd.f32 %v2182, %v2278
  %v2280 = vpop.f32.mrf.mxu0
  %v2281 = vpop.f32.mrf.mxu0
  %v2282 = vadd.f32 %v2185, %v2281
  %v2283 = vpop.f32.mrf.mxu0
  %2284 = vmatprep.mubr.bf16.mxu0 %v897
  %2285 = vmatmul.mubr.bf16.gmra.mxu0 %v896
  %v2286 = vpop.f32.mrf.mxu0
  %v2287 = vadd.f32 %v2190, %v2286
  %v2288 = vpop.f32.mrf.mxu0
  %v2289 = vpop.f32.mrf.mxu0
  %v2290 = vadd.f32 %v2193, %v2289
  %v2291 = vpop.f32.mrf.mxu0
  %2292 = vmatprep.mubr.bf16.mxu0 %v913
  %2293 = vmatmul.mubr.bf16.gmra.mxu0 %v912
  %v2294 = vpop.f32.mrf.mxu0
  %v2295 = vadd.f32 %v2198, %v2294
  %v2296 = vpop.f32.mrf.mxu0
  %v2297 = vpop.f32.mrf.mxu0
  %v2298 = vadd.f32 %v2201, %v2297
  %v2299 = vpop.f32.mrf.mxu0
  %2300 = vdwg.mxu0
  %2301 = vmatprep.subr.bf16.mxu0 0
  %2302 = vmatpush1.bf16.msra.mxu0 %v1647
  %2303 = vmatprep.subr.bf16.mxu0 0
  %2304 = vmatpush1.bf16.msra.mxu0 %v1646
  %2305 = vmatprep.subr.bf16.mxu0 0
  %2306 = vmatpush1.bf16.msra.mxu0 %v1645
  %2307 = vmatprep.subr.bf16.mxu0 0
  %2308 = vmatpush1.bf16.msra.mxu0 %v1644
  %2309 = vmatprep.subr.bf16.mxu0 0
  %2310 = vmatpush1.bf16.msra.mxu0 %v1643
  %2311 = vmatprep.subr.bf16.mxu0 0
  %2312 = vmatpush1.bf16.msra.mxu0 %v1642
  %2313 = vmatprep.subr.bf16.mxu0 0
  %2314 = vmatpush1.bf16.msra.mxu0 %v1641
  %2315 = vmatprep.subr.bf16.mxu0 0
  %2316 = vmatpush1.bf16.msra.mxu0 %v1640
  %2317 = vmatprep.subr.bf16.mxu0 0
  %2318 = vmatpush2.bf16.msra.mxu0 %v1655
  %2319 = vmatprep.subr.bf16.mxu0 0
  %2320 = vmatpush2.bf16.msra.mxu0 %v1654
  %2321 = vmatprep.subr.bf16.mxu0 0
  %2322 = vmatpush2.bf16.msra.mxu0 %v1653
  %2323 = vmatprep.subr.bf16.mxu0 0
  %2324 = vmatpush2.bf16.msra.mxu0 %v1652
  %2325 = vmatprep.subr.bf16.mxu0 0
  %2326 = vmatpush2.bf16.msra.mxu0 %v1651
  %2327 = vmatprep.subr.bf16.mxu0 0
  %2328 = vmatpush2.bf16.msra.mxu0 %v1650
  %2329 = vmatprep.subr.bf16.mxu0 0
  %2330 = vmatpush2.bf16.msra.mxu0 %v1649
  %2331 = vmatprep.subr.bf16.mxu0 0
  %2332 = vmatpush2.bf16.msra.mxu0 %v1648
  %2333 = vmatprep.mubr.bf16.mxu0 %v803
  %2334 = vmatmul.mubr.bf16.gmra.mxu0 %v802
  %v2335 = vpop.f32.mrf.mxu0
  %v2336 = vadd.f32 %v2239, %v2335
  %v2337 = vpop.f32.mrf.mxu0
  %v2338 = vpop.f32.mrf.mxu0
  %v2339 = vadd.f32 %v2242, %v2338
  %v2340 = vpop.f32.mrf.mxu0
  %2341 = vmatprep.mubr.bf16.mxu0 %v819
  %2342 = vmatmul.mubr.bf16.gmra.mxu0 %v818
  %v2343 = vpop.f32.mrf.mxu0
  %v2344 = vadd.f32 %v2247, %v2343
  %v2345 = vpop.f32.mrf.mxu0
  %v2346 = vpop.f32.mrf.mxu0
  %v2347 = vadd.f32 %v2250, %v2346
  %v2348 = vpop.f32.mrf.mxu0
  %2349 = vmatprep.mubr.bf16.mxu0 %v835
  %2350 = vmatmul.mubr.bf16.gmra.mxu0 %v834
  %v2351 = vpop.f32.mrf.mxu0
  %v2352 = vadd.f32 %v2255, %v2351
  %v2353 = vpop.f32.mrf.mxu0
  %v2354 = vpop.f32.mrf.mxu0
  %v2355 = vadd.f32 %v2258, %v2354
  %v2356 = vpop.f32.mrf.mxu0
  %2357 = vmatprep.mubr.bf16.mxu0 %v851
  %2358 = vmatmul.mubr.bf16.gmra.mxu0 %v850
  %v2359 = vpop.f32.mrf.mxu0
  %v2360 = vadd.f32 %v2263, %v2359
  %v2361 = vpop.f32.mrf.mxu0
  %v2362 = vpop.f32.mrf.mxu0
  %v2363 = vadd.f32 %v2266, %v2362
  %v2364 = vpop.f32.mrf.mxu0
  %2365 = vmatprep.mubr.bf16.mxu0 %v867
  %2366 = vmatmul.mubr.bf16.gmra.mxu0 %v866
  %v2367 = vpop.f32.mrf.mxu0
  %v2368 = vadd.f32 %v2271, %v2367
  %v2369 = vpop.f32.mrf.mxu0
  %v2370 = vpop.f32.mrf.mxu0
  %v2371 = vadd.f32 %v2274, %v2370
  %v2372 = vpop.f32.mrf.mxu0
  %2373 = vmatprep.mubr.bf16.mxu0 %v883
  %2374 = vmatmul.mubr.bf16.gmra.mxu0 %v882
  %v2375 = vpop.f32.mrf.mxu0
  %v2376 = vadd.f32 %v2279, %v2375
  %v2377 = vpop.f32.mrf.mxu0
  %v2378 = vpop.f32.mrf.mxu0
  %v2379 = vadd.f32 %v2282, %v2378
  %v2380 = vpop.f32.mrf.mxu0
  %2381 = vmatprep.mubr.bf16.mxu0 %v899
  %2382 = vmatmul.mubr.bf16.gmra.mxu0 %v898
  %v2383 = vpop.f32.mrf.mxu0
  %v2384 = vadd.f32 %v2287, %v2383
  %v2385 = vpop.f32.mrf.mxu0
  %v2386 = vpop.f32.mrf.mxu0
  %v2387 = vadd.f32 %v2290, %v2386
  %v2388 = vpop.f32.mrf.mxu0
  %2389 = vmatprep.mubr.bf16.mxu0 %v915
  %2390 = vmatmul.mubr.bf16.gmra.mxu0 %v914
  %v2391 = vpop.f32.mrf.mxu0
  %v2392 = vadd.f32 %v2295, %v2391
  %v2393 = vpop.f32.mrf.mxu0
  %v2394 = vpop.f32.mrf.mxu0
  %v2395 = vadd.f32 %v2298, %v2394
  %v2396 = vpop.f32.mrf.mxu0
  %2397 = vdwg.mxu0
  %2398 = vmatprep.subr.bf16.mxu0 0
  %2399 = vmatpush1.bf16.msra.mxu0 %v1663
  %2400 = vmatprep.subr.bf16.mxu0 0
  %2401 = vmatpush1.bf16.msra.mxu0 %v1662
  %2402 = vmatprep.subr.bf16.mxu0 0
  %2403 = vmatpush1.bf16.msra.mxu0 %v1661
  %2404 = vmatprep.subr.bf16.mxu0 0
  %2405 = vmatpush1.bf16.msra.mxu0 %v1660
  %2406 = vmatprep.subr.bf16.mxu0 0
  %2407 = vmatpush1.bf16.msra.mxu0 %v1659
  %2408 = vmatprep.subr.bf16.mxu0 0
  %2409 = vmatpush1.bf16.msra.mxu0 %v1658
  %2410 = vmatprep.subr.bf16.mxu0 0
  %2411 = vmatpush1.bf16.msra.mxu0 %v1657
  %2412 = vmatprep.subr.bf16.mxu0 0
  %2413 = vmatpush1.bf16.msra.mxu0 %v1656
  %2414 = vmatprep.subr.bf16.mxu0 0
  %2415 = vmatpush2.bf16.msra.mxu0 %v1671
  %2416 = vmatprep.subr.bf16.mxu0 0
  %2417 = vmatpush2.bf16.msra.mxu0 %v1670
  %2418 = vmatprep.subr.bf16.mxu0 0
  %2419 = vmatpush2.bf16.msra.mxu0 %v1669
  %2420 = vmatprep.subr.bf16.mxu0 0
  %2421 = vmatpush2.bf16.msra.mxu0 %v1668
  %2422 = vmatprep.subr.bf16.mxu0 0
  %2423 = vmatpush2.bf16.msra.mxu0 %v1667
  %2424 = vmatprep.subr.bf16.mxu0 0
  %2425 = vmatpush2.bf16.msra.mxu0 %v1666
  %2426 = vmatprep.subr.bf16.mxu0 0
  %2427 = vmatpush2.bf16.msra.mxu0 %v1665
  %2428 = vmatprep.subr.bf16.mxu0 0
  %2429 = vmatpush2.bf16.msra.mxu0 %v1664
  %2430 = vmatprep.mubr.bf16.mxu0 %v805
  %2431 = vmatmul.mubr.bf16.gmra.mxu0 %v804
  %v2432 = vpop.f32.mrf.mxu0
  %v2433 = vadd.f32 %v2336, %v2432
  %v2434 = vpop.f32.mrf.mxu0
  %v2435 = vpop.f32.mrf.mxu0
  %v2436 = vadd.f32 %v2339, %v2435
  %v2437 = vpop.f32.mrf.mxu0
  %2438 = vmatprep.mubr.bf16.mxu0 %v821
  %2439 = vmatmul.mubr.bf16.gmra.mxu0 %v820
  %v2440 = vpop.f32.mrf.mxu0
  %v2441 = vadd.f32 %v2344, %v2440
  %v2442 = vpop.f32.mrf.mxu0
  %v2443 = vpop.f32.mrf.mxu0
  %v2444 = vadd.f32 %v2347, %v2443
  %v2445 = vpop.f32.mrf.mxu0
  %2446 = vmatprep.mubr.bf16.mxu0 %v837
  %2447 = vmatmul.mubr.bf16.gmra.mxu0 %v836
  %v2448 = vpop.f32.mrf.mxu0
  %v2449 = vadd.f32 %v2352, %v2448
  %v2450 = vpop.f32.mrf.mxu0
  %v2451 = vpop.f32.mrf.mxu0
  %v2452 = vadd.f32 %v2355, %v2451
  %v2453 = vpop.f32.mrf.mxu0
  %2454 = vmatprep.mubr.bf16.mxu0 %v853
  %2455 = vmatmul.mubr.bf16.gmra.mxu0 %v852
  %v2456 = vpop.f32.mrf.mxu0
  %v2457 = vadd.f32 %v2360, %v2456
  %v2458 = vpop.f32.mrf.mxu0
  %v2459 = vpop.f32.mrf.mxu0
  %v2460 = vadd.f32 %v2363, %v2459
  %v2461 = vpop.f32.mrf.mxu0
  %2462 = vmatprep.mubr.bf16.mxu0 %v869
  %2463 = vmatmul.mubr.bf16.gmra.mxu0 %v868
  %v2464 = vpop.f32.mrf.mxu0
  %v2465 = vadd.f32 %v2368, %v2464
  %v2466 = vpop.f32.mrf.mxu0
  %v2467 = vpop.f32.mrf.mxu0
  %v2468 = vadd.f32 %v2371, %v2467
  %v2469 = vpop.f32.mrf.mxu0
  %2470 = vmatprep.mubr.bf16.mxu0 %v885
  %2471 = vmatmul.mubr.bf16.gmra.mxu0 %v884
  %v2472 = vpop.f32.mrf.mxu0
  %v2473 = vadd.f32 %v2376, %v2472
  %v2474 = vpop.f32.mrf.mxu0
  %v2475 = vpop.f32.mrf.mxu0
  %v2476 = vadd.f32 %v2379, %v2475
  %v2477 = vpop.f32.mrf.mxu0
  %2478 = vmatprep.mubr.bf16.mxu0 %v901
  %2479 = vmatmul.mubr.bf16.gmra.mxu0 %v900
  %v2480 = vpop.f32.mrf.mxu0
  %v2481 = vadd.f32 %v2384, %v2480
  %v2482 = vpop.f32.mrf.mxu0
  %v2483 = vpop.f32.mrf.mxu0
  %v2484 = vadd.f32 %v2387, %v2483
  %v2485 = vpop.f32.mrf.mxu0
  %2486 = vmatprep.mubr.bf16.mxu0 %v917
  %2487 = vmatmul.mubr.bf16.gmra.mxu0 %v916
  %v2488 = vpop.f32.mrf.mxu0
  %v2489 = vadd.f32 %v2392, %v2488
  %v2490 = vpop.f32.mrf.mxu0
  %v2491 = vpop.f32.mrf.mxu0
  %v2492 = vadd.f32 %v2395, %v2491
  %v2493 = vpop.f32.mrf.mxu0
  %2494 = vdwg.mxu0
  %2495 = vmatprep.subr.bf16.mxu0 0
  %2496 = vmatpush1.bf16.msra.mxu0 %v1679
  %2497 = vmatprep.subr.bf16.mxu0 0
  %2498 = vmatpush1.bf16.msra.mxu0 %v1678
  %2499 = vmatprep.subr.bf16.mxu0 0
  %2500 = vmatpush1.bf16.msra.mxu0 %v1677
  %2501 = vmatprep.subr.bf16.mxu0 0
  %2502 = vmatpush1.bf16.msra.mxu0 %v1676
  %2503 = vmatprep.subr.bf16.mxu0 0
  %2504 = vmatpush1.bf16.msra.mxu0 %v1675
  %2505 = vmatprep.subr.bf16.mxu0 0
  %2506 = vmatpush1.bf16.msra.mxu0 %v1674
  %2507 = vmatprep.subr.bf16.mxu0 0
  %2508 = vmatpush1.bf16.msra.mxu0 %v1673
  %2509 = vmatprep.subr.bf16.mxu0 0
  %2510 = vmatpush1.bf16.msra.mxu0 %v1672
  %2511 = vmatprep.subr.bf16.mxu0 0
  %2512 = vmatpush2.bf16.msra.mxu0 %v1687
  %2513 = vmatprep.subr.bf16.mxu0 0
  %2514 = vmatpush2.bf16.msra.mxu0 %v1686
  %2515 = vmatprep.subr.bf16.mxu0 0
  %2516 = vmatpush2.bf16.msra.mxu0 %v1685
  %2517 = vmatprep.subr.bf16.mxu0 0
  %2518 = vmatpush2.bf16.msra.mxu0 %v1684
  %2519 = vmatprep.subr.bf16.mxu0 0
  %2520 = vmatpush2.bf16.msra.mxu0 %v1683
  %2521 = vmatprep.subr.bf16.mxu0 0
  %2522 = vmatpush2.bf16.msra.mxu0 %v1682
  %2523 = vmatprep.subr.bf16.mxu0 0
  %2524 = vmatpush2.bf16.msra.mxu0 %v1681
  %2525 = vmatprep.subr.bf16.mxu0 0
  %2526 = vmatpush2.bf16.msra.mxu0 %v1680
  %2527 = vmatprep.mubr.bf16.mxu0 %v807
  %2528 = vmatmul.mubr.bf16.gmra.mxu0 %v806
  %v2529 = vpop.f32.mrf.mxu0
  %v2530 = vadd.f32 %v2433, %v2529
  %v2531 = vpop.f32.mrf.mxu0
  %v2532 = vpop.f32.mrf.mxu0
  %v2533 = vadd.f32 %v2436, %v2532
  %v2534 = vpop.f32.mrf.mxu0
  %2535 = vmatprep.mubr.bf16.mxu0 %v823
  %2536 = vmatmul.mubr.bf16.gmra.mxu0 %v822
  %v2537 = vpop.f32.mrf.mxu0
  %v2538 = vadd.f32 %v2441, %v2537
  %v2539 = vpop.f32.mrf.mxu0
  %v2540 = vpop.f32.mrf.mxu0
  %v2541 = vadd.f32 %v2444, %v2540
  %v2542 = vpop.f32.mrf.mxu0
  %2543 = vmatprep.mubr.bf16.mxu0 %v839
  %2544 = vmatmul.mubr.bf16.gmra.mxu0 %v838
  %v2545 = vpop.f32.mrf.mxu0
  %v2546 = vadd.f32 %v2449, %v2545
  %v2547 = vpop.f32.mrf.mxu0
  %v2548 = vpop.f32.mrf.mxu0
  %v2549 = vadd.f32 %v2452, %v2548
  %v2550 = vpop.f32.mrf.mxu0
  %2551 = vmatprep.mubr.bf16.mxu0 %v855
  %2552 = vmatmul.mubr.bf16.gmra.mxu0 %v854
  %v2553 = vpop.f32.mrf.mxu0
  %v2554 = vadd.f32 %v2457, %v2553
  %v2555 = vpop.f32.mrf.mxu0
  %v2556 = vpop.f32.mrf.mxu0
  %v2557 = vadd.f32 %v2460, %v2556
  %v2558 = vpop.f32.mrf.mxu0
  %2559 = vmatprep.mubr.bf16.mxu0 %v871
  %2560 = vmatmul.mubr.bf16.gmra.mxu0 %v870
  %v2561 = vpop.f32.mrf.mxu0
  %v2562 = vadd.f32 %v2465, %v2561
  %v2563 = vpop.f32.mrf.mxu0
  %v2564 = vpop.f32.mrf.mxu0
  %v2565 = vadd.f32 %v2468, %v2564
  %v2566 = vpop.f32.mrf.mxu0
  %2567 = vmatprep.mubr.bf16.mxu0 %v887
  %2568 = vmatmul.mubr.bf16.gmra.mxu0 %v886
  %v2569 = vpop.f32.mrf.mxu0
  %v2570 = vadd.f32 %v2473, %v2569
  %v2571 = vpop.f32.mrf.mxu0
  %v2572 = vpop.f32.mrf.mxu0
  %v2573 = vadd.f32 %v2476, %v2572
  %v2574 = vpop.f32.mrf.mxu0
  %2575 = vmatprep.mubr.bf16.mxu0 %v903
  %2576 = vmatmul.mubr.bf16.gmra.mxu0 %v902
  %v2577 = vpop.f32.mrf.mxu0
  %v2578 = vadd.f32 %v2481, %v2577
  %v2579 = vpop.f32.mrf.mxu0
  %v2580 = vpop.f32.mrf.mxu0
  %v2581 = vadd.f32 %v2484, %v2580
  %v2582 = vpop.f32.mrf.mxu0
  %2583 = vmatprep.mubr.bf16.mxu0 %v919
  %2584 = vmatmul.mubr.bf16.gmra.mxu0 %v918
  %v2585 = vpop.f32.mrf.mxu0
  %v2586 = vadd.f32 %v2489, %v2585
  %v2587 = vpop.f32.mrf.mxu0
  %v2588 = vpop.f32.mrf.mxu0
  %v2589 = vadd.f32 %v2492, %v2588
  %v2590 = vpop.f32.mrf.mxu0
  %2591 = vdwg.mxu0
  %vm2592 = vcmask 7168
  %2593 = vst.msk [vmem:[%s3] sm:$0xff] %vm2592, %v2530
  %2594 = vst.msk [vmem:[%s3 + $0x8] sm:$0xff] %vm2592, %v2533
  %2595 = vst.msk [vmem:[%s3 + $0x10] sm:$0xff] %vm2592, %v2538
  %2596 = vst.msk [vmem:[%s3 + $0x18] sm:$0xff] %vm2592, %v2541
  %2597 = vst.msk [vmem:[%s3 + $0x20] sm:$0xff] %vm2592, %v2546
  %2598 = vst.msk [vmem:[%s3 + $0x28] sm:$0xff] %vm2592, %v2549
  %2599 = vst.msk [vmem:[%s3 + $0x30] sm:$0xff] %vm2592, %v2554
  %2600 = vst.msk [vmem:[%s3 + $0x38] sm:$0xff] %vm2592, %v2557
  %2601 = vst.msk [vmem:[%s3 + $0x40] sm:$0xff] %vm2592, %v2562
  %2602 = vst.msk [vmem:[%s3 + $0x48] sm:$0xff] %vm2592, %v2565
  %2603 = vst.msk [vmem:[%s3 + $0x50] sm:$0xff] %vm2592, %v2570
  %2604 = vst.msk [vmem:[%s3 + $0x58] sm:$0xff] %vm2592, %v2573
  %2605 = vst.msk [vmem:[%s3 + $0x60] sm:$0xff] %vm2592, %v2578
  %2606 = vst.msk [vmem:[%s3 + $0x68] sm:$0xff] %vm2592, %v2581
  %2607 = vst.msk [vmem:[%s3 + $0x70] sm:$0xff] %vm2592, %v2586
  %2608 = vst.msk [vmem:[%s3 + $0x78] sm:$0xff] %vm2592, %v2589
  // Predicated region
  $region14: #{patchgan_forward.11} parent=0 // pred_check
    _
  $region15: #{patchgan_forward.11} parent=0 // pred_check_branch
    %2610 = sbr.rel (0) target = $region17
  $region16: #{patchgan_forward.11} parent=0 // pred_region
    _
  $region17: #{patchgan_forward.11} parent=0 // pred_fallthru
    _
  // Predicated region
  $region18: #{patchgan_forward.11} parent=0 // pred_check
    _
  $region19: #{patchgan_forward.11} parent=0 // pred_check_branch
    %2612 = sbr.rel (0) target = $region21
  $region20: #{patchgan_forward.11} parent=0 // pred_region
    _
  $region21: #{patchgan_forward.11} parent=0 // pred_fallthru
    _

</llo_original>
